<compile_context>
chip_gen: v7x
topology: tpu7x:2x2x1
jax: 0.10.0
libtpu: 0.0.40
codegen_flags: <defaults>
</compile_context>

<pallas_src>
import functools

import jax
import jax.numpy as jnp
from jax import lax
from jax.experimental import pallas as pl
from jax.experimental.pallas import tpu as pltpu

LANE = 128          # lane tile width / per-gate padded group width
SUB = 8             # sublane tile
D_PAD = 384         # 300 -> 3 full lane tiles
V_PAD = 64          # vocab 50 -> lane-dense one-hot width
C_PAD = 128         # classifier logits padded to a full lane tile
NG = 4 * LANE       # fused gate width: [i | f | o | g], each gate padded to 128 lanes


# ----------------------------------------------------------------------------
# Fused Pallas kernel
# ----------------------------------------------------------------------------

def fused_forward_kernel(tok_ref, embed_ref, gamma_ref, beta_ref,
                         wih1f_ref, wih1b_ref, whh1_ref, b1_ref,
                         wih2f_ref, wih2b_ref, whh2_ref, b2_ref,
                         w1_ref, bh1_ref, w2_ref, bh2_ref, w3_ref, bh3_ref,
                         out_ref, *, T, Bp, Bt, H, H2, Vp):
    f32, bf16 = jnp.float32, jnp.bfloat16
    TB = T * Bp
    G = LANE

    # ---- embedding lookup as a lane-dense one-hot matmul (Vp = 64) --------
    tok = tok_ref[...]                                        # (TB, 1) int32
    vocab_ids = lax.broadcasted_iota(jnp.int32, (TB, Vp), 1)  # (TB, Vp)
    onehot = jnp.where(tok == vocab_ids, 1.0, 0.0).astype(bf16)
    x = jnp.dot(onehot, embed_ref[...], preferred_element_type=f32)  # (TB, Dp)

    # ---- BatchNorm1d(300): train-mode stats over the Bt REAL batch rows ---
    # padded rows (b >= Bt) are excluded; scale/shift folded into one FMA.
    row = lax.broadcasted_iota(jnp.int32, (TB, 1), 0)
    valid = (row % Bp < Bt).astype(f32)                       # (TB, 1)
    inv_n = 1.0 / float(T * Bt)
    mean = jnp.sum(x * valid, axis=0, keepdims=True) * inv_n
    diff = x - mean
    var = jnp.sum(diff * diff * valid, axis=0, keepdims=True) * inv_n
    scale = gamma_ref[...] * lax.rsqrt(var + 1e-5)
    shift = beta_ref[...] - mean * scale
    xb = (x * scale + shift).astype(bf16)                     # (TB, Dp) bf16

    # ---- lstm1: hoisted bf16 input projections, directions fused ----------
    # Fused gate column layout (per gate padded to a full lane tile):
    #   [ i_f i_b pad | f_f f_b pad | o_f o_b pad | g_f g_b pad ]  (NG = 512)
    gi_f = jnp.dot(xb, wih1f_ref[...], preferred_element_type=f32) + b1_ref[...]
    gi_b = jnp.dot(xb, wih1b_ref[...], preferred_element_type=f32)

    whh1 = whh1_ref[...]                                      # (2H, NG), resident

    h_cat = jnp.zeros((Bp, 2 * H), f32)                       # [h_f | h_b]
    c_cat = jnp.zeros((Bp, 2 * H), f32)
    h_steps = []
    for s in range(T):                                        # fully unrolled
        tb = T - 1 - s
        g = (gi_f[s * Bp:(s + 1) * Bp, :] + gi_b[tb * Bp:(tb + 1) * Bp, :]
             + jnp.dot(h_cat, whh1, preferred_element_type=f32))
        sig = jax.nn.sigmoid(g[:, :3 * G])                    # i|f|o groups
        gg = jnp.tanh(g[:, 3 * G:3 * G + 2 * H])              # g gate, both dirs
        c_cat = sig[:, G:G + 2 * H] * c_cat + sig[:, :2 * H] * gg
        h_cat = sig[:, 2 * G:2 * G + 2 * H] * jnp.tanh(c_cat)
        h_steps.append(h_cat)

    # ---- lstm2: only the backward direction contributes to h2[-1] ---------
    # lstm2 (reverse) step s2 consumes ReLU(out1[T-1-s2]):
    #   forward half  of out1[T-1-s2] = h_steps[T-1-s2][:, :H]
    #   backward half of out1[T-1-s2] = h_steps[s2][:, H:]
    # wih2f has zero rows H:2H and wih2b zero rows 0:H, so the full 2H h_cat
    # can be fed to each projection without any lane slicing.
    relu = lambda a: jnp.maximum(a, 0.0)
    hf_src = jnp.concatenate([relu(h_steps[T - 1 - s2]) for s2 in range(T)],
                             axis=0).astype(bf16)             # (TB, 2H)
    hb_src = jnp.concatenate([relu(h) for h in h_steps], axis=0).astype(bf16)
    gi2 = (jnp.dot(hf_src, wih2f_ref[...], preferred_element_type=f32)
           + jnp.dot(hb_src, wih2b_ref[...], preferred_element_type=f32)
           + b2_ref[...])                                     # (TB, NG)

    whh2 = whh2_ref[...]                                      # (H2, NG), resident
    h2 = jnp.zeros((Bp, H2), f32)
    c2 = jnp.zeros((Bp, H2), f32)
    for s2 in range(T):
        g2 = (gi2[s2 * Bp:(s2 + 1) * Bp, :]
              + jnp.dot(h2, whh2, preferred_element_type=f32))
        sig = jax.nn.sigmoid(g2[:, :3 * G])
        gg = jnp.tanh(g2[:, 3 * G:3 * G + H2])
        c2 = sig[:, G:G + H2] * c2 + sig[:, :H2] * gg
        h2 = sig[:, 2 * G:2 * G + H2] * jnp.tanh(c2)

    # ---- head: linear1 -> ReLU -> linear1_1 -> ReLU -> linear2 ------------
    y = relu(jnp.dot(h2, w1_ref[...], preferred_element_type=f32) + bh1_ref[...])
    y = relu(jnp.dot(y, w2_ref[...], preferred_element_type=f32) + bh2_ref[...])
    out_ref[...] = (jnp.dot(y, w3_ref[...], preferred_element_type=f32)
                    + bh3_ref[...])                           # (Bp, 128) lane-dense


# ----------------------------------------------------------------------------
# Parameters (pre-transposed, fused gate layout, pre-padded) and wrapper
# ----------------------------------------------------------------------------

def init_params(key, vocab, emb_dim, hidden, num_class):
    H, H2 = hidden, 3 * hidden
    assert 2 * H <= LANE and H2 <= LANE
    key_it = iter(jax.random.split(key, 32))

    def u(shape, fan):
        bound = 1.0 / float(fan) ** 0.5
        return jax.random.uniform(next(key_it), shape, jnp.float32, -bound, bound)

    def place_gates(src, h, col_off, out_rows, row_off=0):
        # src: (rows, 4*h) compact gate matrix [i|f|o|g].  Returns (out_rows, NG)
        # with gate gi placed at columns gi*LANE+col_off : gi*LANE+col_off+h.
        rows = src.shape[0]
        dst = jnp.zeros((out_rows, NG), jnp.float32)
        for gi in range(4):
            dst = dst.at[row_off:row_off + rows,
                         gi * LANE + col_off:gi * LANE + col_off + h].set(
                             src[:, gi * h:(gi + 1) * h])
        return dst

    def lstm_dir(in_dim, h):
        wih = u((in_dim, 4 * h), h)
        whh = u((h, 4 * h), h)
        b = u((4 * h,), h) + u((4 * h,), h)                   # b_ih + b_hh
        return wih, whh, b[None, :]

    p = {}
    emb = jax.random.normal(next(key_it), (vocab, emb_dim), jnp.float32) * 0.1
    p["embed"] = jnp.pad(emb, ((0, V_PAD - vocab), (0, D_PAD - emb_dim))
                         ).astype(jnp.bfloat16)
    p["bn_gamma"] = jnp.ones((1, D_PAD), jnp.float32)
    p["bn_beta"] = jnp.zeros((1, D_PAD), jnp.float32)

    # lstm1: bidirectional, fwd at lane-offset 0 of each gate group, bwd at H
    wfi, wfh, bf_ = lstm_dir(emb_dim, H)
    wbi, wbh, bb_ = lstm_dir(emb_dim, H)
    p["wih1f"] = place_gates(wfi, H, 0, D_PAD).astype(jnp.bfloat16)
    p["wih1b"] = place_gates(wbi, H, H, D_PAD).astype(jnp.bfloat16)
    p["whh1"] = (place_gates(wfh, H, 0, 2 * H)
                 + place_gates(wbh, H, H, 2 * H, row_off=H))
    p["b1"] = place_gates(bf_, H, 0, 1) + place_gates(bb_, H, H, 1)

    # lstm2: only the backward direction is ever used (h2[-1])
    w2i, w2h, b2_ = lstm_dir(2 * H, H2)
    p["wih2f"] = place_gates(w2i[:H], H2, 0, 2 * H).astype(jnp.bfloat16)
    p["wih2b"] = place_gates(w2i[H:], H2, 0, 2 * H, row_off=H).astype(jnp.bfloat16)
    p["whh2"] = place_gates(w2h, H2, 0, H2)
    p["b2"] = place_gates(b2_, H2, 0, 1)

    # head: linear1 (3H->2H), linear1_1 (2H->H), linear2 (H->num_class, padded)
    p["w1"] = u((H2, 2 * H), H2)
    p["bh1"] = u((2 * H,), H2)[None, :]
    p["w2"] = u((2 * H, H), 2 * H)
    p["bh2"] = u((H,), 2 * H)[None, :]
    p["w3"] = jnp.pad(u((H, num_class), H), ((0, 0), (0, C_PAD - num_class)))
    p["bh3"] = jnp.pad(u((num_class,), H), (0, C_PAD - num_class))[None, :]
    return p


def forward(params, tokens, hidden, num_class):
    B, T = tokens.shape
    H, H2 = hidden, 3 * hidden
    Bp = max(SUB, ((B + SUB - 1) // SUB) * SUB)    # pad batch to full sublane tiles
    Vp, Dp = params["embed"].shape
    Cp = params["w3"].shape[1]

    tok_p = jnp.pad(tokens.astype(jnp.int32), ((0, Bp - B), (0, 0)))
    tok_tm = jnp.transpose(tok_p).reshape(T * Bp, 1)          # row = t*Bp + b

    args = (tok_tm, params["embed"], params["bn_gamma"], params["bn_beta"],
            params["wih1f"], params["wih1b"], params["whh1"], params["b1"],
            params["wih2f"], params["wih2b"], params["whh2"], params["b2"],
            params["w1"], params["bh1"], params["w2"], params["bh2"],
            params["w3"], params["bh3"])

    flops = 2 * (T * Bp * (Vp * Dp + 2 * Dp * NG + 2 * H * NG
                           + 2 * (2 * H) * NG + H2 * NG)
                 + Bp * (H2 * 2 * H + 2 * H * H + H * Cp))
    transcendentals = T * Bp * ((3 * LANE + 2 * 2 * H) + (3 * LANE + 2 * H2))
    bytes_accessed = int(sum(a.size * a.dtype.itemsize for a in args)
                         + Bp * Cp * 4)

    kern = functools.partial(fused_forward_kernel,
                             T=T, Bp=Bp, Bt=B, H=H, H2=H2, Vp=Vp)
    vmem = pl.BlockSpec(memory_space=pltpu.MemorySpace.VMEM)
    out_pad = pl.pallas_call(
        kern,
        out_shape=jax.ShapeDtypeStruct((Bp, Cp), jnp.float32),
        in_specs=[vmem] * len(args),
        out_specs=vmem,
        cost_estimate=pl.CostEstimate(flops=int(flops),
                                      transcendentals=int(transcendentals),
                                      bytes_accessed=bytes_accessed),
    )(*args)
    return out_pad[:B, :num_class]


# ----------------------------------------------------------------------------
# Main
# ----------------------------------------------------------------------------

if __name__ == "__main__":
    VOCAB = 50
    EMB_DIM = 300          # fixed by BatchNorm1d(300)
    HIDDEN = 32
    NUM_CLASS = 10
    B, T = 2, 8            # batch, sequence length

    key = jax.random.PRNGKey(0)
    pkey, dkey = jax.random.split(key)
    params = init_params(pkey, VOCAB, EMB_DIM, HIDDEN, NUM_CLASS)
    tokens = jax.random.randint(dkey, (B, T), 0, VOCAB, dtype=jnp.int32)

    fwd = jax.jit(forward, static_argnums=(2, 3))
    out = jax.block_until_ready(fwd(params, tokens, HIDDEN, NUM_CLASS))
    assert out.shape == (B, NUM_CLASS) and out.dtype == jnp.float32
    assert bool(jnp.all(jnp.isfinite(out)))
    print("KERNEL_OK")
</pallas_src>

<mosaic_0001>
module attributes {stable_mosaic.version = 11 : i64} {
  func.func @fused_forward_kernel(%arg0: memref<64x1xi32, #tpu.memory_space<vmem>>, %arg1: memref<64x384xbf16, #tpu.memory_space<vmem>>, %arg2: memref<1x384xf32, #tpu.memory_space<vmem>>, %arg3: memref<1x384xf32, #tpu.memory_space<vmem>>, %arg4: memref<384x512xbf16, #tpu.memory_space<vmem>>, %arg5: memref<384x512xbf16, #tpu.memory_space<vmem>>, %arg6: memref<64x512xf32, #tpu.memory_space<vmem>>, %arg7: memref<1x512xf32, #tpu.memory_space<vmem>>, %arg8: memref<64x512xbf16, #tpu.memory_space<vmem>>, %arg9: memref<64x512xbf16, #tpu.memory_space<vmem>>, %arg10: memref<96x512xf32, #tpu.memory_space<vmem>>, %arg11: memref<1x512xf32, #tpu.memory_space<vmem>>, %arg12: memref<96x64xf32, #tpu.memory_space<vmem>>, %arg13: memref<1x64xf32, #tpu.memory_space<vmem>>, %arg14: memref<64x32xf32, #tpu.memory_space<vmem>>, %arg15: memref<1x32xf32, #tpu.memory_space<vmem>>, %arg16: memref<32x128xf32, #tpu.memory_space<vmem>>, %arg17: memref<1x128xf32, #tpu.memory_space<vmem>>, %arg18: memref<8x128xf32, #tpu.memory_space<vmem>>) attributes {dimension_semantics = [], scalar_prefetch = 0 : i64, scratch_operands = 0 : i64, tpu.core_type = #tpu.core_type<tc>} {
    %c0 = arith.constant 0 : index
    %c0_0 = arith.constant 0 : index
    %0 = vector.load %arg0[%c0, %c0_0] : memref<64x1xi32, #tpu.memory_space<vmem>>, vector<64x1xi32>
    %1 = tpu.iota {dimensions = array<i32: 1>} : vector<64x64xi32>
    %2 = vector.broadcast %0 : vector<64x1xi32> to vector<64x64xi32>
    %3 = arith.cmpi eq, %2, %1 : vector<64x64xi32>
    %cst = arith.constant 1.000000e+00 : f32
    %cst_1 = arith.constant 0.000000e+00 : f32
    %4 = vector.broadcast %cst : f32 to vector<64x64xf32>
    %5 = vector.broadcast %cst_1 : f32 to vector<64x64xf32>
    %6 = arith.select %3, %4, %5 : vector<64x64xi1>, vector<64x64xf32>
    %7 = arith.truncf %6 : vector<64x64xf32> to vector<64x64xbf16>
    %c0_2 = arith.constant 0 : index
    %c0_3 = arith.constant 0 : index
    %8 = vector.load %arg1[%c0_2, %c0_3] : memref<64x384xbf16, #tpu.memory_space<vmem>>, vector<64x384xbf16>
    %cst_4 = arith.constant dense<0.000000e+00> : vector<64x384xf32>
    %9 = tpu.matmul %7, %8, %cst_4 {dimension_numbers = #tpu.dot_dimension_numbers<[1], [0], [0], [1], [0, 0, 1, 1], [], []>} : vector<64x64xbf16>, vector<64x384xbf16>, vector<64x384xf32> -> vector<64x384xf32>
    %10 = tpu.iota {dimensions = array<i32: 0>} : vector<64x1xi32>
    %c8_i32 = arith.constant 8 : i32
    %c0_i32 = arith.constant 0 : i32
    %11 = arith.cmpi eq, %c8_i32, %c0_i32 : i32
    %c1_i32 = arith.constant 1 : i32
    %12 = arith.select %11, %c1_i32, %c8_i32 : i32
    %13 = vector.broadcast %12 : i32 to vector<64x1xi32>
    %14 = arith.remsi %10, %13 : vector<64x1xi32>
    %c0_i32_5 = arith.constant 0 : i32
    %15 = vector.broadcast %c0_i32_5 : i32 to vector<64x1xi32>
    %16 = arith.cmpi ne, %14, %15 : vector<64x1xi32>
    %c0_i32_6 = arith.constant 0 : i32
    %17 = vector.broadcast %c0_i32_6 : i32 to vector<64x1xi32>
    %18 = arith.cmpi slt, %14, %17 : vector<64x1xi32>
    %c0_i32_7 = arith.constant 0 : i32
    %19 = arith.cmpi slt, %12, %c0_i32_7 : i32
    %20 = vector.broadcast %19 : i1 to vector<64x1xi1>
    %21 = vector.broadcast %20 : vector<64x1xi1> to vector<64x1xi1>
    %22 = arith.xori %18, %21 : vector<64x1xi1>
    %23 = arith.andi %22, %16 : vector<64x1xi1>
    %24 = vector.broadcast %12 : i32 to vector<64x1xi32>
    %25 = arith.addi %14, %24 : vector<64x1xi32>
    %26 = arith.select %23, %25, %14 : vector<64x1xi1>, vector<64x1xi32>
    %c2_i32 = arith.constant 2 : i32
    %27 = vector.broadcast %c2_i32 : i32 to vector<64x1xi32>
    %28 = arith.cmpi slt, %26, %27 : vector<64x1xi32>
    %29 = arith.extui %28 : vector<64x1xi1> to vector<64x1xi32>
    %30 = arith.sitofp %29 : vector<64x1xi32> to vector<64x1xf32>
    %31 = vector.broadcast %30 : vector<64x1xf32> to vector<64x384xf32>
    %32 = arith.mulf %9, %31 : vector<64x384xf32>
    %cst_8 = arith.constant dense<0.000000e+00> : vector<384xf32>
    %33 = vector.multi_reduction <add>, %32, %cst_8 [0] : vector<64x384xf32> to vector<384xf32>
    %34 = vector.shape_cast %33 : vector<384xf32> to vector<1x384xf32>
    %cst_9 = arith.constant 6.250000e-02 : f32
    %35 = vector.broadcast %cst_9 : f32 to vector<1x384xf32>
    %36 = arith.mulf %34, %35 : vector<1x384xf32>
    %37 = vector.broadcast %36 : vector<1x384xf32> to vector<64x384xf32>
    %38 = arith.subf %9, %37 : vector<64x384xf32>
    %39 = arith.mulf %38, %38 : vector<64x384xf32>
    %40 = vector.broadcast %30 : vector<64x1xf32> to vector<64x384xf32>
    %41 = arith.mulf %39, %40 : vector<64x384xf32>
    %cst_10 = arith.constant dense<0.000000e+00> : vector<384xf32>
    %42 = vector.multi_reduction <add>, %41, %cst_10 [0] : vector<64x384xf32> to vector<384xf32>
    %43 = vector.shape_cast %42 : vector<384xf32> to vector<1x384xf32>
    %cst_11 = arith.constant 6.250000e-02 : f32
    %44 = vector.broadcast %cst_11 : f32 to vector<1x384xf32>
    %45 = arith.mulf %43, %44 : vector<1x384xf32>
    %c0_12 = arith.constant 0 : index
    %c0_13 = arith.constant 0 : index
    %46 = vector.load %arg2[%c0_12, %c0_13] : memref<1x384xf32, #tpu.memory_space<vmem>>, vector<1x384xf32>
    %cst_14 = arith.constant 9.99999974E-6 : f32
    %47 = vector.broadcast %cst_14 : f32 to vector<1x384xf32>
    %48 = arith.addf %45, %47 : vector<1x384xf32>
    %49 = math.rsqrt %48 : vector<1x384xf32>
    %50 = arith.mulf %46, %49 : vector<1x384xf32>
    %c0_15 = arith.constant 0 : index
    %c0_16 = arith.constant 0 : index
    %51 = vector.load %arg3[%c0_15, %c0_16] : memref<1x384xf32, #tpu.memory_space<vmem>>, vector<1x384xf32>
    %52 = arith.mulf %36, %50 : vector<1x384xf32>
    %53 = arith.subf %51, %52 : vector<1x384xf32>
    %54 = vector.broadcast %50 : vector<1x384xf32> to vector<64x384xf32>
    %55 = arith.mulf %9, %54 : vector<64x384xf32>
    %56 = vector.broadcast %53 : vector<1x384xf32> to vector<64x384xf32>
    %57 = arith.addf %55, %56 : vector<64x384xf32>
    %58 = arith.truncf %57 : vector<64x384xf32> to vector<64x384xbf16>
    %c0_17 = arith.constant 0 : index
    %c0_18 = arith.constant 0 : index
    %59 = vector.load %arg4[%c0_17, %c0_18] : memref<384x512xbf16, #tpu.memory_space<vmem>>, vector<384x512xbf16>
    %cst_19 = arith.constant dense<0.000000e+00> : vector<64x512xf32>
    %60 = tpu.matmul %58, %59, %cst_19 {dimension_numbers = #tpu.dot_dimension_numbers<[1], [0], [0], [1], [0, 0, 1, 1], [], []>} : vector<64x384xbf16>, vector<384x512xbf16>, vector<64x512xf32> -> vector<64x512xf32>
    %c0_20 = arith.constant 0 : index
    %c0_21 = arith.constant 0 : index
    %61 = vector.load %arg7[%c0_20, %c0_21] : memref<1x512xf32, #tpu.memory_space<vmem>>, vector<1x512xf32>
    %62 = vector.broadcast %61 : vector<1x512xf32> to vector<64x512xf32>
    %63 = arith.addf %60, %62 : vector<64x512xf32>
    %c0_22 = arith.constant 0 : index
    %c0_23 = arith.constant 0 : index
    %64 = vector.load %arg5[%c0_22, %c0_23] : memref<384x512xbf16, #tpu.memory_space<vmem>>, vector<384x512xbf16>
    %cst_24 = arith.constant dense<0.000000e+00> : vector<64x512xf32>
    %65 = tpu.matmul %58, %64, %cst_24 {dimension_numbers = #tpu.dot_dimension_numbers<[1], [0], [0], [1], [0, 0, 1, 1], [], []>} : vector<64x384xbf16>, vector<384x512xbf16>, vector<64x512xf32> -> vector<64x512xf32>
    %c0_25 = arith.constant 0 : index
    %c0_26 = arith.constant 0 : index
    %66 = vector.load %arg6[%c0_25, %c0_26] : memref<64x512xf32, #tpu.memory_space<vmem>>, vector<64x512xf32>
    %cst_27 = arith.constant 0.000000e+00 : f32
    %67 = vector.broadcast %cst_27 : f32 to vector<8x64xf32>
    %cst_28 = arith.constant 0.000000e+00 : f32
    %68 = vector.broadcast %cst_28 : f32 to vector<8x64xf32>
    %69 = vector.extract_strided_slice %63 {offsets = [0, 0], sizes = [8, 512], strides = [1, 1]} : vector<64x512xf32> to vector<8x512xf32>
    %70 = vector.extract_strided_slice %65 {offsets = [56, 0], sizes = [8, 512], strides = [1, 1]} : vector<64x512xf32> to vector<8x512xf32>
    %71 = arith.addf %69, %70 : vector<8x512xf32>
    %cst_29 = arith.constant dense<0.000000e+00> : vector<8x512xf32>
    %72 = tpu.matmul %67, %66, %cst_29 {dimension_numbers = #tpu.dot_dimension_numbers<[1], [0], [0], [1], [0, 0, 1, 1], [], []>} : vector<8x64xf32>, vector<64x512xf32>, vector<8x512xf32> -> vector<8x512xf32>
    %73 = arith.addf %71, %72 : vector<8x512xf32>
    %74 = vector.extract_strided_slice %73 {offsets = [0, 0], sizes = [8, 384], strides = [1, 1]} : vector<8x512xf32> to vector<8x384xf32>
    %75 = arith.negf %74 : vector<8x384xf32>
    %76 = math.exp %75 : vector<8x384xf32>
    %cst_30 = arith.constant 1.000000e+00 : f32
    %77 = vector.broadcast %cst_30 : f32 to vector<8x384xf32>
    %78 = arith.addf %77, %76 : vector<8x384xf32>
    %79 = arith.divf %77, %78 : vector<8x384xf32>
    %80 = vector.extract_strided_slice %73 {offsets = [0, 384], sizes = [8, 64], strides = [1, 1]} : vector<8x512xf32> to vector<8x64xf32>
    %81 = math.tanh %80 : vector<8x64xf32>
    %82 = vector.extract_strided_slice %79 {offsets = [0, 128], sizes = [8, 64], strides = [1, 1]} : vector<8x384xf32> to vector<8x64xf32>
    %83 = arith.mulf %82, %68 : vector<8x64xf32>
    %84 = vector.extract_strided_slice %79 {offsets = [0, 0], sizes = [8, 64], strides = [1, 1]} : vector<8x384xf32> to vector<8x64xf32>
    %85 = arith.mulf %84, %81 : vector<8x64xf32>
    %86 = arith.addf %83, %85 : vector<8x64xf32>
    %87 = vector.extract_strided_slice %79 {offsets = [0, 256], sizes = [8, 64], strides = [1, 1]} : vector<8x384xf32> to vector<8x64xf32>
    %88 = math.tanh %86 : vector<8x64xf32>
    %89 = arith.mulf %87, %88 : vector<8x64xf32>
    %90 = vector.extract_strided_slice %63 {offsets = [8, 0], sizes = [8, 512], strides = [1, 1]} : vector<64x512xf32> to vector<8x512xf32>
    %91 = vector.extract_strided_slice %65 {offsets = [48, 0], sizes = [8, 512], strides = [1, 1]} : vector<64x512xf32> to vector<8x512xf32>
    %92 = arith.addf %90, %91 : vector<8x512xf32>
    %cst_31 = arith.constant dense<0.000000e+00> : vector<8x512xf32>
    %93 = tpu.matmul %89, %66, %cst_31 {dimension_numbers = #tpu.dot_dimension_numbers<[1], [0], [0], [1], [0, 0, 1, 1], [], []>} : vector<8x64xf32>, vector<64x512xf32>, vector<8x512xf32> -> vector<8x512xf32>
    %94 = arith.addf %92, %93 : vector<8x512xf32>
    %95 = vector.extract_strided_slice %94 {offsets = [0, 0], sizes = [8, 384], strides = [1, 1]} : vector<8x512xf32> to vector<8x384xf32>
    %96 = arith.negf %95 : vector<8x384xf32>
    %97 = math.exp %96 : vector<8x384xf32>
    %cst_32 = arith.constant 1.000000e+00 : f32
    %98 = vector.broadcast %cst_32 : f32 to vector<8x384xf32>
    %99 = arith.addf %98, %97 : vector<8x384xf32>
    %100 = arith.divf %98, %99 : vector<8x384xf32>
    %101 = vector.extract_strided_slice %94 {offsets = [0, 384], sizes = [8, 64], strides = [1, 1]} : vector<8x512xf32> to vector<8x64xf32>
    %102 = math.tanh %101 : vector<8x64xf32>
    %103 = vector.extract_strided_slice %100 {offsets = [0, 128], sizes = [8, 64], strides = [1, 1]} : vector<8x384xf32> to vector<8x64xf32>
    %104 = arith.mulf %103, %86 : vector<8x64xf32>
    %105 = vector.extract_strided_slice %100 {offsets = [0, 0], sizes = [8, 64], strides = [1, 1]} : vector<8x384xf32> to vector<8x64xf32>
    %106 = arith.mulf %105, %102 : vector<8x64xf32>
    %107 = arith.addf %104, %106 : vector<8x64xf32>
    %108 = vector.extract_strided_slice %100 {offsets = [0, 256], sizes = [8, 64], strides = [1, 1]} : vector<8x384xf32> to vector<8x64xf32>
    %109 = math.tanh %107 : vector<8x64xf32>
    %110 = arith.mulf %108, %109 : vector<8x64xf32>
    %111 = vector.extract_strided_slice %63 {offsets = [16, 0], sizes = [8, 512], strides = [1, 1]} : vector<64x512xf32> to vector<8x512xf32>
    %112 = vector.extract_strided_slice %65 {offsets = [40, 0], sizes = [8, 512], strides = [1, 1]} : vector<64x512xf32> to vector<8x512xf32>
    %113 = arith.addf %111, %112 : vector<8x512xf32>
    %cst_33 = arith.constant dense<0.000000e+00> : vector<8x512xf32>
    %114 = tpu.matmul %110, %66, %cst_33 {dimension_numbers = #tpu.dot_dimension_numbers<[1], [0], [0], [1], [0, 0, 1, 1], [], []>} : vector<8x64xf32>, vector<64x512xf32>, vector<8x512xf32> -> vector<8x512xf32>
    %115 = arith.addf %113, %114 : vector<8x512xf32>
    %116 = vector.extract_strided_slice %115 {offsets = [0, 0], sizes = [8, 384], strides = [1, 1]} : vector<8x512xf32> to vector<8x384xf32>
    %117 = arith.negf %116 : vector<8x384xf32>
    %118 = math.exp %117 : vector<8x384xf32>
    %cst_34 = arith.constant 1.000000e+00 : f32
    %119 = vector.broadcast %cst_34 : f32 to vector<8x384xf32>
    %120 = arith.addf %119, %118 : vector<8x384xf32>
    %121 = arith.divf %119, %120 : vector<8x384xf32>
    %122 = vector.extract_strided_slice %115 {offsets = [0, 384], sizes = [8, 64], strides = [1, 1]} : vector<8x512xf32> to vector<8x64xf32>
    %123 = math.tanh %122 : vector<8x64xf32>
    %124 = vector.extract_strided_slice %121 {offsets = [0, 128], sizes = [8, 64], strides = [1, 1]} : vector<8x384xf32> to vector<8x64xf32>
    %125 = arith.mulf %124, %107 : vector<8x64xf32>
    %126 = vector.extract_strided_slice %121 {offsets = [0, 0], sizes = [8, 64], strides = [1, 1]} : vector<8x384xf32> to vector<8x64xf32>
    %127 = arith.mulf %126, %123 : vector<8x64xf32>
    %128 = arith.addf %125, %127 : vector<8x64xf32>
    %129 = vector.extract_strided_slice %121 {offsets = [0, 256], sizes = [8, 64], strides = [1, 1]} : vector<8x384xf32> to vector<8x64xf32>
    %130 = math.tanh %128 : vector<8x64xf32>
    %131 = arith.mulf %129, %130 : vector<8x64xf32>
    %132 = vector.extract_strided_slice %63 {offsets = [24, 0], sizes = [8, 512], strides = [1, 1]} : vector<64x512xf32> to vector<8x512xf32>
    %133 = vector.extract_strided_slice %65 {offsets = [32, 0], sizes = [8, 512], strides = [1, 1]} : vector<64x512xf32> to vector<8x512xf32>
    %134 = arith.addf %132, %133 : vector<8x512xf32>
    %cst_35 = arith.constant dense<0.000000e+00> : vector<8x512xf32>
    %135 = tpu.matmul %131, %66, %cst_35 {dimension_numbers = #tpu.dot_dimension_numbers<[1], [0], [0], [1], [0, 0, 1, 1], [], []>} : vector<8x64xf32>, vector<64x512xf32>, vector<8x512xf32> -> vector<8x512xf32>
    %136 = arith.addf %134, %135 : vector<8x512xf32>
    %137 = vector.extract_strided_slice %136 {offsets = [0, 0], sizes = [8, 384], strides = [1, 1]} : vector<8x512xf32> to vector<8x384xf32>
    %138 = arith.negf %137 : vector<8x384xf32>
    %139 = math.exp %138 : vector<8x384xf32>
    %cst_36 = arith.constant 1.000000e+00 : f32
    %140 = vector.broadcast %cst_36 : f32 to vector<8x384xf32>
    %141 = arith.addf %140, %139 : vector<8x384xf32>
    %142 = arith.divf %140, %141 : vector<8x384xf32>
    %143 = vector.extract_strided_slice %136 {offsets = [0, 384], sizes = [8, 64], strides = [1, 1]} : vector<8x512xf32> to vector<8x64xf32>
    %144 = math.tanh %143 : vector<8x64xf32>
    %145 = vector.extract_strided_slice %142 {offsets = [0, 128], sizes = [8, 64], strides = [1, 1]} : vector<8x384xf32> to vector<8x64xf32>
    %146 = arith.mulf %145, %128 : vector<8x64xf32>
    %147 = vector.extract_strided_slice %142 {offsets = [0, 0], sizes = [8, 64], strides = [1, 1]} : vector<8x384xf32> to vector<8x64xf32>
    %148 = arith.mulf %147, %144 : vector<8x64xf32>
    %149 = arith.addf %146, %148 : vector<8x64xf32>
    %150 = vector.extract_strided_slice %142 {offsets = [0, 256], sizes = [8, 64], strides = [1, 1]} : vector<8x384xf32> to vector<8x64xf32>
    %151 = math.tanh %149 : vector<8x64xf32>
    %152 = arith.mulf %150, %151 : vector<8x64xf32>
    %153 = vector.extract_strided_slice %63 {offsets = [32, 0], sizes = [8, 512], strides = [1, 1]} : vector<64x512xf32> to vector<8x512xf32>
    %154 = vector.extract_strided_slice %65 {offsets = [24, 0], sizes = [8, 512], strides = [1, 1]} : vector<64x512xf32> to vector<8x512xf32>
    %155 = arith.addf %153, %154 : vector<8x512xf32>
    %cst_37 = arith.constant dense<0.000000e+00> : vector<8x512xf32>
    %156 = tpu.matmul %152, %66, %cst_37 {dimension_numbers = #tpu.dot_dimension_numbers<[1], [0], [0], [1], [0, 0, 1, 1], [], []>} : vector<8x64xf32>, vector<64x512xf32>, vector<8x512xf32> -> vector<8x512xf32>
    %157 = arith.addf %155, %156 : vector<8x512xf32>
    %158 = vector.extract_strided_slice %157 {offsets = [0, 0], sizes = [8, 384], strides = [1, 1]} : vector<8x512xf32> to vector<8x384xf32>
    %159 = arith.negf %158 : vector<8x384xf32>
    %160 = math.exp %159 : vector<8x384xf32>
    %cst_38 = arith.constant 1.000000e+00 : f32
    %161 = vector.broadcast %cst_38 : f32 to vector<8x384xf32>
    %162 = arith.addf %161, %160 : vector<8x384xf32>
    %163 = arith.divf %161, %162 : vector<8x384xf32>
    %164 = vector.extract_strided_slice %157 {offsets = [0, 384], sizes = [8, 64], strides = [1, 1]} : vector<8x512xf32> to vector<8x64xf32>
    %165 = math.tanh %164 : vector<8x64xf32>
    %166 = vector.extract_strided_slice %163 {offsets = [0, 128], sizes = [8, 64], strides = [1, 1]} : vector<8x384xf32> to vector<8x64xf32>
    %167 = arith.mulf %166, %149 : vector<8x64xf32>
    %168 = vector.extract_strided_slice %163 {offsets = [0, 0], sizes = [8, 64], strides = [1, 1]} : vector<8x384xf32> to vector<8x64xf32>
    %169 = arith.mulf %168, %165 : vector<8x64xf32>
    %170 = arith.addf %167, %169 : vector<8x64xf32>
    %171 = vector.extract_strided_slice %163 {offsets = [0, 256], sizes = [8, 64], strides = [1, 1]} : vector<8x384xf32> to vector<8x64xf32>
    %172 = math.tanh %170 : vector<8x64xf32>
    %173 = arith.mulf %171, %172 : vector<8x64xf32>
    %174 = vector.extract_strided_slice %63 {offsets = [40, 0], sizes = [8, 512], strides = [1, 1]} : vector<64x512xf32> to vector<8x512xf32>
    %175 = vector.extract_strided_slice %65 {offsets = [16, 0], sizes = [8, 512], strides = [1, 1]} : vector<64x512xf32> to vector<8x512xf32>
    %176 = arith.addf %174, %175 : vector<8x512xf32>
    %cst_39 = arith.constant dense<0.000000e+00> : vector<8x512xf32>
    %177 = tpu.matmul %173, %66, %cst_39 {dimension_numbers = #tpu.dot_dimension_numbers<[1], [0], [0], [1], [0, 0, 1, 1], [], []>} : vector<8x64xf32>, vector<64x512xf32>, vector<8x512xf32> -> vector<8x512xf32>
    %178 = arith.addf %176, %177 : vector<8x512xf32>
    %179 = vector.extract_strided_slice %178 {offsets = [0, 0], sizes = [8, 384], strides = [1, 1]} : vector<8x512xf32> to vector<8x384xf32>
    %180 = arith.negf %179 : vector<8x384xf32>
    %181 = math.exp %180 : vector<8x384xf32>
    %cst_40 = arith.constant 1.000000e+00 : f32
    %182 = vector.broadcast %cst_40 : f32 to vector<8x384xf32>
    %183 = arith.addf %182, %181 : vector<8x384xf32>
    %184 = arith.divf %182, %183 : vector<8x384xf32>
    %185 = vector.extract_strided_slice %178 {offsets = [0, 384], sizes = [8, 64], strides = [1, 1]} : vector<8x512xf32> to vector<8x64xf32>
    %186 = math.tanh %185 : vector<8x64xf32>
    %187 = vector.extract_strided_slice %184 {offsets = [0, 128], sizes = [8, 64], strides = [1, 1]} : vector<8x384xf32> to vector<8x64xf32>
    %188 = arith.mulf %187, %170 : vector<8x64xf32>
    %189 = vector.extract_strided_slice %184 {offsets = [0, 0], sizes = [8, 64], strides = [1, 1]} : vector<8x384xf32> to vector<8x64xf32>
    %190 = arith.mulf %189, %186 : vector<8x64xf32>
    %191 = arith.addf %188, %190 : vector<8x64xf32>
    %192 = vector.extract_strided_slice %184 {offsets = [0, 256], sizes = [8, 64], strides = [1, 1]} : vector<8x384xf32> to vector<8x64xf32>
    %193 = math.tanh %191 : vector<8x64xf32>
    %194 = arith.mulf %192, %193 : vector<8x64xf32>
    %195 = vector.extract_strided_slice %63 {offsets = [48, 0], sizes = [8, 512], strides = [1, 1]} : vector<64x512xf32> to vector<8x512xf32>
    %196 = vector.extract_strided_slice %65 {offsets = [8, 0], sizes = [8, 512], strides = [1, 1]} : vector<64x512xf32> to vector<8x512xf32>
    %197 = arith.addf %195, %196 : vector<8x512xf32>
    %cst_41 = arith.constant dense<0.000000e+00> : vector<8x512xf32>
    %198 = tpu.matmul %194, %66, %cst_41 {dimension_numbers = #tpu.dot_dimension_numbers<[1], [0], [0], [1], [0, 0, 1, 1], [], []>} : vector<8x64xf32>, vector<64x512xf32>, vector<8x512xf32> -> vector<8x512xf32>
    %199 = arith.addf %197, %198 : vector<8x512xf32>
    %200 = vector.extract_strided_slice %199 {offsets = [0, 0], sizes = [8, 384], strides = [1, 1]} : vector<8x512xf32> to vector<8x384xf32>
    %201 = arith.negf %200 : vector<8x384xf32>
    %202 = math.exp %201 : vector<8x384xf32>
    %cst_42 = arith.constant 1.000000e+00 : f32
    %203 = vector.broadcast %cst_42 : f32 to vector<8x384xf32>
    %204 = arith.addf %203, %202 : vector<8x384xf32>
    %205 = arith.divf %203, %204 : vector<8x384xf32>
    %206 = vector.extract_strided_slice %199 {offsets = [0, 384], sizes = [8, 64], strides = [1, 1]} : vector<8x512xf32> to vector<8x64xf32>
    %207 = math.tanh %206 : vector<8x64xf32>
    %208 = vector.extract_strided_slice %205 {offsets = [0, 128], sizes = [8, 64], strides = [1, 1]} : vector<8x384xf32> to vector<8x64xf32>
    %209 = arith.mulf %208, %191 : vector<8x64xf32>
    %210 = vector.extract_strided_slice %205 {offsets = [0, 0], sizes = [8, 64], strides = [1, 1]} : vector<8x384xf32> to vector<8x64xf32>
    %211 = arith.mulf %210, %207 : vector<8x64xf32>
    %212 = arith.addf %209, %211 : vector<8x64xf32>
    %213 = vector.extract_strided_slice %205 {offsets = [0, 256], sizes = [8, 64], strides = [1, 1]} : vector<8x384xf32> to vector<8x64xf32>
    %214 = math.tanh %212 : vector<8x64xf32>
    %215 = arith.mulf %213, %214 : vector<8x64xf32>
    %216 = vector.extract_strided_slice %63 {offsets = [56, 0], sizes = [8, 512], strides = [1, 1]} : vector<64x512xf32> to vector<8x512xf32>
    %217 = vector.extract_strided_slice %65 {offsets = [0, 0], sizes = [8, 512], strides = [1, 1]} : vector<64x512xf32> to vector<8x512xf32>
    %218 = arith.addf %216, %217 : vector<8x512xf32>
    %cst_43 = arith.constant dense<0.000000e+00> : vector<8x512xf32>
    %219 = tpu.matmul %215, %66, %cst_43 {dimension_numbers = #tpu.dot_dimension_numbers<[1], [0], [0], [1], [0, 0, 1, 1], [], []>} : vector<8x64xf32>, vector<64x512xf32>, vector<8x512xf32> -> vector<8x512xf32>
    %220 = arith.addf %218, %219 : vector<8x512xf32>
    %221 = vector.extract_strided_slice %220 {offsets = [0, 0], sizes = [8, 384], strides = [1, 1]} : vector<8x512xf32> to vector<8x384xf32>
    %222 = arith.negf %221 : vector<8x384xf32>
    %223 = math.exp %222 : vector<8x384xf32>
    %cst_44 = arith.constant 1.000000e+00 : f32
    %224 = vector.broadcast %cst_44 : f32 to vector<8x384xf32>
    %225 = arith.addf %224, %223 : vector<8x384xf32>
    %226 = arith.divf %224, %225 : vector<8x384xf32>
    %227 = vector.extract_strided_slice %220 {offsets = [0, 384], sizes = [8, 64], strides = [1, 1]} : vector<8x512xf32> to vector<8x64xf32>
    %228 = math.tanh %227 : vector<8x64xf32>
    %229 = vector.extract_strided_slice %226 {offsets = [0, 128], sizes = [8, 64], strides = [1, 1]} : vector<8x384xf32> to vector<8x64xf32>
    %230 = arith.mulf %229, %212 : vector<8x64xf32>
    %231 = vector.extract_strided_slice %226 {offsets = [0, 0], sizes = [8, 64], strides = [1, 1]} : vector<8x384xf32> to vector<8x64xf32>
    %232 = arith.mulf %231, %228 : vector<8x64xf32>
    %233 = arith.addf %230, %232 : vector<8x64xf32>
    %234 = vector.extract_strided_slice %226 {offsets = [0, 256], sizes = [8, 64], strides = [1, 1]} : vector<8x384xf32> to vector<8x64xf32>
    %235 = math.tanh %233 : vector<8x64xf32>
    %236 = arith.mulf %234, %235 : vector<8x64xf32>
    %cst_45 = arith.constant 0.000000e+00 : f32
    %237 = vector.broadcast %cst_45 : f32 to vector<8x64xf32>
    %238 = arith.maximumf %236, %237 : vector<8x64xf32>
    %cst_46 = arith.constant 0.000000e+00 : f32
    %239 = vector.broadcast %cst_46 : f32 to vector<8x64xf32>
    %240 = arith.maximumf %215, %239 : vector<8x64xf32>
    %cst_47 = arith.constant 0.000000e+00 : f32
    %241 = vector.broadcast %cst_47 : f32 to vector<8x64xf32>
    %242 = arith.maximumf %194, %241 : vector<8x64xf32>
    %cst_48 = arith.constant 0.000000e+00 : f32
    %243 = vector.broadcast %cst_48 : f32 to vector<8x64xf32>
    %244 = arith.maximumf %173, %243 : vector<8x64xf32>
    %cst_49 = arith.constant 0.000000e+00 : f32
    %245 = vector.broadcast %cst_49 : f32 to vector<8x64xf32>
    %246 = arith.maximumf %152, %245 : vector<8x64xf32>
    %cst_50 = arith.constant 0.000000e+00 : f32
    %247 = vector.broadcast %cst_50 : f32 to vector<8x64xf32>
    %248 = arith.maximumf %131, %247 : vector<8x64xf32>
    %cst_51 = arith.constant 0.000000e+00 : f32
    %249 = vector.broadcast %cst_51 : f32 to vector<8x64xf32>
    %250 = arith.maximumf %110, %249 : vector<8x64xf32>
    %cst_52 = arith.constant 0.000000e+00 : f32
    %251 = vector.broadcast %cst_52 : f32 to vector<8x64xf32>
    %252 = arith.maximumf %89, %251 : vector<8x64xf32>
    %253 = tpu.concatenate %238, %240, %242, %244, %246, %248, %250, %252 in 0 : vector<8x64xf32>, vector<8x64xf32>, vector<8x64xf32>, vector<8x64xf32>, vector<8x64xf32>, vector<8x64xf32>, vector<8x64xf32>, vector<8x64xf32> -> vector<64x64xf32>
    %254 = arith.truncf %253 : vector<64x64xf32> to vector<64x64xbf16>
    %cst_53 = arith.constant 0.000000e+00 : f32
    %255 = vector.broadcast %cst_53 : f32 to vector<8x64xf32>
    %256 = arith.maximumf %89, %255 : vector<8x64xf32>
    %cst_54 = arith.constant 0.000000e+00 : f32
    %257 = vector.broadcast %cst_54 : f32 to vector<8x64xf32>
    %258 = arith.maximumf %110, %257 : vector<8x64xf32>
    %cst_55 = arith.constant 0.000000e+00 : f32
    %259 = vector.broadcast %cst_55 : f32 to vector<8x64xf32>
    %260 = arith.maximumf %131, %259 : vector<8x64xf32>
    %cst_56 = arith.constant 0.000000e+00 : f32
    %261 = vector.broadcast %cst_56 : f32 to vector<8x64xf32>
    %262 = arith.maximumf %152, %261 : vector<8x64xf32>
    %cst_57 = arith.constant 0.000000e+00 : f32
    %263 = vector.broadcast %cst_57 : f32 to vector<8x64xf32>
    %264 = arith.maximumf %173, %263 : vector<8x64xf32>
    %cst_58 = arith.constant 0.000000e+00 : f32
    %265 = vector.broadcast %cst_58 : f32 to vector<8x64xf32>
    %266 = arith.maximumf %194, %265 : vector<8x64xf32>
    %cst_59 = arith.constant 0.000000e+00 : f32
    %267 = vector.broadcast %cst_59 : f32 to vector<8x64xf32>
    %268 = arith.maximumf %215, %267 : vector<8x64xf32>
    %cst_60 = arith.constant 0.000000e+00 : f32
    %269 = vector.broadcast %cst_60 : f32 to vector<8x64xf32>
    %270 = arith.maximumf %236, %269 : vector<8x64xf32>
    %271 = tpu.concatenate %256, %258, %260, %262, %264, %266, %268, %270 in 0 : vector<8x64xf32>, vector<8x64xf32>, vector<8x64xf32>, vector<8x64xf32>, vector<8x64xf32>, vector<8x64xf32>, vector<8x64xf32>, vector<8x64xf32> -> vector<64x64xf32>
    %272 = arith.truncf %271 : vector<64x64xf32> to vector<64x64xbf16>
    %c0_61 = arith.constant 0 : index
    %c0_62 = arith.constant 0 : index
    %273 = vector.load %arg8[%c0_61, %c0_62] : memref<64x512xbf16, #tpu.memory_space<vmem>>, vector<64x512xbf16>
    %cst_63 = arith.constant dense<0.000000e+00> : vector<64x512xf32>
    %274 = tpu.matmul %254, %273, %cst_63 {dimension_numbers = #tpu.dot_dimension_numbers<[1], [0], [0], [1], [0, 0, 1, 1], [], []>} : vector<64x64xbf16>, vector<64x512xbf16>, vector<64x512xf32> -> vector<64x512xf32>
    %c0_64 = arith.constant 0 : index
    %c0_65 = arith.constant 0 : index
    %275 = vector.load %arg9[%c0_64, %c0_65] : memref<64x512xbf16, #tpu.memory_space<vmem>>, vector<64x512xbf16>
    %cst_66 = arith.constant dense<0.000000e+00> : vector<64x512xf32>
    %276 = tpu.matmul %272, %275, %cst_66 {dimension_numbers = #tpu.dot_dimension_numbers<[1], [0], [0], [1], [0, 0, 1, 1], [], []>} : vector<64x64xbf16>, vector<64x512xbf16>, vector<64x512xf32> -> vector<64x512xf32>
    %277 = arith.addf %274, %276 : vector<64x512xf32>
    %c0_67 = arith.constant 0 : index
    %c0_68 = arith.constant 0 : index
    %278 = vector.load %arg11[%c0_67, %c0_68] : memref<1x512xf32, #tpu.memory_space<vmem>>, vector<1x512xf32>
    %279 = vector.broadcast %278 : vector<1x512xf32> to vector<64x512xf32>
    %280 = arith.addf %277, %279 : vector<64x512xf32>
    %c0_69 = arith.constant 0 : index
    %c0_70 = arith.constant 0 : index
    %281 = vector.load %arg10[%c0_69, %c0_70] : memref<96x512xf32, #tpu.memory_space<vmem>>, vector<96x512xf32>
    %cst_71 = arith.constant 0.000000e+00 : f32
    %282 = vector.broadcast %cst_71 : f32 to vector<8x96xf32>
    %cst_72 = arith.constant 0.000000e+00 : f32
    %283 = vector.broadcast %cst_72 : f32 to vector<8x96xf32>
    %284 = vector.extract_strided_slice %280 {offsets = [0, 0], sizes = [8, 512], strides = [1, 1]} : vector<64x512xf32> to vector<8x512xf32>
    %cst_73 = arith.constant dense<0.000000e+00> : vector<8x512xf32>
    %285 = tpu.matmul %282, %281, %cst_73 {dimension_numbers = #tpu.dot_dimension_numbers<[1], [0], [0], [1], [0, 0, 1, 1], [], []>} : vector<8x96xf32>, vector<96x512xf32>, vector<8x512xf32> -> vector<8x512xf32>
    %286 = arith.addf %284, %285 : vector<8x512xf32>
    %287 = vector.extract_strided_slice %286 {offsets = [0, 0], sizes = [8, 384], strides = [1, 1]} : vector<8x512xf32> to vector<8x384xf32>
    %288 = arith.negf %287 : vector<8x384xf32>
    %289 = math.exp %288 : vector<8x384xf32>
    %cst_74 = arith.constant 1.000000e+00 : f32
    %290 = vector.broadcast %cst_74 : f32 to vector<8x384xf32>
    %291 = arith.addf %290, %289 : vector<8x384xf32>
    %292 = arith.divf %290, %291 : vector<8x384xf32>
    %293 = vector.extract_strided_slice %286 {offsets = [0, 384], sizes = [8, 96], strides = [1, 1]} : vector<8x512xf32> to vector<8x96xf32>
    %294 = math.tanh %293 : vector<8x96xf32>
    %295 = vector.extract_strided_slice %292 {offsets = [0, 128], sizes = [8, 96], strides = [1, 1]} : vector<8x384xf32> to vector<8x96xf32>
    %296 = arith.mulf %295, %283 : vector<8x96xf32>
    %297 = vector.extract_strided_slice %292 {offsets = [0, 0], sizes = [8, 96], strides = [1, 1]} : vector<8x384xf32> to vector<8x96xf32>
    %298 = arith.mulf %297, %294 : vector<8x96xf32>
    %299 = arith.addf %296, %298 : vector<8x96xf32>
    %300 = vector.extract_strided_slice %292 {offsets = [0, 256], sizes = [8, 96], strides = [1, 1]} : vector<8x384xf32> to vector<8x96xf32>
    %301 = math.tanh %299 : vector<8x96xf32>
    %302 = arith.mulf %300, %301 : vector<8x96xf32>
    %303 = vector.extract_strided_slice %280 {offsets = [8, 0], sizes = [8, 512], strides = [1, 1]} : vector<64x512xf32> to vector<8x512xf32>
    %cst_75 = arith.constant dense<0.000000e+00> : vector<8x512xf32>
    %304 = tpu.matmul %302, %281, %cst_75 {dimension_numbers = #tpu.dot_dimension_numbers<[1], [0], [0], [1], [0, 0, 1, 1], [], []>} : vector<8x96xf32>, vector<96x512xf32>, vector<8x512xf32> -> vector<8x512xf32>
    %305 = arith.addf %303, %304 : vector<8x512xf32>
    %306 = vector.extract_strided_slice %305 {offsets = [0, 0], sizes = [8, 384], strides = [1, 1]} : vector<8x512xf32> to vector<8x384xf32>
    %307 = arith.negf %306 : vector<8x384xf32>
    %308 = math.exp %307 : vector<8x384xf32>
    %cst_76 = arith.constant 1.000000e+00 : f32
    %309 = vector.broadcast %cst_76 : f32 to vector<8x384xf32>
    %310 = arith.addf %309, %308 : vector<8x384xf32>
    %311 = arith.divf %309, %310 : vector<8x384xf32>
    %312 = vector.extract_strided_slice %305 {offsets = [0, 384], sizes = [8, 96], strides = [1, 1]} : vector<8x512xf32> to vector<8x96xf32>
    %313 = math.tanh %312 : vector<8x96xf32>
    %314 = vector.extract_strided_slice %311 {offsets = [0, 128], sizes = [8, 96], strides = [1, 1]} : vector<8x384xf32> to vector<8x96xf32>
    %315 = arith.mulf %314, %299 : vector<8x96xf32>
    %316 = vector.extract_strided_slice %311 {offsets = [0, 0], sizes = [8, 96], strides = [1, 1]} : vector<8x384xf32> to vector<8x96xf32>
    %317 = arith.mulf %316, %313 : vector<8x96xf32>
    %318 = arith.addf %315, %317 : vector<8x96xf32>
    %319 = vector.extract_strided_slice %311 {offsets = [0, 256], sizes = [8, 96], strides = [1, 1]} : vector<8x384xf32> to vector<8x96xf32>
    %320 = math.tanh %318 : vector<8x96xf32>
    %321 = arith.mulf %319, %320 : vector<8x96xf32>
    %322 = vector.extract_strided_slice %280 {offsets = [16, 0], sizes = [8, 512], strides = [1, 1]} : vector<64x512xf32> to vector<8x512xf32>
    %cst_77 = arith.constant dense<0.000000e+00> : vector<8x512xf32>
    %323 = tpu.matmul %321, %281, %cst_77 {dimension_numbers = #tpu.dot_dimension_numbers<[1], [0], [0], [1], [0, 0, 1, 1], [], []>} : vector<8x96xf32>, vector<96x512xf32>, vector<8x512xf32> -> vector<8x512xf32>
    %324 = arith.addf %322, %323 : vector<8x512xf32>
    %325 = vector.extract_strided_slice %324 {offsets = [0, 0], sizes = [8, 384], strides = [1, 1]} : vector<8x512xf32> to vector<8x384xf32>
    %326 = arith.negf %325 : vector<8x384xf32>
    %327 = math.exp %326 : vector<8x384xf32>
    %cst_78 = arith.constant 1.000000e+00 : f32
    %328 = vector.broadcast %cst_78 : f32 to vector<8x384xf32>
    %329 = arith.addf %328, %327 : vector<8x384xf32>
    %330 = arith.divf %328, %329 : vector<8x384xf32>
    %331 = vector.extract_strided_slice %324 {offsets = [0, 384], sizes = [8, 96], strides = [1, 1]} : vector<8x512xf32> to vector<8x96xf32>
    %332 = math.tanh %331 : vector<8x96xf32>
    %333 = vector.extract_strided_slice %330 {offsets = [0, 128], sizes = [8, 96], strides = [1, 1]} : vector<8x384xf32> to vector<8x96xf32>
    %334 = arith.mulf %333, %318 : vector<8x96xf32>
    %335 = vector.extract_strided_slice %330 {offsets = [0, 0], sizes = [8, 96], strides = [1, 1]} : vector<8x384xf32> to vector<8x96xf32>
    %336 = arith.mulf %335, %332 : vector<8x96xf32>
    %337 = arith.addf %334, %336 : vector<8x96xf32>
    %338 = vector.extract_strided_slice %330 {offsets = [0, 256], sizes = [8, 96], strides = [1, 1]} : vector<8x384xf32> to vector<8x96xf32>
    %339 = math.tanh %337 : vector<8x96xf32>
    %340 = arith.mulf %338, %339 : vector<8x96xf32>
    %341 = vector.extract_strided_slice %280 {offsets = [24, 0], sizes = [8, 512], strides = [1, 1]} : vector<64x512xf32> to vector<8x512xf32>
    %cst_79 = arith.constant dense<0.000000e+00> : vector<8x512xf32>
    %342 = tpu.matmul %340, %281, %cst_79 {dimension_numbers = #tpu.dot_dimension_numbers<[1], [0], [0], [1], [0, 0, 1, 1], [], []>} : vector<8x96xf32>, vector<96x512xf32>, vector<8x512xf32> -> vector<8x512xf32>
    %343 = arith.addf %341, %342 : vector<8x512xf32>
    %344 = vector.extract_strided_slice %343 {offsets = [0, 0], sizes = [8, 384], strides = [1, 1]} : vector<8x512xf32> to vector<8x384xf32>
    %345 = arith.negf %344 : vector<8x384xf32>
    %346 = math.exp %345 : vector<8x384xf32>
    %cst_80 = arith.constant 1.000000e+00 : f32
    %347 = vector.broadcast %cst_80 : f32 to vector<8x384xf32>
    %348 = arith.addf %347, %346 : vector<8x384xf32>
    %349 = arith.divf %347, %348 : vector<8x384xf32>
    %350 = vector.extract_strided_slice %343 {offsets = [0, 384], sizes = [8, 96], strides = [1, 1]} : vector<8x512xf32> to vector<8x96xf32>
    %351 = math.tanh %350 : vector<8x96xf32>
    %352 = vector.extract_strided_slice %349 {offsets = [0, 128], sizes = [8, 96], strides = [1, 1]} : vector<8x384xf32> to vector<8x96xf32>
    %353 = arith.mulf %352, %337 : vector<8x96xf32>
    %354 = vector.extract_strided_slice %349 {offsets = [0, 0], sizes = [8, 96], strides = [1, 1]} : vector<8x384xf32> to vector<8x96xf32>
    %355 = arith.mulf %354, %351 : vector<8x96xf32>
    %356 = arith.addf %353, %355 : vector<8x96xf32>
    %357 = vector.extract_strided_slice %349 {offsets = [0, 256], sizes = [8, 96], strides = [1, 1]} : vector<8x384xf32> to vector<8x96xf32>
    %358 = math.tanh %356 : vector<8x96xf32>
    %359 = arith.mulf %357, %358 : vector<8x96xf32>
    %360 = vector.extract_strided_slice %280 {offsets = [32, 0], sizes = [8, 512], strides = [1, 1]} : vector<64x512xf32> to vector<8x512xf32>
    %cst_81 = arith.constant dense<0.000000e+00> : vector<8x512xf32>
    %361 = tpu.matmul %359, %281, %cst_81 {dimension_numbers = #tpu.dot_dimension_numbers<[1], [0], [0], [1], [0, 0, 1, 1], [], []>} : vector<8x96xf32>, vector<96x512xf32>, vector<8x512xf32> -> vector<8x512xf32>
    %362 = arith.addf %360, %361 : vector<8x512xf32>
    %363 = vector.extract_strided_slice %362 {offsets = [0, 0], sizes = [8, 384], strides = [1, 1]} : vector<8x512xf32> to vector<8x384xf32>
    %364 = arith.negf %363 : vector<8x384xf32>
    %365 = math.exp %364 : vector<8x384xf32>
    %cst_82 = arith.constant 1.000000e+00 : f32
    %366 = vector.broadcast %cst_82 : f32 to vector<8x384xf32>
    %367 = arith.addf %366, %365 : vector<8x384xf32>
    %368 = arith.divf %366, %367 : vector<8x384xf32>
    %369 = vector.extract_strided_slice %362 {offsets = [0, 384], sizes = [8, 96], strides = [1, 1]} : vector<8x512xf32> to vector<8x96xf32>
    %370 = math.tanh %369 : vector<8x96xf32>
    %371 = vector.extract_strided_slice %368 {offsets = [0, 128], sizes = [8, 96], strides = [1, 1]} : vector<8x384xf32> to vector<8x96xf32>
    %372 = arith.mulf %371, %356 : vector<8x96xf32>
    %373 = vector.extract_strided_slice %368 {offsets = [0, 0], sizes = [8, 96], strides = [1, 1]} : vector<8x384xf32> to vector<8x96xf32>
    %374 = arith.mulf %373, %370 : vector<8x96xf32>
    %375 = arith.addf %372, %374 : vector<8x96xf32>
    %376 = vector.extract_strided_slice %368 {offsets = [0, 256], sizes = [8, 96], strides = [1, 1]} : vector<8x384xf32> to vector<8x96xf32>
    %377 = math.tanh %375 : vector<8x96xf32>
    %378 = arith.mulf %376, %377 : vector<8x96xf32>
    %379 = vector.extract_strided_slice %280 {offsets = [40, 0], sizes = [8, 512], strides = [1, 1]} : vector<64x512xf32> to vector<8x512xf32>
    %cst_83 = arith.constant dense<0.000000e+00> : vector<8x512xf32>
    %380 = tpu.matmul %378, %281, %cst_83 {dimension_numbers = #tpu.dot_dimension_numbers<[1], [0], [0], [1], [0, 0, 1, 1], [], []>} : vector<8x96xf32>, vector<96x512xf32>, vector<8x512xf32> -> vector<8x512xf32>
    %381 = arith.addf %379, %380 : vector<8x512xf32>
    %382 = vector.extract_strided_slice %381 {offsets = [0, 0], sizes = [8, 384], strides = [1, 1]} : vector<8x512xf32> to vector<8x384xf32>
    %383 = arith.negf %382 : vector<8x384xf32>
    %384 = math.exp %383 : vector<8x384xf32>
    %cst_84 = arith.constant 1.000000e+00 : f32
    %385 = vector.broadcast %cst_84 : f32 to vector<8x384xf32>
    %386 = arith.addf %385, %384 : vector<8x384xf32>
    %387 = arith.divf %385, %386 : vector<8x384xf32>
    %388 = vector.extract_strided_slice %381 {offsets = [0, 384], sizes = [8, 96], strides = [1, 1]} : vector<8x512xf32> to vector<8x96xf32>
    %389 = math.tanh %388 : vector<8x96xf32>
    %390 = vector.extract_strided_slice %387 {offsets = [0, 128], sizes = [8, 96], strides = [1, 1]} : vector<8x384xf32> to vector<8x96xf32>
    %391 = arith.mulf %390, %375 : vector<8x96xf32>
    %392 = vector.extract_strided_slice %387 {offsets = [0, 0], sizes = [8, 96], strides = [1, 1]} : vector<8x384xf32> to vector<8x96xf32>
    %393 = arith.mulf %392, %389 : vector<8x96xf32>
    %394 = arith.addf %391, %393 : vector<8x96xf32>
    %395 = vector.extract_strided_slice %387 {offsets = [0, 256], sizes = [8, 96], strides = [1, 1]} : vector<8x384xf32> to vector<8x96xf32>
    %396 = math.tanh %394 : vector<8x96xf32>
    %397 = arith.mulf %395, %396 : vector<8x96xf32>
    %398 = vector.extract_strided_slice %280 {offsets = [48, 0], sizes = [8, 512], strides = [1, 1]} : vector<64x512xf32> to vector<8x512xf32>
    %cst_85 = arith.constant dense<0.000000e+00> : vector<8x512xf32>
    %399 = tpu.matmul %397, %281, %cst_85 {dimension_numbers = #tpu.dot_dimension_numbers<[1], [0], [0], [1], [0, 0, 1, 1], [], []>} : vector<8x96xf32>, vector<96x512xf32>, vector<8x512xf32> -> vector<8x512xf32>
    %400 = arith.addf %398, %399 : vector<8x512xf32>
    %401 = vector.extract_strided_slice %400 {offsets = [0, 0], sizes = [8, 384], strides = [1, 1]} : vector<8x512xf32> to vector<8x384xf32>
    %402 = arith.negf %401 : vector<8x384xf32>
    %403 = math.exp %402 : vector<8x384xf32>
    %cst_86 = arith.constant 1.000000e+00 : f32
    %404 = vector.broadcast %cst_86 : f32 to vector<8x384xf32>
    %405 = arith.addf %404, %403 : vector<8x384xf32>
    %406 = arith.divf %404, %405 : vector<8x384xf32>
    %407 = vector.extract_strided_slice %400 {offsets = [0, 384], sizes = [8, 96], strides = [1, 1]} : vector<8x512xf32> to vector<8x96xf32>
    %408 = math.tanh %407 : vector<8x96xf32>
    %409 = vector.extract_strided_slice %406 {offsets = [0, 128], sizes = [8, 96], strides = [1, 1]} : vector<8x384xf32> to vector<8x96xf32>
    %410 = arith.mulf %409, %394 : vector<8x96xf32>
    %411 = vector.extract_strided_slice %406 {offsets = [0, 0], sizes = [8, 96], strides = [1, 1]} : vector<8x384xf32> to vector<8x96xf32>
    %412 = arith.mulf %411, %408 : vector<8x96xf32>
    %413 = arith.addf %410, %412 : vector<8x96xf32>
    %414 = vector.extract_strided_slice %406 {offsets = [0, 256], sizes = [8, 96], strides = [1, 1]} : vector<8x384xf32> to vector<8x96xf32>
    %415 = math.tanh %413 : vector<8x96xf32>
    %416 = arith.mulf %414, %415 : vector<8x96xf32>
    %417 = vector.extract_strided_slice %280 {offsets = [56, 0], sizes = [8, 512], strides = [1, 1]} : vector<64x512xf32> to vector<8x512xf32>
    %cst_87 = arith.constant dense<0.000000e+00> : vector<8x512xf32>
    %418 = tpu.matmul %416, %281, %cst_87 {dimension_numbers = #tpu.dot_dimension_numbers<[1], [0], [0], [1], [0, 0, 1, 1], [], []>} : vector<8x96xf32>, vector<96x512xf32>, vector<8x512xf32> -> vector<8x512xf32>
    %419 = arith.addf %417, %418 : vector<8x512xf32>
    %420 = vector.extract_strided_slice %419 {offsets = [0, 0], sizes = [8, 384], strides = [1, 1]} : vector<8x512xf32> to vector<8x384xf32>
    %421 = arith.negf %420 : vector<8x384xf32>
    %422 = math.exp %421 : vector<8x384xf32>
    %cst_88 = arith.constant 1.000000e+00 : f32
    %423 = vector.broadcast %cst_88 : f32 to vector<8x384xf32>
    %424 = arith.addf %423, %422 : vector<8x384xf32>
    %425 = arith.divf %423, %424 : vector<8x384xf32>
    %426 = vector.extract_strided_slice %419 {offsets = [0, 384], sizes = [8, 96], strides = [1, 1]} : vector<8x512xf32> to vector<8x96xf32>
    %427 = math.tanh %426 : vector<8x96xf32>
    %428 = vector.extract_strided_slice %425 {offsets = [0, 128], sizes = [8, 96], strides = [1, 1]} : vector<8x384xf32> to vector<8x96xf32>
    %429 = arith.mulf %428, %413 : vector<8x96xf32>
    %430 = vector.extract_strided_slice %425 {offsets = [0, 0], sizes = [8, 96], strides = [1, 1]} : vector<8x384xf32> to vector<8x96xf32>
    %431 = arith.mulf %430, %427 : vector<8x96xf32>
    %432 = arith.addf %429, %431 : vector<8x96xf32>
    %433 = vector.extract_strided_slice %425 {offsets = [0, 256], sizes = [8, 96], strides = [1, 1]} : vector<8x384xf32> to vector<8x96xf32>
    %434 = math.tanh %432 : vector<8x96xf32>
    %435 = arith.mulf %433, %434 : vector<8x96xf32>
    %c0_89 = arith.constant 0 : index
    %c0_90 = arith.constant 0 : index
    %436 = vector.load %arg12[%c0_89, %c0_90] : memref<96x64xf32, #tpu.memory_space<vmem>>, vector<96x64xf32>
    %cst_91 = arith.constant dense<0.000000e+00> : vector<8x64xf32>
    %437 = tpu.matmul %435, %436, %cst_91 {dimension_numbers = #tpu.dot_dimension_numbers<[1], [0], [0], [1], [0, 0, 1, 1], [], []>} : vector<8x96xf32>, vector<96x64xf32>, vector<8x64xf32> -> vector<8x64xf32>
    %c0_92 = arith.constant 0 : index
    %c0_93 = arith.constant 0 : index
    %438 = vector.load %arg13[%c0_92, %c0_93] : memref<1x64xf32, #tpu.memory_space<vmem>>, vector<1x64xf32>
    %439 = vector.broadcast %438 : vector<1x64xf32> to vector<8x64xf32>
    %440 = arith.addf %437, %439 : vector<8x64xf32>
    %cst_94 = arith.constant 0.000000e+00 : f32
    %441 = vector.broadcast %cst_94 : f32 to vector<8x64xf32>
    %442 = arith.maximumf %440, %441 : vector<8x64xf32>
    %c0_95 = arith.constant 0 : index
    %c0_96 = arith.constant 0 : index
    %443 = vector.load %arg14[%c0_95, %c0_96] : memref<64x32xf32, #tpu.memory_space<vmem>>, vector<64x32xf32>
    %cst_97 = arith.constant dense<0.000000e+00> : vector<8x32xf32>
    %444 = tpu.matmul %442, %443, %cst_97 {dimension_numbers = #tpu.dot_dimension_numbers<[1], [0], [0], [1], [0, 0, 1, 1], [], []>} : vector<8x64xf32>, vector<64x32xf32>, vector<8x32xf32> -> vector<8x32xf32>
    %c0_98 = arith.constant 0 : index
    %c0_99 = arith.constant 0 : index
    %445 = vector.load %arg15[%c0_98, %c0_99] : memref<1x32xf32, #tpu.memory_space<vmem>>, vector<1x32xf32>
    %446 = vector.broadcast %445 : vector<1x32xf32> to vector<8x32xf32>
    %447 = arith.addf %444, %446 : vector<8x32xf32>
    %cst_100 = arith.constant 0.000000e+00 : f32
    %448 = vector.broadcast %cst_100 : f32 to vector<8x32xf32>
    %449 = arith.maximumf %447, %448 : vector<8x32xf32>
    %c0_101 = arith.constant 0 : index
    %c0_102 = arith.constant 0 : index
    %450 = vector.load %arg16[%c0_101, %c0_102] : memref<32x128xf32, #tpu.memory_space<vmem>>, vector<32x128xf32>
    %cst_103 = arith.constant dense<0.000000e+00> : vector<8x128xf32>
    %451 = tpu.matmul %449, %450, %cst_103 {dimension_numbers = #tpu.dot_dimension_numbers<[1], [0], [0], [1], [0, 0, 1, 1], [], []>} : vector<8x32xf32>, vector<32x128xf32>, vector<8x128xf32> -> vector<8x128xf32>
    %c0_104 = arith.constant 0 : index
    %c0_105 = arith.constant 0 : index
    %452 = vector.load %arg17[%c0_104, %c0_105] : memref<1x128xf32, #tpu.memory_space<vmem>>, vector<1x128xf32>
    %453 = vector.broadcast %452 : vector<1x128xf32> to vector<8x128xf32>
    %454 = arith.addf %451, %453 : vector<8x128xf32>
    %c0_106 = arith.constant 0 : index
    %c0_107 = arith.constant 0 : index
    %455 = vector.load %arg18[%c0_106, %c0_107] : memref<8x128xf32, #tpu.memory_space<vmem>>, vector<8x128xf32>
    tpu.vector_store %arg18[%c0_106, %c0_107], %454 {strides = array<i32>} : memref<8x128xf32, #tpu.memory_space<vmem>>, vector<8x128xf32>,
    return
  }
}

</mosaic_0001>

<llo_original>
// kernel: forward.1
$region0: #{forward.1}
  #allocation0 [shape = 'u32[]', space=smem, size = 0x4, offset = 0x4, fixed_abs, tag = 'smem constant byte address 0x4 - core index']
  #allocation1 [shape = 'u32[144,128]{1,0:T(1,128)}', space=vmem, size = 0x12000, scoped, tag = 'internal scratch']
  %s0 = inlined_call_operand.vmem [shape: s32[64,1], index: 0, kind: input, shape index: {}]
  %s1 = inlined_call_operand.hbm [shape: bf16[64,384], index: 1, kind: input, shape index: {}]
  %s2 = inlined_call_operand.vmem [shape: f32[1,384], index: 2, kind: input, shape index: {}]
  %s3 = inlined_call_operand.vmem [shape: f32[1,384], index: 3, kind: input, shape index: {}]
  %s4 = inlined_call_operand.hbm [shape: bf16[384,512], index: 4, kind: input, shape index: {}]
  %s5 = inlined_call_operand.hbm [shape: bf16[384,512], index: 5, kind: input, shape index: {}]
  %s6 = inlined_call_operand.hbm [shape: f32[64,512], index: 6, kind: input, shape index: {}]
  %s7 = inlined_call_operand.vmem [shape: f32[1,512], index: 7, kind: input, shape index: {}]
  %s8 = inlined_call_operand.hbm [shape: bf16[64,512], index: 8, kind: input, shape index: {}]
  %s9 = inlined_call_operand.hbm [shape: bf16[64,512], index: 9, kind: input, shape index: {}]
  %s10 = inlined_call_operand.vmem [shape: f32[96,512], index: 10, kind: input, shape index: {}]
  %s11 = inlined_call_operand.vmem [shape: f32[1,512], index: 11, kind: input, shape index: {}]
  %s12 = inlined_call_operand.vmem [shape: f32[96,64], index: 12, kind: input, shape index: {}]
  %s13 = inlined_call_operand.vmem [shape: f32[1,64], index: 13, kind: input, shape index: {}]
  %s14 = inlined_call_operand.vmem [shape: f32[64,32], index: 14, kind: input, shape index: {}]
  %s15 = inlined_call_operand.hbm [shape: f32[1,32], index: 15, kind: input, shape index: {}]
  %s16 = inlined_call_operand.hbm [shape: f32[32,128], index: 16, kind: input, shape index: {}]
  %s17 = inlined_call_operand.hbm [shape: f32[1,128], index: 17, kind: input, shape index: {}]
  %s18 = inlined_call_operand.vmem [shape: f32[8,128], index: 18, kind: output, shape index: {}]
  %s19 = sld [smem:[#allocation0]]
  $region118: #{forward.1} parent=0
    _
  %s21 = ssub.s32 1, %s19
  %s22 = scalar_select 0, %s21, %s19
  $region1: #{forward.1} parent=0
    #allocation2 [shape = 'u8[49152]{0}', space=vmem, size = 0xc000, scoped, tag = 'input window, operand 1, single buffered']
    #allocation3 [shape = 's32[1]{0}', space=sflag, size = 0x4, scoped, tag = 'scoped memory for forward.1']
    #allocation4 [shape = 'u8[393216]{0}', space=vmem, size = 0x60000, scoped, tag = 'input window, operand 4, single buffered']
    #allocation5 [shape = 's32[1]{0}', space=sflag, size = 0x4, scoped, tag = 'scoped memory for forward.1']
    #allocation6 [shape = 'u8[393216]{0}', space=vmem, size = 0x60000, scoped, tag = 'input window, operand 5, single buffered']
    #allocation7 [shape = 'u8[131072]{0}', space=vmem, size = 0x20000, scoped, tag = 'input window, operand 6, single buffered']
    #allocation8 [shape = 's32[1]{0}', space=sflag, size = 0x4, scoped, tag = 'scoped memory for forward.1']
    #allocation9 [shape = 'u8[65536]{0}', space=vmem, size = 0x10000, scoped, tag = 'input window, operand 8, single buffered']
    #allocation10 [shape = 'u8[65536]{0}', space=vmem, size = 0x10000, scoped, tag = 'input window, operand 9, single buffered']
    #allocation11 [shape = 's32[1]{0}', space=sflag, size = 0x4, scoped, tag = 'scoped memory for forward.1']
    #allocation12 [shape = 'u8[512]{0}', space=vmem, size = 0x400, scoped, tag = 'input window, operand 15, single buffered']
    #allocation13 [shape = 'u8[16384]{0}', space=vmem, size = 0x4000, scoped, tag = 'input window, operand 16, single buffered']
    #allocation14 [shape = 's32[1]{0}', space=sflag, size = 0x4, scoped, tag = 'scoped memory for forward.1']
    #allocation15 [shape = 'u8[512]{0}', space=vmem, size = 0x400, scoped, tag = 'input window, operand 17, single buffered']
    %23 = vsyncpa [#allocation3], 0
    %24 = vsyncpa [#allocation5], 0
    %25 = vsyncpa [#allocation8], 0
    %26 = vsyncpa [#allocation11], 0
    %27 = vsyncpa [#allocation14], 0
    // Predicated region
    $region2: #{forward.1} parent=1 // pred_check
      _
    $region3: #{forward.1} parent=1 // pred_check_branch
      %29 = sbr.rel (0) target = $region5
    $region4: #{forward.1} parent=1 // pred_region
      _
    $region5: #{forward.1} parent=1 // pred_fallthru
      _
    // Predicated region
    $region6: #{forward.1} parent=1 // pred_check
      _
    $region7: #{forward.1} parent=1 // pred_check_branch
      %31 = sbr.rel (0) target = $region9
    $region8: #{forward.1} parent=1 // pred_region
      %s33 = ssub.s32 1536, 1536
      %34 = vsyncadd [#allocation3], %s33
      %s35 = sshll.u32 [#allocation2], 4
      %s36 = int_to_ptr.vmem [resolvable:$true] %s35
      %41 = dma.hbm_to_vmem [thread:$0]  %s1, 1536, %s36, [#allocation3], 192, 192, 12
    $region9: #{forward.1} parent=1 // pred_fallthru
      _
    // Predicated region
    $region10: #{forward.1} parent=1 // pred_check
      _
    $region11: #{forward.1} parent=1 // pred_check_branch
      %43 = sbr.rel (0) target = $region13
    $region12: #{forward.1} parent=1 // pred_region
      _
    $region13: #{forward.1} parent=1 // pred_fallthru
      _
    // Predicated region
    $region14: #{forward.1} parent=1 // pred_check
      _
    $region15: #{forward.1} parent=1 // pred_check_branch
      %45 = sbr.rel (0) target = $region17
    $region16: #{forward.1} parent=1 // pred_region
      _
    $region17: #{forward.1} parent=1 // pred_fallthru
      _
    // Predicated region
    $region18: #{forward.1} parent=1 // pred_check
      _
    $region19: #{forward.1} parent=1 // pred_check_branch
      %47 = sbr.rel (0) target = $region21
    $region20: #{forward.1} parent=1 // pred_region
      %s49 = ssub.s32 12288, 12288
      %50 = vsyncadd [#allocation5], %s49
      %s51 = sshll.u32 [#allocation4], 4
      %s52 = int_to_ptr.vmem [resolvable:$true] %s51
      %57 = dma.hbm_to_vmem [thread:$0]  %s4, 12288, %s52, [#allocation5], 256, 256, 16
    $region21: #{forward.1} parent=1 // pred_fallthru
      _
    // Predicated region
    $region22: #{forward.1} parent=1 // pred_check
      _
    $region23: #{forward.1} parent=1 // pred_check_branch
      %59 = sbr.rel (0) target = $region25
    $region24: #{forward.1} parent=1 // pred_region
      %s61 = ssub.s32 12288, 12288
      %62 = vsyncadd [#allocation5], %s61
      %s63 = sshll.u32 [#allocation6], 4
      %s64 = int_to_ptr.vmem [resolvable:$true] %s63
      %69 = dma.hbm_to_vmem [thread:$0]  %s5, 12288, %s64, [#allocation5], 256, 256, 16
    $region25: #{forward.1} parent=1 // pred_fallthru
      _
    // Predicated region
    $region26: #{forward.1} parent=1 // pred_check
      _
    $region27: #{forward.1} parent=1 // pred_check_branch
      %71 = sbr.rel (0) target = $region29
    $region28: #{forward.1} parent=1 // pred_region
      %s73 = ssub.s32 4096, 4096
      %74 = vsyncadd [#allocation8], %s73
      %s75 = sshll.u32 [#allocation7], 4
      %s76 = int_to_ptr.vmem [resolvable:$true] %s75
      %81 = dma.hbm_to_vmem [thread:$0]  %s6, 4096, %s76, [#allocation8], 512, 512, 32
    $region29: #{forward.1} parent=1 // pred_fallthru
      _
    // Predicated region
    $region30: #{forward.1} parent=1 // pred_check
      _
    $region31: #{forward.1} parent=1 // pred_check_branch
      %83 = sbr.rel (0) target = $region33
    $region32: #{forward.1} parent=1 // pred_region
      _
    $region33: #{forward.1} parent=1 // pred_fallthru
      _
    // Predicated region
    $region34: #{forward.1} parent=1 // pred_check
      _
    $region35: #{forward.1} parent=1 // pred_check_branch
      %85 = sbr.rel (0) target = $region37
    $region36: #{forward.1} parent=1 // pred_region
      %s87 = ssub.s32 2048, 2048
      %88 = vsyncadd [#allocation8], %s87
      %s89 = sshll.u32 [#allocation9], 4
      %s90 = int_to_ptr.vmem [resolvable:$true] %s89
      %95 = dma.hbm_to_vmem [thread:$0]  %s8, 2048, %s90, [#allocation8], 256, 256, 16
    $region37: #{forward.1} parent=1 // pred_fallthru
      _
    // Predicated region
    $region38: #{forward.1} parent=1 // pred_check
      _
    $region39: #{forward.1} parent=1 // pred_check_branch
      %97 = sbr.rel (0) target = $region41
    $region40: #{forward.1} parent=1 // pred_region
      %s99 = ssub.s32 2048, 2048
      %100 = vsyncadd [#allocation11], %s99
      %s101 = sshll.u32 [#allocation10], 4
      %s102 = int_to_ptr.vmem [resolvable:$true] %s101
      %107 = dma.hbm_to_vmem [thread:$0]  %s9, 2048, %s102, [#allocation11], 256, 256, 16
    $region41: #{forward.1} parent=1 // pred_fallthru
      _
    // Predicated region
    $region42: #{forward.1} parent=1 // pred_check
      _
    $region43: #{forward.1} parent=1 // pred_check_branch
      %109 = sbr.rel (0) target = $region45
    $region44: #{forward.1} parent=1 // pred_region
      _
    $region45: #{forward.1} parent=1 // pred_fallthru
      _
    // Predicated region
    $region46: #{forward.1} parent=1 // pred_check
      _
    $region47: #{forward.1} parent=1 // pred_check_branch
      %111 = sbr.rel (0) target = $region49
    $region48: #{forward.1} parent=1 // pred_region
      _
    $region49: #{forward.1} parent=1 // pred_fallthru
      _
    // Predicated region
    $region50: #{forward.1} parent=1 // pred_check
      _
    $region51: #{forward.1} parent=1 // pred_check_branch
      %113 = sbr.rel (0) target = $region53
    $region52: #{forward.1} parent=1 // pred_region
      _
    $region53: #{forward.1} parent=1 // pred_fallthru
      _
    // Predicated region
    $region54: #{forward.1} parent=1 // pred_check
      _
    $region55: #{forward.1} parent=1 // pred_check_branch
      %115 = sbr.rel (0) target = $region57
    $region56: #{forward.1} parent=1 // pred_region
      _
    $region57: #{forward.1} parent=1 // pred_fallthru
      _
    // Predicated region
    $region58: #{forward.1} parent=1 // pred_check
      _
    $region59: #{forward.1} parent=1 // pred_check_branch
      %117 = sbr.rel (0) target = $region61
    $region60: #{forward.1} parent=1 // pred_region
      _
    $region61: #{forward.1} parent=1 // pred_fallthru
      _
    // Predicated region
    $region62: #{forward.1} parent=1 // pred_check
      _
    $region63: #{forward.1} parent=1 // pred_check_branch
      %119 = sbr.rel (0) target = $region65
    $region64: #{forward.1} parent=1 // pred_region
      %s121 = ssub.s32 16, 16
      %122 = vsyncadd [#allocation11], %s121
      %s124 = sshll.u32 [#allocation12], 4
      %s125 = int_to_ptr.vmem [resolvable:$true] %s124
      %127 = dma.hbm_to_vmem [thread:$0]  %s15, 16, %s125, [#allocation11]
    $region65: #{forward.1} parent=1 // pred_fallthru
      _
    // Predicated region
    $region66: #{forward.1} parent=1 // pred_check
      _
    $region67: #{forward.1} parent=1 // pred_check_branch
      %129 = sbr.rel (0) target = $region69
    $region68: #{forward.1} parent=1 // pred_region
      %s131 = ssub.s32 512, 512
      %132 = vsyncadd [#allocation14], %s131
      %s133 = sshll.u32 [#allocation13], 4
      %s134 = int_to_ptr.vmem [resolvable:$true] %s133
      %139 = dma.hbm_to_vmem [thread:$0]  %s16, 512, %s134, [#allocation14], 128, 128, 8
    $region69: #{forward.1} parent=1 // pred_fallthru
      _
    // Predicated region
    $region70: #{forward.1} parent=1 // pred_check
      _
    $region71: #{forward.1} parent=1 // pred_check_branch
      %141 = sbr.rel (0) target = $region73
    $region72: #{forward.1} parent=1 // pred_region
      %s143 = ssub.s32 16, 16
      %144 = vsyncadd [#allocation14], %s143
      %s146 = sshll.u32 [#allocation15], 4
      %s147 = int_to_ptr.vmem [resolvable:$true] %s146
      %149 = dma.hbm_to_vmem [thread:$0]  %s17, 16, %s147, [#allocation14]
    $region73: #{forward.1} parent=1 // pred_fallthru
      _
    // Predicated region
    $region74: #{forward.1} parent=1 // pred_check
      _
    $region75: #{forward.1} parent=1 // pred_check_branch
      %151 = sbr.rel (0) target = $region77
    $region76: #{forward.1} parent=1 // pred_region
      %152 = dma.done [#allocation3], 1536
    $region77: #{forward.1} parent=1 // pred_fallthru
      _
    // Predicated region
    $region78: #{forward.1} parent=1 // pred_check
      _
    $region79: #{forward.1} parent=1 // pred_check_branch
      %154 = sbr.rel (0) target = $region81
    $region80: #{forward.1} parent=1 // pred_region
      %155 = dma.done [#allocation5], 12288
    $region81: #{forward.1} parent=1 // pred_fallthru
      _
    // Predicated region
    $region82: #{forward.1} parent=1 // pred_check
      _
    $region83: #{forward.1} parent=1 // pred_check_branch
      %157 = sbr.rel (0) target = $region85
    $region84: #{forward.1} parent=1 // pred_region
      %158 = dma.done [#allocation5], 12288
    $region85: #{forward.1} parent=1 // pred_fallthru
      _
    // Predicated region
    $region86: #{forward.1} parent=1 // pred_check
      _
    $region87: #{forward.1} parent=1 // pred_check_branch
      %160 = sbr.rel (0) target = $region89
    $region88: #{forward.1} parent=1 // pred_region
      %161 = dma.done [#allocation8], 4096
    $region89: #{forward.1} parent=1 // pred_fallthru
      _
    // Predicated region
    $region90: #{forward.1} parent=1 // pred_check
      _
    $region91: #{forward.1} parent=1 // pred_check_branch
      %163 = sbr.rel (0) target = $region93
    $region92: #{forward.1} parent=1 // pred_region
      %164 = dma.done [#allocation8], 2048
    $region93: #{forward.1} parent=1 // pred_fallthru
      _
    // Predicated region
    $region94: #{forward.1} parent=1 // pred_check
      _
    $region95: #{forward.1} parent=1 // pred_check_branch
      %166 = sbr.rel (0) target = $region97
    $region96: #{forward.1} parent=1 // pred_region
      %167 = dma.done [#allocation11], 2048
    $region97: #{forward.1} parent=1 // pred_fallthru
      _
    // Predicated region
    $region98: #{forward.1} parent=1 // pred_check
      _
    $region99: #{forward.1} parent=1 // pred_check_branch
      %169 = sbr.rel (0) target = $region101
    $region100: #{forward.1} parent=1 // pred_region
      %170 = dma.done [#allocation11], 16
    $region101: #{forward.1} parent=1 // pred_fallthru
      _
    // Predicated region
    $region102: #{forward.1} parent=1 // pred_check
      _
    $region103: #{forward.1} parent=1 // pred_check_branch
      %172 = sbr.rel (0) target = $region105
    $region104: #{forward.1} parent=1 // pred_region
      %173 = dma.done [#allocation14], 512
    $region105: #{forward.1} parent=1 // pred_fallthru
      _
    // Predicated region
    $region106: #{forward.1} parent=1 // pred_check
      _
    $region107: #{forward.1} parent=1 // pred_check_branch
      %175 = sbr.rel (0) target = $region109
    $region108: #{forward.1} parent=1 // pred_region
      %176 = dma.done [#allocation14], 16
    $region109: #{forward.1} parent=1 // pred_fallthru
      _
    %v178 = vld [vmem:[%s0] sm:$0xff]
    %v179 = vld [vmem:[%s0 + $0x8] sm:$0xff]
    %v180 = vld [vmem:[%s0 + $0x10] sm:$0xff]
    %v181 = vld [vmem:[%s0 + $0x18] sm:$0xff]
    %v182 = vld [vmem:[%s0 + $0x20] sm:$0xff]
    %v183 = vld [vmem:[%s0 + $0x28] sm:$0xff]
    %v184 = vld [vmem:[%s0 + $0x30] sm:$0xff]
    %v185 = vld [vmem:[%s0 + $0x38] sm:$0xff]
    %v186 = vlaneseq
    %v187 = vand.u32 %v186, 127
    %188 = vset.pattern.permute.xlu0 0
    %189 = vperm.xlu0 %188, %v178
    %v190 = vpop.permute.xlu0 %189
    %191 = vset.pattern.permute.xlu0 0
    %192 = vperm.xlu0 %191, %v179
    %v193 = vpop.permute.xlu0 %192
    %194 = vset.pattern.permute.xlu0 0
    %195 = vperm.xlu0 %194, %v180
    %v196 = vpop.permute.xlu0 %195
    %197 = vset.pattern.permute.xlu0 0
    %198 = vperm.xlu0 %197, %v181
    %v199 = vpop.permute.xlu0 %198
    %200 = vset.pattern.permute.xlu0 0
    %201 = vperm.xlu0 %200, %v182
    %v202 = vpop.permute.xlu0 %201
    %203 = vset.pattern.permute.xlu0 0
    %204 = vperm.xlu0 %203, %v183
    %v205 = vpop.permute.xlu0 %204
    %206 = vset.pattern.permute.xlu0 0
    %207 = vperm.xlu0 %206, %v184
    %v208 = vpop.permute.xlu0 %207
    %209 = vset.pattern.permute.xlu0 0
    %210 = vperm.xlu0 %209, %v185
    %v211 = vpop.permute.xlu0 %210
    %vm212 = vcmp.eq.s32.totalorder %v190, %v187
    %vm213 = vcmp.eq.s32.totalorder %v193, %v187
    %vm214 = vcmp.eq.s32.totalorder %v196, %v187
    %vm215 = vcmp.eq.s32.totalorder %v199, %v187
    %vm216 = vcmp.eq.s32.totalorder %v202, %v187
    %vm217 = vcmp.eq.s32.totalorder %v205, %v187
    %vm218 = vcmp.eq.s32.totalorder %v208, %v187
    %vm219 = vcmp.eq.s32.totalorder %v211, %v187
    %v220 = vsel %vm212, 1.0, 0.0
    %v221 = vsel %vm213, 1.0, 0.0
    %v222 = vsel %vm214, 1.0, 0.0
    %v223 = vsel %vm215, 1.0, 0.0
    %v224 = vsel %vm216, 1.0, 0.0
    %v225 = vsel %vm217, 1.0, 0.0
    %v226 = vsel %vm218, 1.0, 0.0
    %v227 = vsel %vm219, 1.0, 0.0
    %v228 = vpack.c.bf16 %v221, %v220
    %v229 = vpack.c.bf16 %v223, %v222
    %v230 = vpack.c.bf16 %v225, %v224
    %v231 = vpack.c.bf16 %v227, %v226
    %v232 = vld [vmem:[#allocation2] sm:$0xff]
    %v233 = vld [vmem:[#allocation2 + $0x8] sm:$0xf]
    %v234 = vld [vmem:[#allocation2 + $0xc] sm:$0xff]
    %v235 = vld [vmem:[#allocation2 + $0x14] sm:$0xf]
    %v236 = vld [vmem:[#allocation2 + $0x18] sm:$0xff]
    %v237 = vld [vmem:[#allocation2 + $0x20] sm:$0xf]
    %v238 = vld [vmem:[#allocation2 + $0x24] sm:$0xff]
    %v239 = vld [vmem:[#allocation2 + $0x2c] sm:$0xf]
    %v240 = vld [vmem:[#allocation2 + $0x30] sm:$0xff]
    %v241 = vld [vmem:[#allocation2 + $0x38] sm:$0xf]
    %v242 = vld [vmem:[#allocation2 + $0x3c] sm:$0xff]
    %v243 = vld [vmem:[#allocation2 + $0x44] sm:$0xf]
    %v244 = vld [vmem:[#allocation2 + $0x48] sm:$0xff]
    %v245 = vld [vmem:[#allocation2 + $0x50] sm:$0xf]
    %v246 = vld [vmem:[#allocation2 + $0x54] sm:$0xff]
    %v247 = vld [vmem:[#allocation2 + $0x5c] sm:$0xf]
    %v264 = vunpack.c.l.b16 %v232
    %v265 = vunpack.c.h.b16 %v232
    %v266 = vunpack.c.l.b16 %v233
    %v267 = vunpack.c.l.b16 %v234
    %v268 = vunpack.c.h.b16 %v234
    %v269 = vunpack.c.l.b16 %v235
    %v270 = vunpack.c.l.b16 %v236
    %v271 = vunpack.c.h.b16 %v236
    %v272 = vunpack.c.l.b16 %v237
    %v273 = vunpack.c.l.b16 %v238
    %v274 = vunpack.c.h.b16 %v238
    %v275 = vunpack.c.l.b16 %v239
    %v276 = vunpack.c.l.b16 %v240
    %v277 = vunpack.c.h.b16 %v240
    %v278 = vunpack.c.l.b16 %v241
    %v279 = vunpack.c.l.b16 %v242
    %v280 = vunpack.c.h.b16 %v242
    %v281 = vunpack.c.l.b16 %v243
    %v282 = vunpack.c.l.b16 %v244
    %v283 = vunpack.c.h.b16 %v244
    %v284 = vunpack.c.l.b16 %v245
    %v285 = vunpack.c.l.b16 %v246
    %v286 = vunpack.c.h.b16 %v246
    %v287 = vunpack.c.l.b16 %v247
    %v288 = vpack.c.b16 %v267, %v264
    %v289 = vpack.c.b16 %v268, %v265
    %v290 = vpack.c.b16 %v269, %v266
    %v291 = vpack.c.b16 %v273, %v270
    %v292 = vpack.c.b16 %v274, %v271
    %v293 = vpack.c.b16 %v275, %v272
    %v294 = vpack.c.b16 %v279, %v276
    %v295 = vpack.c.b16 %v280, %v277
    %v296 = vpack.c.b16 %v281, %v278
    %v297 = vpack.c.b16 %v285, %v282
    %v298 = vpack.c.b16 %v286, %v283
    %v299 = vpack.c.b16 %v287, %v284
    %vm312 = vcmask 523264
    %v314 = vsel %vm312, %v228, 0
    %v317 = vsel %vm312, %v229, 0
    %v320 = vsel %vm312, %v230, 0
    %v323 = vsel %vm312, %v231, 0
    %325 = vmatprep.subr.bf16.mxu0 %v289
    %326 = vmatpush1.bf16.msra.mxu0 %v288
    %327 = vmatprep.subr.bf16.mxu0 %v292
    %328 = vmatpush1.bf16.msra.mxu0 %v291
    %329 = vmatprep.subr.bf16.mxu0 %v295
    %330 = vmatpush1.bf16.msra.mxu0 %v294
    %331 = vmatprep.subr.bf16.mxu0 %v298
    %332 = vmatpush1.bf16.msra.mxu0 %v297
    %333 = vmatprep.subr.bf16.mxu0 0
    %334 = vmatpush1.bf16.msra.mxu0 0
    %335 = vmatprep.subr.bf16.mxu0 0
    %336 = vmatpush1.bf16.msra.mxu0 0
    %337 = vmatprep.subr.bf16.mxu0 0
    %338 = vmatpush1.bf16.msra.mxu0 0
    %339 = vmatprep.subr.bf16.mxu0 0
    %340 = vmatpush1.bf16.msra.mxu0 0
    %341 = vmatprep.subr.bf16.mxu0 0
    %342 = vmatpush1.bf16.msra.mxu0 0
    %343 = vmatprep.subr.bf16.mxu0 0
    %344 = vmatpush1.bf16.msra.mxu0 0
    %345 = vmatprep.subr.bf16.mxu0 0
    %346 = vmatpush1.bf16.msra.mxu0 0
    %347 = vmatprep.subr.bf16.mxu0 0
    %348 = vmatpush1.bf16.msra.mxu0 0
    %349 = vmatprep.subr.bf16.mxu0 0
    %350 = vmatpush1.bf16.msra.mxu0 0
    %351 = vmatprep.subr.bf16.mxu0 0
    %352 = vmatpush1.bf16.msra.mxu0 0
    %353 = vmatprep.subr.bf16.mxu0 0
    %354 = vmatpush1.bf16.msra.mxu0 0
    %355 = vmatprep.subr.bf16.mxu0 0
    %356 = vmatpush1.bf16.msra.mxu0 0
    %357 = vmatprep.mubr.bf16.mxu0 0
    %358 = vmatmul.mubr.bf16.gmra.mrb[0].mxu0 %v314
    %v359 = vpop.f32.mrb[0].mxu0
    %v360 = vadd.f32 0.0, %v359
    %v361 = vpop.f32.mrb[0].mxu0
    %v362 = vadd.f32 0.0, %v361
    %v363 = vpop.f32.mrb[0].mxu0
    %v364 = vadd.f32 0.0, %v363
    %v365 = vpop.f32.mrb[0].mxu0
    %v366 = vadd.f32 0.0, %v365
    %367 = vmatprep.mubr.bf16.mxu0 0
    %368 = vmatmul.mubr.bf16.gmra.mrb[0].mxu0 %v317
    %v369 = vpop.f32.mrb[0].mxu0
    %v370 = vadd.f32 0.0, %v369
    %v371 = vpop.f32.mrb[0].mxu0
    %v372 = vadd.f32 0.0, %v371
    %v373 = vpop.f32.mrb[0].mxu0
    %v374 = vadd.f32 0.0, %v373
    %v375 = vpop.f32.mrb[0].mxu0
    %v376 = vadd.f32 0.0, %v375
    %377 = vmatprep.mubr.bf16.mxu0 0
    %378 = vmatmul.mubr.bf16.gmra.mrb[0].mxu0 %v320
    %v379 = vpop.f32.mrb[0].mxu0
    %v380 = vadd.f32 0.0, %v379
    %v381 = vpop.f32.mrb[0].mxu0
    %v382 = vadd.f32 0.0, %v381
    %v383 = vpop.f32.mrb[0].mxu0
    %v384 = vadd.f32 0.0, %v383
    %v385 = vpop.f32.mrb[0].mxu0
    %v386 = vadd.f32 0.0, %v385
    %387 = vmatprep.mubr.bf16.mxu0 0
    %388 = vmatmul.mubr.bf16.gmra.mrb[0].mxu0 %v323
    %v389 = vpop.f32.mrb[0].mxu0
    %v390 = vadd.f32 0.0, %v389
    %v391 = vpop.f32.mrb[0].mxu0
    %v392 = vadd.f32 0.0, %v391
    %v393 = vpop.f32.mrb[0].mxu0
    %v394 = vadd.f32 0.0, %v393
    %v395 = vpop.f32.mrb[0].mxu0
    %v396 = vadd.f32 0.0, %v395
    %397 = vdwg.mxu0
    %398 = vmatprep.subr.bf16.mxu0 0
    %399 = vmatpush1.bf16.msra.mxu0 %v290
    %400 = vmatprep.subr.bf16.mxu0 0
    %401 = vmatpush1.bf16.msra.mxu0 %v293
    %402 = vmatprep.subr.bf16.mxu0 0
    %403 = vmatpush1.bf16.msra.mxu0 %v296
    %404 = vmatprep.subr.bf16.mxu0 0
    %405 = vmatpush1.bf16.msra.mxu0 %v299
    %406 = vmatprep.subr.bf16.mxu0 0
    %407 = vmatpush1.bf16.msra.mxu0 0
    %408 = vmatprep.subr.bf16.mxu0 0
    %409 = vmatpush1.bf16.msra.mxu0 0
    %410 = vmatprep.subr.bf16.mxu0 0
    %411 = vmatpush1.bf16.msra.mxu0 0
    %412 = vmatprep.subr.bf16.mxu0 0
    %413 = vmatpush1.bf16.msra.mxu0 0
    %414 = vmatprep.subr.bf16.mxu0 0
    %415 = vmatpush1.bf16.msra.mxu0 0
    %416 = vmatprep.subr.bf16.mxu0 0
    %417 = vmatpush1.bf16.msra.mxu0 0
    %418 = vmatprep.subr.bf16.mxu0 0
    %419 = vmatpush1.bf16.msra.mxu0 0
    %420 = vmatprep.subr.bf16.mxu0 0
    %421 = vmatpush1.bf16.msra.mxu0 0
    %422 = vmatprep.subr.bf16.mxu0 0
    %423 = vmatpush1.bf16.msra.mxu0 0
    %424 = vmatprep.subr.bf16.mxu0 0
    %425 = vmatpush1.bf16.msra.mxu0 0
    %426 = vmatprep.subr.bf16.mxu0 0
    %427 = vmatpush1.bf16.msra.mxu0 0
    %428 = vmatprep.subr.bf16.mxu0 0
    %429 = vmatpush1.bf16.msra.mxu0 0
    %430 = vmatprep.mubr.bf16.mxu0 0
    %431 = vmatmul.mubr.bf16.gmra.mrb[0].mxu0 %v314
    %v432 = vpop.f32.mrb[0].mxu0
    %v433 = vadd.f32 0.0, %v432
    %v434 = vpop.f32.mrb[0].mxu0
    %v435 = vpop.f32.mrb[0].mxu0
    %v436 = vadd.f32 0.0, %v435
    %v437 = vpop.f32.mrb[0].mxu0
    %438 = vmatprep.mubr.bf16.mxu0 0
    %439 = vmatmul.mubr.bf16.gmra.mrb[0].mxu0 %v317
    %v440 = vpop.f32.mrb[0].mxu0
    %v441 = vadd.f32 0.0, %v440
    %v442 = vpop.f32.mrb[0].mxu0
    %v443 = vpop.f32.mrb[0].mxu0
    %v444 = vadd.f32 0.0, %v443
    %v445 = vpop.f32.mrb[0].mxu0
    %446 = vmatprep.mubr.bf16.mxu0 0
    %447 = vmatmul.mubr.bf16.gmra.mrb[0].mxu0 %v320
    %v448 = vpop.f32.mrb[0].mxu0
    %v449 = vadd.f32 0.0, %v448
    %v450 = vpop.f32.mrb[0].mxu0
    %v451 = vpop.f32.mrb[0].mxu0
    %v452 = vadd.f32 0.0, %v451
    %v453 = vpop.f32.mrb[0].mxu0
    %454 = vmatprep.mubr.bf16.mxu0 0
    %455 = vmatmul.mubr.bf16.gmra.mrb[0].mxu0 %v323
    %v456 = vpop.f32.mrb[0].mxu0
    %v457 = vadd.f32 0.0, %v456
    %v458 = vpop.f32.mrb[0].mxu0
    %v459 = vpop.f32.mrb[0].mxu0
    %v460 = vadd.f32 0.0, %v459
    %v461 = vpop.f32.mrb[0].mxu0
    %462 = vdwg.mxu0
    %v463 = vlaneseq
    %v464 = vshrl.u32 %v463, 7
    %v465 = vadd.s32 %v464, 8
    %v466 = vadd.s32 %v464, 16
    %v467 = vadd.s32 %v464, 24
    %v468 = vadd.s32 %v464, 32
    %v469 = vadd.s32 %v464, 40
    %v470 = vadd.s32 %v464, 48
    %v471 = vadd.s32 %v464, 56
    %vm472 = vcmp.lt.s32.totalorder %v464, 0
    %v473 = vsub.s32 0, %v464
    %v474 = vsel %vm472, %v473, %v464
    %v475 = vshrl.u32 %v474, 3
    %v476 = vand.u32 %v474, 7
    %v477 = vsub.s32 0, %v476
    %v478 = vsel %vm472, %v477, %v476
    %vm479 = vcmp.lt.s32.totalorder %v465, 0
    %v480 = vsub.s32 0, %v465
    %v481 = vsel %vm479, %v480, %v465
    %v482 = vshrl.u32 %v481, 3
    %v483 = vand.u32 %v481, 7
    %v484 = vsub.s32 0, %v483
    %v485 = vsel %vm479, %v484, %v483
    %vm486 = vcmp.lt.s32.totalorder %v466, 0
    %v487 = vsub.s32 0, %v466
    %v488 = vsel %vm486, %v487, %v466
    %v489 = vshrl.u32 %v488, 3
    %v490 = vand.u32 %v488, 7
    %v491 = vsub.s32 0, %v490
    %v492 = vsel %vm486, %v491, %v490
    %vm493 = vcmp.lt.s32.totalorder %v467, 0
    %v494 = vsub.s32 0, %v467
    %v495 = vsel %vm493, %v494, %v467
    %v496 = vshrl.u32 %v495, 3
    %v497 = vand.u32 %v495, 7
    %v498 = vsub.s32 0, %v497
    %v499 = vsel %vm493, %v498, %v497
    %vm500 = vcmp.lt.s32.totalorder %v468, 0
    %v501 = vsub.s32 0, %v468
    %v502 = vsel %vm500, %v501, %v468
    %v503 = vshrl.u32 %v502, 3
    %v504 = vand.u32 %v502, 7
    %v505 = vsub.s32 0, %v504
    %v506 = vsel %vm500, %v505, %v504
    %vm507 = vcmp.lt.s32.totalorder %v469, 0
    %v508 = vsub.s32 0, %v469
    %v509 = vsel %vm507, %v508, %v469
    %v510 = vshrl.u32 %v509, 3
    %v511 = vand.u32 %v509, 7
    %v512 = vsub.s32 0, %v511
    %v513 = vsel %vm507, %v512, %v511
    %vm514 = vcmp.lt.s32.totalorder %v470, 0
    %v515 = vsub.s32 0, %v470
    %v516 = vsel %vm514, %v515, %v470
    %v517 = vshrl.u32 %v516, 3
    %v518 = vand.u32 %v516, 7
    %v519 = vsub.s32 0, %v518
    %v520 = vsel %vm514, %v519, %v518
    %vm521 = vcmp.lt.s32.totalorder %v471, 0
    %v522 = vsub.s32 0, %v471
    %v523 = vsel %vm521, %v522, %v471
    %v524 = vshrl.u32 %v523, 3
    %v525 = vand.u32 %v523, 7
    %v526 = vsub.s32 0, %v525
    %v527 = vsel %vm521, %v526, %v525
    %vm528 = vcmp.ne.s32.totalorder %v478, 0
    %vm529 = vcmp.ne.s32.totalorder %v485, 0
    %vm530 = vcmp.ne.s32.totalorder %v492, 0
    %vm531 = vcmp.ne.s32.totalorder %v499, 0
    %vm532 = vcmp.ne.s32.totalorder %v506, 0
    %vm533 = vcmp.ne.s32.totalorder %v513, 0
    %vm534 = vcmp.ne.s32.totalorder %v520, 0
    %vm535 = vcmp.ne.s32.totalorder %v527, 0
    %vm536 = vcmp.lt.s32.totalorder %v478, 0
    %vm537 = vcmp.lt.s32.totalorder %v485, 0
    %vm538 = vcmp.lt.s32.totalorder %v492, 0
    %vm539 = vcmp.lt.s32.totalorder %v499, 0
    %vm540 = vcmp.lt.s32.totalorder %v506, 0
    %vm541 = vcmp.lt.s32.totalorder %v513, 0
    %vm542 = vcmp.lt.s32.totalorder %v520, 0
    %vm543 = vcmp.lt.s32.totalorder %v527, 0
    %vm544 = vmand %vm536, %vm528
    %vm545 = vmand %vm537, %vm529
    %vm546 = vmand %vm538, %vm530
    %vm547 = vmand %vm539, %vm531
    %vm548 = vmand %vm540, %vm532
    %vm549 = vmand %vm541, %vm533
    %vm550 = vmand %vm542, %vm534
    %vm551 = vmand %vm543, %vm535
    %v552 = vadd.s32 %v478, 8
    %v553 = vadd.s32 %v485, 8
    %v554 = vadd.s32 %v492, 8
    %v555 = vadd.s32 %v499, 8
    %v556 = vadd.s32 %v506, 8
    %v557 = vadd.s32 %v513, 8
    %v558 = vadd.s32 %v520, 8
    %v559 = vadd.s32 %v527, 8
    %v560 = vsel %vm544, %v552, %v478
    %v561 = vsel %vm545, %v553, %v485
    %v562 = vsel %vm546, %v554, %v492
    %v563 = vsel %vm547, %v555, %v499
    %v564 = vsel %vm548, %v556, %v506
    %v565 = vsel %vm549, %v557, %v513
    %v566 = vsel %vm550, %v558, %v520
    %v567 = vsel %vm551, %v559, %v527
    %vm568 = vcmp.lt.s32.totalorder %v560, 2
    %vm569 = vcmp.lt.s32.totalorder %v561, 2
    %vm570 = vcmp.lt.s32.totalorder %v562, 2
    %vm571 = vcmp.lt.s32.totalorder %v563, 2
    %vm572 = vcmp.lt.s32.totalorder %v564, 2
    %vm573 = vcmp.lt.s32.totalorder %v565, 2
    %vm574 = vcmp.lt.s32.totalorder %v566, 2
    %vm575 = vcmp.lt.s32.totalorder %v567, 2
    %v576 = vsel %vm568, 1, 0
    %v577 = vsel %vm569, 1, 0
    %v578 = vsel %vm570, 1, 0
    %v579 = vsel %vm571, 1, 0
    %v580 = vsel %vm572, 1, 0
    %v581 = vsel %vm573, 1, 0
    %v582 = vsel %vm574, 1, 0
    %v583 = vsel %vm575, 1, 0
    %v584 = vcvt.s32.f32 %v576
    %v585 = vcvt.s32.f32 %v577
    %v586 = vcvt.s32.f32 %v578
    %v587 = vcvt.s32.f32 %v579
    %v588 = vcvt.s32.f32 %v580
    %v589 = vcvt.s32.f32 %v581
    %v590 = vcvt.s32.f32 %v582
    %v591 = vcvt.s32.f32 %v583
    %v592 = vmul.f32 %v360, %v584
    %v593 = vmul.f32 %v362, %v584
    %v594 = vmul.f32 %v433, %v584
    %v595 = vmul.f32 %v364, %v585
    %v596 = vmul.f32 %v366, %v585
    %v597 = vmul.f32 %v436, %v585
    %v598 = vmul.f32 %v370, %v586
    %v599 = vmul.f32 %v372, %v586
    %v600 = vmul.f32 %v441, %v586
    %v601 = vmul.f32 %v374, %v587
    %v602 = vmul.f32 %v376, %v587
    %v603 = vmul.f32 %v444, %v587
    %v604 = vmul.f32 %v380, %v588
    %v605 = vmul.f32 %v382, %v588
    %v606 = vmul.f32 %v449, %v588
    %v607 = vmul.f32 %v384, %v589
    %v608 = vmul.f32 %v386, %v589
    %v609 = vmul.f32 %v452, %v589
    %v610 = vmul.f32 %v390, %v590
    %v611 = vmul.f32 %v392, %v590
    %v612 = vmul.f32 %v457, %v590
    %v613 = vmul.f32 %v394, %v591
    %v614 = vmul.f32 %v396, %v591
    %v615 = vmul.f32 %v460, %v591
    %v616 = vadd.f32 %v592, %v595
    %v617 = vadd.f32 %v616, %v598
    %v618 = vadd.f32 %v617, %v601
    %v619 = vadd.f32 %v618, %v604
    %v620 = vadd.f32 %v619, %v607
    %v621 = vadd.f32 %v620, %v610
    %v622 = vadd.f32 %v621, %v613
    %v623 = vrot.slane %v622, 4
    %v624 = vadd.f32 %v622, %v623
    %v625 = vrot.slane %v624, 2
    %v626 = vadd.f32 %v624, %v625
    %v627 = vrot.slane %v626, 1
    %v628 = vadd.f32 %v626, %v627
    %v629 = vadd.f32 %v593, %v596
    %v630 = vadd.f32 %v629, %v599
    %v631 = vadd.f32 %v630, %v602
    %v632 = vadd.f32 %v631, %v605
    %v633 = vadd.f32 %v632, %v608
    %v634 = vadd.f32 %v633, %v611
    %v635 = vadd.f32 %v634, %v614
    %v636 = vrot.slane %v635, 4
    %v637 = vadd.f32 %v635, %v636
    %v638 = vrot.slane %v637, 2
    %v639 = vadd.f32 %v637, %v638
    %v640 = vrot.slane %v639, 1
    %v641 = vadd.f32 %v639, %v640
    %v642 = vadd.f32 %v594, %v597
    %v643 = vadd.f32 %v642, %v600
    %v644 = vadd.f32 %v643, %v603
    %v645 = vadd.f32 %v644, %v606
    %v646 = vadd.f32 %v645, %v609
    %v647 = vadd.f32 %v646, %v612
    %v648 = vadd.f32 %v647, %v615
    %v649 = vrot.slane %v648, 4
    %v650 = vadd.f32 %v648, %v649
    %v651 = vrot.slane %v650, 2
    %v652 = vadd.f32 %v650, %v651
    %v653 = vrot.slane %v652, 1
    %v654 = vadd.f32 %v652, %v653
    %v655 = vmul.f32 %v628, 0.0625
    %v656 = vmul.f32 %v641, 0.0625
    %v657 = vmul.f32 %v654, 0.0625
    %v658 = vsub.f32 %v360, %v655
    %v659 = vsub.f32 %v362, %v656
    %v660 = vsub.f32 %v433, %v657
    %v661 = vsub.f32 %v364, %v655
    %v662 = vsub.f32 %v366, %v656
    %v663 = vsub.f32 %v436, %v657
    %v664 = vsub.f32 %v370, %v655
    %v665 = vsub.f32 %v372, %v656
    %v666 = vsub.f32 %v441, %v657
    %v667 = vsub.f32 %v374, %v655
    %v668 = vsub.f32 %v376, %v656
    %v669 = vsub.f32 %v444, %v657
    %v670 = vsub.f32 %v380, %v655
    %v671 = vsub.f32 %v382, %v656
    %v672 = vsub.f32 %v449, %v657
    %v673 = vsub.f32 %v384, %v655
    %v674 = vsub.f32 %v386, %v656
    %v675 = vsub.f32 %v452, %v657
    %v676 = vsub.f32 %v390, %v655
    %v677 = vsub.f32 %v392, %v656
    %v678 = vsub.f32 %v457, %v657
    %v679 = vsub.f32 %v394, %v655
    %v680 = vsub.f32 %v396, %v656
    %v681 = vsub.f32 %v460, %v657
    %v682 = vmul.f32 %v658, %v658
    %v683 = vmul.f32 %v659, %v659
    %v684 = vmul.f32 %v660, %v660
    %v685 = vmul.f32 %v661, %v661
    %v686 = vmul.f32 %v662, %v662
    %v687 = vmul.f32 %v663, %v663
    %v688 = vmul.f32 %v664, %v664
    %v689 = vmul.f32 %v665, %v665
    %v690 = vmul.f32 %v666, %v666
    %v691 = vmul.f32 %v667, %v667
    %v692 = vmul.f32 %v668, %v668
    %v693 = vmul.f32 %v669, %v669
    %v694 = vmul.f32 %v670, %v670
    %v695 = vmul.f32 %v671, %v671
    %v696 = vmul.f32 %v672, %v672
    %v697 = vmul.f32 %v673, %v673
    %v698 = vmul.f32 %v674, %v674
    %v699 = vmul.f32 %v675, %v675
    %v700 = vmul.f32 %v676, %v676
    %v701 = vmul.f32 %v677, %v677
    %v702 = vmul.f32 %v678, %v678
    %v703 = vmul.f32 %v679, %v679
    %v704 = vmul.f32 %v680, %v680
    %v705 = vmul.f32 %v681, %v681
    %v706 = vmul.f32 %v682, %v584
    %v707 = vmul.f32 %v683, %v584
    %v708 = vmul.f32 %v684, %v584
    %v709 = vmul.f32 %v685, %v585
    %v710 = vmul.f32 %v686, %v585
    %v711 = vmul.f32 %v687, %v585
    %v712 = vmul.f32 %v688, %v586
    %v713 = vmul.f32 %v689, %v586
    %v714 = vmul.f32 %v690, %v586
    %v715 = vmul.f32 %v691, %v587
    %v716 = vmul.f32 %v692, %v587
    %v717 = vmul.f32 %v693, %v587
    %v718 = vmul.f32 %v694, %v588
    %v719 = vmul.f32 %v695, %v588
    %v720 = vmul.f32 %v696, %v588
    %v721 = vmul.f32 %v697, %v589
    %v722 = vmul.f32 %v698, %v589
    %v723 = vmul.f32 %v699, %v589
    %v724 = vmul.f32 %v700, %v590
    %v725 = vmul.f32 %v701, %v590
    %v726 = vmul.f32 %v702, %v590
    %v727 = vmul.f32 %v703, %v591
    %v728 = vmul.f32 %v704, %v591
    %v729 = vmul.f32 %v705, %v591
    %v730 = vadd.f32 %v706, %v709
    %v731 = vadd.f32 %v730, %v712
    %v732 = vadd.f32 %v731, %v715
    %v733 = vadd.f32 %v732, %v718
    %v734 = vadd.f32 %v733, %v721
    %v735 = vadd.f32 %v734, %v724
    %v736 = vadd.f32 %v735, %v727
    %v737 = vrot.slane %v736, 4
    %v738 = vadd.f32 %v736, %v737
    %v739 = vrot.slane %v738, 2
    %v740 = vadd.f32 %v738, %v739
    %v741 = vrot.slane %v740, 1
    %v742 = vadd.f32 %v740, %v741
    %v743 = vadd.f32 %v707, %v710
    %v744 = vadd.f32 %v743, %v713
    %v745 = vadd.f32 %v744, %v716
    %v746 = vadd.f32 %v745, %v719
    %v747 = vadd.f32 %v746, %v722
    %v748 = vadd.f32 %v747, %v725
    %v749 = vadd.f32 %v748, %v728
    %v750 = vrot.slane %v749, 4
    %v751 = vadd.f32 %v749, %v750
    %v752 = vrot.slane %v751, 2
    %v753 = vadd.f32 %v751, %v752
    %v754 = vrot.slane %v753, 1
    %v755 = vadd.f32 %v753, %v754
    %v756 = vadd.f32 %v708, %v711
    %v757 = vadd.f32 %v756, %v714
    %v758 = vadd.f32 %v757, %v717
    %v759 = vadd.f32 %v758, %v720
    %v760 = vadd.f32 %v759, %v723
    %v761 = vadd.f32 %v760, %v726
    %v762 = vadd.f32 %v761, %v729
    %v763 = vrot.slane %v762, 4
    %v764 = vadd.f32 %v762, %v763
    %v765 = vrot.slane %v764, 2
    %v766 = vadd.f32 %v764, %v765
    %v767 = vrot.slane %v766, 1
    %v768 = vadd.f32 %v766, %v767
    %v769 = vmul.f32 %v742, 0.0625
    %v770 = vmul.f32 %v755, 0.0625
    %v771 = vmul.f32 %v768, 0.0625
    %v772 = vld [vmem:[%s2] sm:$0x7]
    %v773 = vadd.f32 %v769, 1e-05
    %v774 = vadd.f32 %v770, 1e-05
    %v775 = vadd.f32 %v771, 1e-05
    %v776 = vrsqrt.pop %v773
    %v777 = vrsqrt.pop %v774
    %v778 = vrsqrt.pop %v775
    %v782 = vcombine.low %v776, %v777
    %v784 = vunpack.c.l.s4 1966171168
    %v785 = vunpack.c.0.s8 %v784
    %v786 = vlaneseq
    %v787 = vshrl.u32 %v786, 7
    %v788 = vsub.s32 %v785, %v787
    %v789 = vrot.slane %v782, %v788
    %v791 = vunpack.c.l.s4 1966171168
    %v792 = vunpack.c.0.s8 %v791
    %v793 = vlaneseq
    %v794 = vshrl.u32 %v793, 7
    %v795 = vsub.s32 %v792, %v794
    %v796 = vrot.slane %v778, %v795
    %v797 = vcombine.low %v789, %v796
    %v799 = vunpack.c.l.s4 1966171168
    %v800 = vunpack.c.0.s8 %v799
    %v801 = vlaneseq
    %v802 = vshrl.u32 %v801, 7
    %v803 = vsub.s32 %v800, %v802
    %v804 = vrot.slane %v797, %v803
    %v806 = vmul.f32 %v772, %v804
    %v807 = vld [vmem:[%s3] sm:$0x7]
    %v809 = vlaneseq
    %v810 = vshrl.u32 %v809, 7
    %v811 = vsub.s32 0, %v810
    %v812 = vrot.slane %v806, %v811
    %v813 = vlaneseq
    %v814 = vshrl.u32 %v813, 7
    %v815 = vsub.s32 1, %v814
    %v816 = vrot.slane %v806, %v815
    %v817 = vlaneseq
    %v818 = vshrl.u32 %v817, 7
    %v819 = vsub.s32 2, %v818
    %v820 = vrot.slane %v806, %v819
    %v824 = vmul.f32 %v655, %v812
    %v825 = vmul.f32 %v656, %v816
    %v826 = vmul.f32 %v657, %v820
    %v830 = vcombine.low %v824, %v825
    %v832 = vunpack.c.l.s4 1966171168
    %v833 = vunpack.c.0.s8 %v832
    %v834 = vlaneseq
    %v835 = vshrl.u32 %v834, 7
    %v836 = vsub.s32 %v833, %v835
    %v837 = vrot.slane %v830, %v836
    %v839 = vunpack.c.l.s4 1966171168
    %v840 = vunpack.c.0.s8 %v839
    %v841 = vlaneseq
    %v842 = vshrl.u32 %v841, 7
    %v843 = vsub.s32 %v840, %v842
    %v844 = vrot.slane %v826, %v843
    %v845 = vcombine.low %v837, %v844
    %v847 = vunpack.c.l.s4 1966171168
    %v848 = vunpack.c.0.s8 %v847
    %v849 = vlaneseq
    %v850 = vshrl.u32 %v849, 7
    %v851 = vsub.s32 %v848, %v850
    %v852 = vrot.slane %v845, %v851
    %v854 = vsub.f32 %v807, %v852
    %v855 = vmul.f32 %v360, %v812
    %v856 = vmul.f32 %v362, %v816
    %v857 = vmul.f32 %v433, %v820
    %v858 = vmul.f32 %v364, %v812
    %v859 = vmul.f32 %v366, %v816
    %v860 = vmul.f32 %v436, %v820
    %v861 = vmul.f32 %v370, %v812
    %v862 = vmul.f32 %v372, %v816
    %v863 = vmul.f32 %v441, %v820
    %v864 = vmul.f32 %v374, %v812
    %v865 = vmul.f32 %v376, %v816
    %v866 = vmul.f32 %v444, %v820
    %v867 = vmul.f32 %v380, %v812
    %v868 = vmul.f32 %v382, %v816
    %v869 = vmul.f32 %v449, %v820
    %v870 = vmul.f32 %v384, %v812
    %v871 = vmul.f32 %v386, %v816
    %v872 = vmul.f32 %v452, %v820
    %v873 = vmul.f32 %v390, %v812
    %v874 = vmul.f32 %v392, %v816
    %v875 = vmul.f32 %v457, %v820
    %v876 = vmul.f32 %v394, %v812
    %v877 = vmul.f32 %v396, %v816
    %v878 = vmul.f32 %v460, %v820
    %v880 = vlaneseq
    %v881 = vshrl.u32 %v880, 7
    %v882 = vsub.s32 0, %v881
    %v883 = vrot.slane %v854, %v882
    %v884 = vlaneseq
    %v885 = vshrl.u32 %v884, 7
    %v886 = vsub.s32 1, %v885
    %v887 = vrot.slane %v854, %v886
    %v888 = vlaneseq
    %v889 = vshrl.u32 %v888, 7
    %v890 = vsub.s32 2, %v889
    %v891 = vrot.slane %v854, %v890
    %v895 = vadd.f32 %v855, %v883
    %v896 = vadd.f32 %v856, %v887
    %v897 = vadd.f32 %v857, %v891
    %v898 = vadd.f32 %v858, %v883
    %v899 = vadd.f32 %v859, %v887
    %v900 = vadd.f32 %v860, %v891
    %v901 = vadd.f32 %v861, %v883
    %v902 = vadd.f32 %v862, %v887
    %v903 = vadd.f32 %v863, %v891
    %v904 = vadd.f32 %v864, %v883
    %v905 = vadd.f32 %v865, %v887
    %v906 = vadd.f32 %v866, %v891
    %v907 = vadd.f32 %v867, %v883
    %v908 = vadd.f32 %v868, %v887
    %v909 = vadd.f32 %v869, %v891
    %v910 = vadd.f32 %v870, %v883
    %v911 = vadd.f32 %v871, %v887
    %v912 = vadd.f32 %v872, %v891
    %v913 = vadd.f32 %v873, %v883
    %v914 = vadd.f32 %v874, %v887
    %v915 = vadd.f32 %v875, %v891
    %v916 = vadd.f32 %v876, %v883
    %v917 = vadd.f32 %v877, %v887
    %v918 = vadd.f32 %v878, %v891
    %v919 = vpack.c.bf16 %v898, %v895
    %v920 = vpack.c.bf16 %v899, %v896
    %v921 = vpack.c.bf16 %v900, %v897
    %v922 = vpack.c.bf16 %v904, %v901
    %v923 = vpack.c.bf16 %v905, %v902
    %v924 = vpack.c.bf16 %v906, %v903
    %v925 = vpack.c.bf16 %v910, %v907
    %v926 = vpack.c.bf16 %v911, %v908
    %v927 = vpack.c.bf16 %v912, %v909
    %v928 = vpack.c.bf16 %v916, %v913
    %v929 = vpack.c.bf16 %v917, %v914
    %v930 = vpack.c.bf16 %v918, %v915
    %v931 = vld [vmem:[#allocation4] sm:$0xff]
    %v932 = vld [vmem:[#allocation4 + $0x8] sm:$0xff]
    %v933 = vld [vmem:[#allocation4 + $0x10] sm:$0xff]
    %v934 = vld [vmem:[#allocation4 + $0x18] sm:$0xff]
    %v935 = vld [vmem:[#allocation4 + $0x20] sm:$0xff]
    %v936 = vld [vmem:[#allocation4 + $0x28] sm:$0xff]
    %v937 = vld [vmem:[#allocation4 + $0x30] sm:$0xff]
    %v938 = vld [vmem:[#allocation4 + $0x38] sm:$0xff]
    %v939 = vld [vmem:[#allocation4 + $0x40] sm:$0xff]
    %v940 = vld [vmem:[#allocation4 + $0x48] sm:$0xff]
    %v941 = vld [vmem:[#allocation4 + $0x50] sm:$0xff]
    %v942 = vld [vmem:[#allocation4 + $0x58] sm:$0xff]
    %v943 = vld [vmem:[#allocation4 + $0x60] sm:$0xff]
    %v944 = vld [vmem:[#allocation4 + $0x68] sm:$0xff]
    %v945 = vld [vmem:[#allocation4 + $0x70] sm:$0xff]
    %v946 = vld [vmem:[#allocation4 + $0x78] sm:$0xff]
    %v947 = vld [vmem:[#allocation4 + $0x80] sm:$0xff]
    %v948 = vld [vmem:[#allocation4 + $0x88] sm:$0xff]
    %v949 = vld [vmem:[#allocation4 + $0x90] sm:$0xff]
    %v950 = vld [vmem:[#allocation4 + $0x98] sm:$0xff]
    %v951 = vld [vmem:[#allocation4 + $0xa0] sm:$0xff]
    %v952 = vld [vmem:[#allocation4 + $0xa8] sm:$0xff]
    %v953 = vld [vmem:[#allocation4 + $0xb0] sm:$0xff]
    %v954 = vld [vmem:[#allocation4 + $0xb8] sm:$0xff]
    %v955 = vld [vmem:[#allocation4 + $0xc0] sm:$0xff]
    %v956 = vld [vmem:[#allocation4 + $0xc8] sm:$0xff]
    %v957 = vld [vmem:[#allocation4 + $0xd0] sm:$0xff]
    %v958 = vld [vmem:[#allocation4 + $0xd8] sm:$0xff]
    %v959 = vld [vmem:[#allocation4 + $0xe0] sm:$0xff]
    %v960 = vld [vmem:[#allocation4 + $0xe8] sm:$0xff]
    %v961 = vld [vmem:[#allocation4 + $0xf0] sm:$0xff]
    %v962 = vld [vmem:[#allocation4 + $0xf8] sm:$0xff]
    %v963 = vld [vmem:[#allocation4 + $0x100] sm:$0xff]
    %v964 = vld [vmem:[#allocation4 + $0x108] sm:$0xff]
    %v965 = vld [vmem:[#allocation4 + $0x110] sm:$0xff]
    %v966 = vld [vmem:[#allocation4 + $0x118] sm:$0xff]
    %v967 = vld [vmem:[#allocation4 + $0x120] sm:$0xff]
    %v968 = vld [vmem:[#allocation4 + $0x128] sm:$0xff]
    %v969 = vld [vmem:[#allocation4 + $0x130] sm:$0xff]
    %v970 = vld [vmem:[#allocation4 + $0x138] sm:$0xff]
    %v971 = vld [vmem:[#allocation4 + $0x140] sm:$0xff]
    %v972 = vld [vmem:[#allocation4 + $0x148] sm:$0xff]
    %v973 = vld [vmem:[#allocation4 + $0x150] sm:$0xff]
    %v974 = vld [vmem:[#allocation4 + $0x158] sm:$0xff]
    %v975 = vld [vmem:[#allocation4 + $0x160] sm:$0xff]
    %v976 = vld [vmem:[#allocation4 + $0x168] sm:$0xff]
    %v977 = vld [vmem:[#allocation4 + $0x170] sm:$0xff]
    %v978 = vld [vmem:[#allocation4 + $0x178] sm:$0xff]
    %v979 = vld [vmem:[#allocation4 + $0x180] sm:$0xff]
    %v980 = vld [vmem:[#allocation4 + $0x188] sm:$0xff]
    %v981 = vld [vmem:[#allocation4 + $0x190] sm:$0xff]
    %v982 = vld [vmem:[#allocation4 + $0x198] sm:$0xff]
    %v983 = vld [vmem:[#allocation4 + $0x1a0] sm:$0xff]
    %v984 = vld [vmem:[#allocation4 + $0x1a8] sm:$0xff]
    %v985 = vld [vmem:[#allocation4 + $0x1b0] sm:$0xff]
    %v986 = vld [vmem:[#allocation4 + $0x1b8] sm:$0xff]
    %v987 = vld [vmem:[#allocation4 + $0x1c0] sm:$0xff]
    %v988 = vld [vmem:[#allocation4 + $0x1c8] sm:$0xff]
    %v989 = vld [vmem:[#allocation4 + $0x1d0] sm:$0xff]
    %v990 = vld [vmem:[#allocation4 + $0x1d8] sm:$0xff]
    %v991 = vld [vmem:[#allocation4 + $0x1e0] sm:$0xff]
    %v992 = vld [vmem:[#allocation4 + $0x1e8] sm:$0xff]
    %v993 = vld [vmem:[#allocation4 + $0x1f0] sm:$0xff]
    %v994 = vld [vmem:[#allocation4 + $0x1f8] sm:$0xff]
    %v995 = vld [vmem:[#allocation4 + $0x200] sm:$0xff]
    %v996 = vld [vmem:[#allocation4 + $0x208] sm:$0xff]
    %v997 = vld [vmem:[#allocation4 + $0x210] sm:$0xff]
    %v998 = vld [vmem:[#allocation4 + $0x218] sm:$0xff]
    %v999 = vld [vmem:[#allocation4 + $0x220] sm:$0xff]
    %v1000 = vld [vmem:[#allocation4 + $0x228] sm:$0xff]
    %v1001 = vld [vmem:[#allocation4 + $0x230] sm:$0xff]
    %v1002 = vld [vmem:[#allocation4 + $0x238] sm:$0xff]
    %v1003 = vld [vmem:[#allocation4 + $0x240] sm:$0xff]
    %v1004 = vld [vmem:[#allocation4 + $0x248] sm:$0xff]
    %v1005 = vld [vmem:[#allocation4 + $0x250] sm:$0xff]
    %v1006 = vld [vmem:[#allocation4 + $0x258] sm:$0xff]
    %v1007 = vld [vmem:[#allocation4 + $0x260] sm:$0xff]
    %v1008 = vld [vmem:[#allocation4 + $0x268] sm:$0xff]
    %v1009 = vld [vmem:[#allocation4 + $0x270] sm:$0xff]
    %v1010 = vld [vmem:[#allocation4 + $0x278] sm:$0xff]
    %v1011 = vld [vmem:[#allocation4 + $0x280] sm:$0xff]
    %v1012 = vld [vmem:[#allocation4 + $0x288] sm:$0xff]
    %v1013 = vld [vmem:[#allocation4 + $0x290] sm:$0xff]
    %v1014 = vld [vmem:[#allocation4 + $0x298] sm:$0xff]
    %v1015 = vld [vmem:[#allocation4 + $0x2a0] sm:$0xff]
    %v1016 = vld [vmem:[#allocation4 + $0x2a8] sm:$0xff]
    %v1017 = vld [vmem:[#allocation4 + $0x2b0] sm:$0xff]
    %v1018 = vld [vmem:[#allocation4 + $0x2b8] sm:$0xff]
    %v1019 = vld [vmem:[#allocation4 + $0x2c0] sm:$0xff]
    %v1020 = vld [vmem:[#allocation4 + $0x2c8] sm:$0xff]
    %v1021 = vld [vmem:[#allocation4 + $0x2d0] sm:$0xff]
    %v1022 = vld [vmem:[#allocation4 + $0x2d8] sm:$0xff]
    %v1023 = vld [vmem:[#allocation4 + $0x2e0] sm:$0xff]
    %v1024 = vld [vmem:[#allocation4 + $0x2e8] sm:$0xff]
    %v1025 = vld [vmem:[#allocation4 + $0x2f0] sm:$0xff]
    %v1026 = vld [vmem:[#allocation4 + $0x2f8] sm:$0xff]
    %v1027 = vld [vmem:[%s7] sm:$0xf]
    %v1029 = vlaneseq
    %v1030 = vshrl.u32 %v1029, 7
    %v1031 = vsub.s32 0, %v1030
    %v1032 = vrot.slane %v1027, %v1031
    %v1033 = vlaneseq
    %v1034 = vshrl.u32 %v1033, 7
    %v1035 = vsub.s32 1, %v1034
    %v1036 = vrot.slane %v1027, %v1035
    %v1037 = vlaneseq
    %v1038 = vshrl.u32 %v1037, 7
    %v1039 = vsub.s32 2, %v1038
    %v1040 = vrot.slane %v1027, %v1039
    %v1041 = vlaneseq
    %v1042 = vshrl.u32 %v1041, 7
    %v1043 = vsub.s32 3, %v1042
    %v1044 = vrot.slane %v1027, %v1043
    %v1145 = vunpack.c.l.b16 %v931
    %v1146 = vunpack.c.h.b16 %v931
    %v1147 = vunpack.c.l.b16 %v932
    %v1148 = vunpack.c.h.b16 %v932
    %v1149 = vunpack.c.l.b16 %v933
    %v1150 = vunpack.c.h.b16 %v933
    %v1151 = vunpack.c.l.b16 %v934
    %v1152 = vunpack.c.h.b16 %v934
    %v1153 = vunpack.c.l.b16 %v935
    %v1154 = vunpack.c.h.b16 %v935
    %v1155 = vunpack.c.l.b16 %v936
    %v1156 = vunpack.c.h.b16 %v936
    %v1157 = vunpack.c.l.b16 %v937
    %v1158 = vunpack.c.h.b16 %v937
    %v1159 = vunpack.c.l.b16 %v938
    %v1160 = vunpack.c.h.b16 %v938
    %v1161 = vunpack.c.l.b16 %v939
    %v1162 = vunpack.c.h.b16 %v939
    %v1163 = vunpack.c.l.b16 %v940
    %v1164 = vunpack.c.h.b16 %v940
    %v1165 = vunpack.c.l.b16 %v941
    %v1166 = vunpack.c.h.b16 %v941
    %v1167 = vunpack.c.l.b16 %v942
    %v1168 = vunpack.c.h.b16 %v942
    %v1169 = vunpack.c.l.b16 %v943
    %v1170 = vunpack.c.h.b16 %v943
    %v1171 = vunpack.c.l.b16 %v944
    %v1172 = vunpack.c.h.b16 %v944
    %v1173 = vunpack.c.l.b16 %v945
    %v1174 = vunpack.c.h.b16 %v945
    %v1175 = vunpack.c.l.b16 %v946
    %v1176 = vunpack.c.h.b16 %v946
    %v1177 = vunpack.c.l.b16 %v947
    %v1178 = vunpack.c.h.b16 %v947
    %v1179 = vunpack.c.l.b16 %v948
    %v1180 = vunpack.c.h.b16 %v948
    %v1181 = vunpack.c.l.b16 %v949
    %v1182 = vunpack.c.h.b16 %v949
    %v1183 = vunpack.c.l.b16 %v950
    %v1184 = vunpack.c.h.b16 %v950
    %v1185 = vunpack.c.l.b16 %v951
    %v1186 = vunpack.c.h.b16 %v951
    %v1187 = vunpack.c.l.b16 %v952
    %v1188 = vunpack.c.h.b16 %v952
    %v1189 = vunpack.c.l.b16 %v953
    %v1190 = vunpack.c.h.b16 %v953
    %v1191 = vunpack.c.l.b16 %v954
    %v1192 = vunpack.c.h.b16 %v954
    %v1193 = vunpack.c.l.b16 %v955
    %v1194 = vunpack.c.h.b16 %v955
    %v1195 = vunpack.c.l.b16 %v956
    %v1196 = vunpack.c.h.b16 %v956
    %v1197 = vunpack.c.l.b16 %v957
    %v1198 = vunpack.c.h.b16 %v957
    %v1199 = vunpack.c.l.b16 %v958
    %v1200 = vunpack.c.h.b16 %v958
    %v1201 = vunpack.c.l.b16 %v959
    %v1202 = vunpack.c.h.b16 %v959
    %v1203 = vunpack.c.l.b16 %v960
    %v1204 = vunpack.c.h.b16 %v960
    %v1205 = vunpack.c.l.b16 %v961
    %v1206 = vunpack.c.h.b16 %v961
    %v1207 = vunpack.c.l.b16 %v962
    %v1208 = vunpack.c.h.b16 %v962
    %v1209 = vunpack.c.l.b16 %v963
    %v1210 = vunpack.c.h.b16 %v963
    %v1211 = vunpack.c.l.b16 %v964
    %v1212 = vunpack.c.h.b16 %v964
    %v1213 = vunpack.c.l.b16 %v965
    %v1214 = vunpack.c.h.b16 %v965
    %v1215 = vunpack.c.l.b16 %v966
    %v1216 = vunpack.c.h.b16 %v966
    %v1217 = vunpack.c.l.b16 %v967
    %v1218 = vunpack.c.h.b16 %v967
    %v1219 = vunpack.c.l.b16 %v968
    %v1220 = vunpack.c.h.b16 %v968
    %v1221 = vunpack.c.l.b16 %v969
    %v1222 = vunpack.c.h.b16 %v969
    %v1223 = vunpack.c.l.b16 %v970
    %v1224 = vunpack.c.h.b16 %v970
    %v1225 = vunpack.c.l.b16 %v971
    %v1226 = vunpack.c.h.b16 %v971
    %v1227 = vunpack.c.l.b16 %v972
    %v1228 = vunpack.c.h.b16 %v972
    %v1229 = vunpack.c.l.b16 %v973
    %v1230 = vunpack.c.h.b16 %v973
    %v1231 = vunpack.c.l.b16 %v974
    %v1232 = vunpack.c.h.b16 %v974
    %v1233 = vunpack.c.l.b16 %v975
    %v1234 = vunpack.c.h.b16 %v975
    %v1235 = vunpack.c.l.b16 %v976
    %v1236 = vunpack.c.h.b16 %v976
    %v1237 = vunpack.c.l.b16 %v977
    %v1238 = vunpack.c.h.b16 %v977
    %v1239 = vunpack.c.l.b16 %v978
    %v1240 = vunpack.c.h.b16 %v978
    %v1241 = vunpack.c.l.b16 %v979
    %v1242 = vunpack.c.h.b16 %v979
    %v1243 = vunpack.c.l.b16 %v980
    %v1244 = vunpack.c.h.b16 %v980
    %v1245 = vunpack.c.l.b16 %v981
    %v1246 = vunpack.c.h.b16 %v981
    %v1247 = vunpack.c.l.b16 %v982
    %v1248 = vunpack.c.h.b16 %v982
    %v1249 = vunpack.c.l.b16 %v983
    %v1250 = vunpack.c.h.b16 %v983
    %v1251 = vunpack.c.l.b16 %v984
    %v1252 = vunpack.c.h.b16 %v984
    %v1253 = vunpack.c.l.b16 %v985
    %v1254 = vunpack.c.h.b16 %v985
    %v1255 = vunpack.c.l.b16 %v986
    %v1256 = vunpack.c.h.b16 %v986
    %v1257 = vunpack.c.l.b16 %v987
    %v1258 = vunpack.c.h.b16 %v987
    %v1259 = vunpack.c.l.b16 %v988
    %v1260 = vunpack.c.h.b16 %v988
    %v1261 = vunpack.c.l.b16 %v989
    %v1262 = vunpack.c.h.b16 %v989
    %v1263 = vunpack.c.l.b16 %v990
    %v1264 = vunpack.c.h.b16 %v990
    %v1265 = vunpack.c.l.b16 %v991
    %v1266 = vunpack.c.h.b16 %v991
    %v1267 = vunpack.c.l.b16 %v992
    %v1268 = vunpack.c.h.b16 %v992
    %v1269 = vunpack.c.l.b16 %v993
    %v1270 = vunpack.c.h.b16 %v993
    %v1271 = vunpack.c.l.b16 %v994
    %v1272 = vunpack.c.h.b16 %v994
    %v1273 = vunpack.c.l.b16 %v995
    %v1274 = vunpack.c.h.b16 %v995
    %v1275 = vunpack.c.l.b16 %v996
    %v1276 = vunpack.c.h.b16 %v996
    %v1277 = vunpack.c.l.b16 %v997
    %v1278 = vunpack.c.h.b16 %v997
    %v1279 = vunpack.c.l.b16 %v998
    %v1280 = vunpack.c.h.b16 %v998
    %v1281 = vunpack.c.l.b16 %v999
    %v1282 = vunpack.c.h.b16 %v999
    %v1283 = vunpack.c.l.b16 %v1000
    %v1284 = vunpack.c.h.b16 %v1000
    %v1285 = vunpack.c.l.b16 %v1001
    %v1286 = vunpack.c.h.b16 %v1001
    %v1287 = vunpack.c.l.b16 %v1002
    %v1288 = vunpack.c.h.b16 %v1002
    %v1289 = vunpack.c.l.b16 %v1003
    %v1290 = vunpack.c.h.b16 %v1003
    %v1291 = vunpack.c.l.b16 %v1004
    %v1292 = vunpack.c.h.b16 %v1004
    %v1293 = vunpack.c.l.b16 %v1005
    %v1294 = vunpack.c.h.b16 %v1005
    %v1295 = vunpack.c.l.b16 %v1006
    %v1296 = vunpack.c.h.b16 %v1006
    %v1297 = vunpack.c.l.b16 %v1007
    %v1298 = vunpack.c.h.b16 %v1007
    %v1299 = vunpack.c.l.b16 %v1008
    %v1300 = vunpack.c.h.b16 %v1008
    %v1301 = vunpack.c.l.b16 %v1009
    %v1302 = vunpack.c.h.b16 %v1009
    %v1303 = vunpack.c.l.b16 %v1010
    %v1304 = vunpack.c.h.b16 %v1010
    %v1305 = vunpack.c.l.b16 %v1011
    %v1306 = vunpack.c.h.b16 %v1011
    %v1307 = vunpack.c.l.b16 %v1012
    %v1308 = vunpack.c.h.b16 %v1012
    %v1309 = vunpack.c.l.b16 %v1013
    %v1310 = vunpack.c.h.b16 %v1013
    %v1311 = vunpack.c.l.b16 %v1014
    %v1312 = vunpack.c.h.b16 %v1014
    %v1313 = vunpack.c.l.b16 %v1015
    %v1314 = vunpack.c.h.b16 %v1015
    %v1315 = vunpack.c.l.b16 %v1016
    %v1316 = vunpack.c.h.b16 %v1016
    %v1317 = vunpack.c.l.b16 %v1017
    %v1318 = vunpack.c.h.b16 %v1017
    %v1319 = vunpack.c.l.b16 %v1018
    %v1320 = vunpack.c.h.b16 %v1018
    %v1321 = vunpack.c.l.b16 %v1019
    %v1322 = vunpack.c.h.b16 %v1019
    %v1323 = vunpack.c.l.b16 %v1020
    %v1324 = vunpack.c.h.b16 %v1020
    %v1325 = vunpack.c.l.b16 %v1021
    %v1326 = vunpack.c.h.b16 %v1021
    %v1327 = vunpack.c.l.b16 %v1022
    %v1328 = vunpack.c.h.b16 %v1022
    %v1329 = vunpack.c.l.b16 %v1023
    %v1330 = vunpack.c.h.b16 %v1023
    %v1331 = vunpack.c.l.b16 %v1024
    %v1332 = vunpack.c.h.b16 %v1024
    %v1333 = vunpack.c.l.b16 %v1025
    %v1334 = vunpack.c.h.b16 %v1025
    %v1335 = vunpack.c.l.b16 %v1026
    %v1336 = vunpack.c.h.b16 %v1026
    %v1337 = vpack.c.b16 %v1149, %v1145
    %v1338 = vpack.c.b16 %v1150, %v1146
    %v1339 = vpack.c.b16 %v1151, %v1147
    %v1340 = vpack.c.b16 %v1152, %v1148
    %v1341 = vpack.c.b16 %v1157, %v1153
    %v1342 = vpack.c.b16 %v1158, %v1154
    %v1343 = vpack.c.b16 %v1159, %v1155
    %v1344 = vpack.c.b16 %v1160, %v1156
    %v1345 = vpack.c.b16 %v1165, %v1161
    %v1346 = vpack.c.b16 %v1166, %v1162
    %v1347 = vpack.c.b16 %v1167, %v1163
    %v1348 = vpack.c.b16 %v1168, %v1164
    %v1349 = vpack.c.b16 %v1173, %v1169
    %v1350 = vpack.c.b16 %v1174, %v1170
    %v1351 = vpack.c.b16 %v1175, %v1171
    %v1352 = vpack.c.b16 %v1176, %v1172
    %v1353 = vpack.c.b16 %v1181, %v1177
    %v1354 = vpack.c.b16 %v1182, %v1178
    %v1355 = vpack.c.b16 %v1183, %v1179
    %v1356 = vpack.c.b16 %v1184, %v1180
    %v1357 = vpack.c.b16 %v1189, %v1185
    %v1358 = vpack.c.b16 %v1190, %v1186
    %v1359 = vpack.c.b16 %v1191, %v1187
    %v1360 = vpack.c.b16 %v1192, %v1188
    %v1361 = vpack.c.b16 %v1197, %v1193
    %v1362 = vpack.c.b16 %v1198, %v1194
    %v1363 = vpack.c.b16 %v1199, %v1195
    %v1364 = vpack.c.b16 %v1200, %v1196
    %v1365 = vpack.c.b16 %v1205, %v1201
    %v1366 = vpack.c.b16 %v1206, %v1202
    %v1367 = vpack.c.b16 %v1207, %v1203
    %v1368 = vpack.c.b16 %v1208, %v1204
    %v1369 = vpack.c.b16 %v1213, %v1209
    %v1370 = vpack.c.b16 %v1214, %v1210
    %v1371 = vpack.c.b16 %v1215, %v1211
    %v1372 = vpack.c.b16 %v1216, %v1212
    %v1373 = vpack.c.b16 %v1221, %v1217
    %v1374 = vpack.c.b16 %v1222, %v1218
    %v1375 = vpack.c.b16 %v1223, %v1219
    %v1376 = vpack.c.b16 %v1224, %v1220
    %v1377 = vpack.c.b16 %v1229, %v1225
    %v1378 = vpack.c.b16 %v1230, %v1226
    %v1379 = vpack.c.b16 %v1231, %v1227
    %v1380 = vpack.c.b16 %v1232, %v1228
    %v1381 = vpack.c.b16 %v1237, %v1233
    %v1382 = vpack.c.b16 %v1238, %v1234
    %v1383 = vpack.c.b16 %v1239, %v1235
    %v1384 = vpack.c.b16 %v1240, %v1236
    %v1385 = vpack.c.b16 %v1245, %v1241
    %v1386 = vpack.c.b16 %v1246, %v1242
    %v1387 = vpack.c.b16 %v1247, %v1243
    %v1388 = vpack.c.b16 %v1248, %v1244
    %v1389 = vpack.c.b16 %v1253, %v1249
    %v1390 = vpack.c.b16 %v1254, %v1250
    %v1391 = vpack.c.b16 %v1255, %v1251
    %v1392 = vpack.c.b16 %v1256, %v1252
    %v1393 = vpack.c.b16 %v1261, %v1257
    %v1394 = vpack.c.b16 %v1262, %v1258
    %v1395 = vpack.c.b16 %v1263, %v1259
    %v1396 = vpack.c.b16 %v1264, %v1260
    %v1397 = vpack.c.b16 %v1269, %v1265
    %v1398 = vpack.c.b16 %v1270, %v1266
    %v1399 = vpack.c.b16 %v1271, %v1267
    %v1400 = vpack.c.b16 %v1272, %v1268
    %v1401 = vpack.c.b16 %v1277, %v1273
    %v1402 = vpack.c.b16 %v1278, %v1274
    %v1403 = vpack.c.b16 %v1279, %v1275
    %v1404 = vpack.c.b16 %v1280, %v1276
    %v1405 = vpack.c.b16 %v1285, %v1281
    %v1406 = vpack.c.b16 %v1286, %v1282
    %v1407 = vpack.c.b16 %v1287, %v1283
    %v1408 = vpack.c.b16 %v1288, %v1284
    %v1409 = vpack.c.b16 %v1293, %v1289
    %v1410 = vpack.c.b16 %v1294, %v1290
    %v1411 = vpack.c.b16 %v1295, %v1291
    %v1412 = vpack.c.b16 %v1296, %v1292
    %v1413 = vpack.c.b16 %v1301, %v1297
    %v1414 = vpack.c.b16 %v1302, %v1298
    %v1415 = vpack.c.b16 %v1303, %v1299
    %v1416 = vpack.c.b16 %v1304, %v1300
    %v1417 = vpack.c.b16 %v1309, %v1305
    %v1418 = vpack.c.b16 %v1310, %v1306
    %v1419 = vpack.c.b16 %v1311, %v1307
    %v1420 = vpack.c.b16 %v1312, %v1308
    %v1421 = vpack.c.b16 %v1317, %v1313
    %v1422 = vpack.c.b16 %v1318, %v1314
    %v1423 = vpack.c.b16 %v1319, %v1315
    %v1424 = vpack.c.b16 %v1320, %v1316
    %v1425 = vpack.c.b16 %v1325, %v1321
    %v1426 = vpack.c.b16 %v1326, %v1322
    %v1427 = vpack.c.b16 %v1327, %v1323
    %v1428 = vpack.c.b16 %v1328, %v1324
    %v1429 = vpack.c.b16 %v1333, %v1329
    %v1430 = vpack.c.b16 %v1334, %v1330
    %v1431 = vpack.c.b16 %v1335, %v1331
    %v1432 = vpack.c.b16 %v1336, %v1332
    %1529 = vmatprep.subr.bf16.mxu0 %v1338
    %1530 = vmatpush1.bf16.msra.mxu0 %v1337
    %1531 = vmatprep.subr.bf16.mxu0 %v1342
    %1532 = vmatpush1.bf16.msra.mxu0 %v1341
    %1533 = vmatprep.subr.bf16.mxu0 %v1346
    %1534 = vmatpush1.bf16.msra.mxu0 %v1345
    %1535 = vmatprep.subr.bf16.mxu0 %v1350
    %1536 = vmatpush1.bf16.msra.mxu0 %v1349
    %1537 = vmatprep.subr.bf16.mxu0 %v1354
    %1538 = vmatpush1.bf16.msra.mxu0 %v1353
    %1539 = vmatprep.subr.bf16.mxu0 %v1358
    %1540 = vmatpush1.bf16.msra.mxu0 %v1357
    %1541 = vmatprep.subr.bf16.mxu0 %v1362
    %1542 = vmatpush1.bf16.msra.mxu0 %v1361
    %1543 = vmatprep.subr.bf16.mxu0 %v1366
    %1544 = vmatpush1.bf16.msra.mxu0 %v1365
    %1545 = vmatprep.subr.bf16.mxu0 %v1370
    %1546 = vmatpush1.bf16.msra.mxu0 %v1369
    %1547 = vmatprep.subr.bf16.mxu0 %v1374
    %1548 = vmatpush1.bf16.msra.mxu0 %v1373
    %1549 = vmatprep.subr.bf16.mxu0 %v1378
    %1550 = vmatpush1.bf16.msra.mxu0 %v1377
    %1551 = vmatprep.subr.bf16.mxu0 %v1382
    %1552 = vmatpush1.bf16.msra.mxu0 %v1381
    %1553 = vmatprep.subr.bf16.mxu0 %v1386
    %1554 = vmatpush1.bf16.msra.mxu0 %v1385
    %1555 = vmatprep.subr.bf16.mxu0 %v1390
    %1556 = vmatpush1.bf16.msra.mxu0 %v1389
    %1557 = vmatprep.subr.bf16.mxu0 %v1394
    %1558 = vmatpush1.bf16.msra.mxu0 %v1393
    %1559 = vmatprep.subr.bf16.mxu0 %v1398
    %1560 = vmatpush1.bf16.msra.mxu0 %v1397
    %1561 = vmatprep.mubr.bf16.mxu0 %v920
    %1562 = vmatmul.mubr.bf16.gmra.mrb[0].mxu0 %v919
    %v1563 = vpop.f32.mrb[0].mxu0
    %v1564 = vadd.f32 %v1032, %v1563
    %v1565 = vpop.f32.mrb[0].mxu0
    %v1566 = vadd.f32 %v1036, %v1565
    %v1567 = vpop.f32.mrb[0].mxu0
    %v1568 = vadd.f32 %v1032, %v1567
    %v1569 = vpop.f32.mrb[0].mxu0
    %v1570 = vadd.f32 %v1036, %v1569
    %1571 = vmatprep.mubr.bf16.mxu0 %v923
    %1572 = vmatmul.mubr.bf16.gmra.mrb[0].mxu0 %v922
    %v1573 = vpop.f32.mrb[0].mxu0
    %v1574 = vadd.f32 %v1032, %v1573
    %v1575 = vpop.f32.mrb[0].mxu0
    %v1576 = vadd.f32 %v1036, %v1575
    %v1577 = vpop.f32.mrb[0].mxu0
    %v1578 = vadd.f32 %v1032, %v1577
    %v1579 = vpop.f32.mrb[0].mxu0
    %v1580 = vadd.f32 %v1036, %v1579
    %1581 = vmatprep.mubr.bf16.mxu0 %v926
    %1582 = vmatmul.mubr.bf16.gmra.mrb[0].mxu0 %v925
    %v1583 = vpop.f32.mrb[0].mxu0
    %v1584 = vadd.f32 %v1032, %v1583
    %v1585 = vpop.f32.mrb[0].mxu0
    %v1586 = vadd.f32 %v1036, %v1585
    %v1587 = vpop.f32.mrb[0].mxu0
    %v1588 = vadd.f32 %v1032, %v1587
    %v1589 = vpop.f32.mrb[0].mxu0
    %v1590 = vadd.f32 %v1036, %v1589
    %1591 = vmatprep.mubr.bf16.mxu0 %v929
    %1592 = vmatmul.mubr.bf16.gmra.mrb[0].mxu0 %v928
    %v1593 = vpop.f32.mrb[0].mxu0
    %v1594 = vadd.f32 %v1032, %v1593
    %v1595 = vpop.f32.mrb[0].mxu0
    %v1596 = vadd.f32 %v1036, %v1595
    %v1597 = vpop.f32.mrb[0].mxu0
    %v1598 = vadd.f32 %v1032, %v1597
    %v1599 = vpop.f32.mrb[0].mxu0
    %v1600 = vadd.f32 %v1036, %v1599
    %1601 = vdwg.mxu0
    %1602 = vmatprep.subr.bf16.mxu0 %v1402
    %1603 = vmatpush1.bf16.msra.mxu0 %v1401
    %1604 = vmatprep.subr.bf16.mxu0 %v1406
    %1605 = vmatpush1.bf16.msra.mxu0 %v1405
    %1606 = vmatprep.subr.bf16.mxu0 %v1410
    %1607 = vmatpush1.bf16.msra.mxu0 %v1409
    %1608 = vmatprep.subr.bf16.mxu0 %v1414
    %1609 = vmatpush1.bf16.msra.mxu0 %v1413
    %1610 = vmatprep.subr.bf16.mxu0 %v1418
    %1611 = vmatpush1.bf16.msra.mxu0 %v1417
    %1612 = vmatprep.subr.bf16.mxu0 %v1422
    %1613 = vmatpush1.bf16.msra.mxu0 %v1421
    %1614 = vmatprep.subr.bf16.mxu0 %v1426
    %1615 = vmatpush1.bf16.msra.mxu0 %v1425
    %1616 = vmatprep.subr.bf16.mxu0 %v1430
    %1617 = vmatpush1.bf16.msra.mxu0 %v1429
    %1618 = vmatprep.subr.bf16.mxu0 0
    %1619 = vmatpush1.bf16.msra.mxu0 0
    %1620 = vmatprep.subr.bf16.mxu0 0
    %1621 = vmatpush1.bf16.msra.mxu0 0
    %1622 = vmatprep.subr.bf16.mxu0 0
    %1623 = vmatpush1.bf16.msra.mxu0 0
    %1624 = vmatprep.subr.bf16.mxu0 0
    %1625 = vmatpush1.bf16.msra.mxu0 0
    %1626 = vmatprep.subr.bf16.mxu0 0
    %1627 = vmatpush1.bf16.msra.mxu0 0
    %1628 = vmatprep.subr.bf16.mxu0 0
    %1629 = vmatpush1.bf16.msra.mxu0 0
    %1630 = vmatprep.subr.bf16.mxu0 0
    %1631 = vmatpush1.bf16.msra.mxu0 0
    %1632 = vmatprep.subr.bf16.mxu0 0
    %1633 = vmatpush1.bf16.msra.mxu0 0
    %1634 = vmatprep.mubr.bf16.mxu0 0
    %1635 = vmatmul.mubr.bf16.gmra.mrb[0].mxu0 %v921
    %v1636 = vpop.f32.mrb[0].mxu0
    %v1637 = vadd.f32 %v1564, %v1636
    %v1638 = vpop.f32.mrb[0].mxu0
    %v1639 = vadd.f32 %v1566, %v1638
    %v1640 = vpop.f32.mrb[0].mxu0
    %v1641 = vadd.f32 %v1568, %v1640
    %v1642 = vpop.f32.mrb[0].mxu0
    %v1643 = vadd.f32 %v1570, %v1642
    %1644 = vmatprep.mubr.bf16.mxu0 0
    %1645 = vmatmul.mubr.bf16.gmra.mrb[0].mxu0 %v924
    %v1646 = vpop.f32.mrb[0].mxu0
    %v1647 = vadd.f32 %v1574, %v1646
    %v1648 = vpop.f32.mrb[0].mxu0
    %v1649 = vadd.f32 %v1576, %v1648
    %v1650 = vpop.f32.mrb[0].mxu0
    %v1651 = vadd.f32 %v1578, %v1650
    %v1652 = vpop.f32.mrb[0].mxu0
    %v1653 = vadd.f32 %v1580, %v1652
    %1654 = vmatprep.mubr.bf16.mxu0 0
    %1655 = vmatmul.mubr.bf16.gmra.mrb[0].mxu0 %v927
    %v1656 = vpop.f32.mrb[0].mxu0
    %v1657 = vadd.f32 %v1584, %v1656
    %v1658 = vpop.f32.mrb[0].mxu0
    %v1659 = vadd.f32 %v1586, %v1658
    %v1660 = vpop.f32.mrb[0].mxu0
    %v1661 = vadd.f32 %v1588, %v1660
    %v1662 = vpop.f32.mrb[0].mxu0
    %v1663 = vadd.f32 %v1590, %v1662
    %1664 = vmatprep.mubr.bf16.mxu0 0
    %1665 = vmatmul.mubr.bf16.gmra.mrb[0].mxu0 %v930
    %v1666 = vpop.f32.mrb[0].mxu0
    %v1667 = vadd.f32 %v1594, %v1666
    %v1668 = vpop.f32.mrb[0].mxu0
    %v1669 = vadd.f32 %v1596, %v1668
    %v1670 = vpop.f32.mrb[0].mxu0
    %v1671 = vadd.f32 %v1598, %v1670
    %v1672 = vpop.f32.mrb[0].mxu0
    %v1673 = vadd.f32 %v1600, %v1672
    %1674 = vdwg.mxu0
    %1675 = vmatprep.subr.bf16.mxu0 %v1340
    %1676 = vmatpush1.bf16.msra.mxu0 %v1339
    %1677 = vmatprep.subr.bf16.mxu0 %v1344
    %1678 = vmatpush1.bf16.msra.mxu0 %v1343
    %1679 = vmatprep.subr.bf16.mxu0 %v1348
    %1680 = vmatpush1.bf16.msra.mxu0 %v1347
    %1681 = vmatprep.subr.bf16.mxu0 %v1352
    %1682 = vmatpush1.bf16.msra.mxu0 %v1351
    %1683 = vmatprep.subr.bf16.mxu0 %v1356
    %1684 = vmatpush1.bf16.msra.mxu0 %v1355
    %1685 = vmatprep.subr.bf16.mxu0 %v1360
    %1686 = vmatpush1.bf16.msra.mxu0 %v1359
    %1687 = vmatprep.subr.bf16.mxu0 %v1364
    %1688 = vmatpush1.bf16.msra.mxu0 %v1363
    %1689 = vmatprep.subr.bf16.mxu0 %v1368
    %1690 = vmatpush1.bf16.msra.mxu0 %v1367
    %1691 = vmatprep.subr.bf16.mxu0 %v1372
    %1692 = vmatpush1.bf16.msra.mxu0 %v1371
    %1693 = vmatprep.subr.bf16.mxu0 %v1376
    %1694 = vmatpush1.bf16.msra.mxu0 %v1375
    %1695 = vmatprep.subr.bf16.mxu0 %v1380
    %1696 = vmatpush1.bf16.msra.mxu0 %v1379
    %1697 = vmatprep.subr.bf16.mxu0 %v1384
    %1698 = vmatpush1.bf16.msra.mxu0 %v1383
    %1699 = vmatprep.subr.bf16.mxu0 %v1388
    %1700 = vmatpush1.bf16.msra.mxu0 %v1387
    %1701 = vmatprep.subr.bf16.mxu0 %v1392
    %1702 = vmatpush1.bf16.msra.mxu0 %v1391
    %1703 = vmatprep.subr.bf16.mxu0 %v1396
    %1704 = vmatpush1.bf16.msra.mxu0 %v1395
    %1705 = vmatprep.subr.bf16.mxu0 %v1400
    %1706 = vmatpush1.bf16.msra.mxu0 %v1399
    %1707 = vmatprep.mubr.bf16.mxu0 %v920
    %1708 = vmatmul.mubr.bf16.gmra.mrb[0].mxu0 %v919
    %v1709 = vpop.f32.mrb[0].mxu0
    %v1710 = vadd.f32 %v1040, %v1709
    %v1711 = vpop.f32.mrb[0].mxu0
    %v1712 = vadd.f32 %v1044, %v1711
    %v1713 = vpop.f32.mrb[0].mxu0
    %v1714 = vadd.f32 %v1040, %v1713
    %v1715 = vpop.f32.mrb[0].mxu0
    %v1716 = vadd.f32 %v1044, %v1715
    %1717 = vmatprep.mubr.bf16.mxu0 %v923
    %1718 = vmatmul.mubr.bf16.gmra.mrb[0].mxu0 %v922
    %v1719 = vpop.f32.mrb[0].mxu0
    %v1720 = vadd.f32 %v1040, %v1719
    %v1721 = vpop.f32.mrb[0].mxu0
    %v1722 = vadd.f32 %v1044, %v1721
    %v1723 = vpop.f32.mrb[0].mxu0
    %v1724 = vadd.f32 %v1040, %v1723
    %v1725 = vpop.f32.mrb[0].mxu0
    %v1726 = vadd.f32 %v1044, %v1725
    %1727 = vmatprep.mubr.bf16.mxu0 %v926
    %1728 = vmatmul.mubr.bf16.gmra.mrb[0].mxu0 %v925
    %v1729 = vpop.f32.mrb[0].mxu0
    %v1730 = vadd.f32 %v1040, %v1729
    %v1731 = vpop.f32.mrb[0].mxu0
    %v1732 = vadd.f32 %v1044, %v1731
    %v1733 = vpop.f32.mrb[0].mxu0
    %v1734 = vadd.f32 %v1040, %v1733
    %v1735 = vpop.f32.mrb[0].mxu0
    %v1736 = vadd.f32 %v1044, %v1735
    %1737 = vmatprep.mubr.bf16.mxu0 %v929
    %1738 = vmatmul.mubr.bf16.gmra.mrb[0].mxu0 %v928
    %v1739 = vpop.f32.mrb[0].mxu0
    %v1740 = vadd.f32 %v1040, %v1739
    %v1741 = vpop.f32.mrb[0].mxu0
    %v1742 = vadd.f32 %v1044, %v1741
    %v1743 = vpop.f32.mrb[0].mxu0
    %v1744 = vadd.f32 %v1040, %v1743
    %v1745 = vpop.f32.mrb[0].mxu0
    %v1746 = vadd.f32 %v1044, %v1745
    %1747 = vdwg.mxu0
    %1748 = vmatprep.subr.bf16.mxu0 %v1404
    %1749 = vmatpush1.bf16.msra.mxu0 %v1403
    %1750 = vmatprep.subr.bf16.mxu0 %v1408
    %1751 = vmatpush1.bf16.msra.mxu0 %v1407
    %1752 = vmatprep.subr.bf16.mxu0 %v1412
    %1753 = vmatpush1.bf16.msra.mxu0 %v1411
    %1754 = vmatprep.subr.bf16.mxu0 %v1416
    %1755 = vmatpush1.bf16.msra.mxu0 %v1415
    %1756 = vmatprep.subr.bf16.mxu0 %v1420
    %1757 = vmatpush1.bf16.msra.mxu0 %v1419
    %1758 = vmatprep.subr.bf16.mxu0 %v1424
    %1759 = vmatpush1.bf16.msra.mxu0 %v1423
    %1760 = vmatprep.subr.bf16.mxu0 %v1428
    %1761 = vmatpush1.bf16.msra.mxu0 %v1427
    %1762 = vmatprep.subr.bf16.mxu0 %v1432
    %1763 = vmatpush1.bf16.msra.mxu0 %v1431
    %1764 = vmatprep.subr.bf16.mxu0 0
    %1765 = vmatpush1.bf16.msra.mxu0 0
    %1766 = vmatprep.subr.bf16.mxu0 0
    %1767 = vmatpush1.bf16.msra.mxu0 0
    %1768 = vmatprep.subr.bf16.mxu0 0
    %1769 = vmatpush1.bf16.msra.mxu0 0
    %1770 = vmatprep.subr.bf16.mxu0 0
    %1771 = vmatpush1.bf16.msra.mxu0 0
    %1772 = vmatprep.subr.bf16.mxu0 0
    %1773 = vmatpush1.bf16.msra.mxu0 0
    %1774 = vmatprep.subr.bf16.mxu0 0
    %1775 = vmatpush1.bf16.msra.mxu0 0
    %1776 = vmatprep.subr.bf16.mxu0 0
    %1777 = vmatpush1.bf16.msra.mxu0 0
    %1778 = vmatprep.subr.bf16.mxu0 0
    %1779 = vmatpush1.bf16.msra.mxu0 0
    %1780 = vmatprep.mubr.bf16.mxu0 0
    %1781 = vmatmul.mubr.bf16.gmra.mrb[0].mxu0 %v921
    %v1782 = vpop.f32.mrb[0].mxu0
    %v1783 = vadd.f32 %v1710, %v1782
    %v1784 = vpop.f32.mrb[0].mxu0
    %v1785 = vadd.f32 %v1712, %v1784
    %v1786 = vpop.f32.mrb[0].mxu0
    %v1787 = vadd.f32 %v1714, %v1786
    %v1788 = vpop.f32.mrb[0].mxu0
    %v1789 = vadd.f32 %v1716, %v1788
    %1790 = vmatprep.mubr.bf16.mxu0 0
    %1791 = vmatmul.mubr.bf16.gmra.mrb[0].mxu0 %v924
    %v1792 = vpop.f32.mrb[0].mxu0
    %v1793 = vadd.f32 %v1720, %v1792
    %v1794 = vpop.f32.mrb[0].mxu0
    %v1795 = vadd.f32 %v1722, %v1794
    %v1796 = vpop.f32.mrb[0].mxu0
    %v1797 = vadd.f32 %v1724, %v1796
    %v1798 = vpop.f32.mrb[0].mxu0
    %v1799 = vadd.f32 %v1726, %v1798
    %1800 = vmatprep.mubr.bf16.mxu0 0
    %1801 = vmatmul.mubr.bf16.gmra.mrb[0].mxu0 %v927
    %v1802 = vpop.f32.mrb[0].mxu0
    %v1803 = vadd.f32 %v1730, %v1802
    %v1804 = vpop.f32.mrb[0].mxu0
    %v1805 = vadd.f32 %v1732, %v1804
    %v1806 = vpop.f32.mrb[0].mxu0
    %v1807 = vadd.f32 %v1734, %v1806
    %v1808 = vpop.f32.mrb[0].mxu0
    %v1809 = vadd.f32 %v1736, %v1808
    %1810 = vmatprep.mubr.bf16.mxu0 0
    %1811 = vmatmul.mubr.bf16.gmra.mrb[0].mxu0 %v930
    %v1812 = vpop.f32.mrb[0].mxu0
    %v1813 = vadd.f32 %v1740, %v1812
    %v1814 = vpop.f32.mrb[0].mxu0
    %v1815 = vadd.f32 %v1742, %v1814
    %v1816 = vpop.f32.mrb[0].mxu0
    %v1817 = vadd.f32 %v1744, %v1816
    %v1818 = vpop.f32.mrb[0].mxu0
    %v1819 = vadd.f32 %v1746, %v1818
    %1820 = vdwg.mxu0
    %v1821 = vld [vmem:[#allocation6] sm:$0xff]
    %v1822 = vld [vmem:[#allocation6 + $0x8] sm:$0xff]
    %v1823 = vld [vmem:[#allocation6 + $0x10] sm:$0xff]
    %v1824 = vld [vmem:[#allocation6 + $0x18] sm:$0xff]
    %v1825 = vld [vmem:[#allocation6 + $0x20] sm:$0xff]
    %v1826 = vld [vmem:[#allocation6 + $0x28] sm:$0xff]
    %v1827 = vld [vmem:[#allocation6 + $0x30] sm:$0xff]
    %v1828 = vld [vmem:[#allocation6 + $0x38] sm:$0xff]
    %v1829 = vld [vmem:[#allocation6 + $0x40] sm:$0xff]
    %v1830 = vld [vmem:[#allocation6 + $0x48] sm:$0xff]
    %v1831 = vld [vmem:[#allocation6 + $0x50] sm:$0xff]
    %v1832 = vld [vmem:[#allocation6 + $0x58] sm:$0xff]
    %v1833 = vld [vmem:[#allocation6 + $0x60] sm:$0xff]
    %v1834 = vld [vmem:[#allocation6 + $0x68] sm:$0xff]
    %v1835 = vld [vmem:[#allocation6 + $0x70] sm:$0xff]
    %v1836 = vld [vmem:[#allocation6 + $0x78] sm:$0xff]
    %v1837 = vld [vmem:[#allocation6 + $0x80] sm:$0xff]
    %v1838 = vld [vmem:[#allocation6 + $0x88] sm:$0xff]
    %v1839 = vld [vmem:[#allocation6 + $0x90] sm:$0xff]
    %v1840 = vld [vmem:[#allocation6 + $0x98] sm:$0xff]
    %v1841 = vld [vmem:[#allocation6 + $0xa0] sm:$0xff]
    %v1842 = vld [vmem:[#allocation6 + $0xa8] sm:$0xff]
    %v1843 = vld [vmem:[#allocation6 + $0xb0] sm:$0xff]
    %v1844 = vld [vmem:[#allocation6 + $0xb8] sm:$0xff]
    %v1845 = vld [vmem:[#allocation6 + $0xc0] sm:$0xff]
    %v1846 = vld [vmem:[#allocation6 + $0xc8] sm:$0xff]
    %v1847 = vld [vmem:[#allocation6 + $0xd0] sm:$0xff]
    %v1848 = vld [vmem:[#allocation6 + $0xd8] sm:$0xff]
    %v1849 = vld [vmem:[#allocation6 + $0xe0] sm:$0xff]
    %v1850 = vld [vmem:[#allocation6 + $0xe8] sm:$0xff]
    %v1851 = vld [vmem:[#allocation6 + $0xf0] sm:$0xff]
    %v1852 = vld [vmem:[#allocation6 + $0xf8] sm:$0xff]
    %v1853 = vld [vmem:[#allocation6 + $0x100] sm:$0xff]
    %v1854 = vld [vmem:[#allocation6 + $0x108] sm:$0xff]
    %v1855 = vld [vmem:[#allocation6 + $0x110] sm:$0xff]
    %v1856 = vld [vmem:[#allocation6 + $0x118] sm:$0xff]
    %v1857 = vld [vmem:[#allocation6 + $0x120] sm:$0xff]
    %v1858 = vld [vmem:[#allocation6 + $0x128] sm:$0xff]
    %v1859 = vld [vmem:[#allocation6 + $0x130] sm:$0xff]
    %v1860 = vld [vmem:[#allocation6 + $0x138] sm:$0xff]
    %v1861 = vld [vmem:[#allocation6 + $0x140] sm:$0xff]
    %v1862 = vld [vmem:[#allocation6 + $0x148] sm:$0xff]
    %v1863 = vld [vmem:[#allocation6 + $0x150] sm:$0xff]
    %v1864 = vld [vmem:[#allocation6 + $0x158] sm:$0xff]
    %v1865 = vld [vmem:[#allocation6 + $0x160] sm:$0xff]
    %v1866 = vld [vmem:[#allocation6 + $0x168] sm:$0xff]
    %v1867 = vld [vmem:[#allocation6 + $0x170] sm:$0xff]
    %v1868 = vld [vmem:[#allocation6 + $0x178] sm:$0xff]
    %v1869 = vld [vmem:[#allocation6 + $0x180] sm:$0xff]
    %v1870 = vld [vmem:[#allocation6 + $0x188] sm:$0xff]
    %v1871 = vld [vmem:[#allocation6 + $0x190] sm:$0xff]
    %v1872 = vld [vmem:[#allocation6 + $0x198] sm:$0xff]
    %v1873 = vld [vmem:[#allocation6 + $0x1a0] sm:$0xff]
    %v1874 = vld [vmem:[#allocation6 + $0x1a8] sm:$0xff]
    %v1875 = vld [vmem:[#allocation6 + $0x1b0] sm:$0xff]
    %v1876 = vld [vmem:[#allocation6 + $0x1b8] sm:$0xff]
    %v1877 = vld [vmem:[#allocation6 + $0x1c0] sm:$0xff]
    %v1878 = vld [vmem:[#allocation6 + $0x1c8] sm:$0xff]
    %v1879 = vld [vmem:[#allocation6 + $0x1d0] sm:$0xff]
    %v1880 = vld [vmem:[#allocation6 + $0x1d8] sm:$0xff]
    %v1881 = vld [vmem:[#allocation6 + $0x1e0] sm:$0xff]
    %v1882 = vld [vmem:[#allocation6 + $0x1e8] sm:$0xff]
    %v1883 = vld [vmem:[#allocation6 + $0x1f0] sm:$0xff]
    %v1884 = vld [vmem:[#allocation6 + $0x1f8] sm:$0xff]
    %v1885 = vld [vmem:[#allocation6 + $0x200] sm:$0xff]
    %v1886 = vld [vmem:[#allocation6 + $0x208] sm:$0xff]
    %v1887 = vld [vmem:[#allocation6 + $0x210] sm:$0xff]
    %v1888 = vld [vmem:[#allocation6 + $0x218] sm:$0xff]
    %v1889 = vld [vmem:[#allocation6 + $0x220] sm:$0xff]
    %v1890 = vld [vmem:[#allocation6 + $0x228] sm:$0xff]
    %v1891 = vld [vmem:[#allocation6 + $0x230] sm:$0xff]
    %v1892 = vld [vmem:[#allocation6 + $0x238] sm:$0xff]
    %v1893 = vld [vmem:[#allocation6 + $0x240] sm:$0xff]
    %v1894 = vld [vmem:[#allocation6 + $0x248] sm:$0xff]
    %v1895 = vld [vmem:[#allocation6 + $0x250] sm:$0xff]
    %v1896 = vld [vmem:[#allocation6 + $0x258] sm:$0xff]
    %v1897 = vld [vmem:[#allocation6 + $0x260] sm:$0xff]
    %v1898 = vld [vmem:[#allocation6 + $0x268] sm:$0xff]
    %v1899 = vld [vmem:[#allocation6 + $0x270] sm:$0xff]
    %v1900 = vld [vmem:[#allocation6 + $0x278] sm:$0xff]
    %v1901 = vld [vmem:[#allocation6 + $0x280] sm:$0xff]
    %v1902 = vld [vmem:[#allocation6 + $0x288] sm:$0xff]
    %v1903 = vld [vmem:[#allocation6 + $0x290] sm:$0xff]
    %v1904 = vld [vmem:[#allocation6 + $0x298] sm:$0xff]
    %v1905 = vld [vmem:[#allocation6 + $0x2a0] sm:$0xff]
    %v1906 = vld [vmem:[#allocation6 + $0x2a8] sm:$0xff]
    %v1907 = vld [vmem:[#allocation6 + $0x2b0] sm:$0xff]
    %v1908 = vld [vmem:[#allocation6 + $0x2b8] sm:$0xff]
    %v1909 = vld [vmem:[#allocation6 + $0x2c0] sm:$0xff]
    %v1910 = vld [vmem:[#allocation6 + $0x2c8] sm:$0xff]
    %v1911 = vld [vmem:[#allocation6 + $0x2d0] sm:$0xff]
    %v1912 = vld [vmem:[#allocation6 + $0x2d8] sm:$0xff]
    %v1913 = vld [vmem:[#allocation6 + $0x2e0] sm:$0xff]
    %v1914 = vld [vmem:[#allocation6 + $0x2e8] sm:$0xff]
    %v1915 = vld [vmem:[#allocation6 + $0x2f0] sm:$0xff]
    %v1916 = vld [vmem:[#allocation6 + $0x2f8] sm:$0xff]
    %v2013 = vunpack.c.l.b16 %v1821
    %v2014 = vunpack.c.h.b16 %v1821
    %v2015 = vunpack.c.l.b16 %v1822
    %v2016 = vunpack.c.h.b16 %v1822
    %v2017 = vunpack.c.l.b16 %v1823
    %v2018 = vunpack.c.h.b16 %v1823
    %v2019 = vunpack.c.l.b16 %v1824
    %v2020 = vunpack.c.h.b16 %v1824
    %v2021 = vunpack.c.l.b16 %v1825
    %v2022 = vunpack.c.h.b16 %v1825
    %v2023 = vunpack.c.l.b16 %v1826
    %v2024 = vunpack.c.h.b16 %v1826
    %v2025 = vunpack.c.l.b16 %v1827
    %v2026 = vunpack.c.h.b16 %v1827
    %v2027 = vunpack.c.l.b16 %v1828
    %v2028 = vunpack.c.h.b16 %v1828
    %v2029 = vunpack.c.l.b16 %v1829
    %v2030 = vunpack.c.h.b16 %v1829
    %v2031 = vunpack.c.l.b16 %v1830
    %v2032 = vunpack.c.h.b16 %v1830
    %v2033 = vunpack.c.l.b16 %v1831
    %v2034 = vunpack.c.h.b16 %v1831
    %v2035 = vunpack.c.l.b16 %v1832
    %v2036 = vunpack.c.h.b16 %v1832
    %v2037 = vunpack.c.l.b16 %v1833
    %v2038 = vunpack.c.h.b16 %v1833
    %v2039 = vunpack.c.l.b16 %v1834
    %v2040 = vunpack.c.h.b16 %v1834
    %v2041 = vunpack.c.l.b16 %v1835
    %v2042 = vunpack.c.h.b16 %v1835
    %v2043 = vunpack.c.l.b16 %v1836
    %v2044 = vunpack.c.h.b16 %v1836
    %v2045 = vunpack.c.l.b16 %v1837
    %v2046 = vunpack.c.h.b16 %v1837
    %v2047 = vunpack.c.l.b16 %v1838
    %v2048 = vunpack.c.h.b16 %v1838
    %v2049 = vunpack.c.l.b16 %v1839
    %v2050 = vunpack.c.h.b16 %v1839
    %v2051 = vunpack.c.l.b16 %v1840
    %v2052 = vunpack.c.h.b16 %v1840
    %v2053 = vunpack.c.l.b16 %v1841
    %v2054 = vunpack.c.h.b16 %v1841
    %v2055 = vunpack.c.l.b16 %v1842
    %v2056 = vunpack.c.h.b16 %v1842
    %v2057 = vunpack.c.l.b16 %v1843
    %v2058 = vunpack.c.h.b16 %v1843
    %v2059 = vunpack.c.l.b16 %v1844
    %v2060 = vunpack.c.h.b16 %v1844
    %v2061 = vunpack.c.l.b16 %v1845
    %v2062 = vunpack.c.h.b16 %v1845
    %v2063 = vunpack.c.l.b16 %v1846
    %v2064 = vunpack.c.h.b16 %v1846
    %v2065 = vunpack.c.l.b16 %v1847
    %v2066 = vunpack.c.h.b16 %v1847
    %v2067 = vunpack.c.l.b16 %v1848
    %v2068 = vunpack.c.h.b16 %v1848
    %v2069 = vunpack.c.l.b16 %v1849
    %v2070 = vunpack.c.h.b16 %v1849
    %v2071 = vunpack.c.l.b16 %v1850
    %v2072 = vunpack.c.h.b16 %v1850
    %v2073 = vunpack.c.l.b16 %v1851
    %v2074 = vunpack.c.h.b16 %v1851
    %v2075 = vunpack.c.l.b16 %v1852
    %v2076 = vunpack.c.h.b16 %v1852
    %v2077 = vunpack.c.l.b16 %v1853
    %v2078 = vunpack.c.h.b16 %v1853
    %v2079 = vunpack.c.l.b16 %v1854
    %v2080 = vunpack.c.h.b16 %v1854
    %v2081 = vunpack.c.l.b16 %v1855
    %v2082 = vunpack.c.h.b16 %v1855
    %v2083 = vunpack.c.l.b16 %v1856
    %v2084 = vunpack.c.h.b16 %v1856
    %v2085 = vunpack.c.l.b16 %v1857
    %v2086 = vunpack.c.h.b16 %v1857
    %v2087 = vunpack.c.l.b16 %v1858
    %v2088 = vunpack.c.h.b16 %v1858
    %v2089 = vunpack.c.l.b16 %v1859
    %v2090 = vunpack.c.h.b16 %v1859
    %v2091 = vunpack.c.l.b16 %v1860
    %v2092 = vunpack.c.h.b16 %v1860
    %v2093 = vunpack.c.l.b16 %v1861
    %v2094 = vunpack.c.h.b16 %v1861
    %v2095 = vunpack.c.l.b16 %v1862
    %v2096 = vunpack.c.h.b16 %v1862
    %v2097 = vunpack.c.l.b16 %v1863
    %v2098 = vunpack.c.h.b16 %v1863
    %v2099 = vunpack.c.l.b16 %v1864
    %v2100 = vunpack.c.h.b16 %v1864
    %v2101 = vunpack.c.l.b16 %v1865
    %v2102 = vunpack.c.h.b16 %v1865
    %v2103 = vunpack.c.l.b16 %v1866
    %v2104 = vunpack.c.h.b16 %v1866
    %v2105 = vunpack.c.l.b16 %v1867
    %v2106 = vunpack.c.h.b16 %v1867
    %v2107 = vunpack.c.l.b16 %v1868
    %v2108 = vunpack.c.h.b16 %v1868
    %v2109 = vunpack.c.l.b16 %v1869
    %v2110 = vunpack.c.h.b16 %v1869
    %v2111 = vunpack.c.l.b16 %v1870
    %v2112 = vunpack.c.h.b16 %v1870
    %v2113 = vunpack.c.l.b16 %v1871
    %v2114 = vunpack.c.h.b16 %v1871
    %v2115 = vunpack.c.l.b16 %v1872
    %v2116 = vunpack.c.h.b16 %v1872
    %v2117 = vunpack.c.l.b16 %v1873
    %v2118 = vunpack.c.h.b16 %v1873
    %v2119 = vunpack.c.l.b16 %v1874
    %v2120 = vunpack.c.h.b16 %v1874
    %v2121 = vunpack.c.l.b16 %v1875
    %v2122 = vunpack.c.h.b16 %v1875
    %v2123 = vunpack.c.l.b16 %v1876
    %v2124 = vunpack.c.h.b16 %v1876
    %v2125 = vunpack.c.l.b16 %v1877
    %v2126 = vunpack.c.h.b16 %v1877
    %v2127 = vunpack.c.l.b16 %v1878
    %v2128 = vunpack.c.h.b16 %v1878
    %v2129 = vunpack.c.l.b16 %v1879
    %v2130 = vunpack.c.h.b16 %v1879
    %v2131 = vunpack.c.l.b16 %v1880
    %v2132 = vunpack.c.h.b16 %v1880
    %v2133 = vunpack.c.l.b16 %v1881
    %v2134 = vunpack.c.h.b16 %v1881
    %v2135 = vunpack.c.l.b16 %v1882
    %v2136 = vunpack.c.h.b16 %v1882
    %v2137 = vunpack.c.l.b16 %v1883
    %v2138 = vunpack.c.h.b16 %v1883
    %v2139 = vunpack.c.l.b16 %v1884
    %v2140 = vunpack.c.h.b16 %v1884
    %v2141 = vunpack.c.l.b16 %v1885
    %v2142 = vunpack.c.h.b16 %v1885
    %v2143 = vunpack.c.l.b16 %v1886
    %v2144 = vunpack.c.h.b16 %v1886
    %v2145 = vunpack.c.l.b16 %v1887
    %v2146 = vunpack.c.h.b16 %v1887
    %v2147 = vunpack.c.l.b16 %v1888
    %v2148 = vunpack.c.h.b16 %v1888
    %v2149 = vunpack.c.l.b16 %v1889
    %v2150 = vunpack.c.h.b16 %v1889
    %v2151 = vunpack.c.l.b16 %v1890
    %v2152 = vunpack.c.h.b16 %v1890
    %v2153 = vunpack.c.l.b16 %v1891
    %v2154 = vunpack.c.h.b16 %v1891
    %v2155 = vunpack.c.l.b16 %v1892
    %v2156 = vunpack.c.h.b16 %v1892
    %v2157 = vunpack.c.l.b16 %v1893
    %v2158 = vunpack.c.h.b16 %v1893
    %v2159 = vunpack.c.l.b16 %v1894
    %v2160 = vunpack.c.h.b16 %v1894
    %v2161 = vunpack.c.l.b16 %v1895
    %v2162 = vunpack.c.h.b16 %v1895
    %v2163 = vunpack.c.l.b16 %v1896
    %v2164 = vunpack.c.h.b16 %v1896
    %v2165 = vunpack.c.l.b16 %v1897
    %v2166 = vunpack.c.h.b16 %v1897
    %v2167 = vunpack.c.l.b16 %v1898
    %v2168 = vunpack.c.h.b16 %v1898
    %v2169 = vunpack.c.l.b16 %v1899
    %v2170 = vunpack.c.h.b16 %v1899
    %v2171 = vunpack.c.l.b16 %v1900
    %v2172 = vunpack.c.h.b16 %v1900
    %v2173 = vunpack.c.l.b16 %v1901
    %v2174 = vunpack.c.h.b16 %v1901
    %v2175 = vunpack.c.l.b16 %v1902
    %v2176 = vunpack.c.h.b16 %v1902
    %v2177 = vunpack.c.l.b16 %v1903
    %v2178 = vunpack.c.h.b16 %v1903
    %v2179 = vunpack.c.l.b16 %v1904
    %v2180 = vunpack.c.h.b16 %v1904
    %v2181 = vunpack.c.l.b16 %v1905
    %v2182 = vunpack.c.h.b16 %v1905
    %v2183 = vunpack.c.l.b16 %v1906
    %v2184 = vunpack.c.h.b16 %v1906
    %v2185 = vunpack.c.l.b16 %v1907
    %v2186 = vunpack.c.h.b16 %v1907
    %v2187 = vunpack.c.l.b16 %v1908
    %v2188 = vunpack.c.h.b16 %v1908
    %v2189 = vunpack.c.l.b16 %v1909
    %v2190 = vunpack.c.h.b16 %v1909
    %v2191 = vunpack.c.l.b16 %v1910
    %v2192 = vunpack.c.h.b16 %v1910
    %v2193 = vunpack.c.l.b16 %v1911
    %v2194 = vunpack.c.h.b16 %v1911
    %v2195 = vunpack.c.l.b16 %v1912
    %v2196 = vunpack.c.h.b16 %v1912
    %v2197 = vunpack.c.l.b16 %v1913
    %v2198 = vunpack.c.h.b16 %v1913
    %v2199 = vunpack.c.l.b16 %v1914
    %v2200 = vunpack.c.h.b16 %v1914
    %v2201 = vunpack.c.l.b16 %v1915
    %v2202 = vunpack.c.h.b16 %v1915
    %v2203 = vunpack.c.l.b16 %v1916
    %v2204 = vunpack.c.h.b16 %v1916
    %v2205 = vpack.c.b16 %v2017, %v2013
    %v2206 = vpack.c.b16 %v2018, %v2014
    %v2207 = vpack.c.b16 %v2019, %v2015
    %v2208 = vpack.c.b16 %v2020, %v2016
    %v2209 = vpack.c.b16 %v2025, %v2021
    %v2210 = vpack.c.b16 %v2026, %v2022
    %v2211 = vpack.c.b16 %v2027, %v2023
    %v2212 = vpack.c.b16 %v2028, %v2024
    %v2213 = vpack.c.b16 %v2033, %v2029
    %v2214 = vpack.c.b16 %v2034, %v2030
    %v2215 = vpack.c.b16 %v2035, %v2031
    %v2216 = vpack.c.b16 %v2036, %v2032
    %v2217 = vpack.c.b16 %v2041, %v2037
    %v2218 = vpack.c.b16 %v2042, %v2038
    %v2219 = vpack.c.b16 %v2043, %v2039
    %v2220 = vpack.c.b16 %v2044, %v2040
    %v2221 = vpack.c.b16 %v2049, %v2045
    %v2222 = vpack.c.b16 %v2050, %v2046
    %v2223 = vpack.c.b16 %v2051, %v2047
    %v2224 = vpack.c.b16 %v2052, %v2048
    %v2225 = vpack.c.b16 %v2057, %v2053
    %v2226 = vpack.c.b16 %v2058, %v2054
    %v2227 = vpack.c.b16 %v2059, %v2055
    %v2228 = vpack.c.b16 %v2060, %v2056
    %v2229 = vpack.c.b16 %v2065, %v2061
    %v2230 = vpack.c.b16 %v2066, %v2062
    %v2231 = vpack.c.b16 %v2067, %v2063
    %v2232 = vpack.c.b16 %v2068, %v2064
    %v2233 = vpack.c.b16 %v2073, %v2069
    %v2234 = vpack.c.b16 %v2074, %v2070
    %v2235 = vpack.c.b16 %v2075, %v2071
    %v2236 = vpack.c.b16 %v2076, %v2072
    %v2237 = vpack.c.b16 %v2081, %v2077
    %v2238 = vpack.c.b16 %v2082, %v2078
    %v2239 = vpack.c.b16 %v2083, %v2079
    %v2240 = vpack.c.b16 %v2084, %v2080
    %v2241 = vpack.c.b16 %v2089, %v2085
    %v2242 = vpack.c.b16 %v2090, %v2086
    %v2243 = vpack.c.b16 %v2091, %v2087
    %v2244 = vpack.c.b16 %v2092, %v2088
    %v2245 = vpack.c.b16 %v2097, %v2093
    %v2246 = vpack.c.b16 %v2098, %v2094
    %v2247 = vpack.c.b16 %v2099, %v2095
    %v2248 = vpack.c.b16 %v2100, %v2096
    %v2249 = vpack.c.b16 %v2105, %v2101
    %v2250 = vpack.c.b16 %v2106, %v2102
    %v2251 = vpack.c.b16 %v2107, %v2103
    %v2252 = vpack.c.b16 %v2108, %v2104
    %v2253 = vpack.c.b16 %v2113, %v2109
    %v2254 = vpack.c.b16 %v2114, %v2110
    %v2255 = vpack.c.b16 %v2115, %v2111
    %v2256 = vpack.c.b16 %v2116, %v2112
    %v2257 = vpack.c.b16 %v2121, %v2117
    %v2258 = vpack.c.b16 %v2122, %v2118
    %v2259 = vpack.c.b16 %v2123, %v2119
    %v2260 = vpack.c.b16 %v2124, %v2120
    %v2261 = vpack.c.b16 %v2129, %v2125
    %v2262 = vpack.c.b16 %v2130, %v2126
    %v2263 = vpack.c.b16 %v2131, %v2127
    %v2264 = vpack.c.b16 %v2132, %v2128
    %v2265 = vpack.c.b16 %v2137, %v2133
    %v2266 = vpack.c.b16 %v2138, %v2134
    %v2267 = vpack.c.b16 %v2139, %v2135
    %v2268 = vpack.c.b16 %v2140, %v2136
    %v2269 = vpack.c.b16 %v2145, %v2141
    %v2270 = vpack.c.b16 %v2146, %v2142
    %v2271 = vpack.c.b16 %v2147, %v2143
    %v2272 = vpack.c.b16 %v2148, %v2144
    %v2273 = vpack.c.b16 %v2153, %v2149
    %v2274 = vpack.c.b16 %v2154, %v2150
    %v2275 = vpack.c.b16 %v2155, %v2151
    %v2276 = vpack.c.b16 %v2156, %v2152
    %v2277 = vpack.c.b16 %v2161, %v2157
    %v2278 = vpack.c.b16 %v2162, %v2158
    %v2279 = vpack.c.b16 %v2163, %v2159
    %v2280 = vpack.c.b16 %v2164, %v2160
    %v2281 = vpack.c.b16 %v2169, %v2165
    %v2282 = vpack.c.b16 %v2170, %v2166
    %v2283 = vpack.c.b16 %v2171, %v2167
    %v2284 = vpack.c.b16 %v2172, %v2168
    %v2285 = vpack.c.b16 %v2177, %v2173
    %v2286 = vpack.c.b16 %v2178, %v2174
    %v2287 = vpack.c.b16 %v2179, %v2175
    %v2288 = vpack.c.b16 %v2180, %v2176
    %v2289 = vpack.c.b16 %v2185, %v2181
    %v2290 = vpack.c.b16 %v2186, %v2182
    %v2291 = vpack.c.b16 %v2187, %v2183
    %v2292 = vpack.c.b16 %v2188, %v2184
    %v2293 = vpack.c.b16 %v2193, %v2189
    %v2294 = vpack.c.b16 %v2194, %v2190
    %v2295 = vpack.c.b16 %v2195, %v2191
    %v2296 = vpack.c.b16 %v2196, %v2192
    %v2297 = vpack.c.b16 %v2201, %v2197
    %v2298 = vpack.c.b16 %v2202, %v2198
    %v2299 = vpack.c.b16 %v2203, %v2199
    %v2300 = vpack.c.b16 %v2204, %v2200
    %2397 = vmatprep.subr.bf16.mxu0 %v2206
    %2398 = vmatpush1.bf16.msra.mxu0 %v2205
    %2399 = vmatprep.subr.bf16.mxu0 %v2210
    %2400 = vmatpush1.bf16.msra.mxu0 %v2209
    %2401 = vmatprep.subr.bf16.mxu0 %v2214
    %2402 = vmatpush1.bf16.msra.mxu0 %v2213
    %2403 = vmatprep.subr.bf16.mxu0 %v2218
    %2404 = vmatpush1.bf16.msra.mxu0 %v2217
    %2405 = vmatprep.subr.bf16.mxu0 %v2222
    %2406 = vmatpush1.bf16.msra.mxu0 %v2221
    %2407 = vmatprep.subr.bf16.mxu0 %v2226
    %2408 = vmatpush1.bf16.msra.mxu0 %v2225
    %2409 = vmatprep.subr.bf16.mxu0 %v2230
    %2410 = vmatpush1.bf16.msra.mxu0 %v2229
    %2411 = vmatprep.subr.bf16.mxu0 %v2234
    %2412 = vmatpush1.bf16.msra.mxu0 %v2233
    %2413 = vmatprep.subr.bf16.mxu0 %v2238
    %2414 = vmatpush1.bf16.msra.mxu0 %v2237
    %2415 = vmatprep.subr.bf16.mxu0 %v2242
    %2416 = vmatpush1.bf16.msra.mxu0 %v2241
    %2417 = vmatprep.subr.bf16.mxu0 %v2246
    %2418 = vmatpush1.bf16.msra.mxu0 %v2245
    %2419 = vmatprep.subr.bf16.mxu0 %v2250
    %2420 = vmatpush1.bf16.msra.mxu0 %v2249
    %2421 = vmatprep.subr.bf16.mxu0 %v2254
    %2422 = vmatpush1.bf16.msra.mxu0 %v2253
    %2423 = vmatprep.subr.bf16.mxu0 %v2258
    %2424 = vmatpush1.bf16.msra.mxu0 %v2257
    %2425 = vmatprep.subr.bf16.mxu0 %v2262
    %2426 = vmatpush1.bf16.msra.mxu0 %v2261
    %2427 = vmatprep.subr.bf16.mxu0 %v2266
    %2428 = vmatpush1.bf16.msra.mxu0 %v2265
    %2429 = vmatprep.mubr.bf16.mxu0 %v920
    %2430 = vmatmul.mubr.bf16.gmra.mrb[0].mxu0 %v919
    %v2431 = vpop.f32.mrb[0].mxu0
    %v2432 = vadd.f32 0.0, %v2431
    %v2433 = vpop.f32.mrb[0].mxu0
    %v2434 = vadd.f32 0.0, %v2433
    %v2435 = vpop.f32.mrb[0].mxu0
    %v2436 = vadd.f32 0.0, %v2435
    %v2437 = vpop.f32.mrb[0].mxu0
    %v2438 = vadd.f32 0.0, %v2437
    %2439 = vmatprep.mubr.bf16.mxu0 %v923
    %2440 = vmatmul.mubr.bf16.gmra.mrb[0].mxu0 %v922
    %v2441 = vpop.f32.mrb[0].mxu0
    %v2442 = vadd.f32 0.0, %v2441
    %v2443 = vpop.f32.mrb[0].mxu0
    %v2444 = vadd.f32 0.0, %v2443
    %v2445 = vpop.f32.mrb[0].mxu0
    %v2446 = vadd.f32 0.0, %v2445
    %v2447 = vpop.f32.mrb[0].mxu0
    %v2448 = vadd.f32 0.0, %v2447
    %2449 = vmatprep.mubr.bf16.mxu0 %v926
    %2450 = vmatmul.mubr.bf16.gmra.mrb[0].mxu0 %v925
    %v2451 = vpop.f32.mrb[0].mxu0
    %v2452 = vadd.f32 0.0, %v2451
    %v2453 = vpop.f32.mrb[0].mxu0
    %v2454 = vadd.f32 0.0, %v2453
    %v2455 = vpop.f32.mrb[0].mxu0
    %v2456 = vadd.f32 0.0, %v2455
    %v2457 = vpop.f32.mrb[0].mxu0
    %v2458 = vadd.f32 0.0, %v2457
    %2459 = vmatprep.mubr.bf16.mxu0 %v929
    %2460 = vmatmul.mubr.bf16.gmra.mrb[0].mxu0 %v928
    %v2461 = vpop.f32.mrb[0].mxu0
    %v2462 = vadd.f32 0.0, %v2461
    %v2463 = vpop.f32.mrb[0].mxu0
    %v2464 = vadd.f32 0.0, %v2463
    %v2465 = vpop.f32.mrb[0].mxu0
    %v2466 = vadd.f32 0.0, %v2465
    %v2467 = vpop.f32.mrb[0].mxu0
    %v2468 = vadd.f32 0.0, %v2467
    %2469 = vdwg.mxu0
    %2470 = vmatprep.subr.bf16.mxu0 %v2270
    %2471 = vmatpush1.bf16.msra.mxu0 %v2269
    %2472 = vmatprep.subr.bf16.mxu0 %v2274
    %2473 = vmatpush1.bf16.msra.mxu0 %v2273
    %2474 = vmatprep.subr.bf16.mxu0 %v2278
    %2475 = vmatpush1.bf16.msra.mxu0 %v2277
    %2476 = vmatprep.subr.bf16.mxu0 %v2282
    %2477 = vmatpush1.bf16.msra.mxu0 %v2281
    %2478 = vmatprep.subr.bf16.mxu0 %v2286
    %2479 = vmatpush1.bf16.msra.mxu0 %v2285
    %2480 = vmatprep.subr.bf16.mxu0 %v2290
    %2481 = vmatpush1.bf16.msra.mxu0 %v2289
    %2482 = vmatprep.subr.bf16.mxu0 %v2294
    %2483 = vmatpush1.bf16.msra.mxu0 %v2293
    %2484 = vmatprep.subr.bf16.mxu0 %v2298
    %2485 = vmatpush1.bf16.msra.mxu0 %v2297
    %2486 = vmatprep.subr.bf16.mxu0 0
    %2487 = vmatpush1.bf16.msra.mxu0 0
    %2488 = vmatprep.subr.bf16.mxu0 0
    %2489 = vmatpush1.bf16.msra.mxu0 0
    %2490 = vmatprep.subr.bf16.mxu0 0
    %2491 = vmatpush1.bf16.msra.mxu0 0
    %2492 = vmatprep.subr.bf16.mxu0 0
    %2493 = vmatpush1.bf16.msra.mxu0 0
    %2494 = vmatprep.subr.bf16.mxu0 0
    %2495 = vmatpush1.bf16.msra.mxu0 0
    %2496 = vmatprep.subr.bf16.mxu0 0
    %2497 = vmatpush1.bf16.msra.mxu0 0
    %2498 = vmatprep.subr.bf16.mxu0 0
    %2499 = vmatpush1.bf16.msra.mxu0 0
    %2500 = vmatprep.subr.bf16.mxu0 0
    %2501 = vmatpush1.bf16.msra.mxu0 0
    %2502 = vmatprep.mubr.bf16.mxu0 0
    %2503 = vmatmul.mubr.bf16.gmra.mrb[0].mxu0 %v921
    %v2504 = vpop.f32.mrb[0].mxu0
    %v2505 = vadd.f32 %v2432, %v2504
    %v2506 = vpop.f32.mrb[0].mxu0
    %v2507 = vadd.f32 %v2434, %v2506
    %v2508 = vpop.f32.mrb[0].mxu0
    %v2509 = vadd.f32 %v2436, %v2508
    %v2510 = vpop.f32.mrb[0].mxu0
    %v2511 = vadd.f32 %v2438, %v2510
    %2512 = vmatprep.mubr.bf16.mxu0 0
    %2513 = vmatmul.mubr.bf16.gmra.mrb[0].mxu0 %v924
    %v2514 = vpop.f32.mrb[0].mxu0
    %v2515 = vadd.f32 %v2442, %v2514
    %v2516 = vpop.f32.mrb[0].mxu0
    %v2517 = vadd.f32 %v2444, %v2516
    %v2518 = vpop.f32.mrb[0].mxu0
    %v2519 = vadd.f32 %v2446, %v2518
    %v2520 = vpop.f32.mrb[0].mxu0
    %v2521 = vadd.f32 %v2448, %v2520
    %2522 = vmatprep.mubr.bf16.mxu0 0
    %2523 = vmatmul.mubr.bf16.gmra.mrb[0].mxu0 %v927
    %v2524 = vpop.f32.mrb[0].mxu0
    %v2525 = vadd.f32 %v2452, %v2524
    %v2526 = vpop.f32.mrb[0].mxu0
    %v2527 = vadd.f32 %v2454, %v2526
    %v2528 = vpop.f32.mrb[0].mxu0
    %v2529 = vadd.f32 %v2456, %v2528
    %v2530 = vpop.f32.mrb[0].mxu0
    %v2531 = vadd.f32 %v2458, %v2530
    %2532 = vmatprep.mubr.bf16.mxu0 0
    %2533 = vmatmul.mubr.bf16.gmra.mrb[0].mxu0 %v930
    %v2534 = vpop.f32.mrb[0].mxu0
    %v2535 = vadd.f32 %v2462, %v2534
    %v2536 = vpop.f32.mrb[0].mxu0
    %v2537 = vadd.f32 %v2464, %v2536
    %v2538 = vpop.f32.mrb[0].mxu0
    %v2539 = vadd.f32 %v2466, %v2538
    %v2540 = vpop.f32.mrb[0].mxu0
    %v2541 = vadd.f32 %v2468, %v2540
    %2542 = vdwg.mxu0
    %2543 = vmatprep.subr.bf16.mxu0 %v2208
    %2544 = vmatpush1.bf16.msra.mxu0 %v2207
    %2545 = vmatprep.subr.bf16.mxu0 %v2212
    %2546 = vmatpush1.bf16.msra.mxu0 %v2211
    %2547 = vmatprep.subr.bf16.mxu0 %v2216
    %2548 = vmatpush1.bf16.msra.mxu0 %v2215
    %2549 = vmatprep.subr.bf16.mxu0 %v2220
    %2550 = vmatpush1.bf16.msra.mxu0 %v2219
    %2551 = vmatprep.subr.bf16.mxu0 %v2224
    %2552 = vmatpush1.bf16.msra.mxu0 %v2223
    %2553 = vmatprep.subr.bf16.mxu0 %v2228
    %2554 = vmatpush1.bf16.msra.mxu0 %v2227
    %2555 = vmatprep.subr.bf16.mxu0 %v2232
    %2556 = vmatpush1.bf16.msra.mxu0 %v2231
    %2557 = vmatprep.subr.bf16.mxu0 %v2236
    %2558 = vmatpush1.bf16.msra.mxu0 %v2235
    %2559 = vmatprep.subr.bf16.mxu0 %v2240
    %2560 = vmatpush1.bf16.msra.mxu0 %v2239
    %2561 = vmatprep.subr.bf16.mxu0 %v2244
    %2562 = vmatpush1.bf16.msra.mxu0 %v2243
    %2563 = vmatprep.subr.bf16.mxu0 %v2248
    %2564 = vmatpush1.bf16.msra.mxu0 %v2247
    %2565 = vmatprep.subr.bf16.mxu0 %v2252
    %2566 = vmatpush1.bf16.msra.mxu0 %v2251
    %2567 = vmatprep.subr.bf16.mxu0 %v2256
    %2568 = vmatpush1.bf16.msra.mxu0 %v2255
    %2569 = vmatprep.subr.bf16.mxu0 %v2260
    %2570 = vmatpush1.bf16.msra.mxu0 %v2259
    %2571 = vmatprep.subr.bf16.mxu0 %v2264
    %2572 = vmatpush1.bf16.msra.mxu0 %v2263
    %2573 = vmatprep.subr.bf16.mxu0 %v2268
    %2574 = vmatpush1.bf16.msra.mxu0 %v2267
    %2575 = vmatprep.mubr.bf16.mxu0 %v920
    %2576 = vmatmul.mubr.bf16.gmra.mrb[0].mxu0 %v919
    %v2577 = vpop.f32.mrb[0].mxu0
    %v2578 = vadd.f32 0.0, %v2577
    %v2579 = vpop.f32.mrb[0].mxu0
    %v2580 = vadd.f32 0.0, %v2579
    %v2581 = vpop.f32.mrb[0].mxu0
    %v2582 = vadd.f32 0.0, %v2581
    %v2583 = vpop.f32.mrb[0].mxu0
    %v2584 = vadd.f32 0.0, %v2583
    %2585 = vmatprep.mubr.bf16.mxu0 %v923
    %2586 = vmatmul.mubr.bf16.gmra.mrb[0].mxu0 %v922
    %v2587 = vpop.f32.mrb[0].mxu0
    %v2588 = vadd.f32 0.0, %v2587
    %v2589 = vpop.f32.mrb[0].mxu0
    %v2590 = vadd.f32 0.0, %v2589
    %v2591 = vpop.f32.mrb[0].mxu0
    %v2592 = vadd.f32 0.0, %v2591
    %v2593 = vpop.f32.mrb[0].mxu0
    %v2594 = vadd.f32 0.0, %v2593
    %2595 = vmatprep.mubr.bf16.mxu0 %v926
    %2596 = vmatmul.mubr.bf16.gmra.mrb[0].mxu0 %v925
    %v2597 = vpop.f32.mrb[0].mxu0
    %v2598 = vadd.f32 0.0, %v2597
    %v2599 = vpop.f32.mrb[0].mxu0
    %v2600 = vadd.f32 0.0, %v2599
    %v2601 = vpop.f32.mrb[0].mxu0
    %v2602 = vadd.f32 0.0, %v2601
    %v2603 = vpop.f32.mrb[0].mxu0
    %v2604 = vadd.f32 0.0, %v2603
    %2605 = vmatprep.mubr.bf16.mxu0 %v929
    %2606 = vmatmul.mubr.bf16.gmra.mrb[0].mxu0 %v928
    %v2607 = vpop.f32.mrb[0].mxu0
    %v2608 = vadd.f32 0.0, %v2607
    %v2609 = vpop.f32.mrb[0].mxu0
    %v2610 = vadd.f32 0.0, %v2609
    %v2611 = vpop.f32.mrb[0].mxu0
    %v2612 = vadd.f32 0.0, %v2611
    %v2613 = vpop.f32.mrb[0].mxu0
    %v2614 = vadd.f32 0.0, %v2613
    %2615 = vdwg.mxu0
    %2616 = vmatprep.subr.bf16.mxu0 %v2272
    %2617 = vmatpush1.bf16.msra.mxu0 %v2271
    %2618 = vmatprep.subr.bf16.mxu0 %v2276
    %2619 = vmatpush1.bf16.msra.mxu0 %v2275
    %2620 = vmatprep.subr.bf16.mxu0 %v2280
    %2621 = vmatpush1.bf16.msra.mxu0 %v2279
    %2622 = vmatprep.subr.bf16.mxu0 %v2284
    %2623 = vmatpush1.bf16.msra.mxu0 %v2283
    %2624 = vmatprep.subr.bf16.mxu0 %v2288
    %2625 = vmatpush1.bf16.msra.mxu0 %v2287
    %2626 = vmatprep.subr.bf16.mxu0 %v2292
    %2627 = vmatpush1.bf16.msra.mxu0 %v2291
    %2628 = vmatprep.subr.bf16.mxu0 %v2296
    %2629 = vmatpush1.bf16.msra.mxu0 %v2295
    %2630 = vmatprep.subr.bf16.mxu0 %v2300
    %2631 = vmatpush1.bf16.msra.mxu0 %v2299
    %2632 = vmatprep.subr.bf16.mxu0 0
    %2633 = vmatpush1.bf16.msra.mxu0 0
    %2634 = vmatprep.subr.bf16.mxu0 0
    %2635 = vmatpush1.bf16.msra.mxu0 0
    %2636 = vmatprep.subr.bf16.mxu0 0
    %2637 = vmatpush1.bf16.msra.mxu0 0
    %2638 = vmatprep.subr.bf16.mxu0 0
    %2639 = vmatpush1.bf16.msra.mxu0 0
    %2640 = vmatprep.subr.bf16.mxu0 0
    %2641 = vmatpush1.bf16.msra.mxu0 0
    %2642 = vmatprep.subr.bf16.mxu0 0
    %2643 = vmatpush1.bf16.msra.mxu0 0
    %2644 = vmatprep.subr.bf16.mxu0 0
    %2645 = vmatpush1.bf16.msra.mxu0 0
    %2646 = vmatprep.subr.bf16.mxu0 0
    %2647 = vmatpush1.bf16.msra.mxu0 0
    %2648 = vmatprep.mubr.bf16.mxu0 0
    %2649 = vmatmul.mubr.bf16.gmra.mrb[0].mxu0 %v921
    %v2650 = vpop.f32.mrb[0].mxu0
    %v2651 = vadd.f32 %v2578, %v2650
    %v2652 = vpop.f32.mrb[0].mxu0
    %v2653 = vadd.f32 %v2580, %v2652
    %v2654 = vpop.f32.mrb[0].mxu0
    %v2655 = vadd.f32 %v2582, %v2654
    %v2656 = vpop.f32.mrb[0].mxu0
    %v2657 = vadd.f32 %v2584, %v2656
    %2658 = vmatprep.mubr.bf16.mxu0 0
    %2659 = vmatmul.mubr.bf16.gmra.mrb[0].mxu0 %v924
    %v2660 = vpop.f32.mrb[0].mxu0
    %v2661 = vadd.f32 %v2588, %v2660
    %v2662 = vpop.f32.mrb[0].mxu0
    %v2663 = vadd.f32 %v2590, %v2662
    %v2664 = vpop.f32.mrb[0].mxu0
    %v2665 = vadd.f32 %v2592, %v2664
    %v2666 = vpop.f32.mrb[0].mxu0
    %v2667 = vadd.f32 %v2594, %v2666
    %2668 = vmatprep.mubr.bf16.mxu0 0
    %2669 = vmatmul.mubr.bf16.gmra.mrb[0].mxu0 %v927
    %v2670 = vpop.f32.mrb[0].mxu0
    %v2671 = vadd.f32 %v2598, %v2670
    %v2672 = vpop.f32.mrb[0].mxu0
    %v2673 = vadd.f32 %v2600, %v2672
    %v2674 = vpop.f32.mrb[0].mxu0
    %v2675 = vadd.f32 %v2602, %v2674
    %v2676 = vpop.f32.mrb[0].mxu0
    %v2677 = vadd.f32 %v2604, %v2676
    %2678 = vmatprep.mubr.bf16.mxu0 0
    %2679 = vmatmul.mubr.bf16.gmra.mrb[0].mxu0 %v930
    %v2680 = vpop.f32.mrb[0].mxu0
    %v2681 = vadd.f32 %v2608, %v2680
    %v2682 = vpop.f32.mrb[0].mxu0
    %v2683 = vadd.f32 %v2610, %v2682
    %v2684 = vpop.f32.mrb[0].mxu0
    %v2685 = vadd.f32 %v2612, %v2684
    %v2686 = vpop.f32.mrb[0].mxu0
    %v2687 = vadd.f32 %v2614, %v2686
    %2688 = vdwg.mxu0
    %v2689 = vld [vmem:[#allocation7] sm:$0xff]
    %v2690 = vld [vmem:[#allocation7 + $0x8] sm:$0xff]
    %v2691 = vld [vmem:[#allocation7 + $0x10] sm:$0xff]
    %v2692 = vld [vmem:[#allocation7 + $0x18] sm:$0xff]
    %v2693 = vld [vmem:[#allocation7 + $0x20] sm:$0xff]
    %v2694 = vld [vmem:[#allocation7 + $0x28] sm:$0xff]
    %v2695 = vld [vmem:[#allocation7 + $0x30] sm:$0xff]
    %v2696 = vld [vmem:[#allocation7 + $0x38] sm:$0xff]
    %v2697 = vld [vmem:[#allocation7 + $0x40] sm:$0xff]
    %v2698 = vld [vmem:[#allocation7 + $0x48] sm:$0xff]
    %v2699 = vld [vmem:[#allocation7 + $0x50] sm:$0xff]
    %v2700 = vld [vmem:[#allocation7 + $0x58] sm:$0xff]
    %v2701 = vld [vmem:[#allocation7 + $0x60] sm:$0xff]
    %v2702 = vld [vmem:[#allocation7 + $0x68] sm:$0xff]
    %v2703 = vld [vmem:[#allocation7 + $0x70] sm:$0xff]
    %v2704 = vld [vmem:[#allocation7 + $0x78] sm:$0xff]
    %v2705 = vld [vmem:[#allocation7 + $0x80] sm:$0xff]
    %v2706 = vld [vmem:[#allocation7 + $0x88] sm:$0xff]
    %v2707 = vld [vmem:[#allocation7 + $0x90] sm:$0xff]
    %v2708 = vld [vmem:[#allocation7 + $0x98] sm:$0xff]
    %v2709 = vld [vmem:[#allocation7 + $0xa0] sm:$0xff]
    %v2710 = vld [vmem:[#allocation7 + $0xa8] sm:$0xff]
    %v2711 = vld [vmem:[#allocation7 + $0xb0] sm:$0xff]
    %v2712 = vld [vmem:[#allocation7 + $0xb8] sm:$0xff]
    %v2713 = vld [vmem:[#allocation7 + $0xc0] sm:$0xff]
    %v2714 = vld [vmem:[#allocation7 + $0xc8] sm:$0xff]
    %v2715 = vld [vmem:[#allocation7 + $0xd0] sm:$0xff]
    %v2716 = vld [vmem:[#allocation7 + $0xd8] sm:$0xff]
    %v2717 = vld [vmem:[#allocation7 + $0xe0] sm:$0xff]
    %v2718 = vld [vmem:[#allocation7 + $0xe8] sm:$0xff]
    %v2719 = vld [vmem:[#allocation7 + $0xf0] sm:$0xff]
    %v2720 = vld [vmem:[#allocation7 + $0xf8] sm:$0xff]
    %v2721 = vadd.f32 %v1637, %v2539
    %v2722 = vadd.f32 %v1639, %v2541
    %v2723 = vadd.f32 %v1783, %v2685
    %v2724 = vadd.f32 %v1785, %v2687
    %v2726 = vsel %vm312, 0.0, 0
    %2728 = vmatprep.subr.mxu0 %v2690
    %2729 = vmatpush1.msra.mxu0 %v2689
    %2730 = vmatprep.subr.mxu0 %v2694
    %2731 = vmatpush1.msra.mxu0 %v2693
    %2732 = vmatprep.subr.mxu0 %v2698
    %2733 = vmatpush1.msra.mxu0 %v2697
    %2734 = vmatprep.subr.mxu0 %v2702
    %2735 = vmatpush1.msra.mxu0 %v2701
    %2736 = vmatprep.subr.mxu0 %v2706
    %2737 = vmatpush1.msra.mxu0 %v2705
    %2738 = vmatprep.subr.mxu0 %v2710
    %2739 = vmatpush1.msra.mxu0 %v2709
    %2740 = vmatprep.subr.mxu0 %v2714
    %2741 = vmatpush1.msra.mxu0 %v2713
    %2742 = vmatprep.subr.mxu0 %v2718
    %2743 = vmatpush1.msra.mxu0 %v2717
    %2744 = vmatprep.subr.mxu0 0.0
    %2745 = vmatpush1.msra.mxu0 0.0
    %2746 = vmatprep.subr.mxu0 0.0
    %2747 = vmatpush1.msra.mxu0 0.0
    %2748 = vmatprep.subr.mxu0 0.0
    %2749 = vmatpush1.msra.mxu0 0.0
    %2750 = vmatprep.subr.mxu0 0.0
    %2751 = vmatpush1.msra.mxu0 0.0
    %2752 = vmatprep.subr.mxu0 0.0
    %2753 = vmatpush1.msra.mxu0 0.0
    %2754 = vmatprep.subr.mxu0 0.0
    %2755 = vmatpush1.msra.mxu0 0.0
    %2756 = vmatprep.subr.mxu0 0.0
    %2757 = vmatpush1.msra.mxu0 0.0
    %2758 = vmatprep.subr.mxu0 0.0
    %2759 = vmatpush1.msra.mxu0 0.0
    %2760 = vmatprep.subr.mxu0 0.0
    %2761 = vmatpush1.msra.mxu0 0.0
    %2762 = vmatprep.subr.mxu0 0.0
    %2763 = vmatpush1.msra.mxu0 0.0
    %2764 = vmatprep.subr.mxu0 0.0
    %2765 = vmatpush1.msra.mxu0 0.0
    %2766 = vmatprep.subr.mxu0 0.0
    %2767 = vmatpush1.msra.mxu0 0.0
    %2768 = vmatprep.subr.mxu0 0.0
    %2769 = vmatpush1.msra.mxu0 0.0
    %2770 = vmatprep.subr.mxu0 0.0
    %2771 = vmatpush1.msra.mxu0 0.0
    %2772 = vmatprep.subr.mxu0 0.0
    %2773 = vmatpush1.msra.mxu0 0.0
    %2774 = vmatprep.subr.mxu0 0.0
    %2775 = vmatpush1.msra.mxu0 0.0
    %2776 = vmatprep.subr.mxu0 0.0
    %2777 = vmatpush1.msra.mxu0 0.0
    %2778 = vmatprep.subr.mxu0 0.0
    %2779 = vmatpush1.msra.mxu0 0.0
    %2780 = vmatprep.subr.mxu0 0.0
    %2781 = vmatpush1.msra.mxu0 0.0
    %2782 = vmatprep.subr.mxu0 0.0
    %2783 = vmatpush1.msra.mxu0 0.0
    %2784 = vmatprep.subr.mxu0 0.0
    %2785 = vmatpush1.msra.mxu0 0.0
    %2786 = vmatprep.subr.mxu0 0.0
    %2787 = vmatpush1.msra.mxu0 0.0
    %2788 = vmatprep.subr.mxu0 0.0
    %2789 = vmatpush1.msra.mxu0 0.0
    %2790 = vmatprep.subr.mxu0 0.0
    %2791 = vmatpush1.msra.mxu0 0.0
    %2792 = vmatprep.mubr.f32.mxu0 0.0
    %2793 = vmatmul.mubr.f32.gmra.mrb[0].mxu0 %v2726
    %v2794 = vpop.f32.mrb[0].mxu0
    %v2795 = vadd.f32 0.0, %v2794
    %v2796 = vpop.f32.mrb[0].mxu0
    %v2797 = vadd.f32 0.0, %v2796
    %2798 = vdwg.mxu0
    %2799 = vmatprep.subr.mxu0 %v2692
    %2800 = vmatpush1.msra.mxu0 %v2691
    %2801 = vmatprep.subr.mxu0 %v2696
    %2802 = vmatpush1.msra.mxu0 %v2695
    %2803 = vmatprep.subr.mxu0 %v2700
    %2804 = vmatpush1.msra.mxu0 %v2699
    %2805 = vmatprep.subr.mxu0 %v2704
    %2806 = vmatpush1.msra.mxu0 %v2703
    %2807 = vmatprep.subr.mxu0 %v2708
    %2808 = vmatpush1.msra.mxu0 %v2707
    %2809 = vmatprep.subr.mxu0 %v2712
    %2810 = vmatpush1.msra.mxu0 %v2711
    %2811 = vmatprep.subr.mxu0 %v2716
    %2812 = vmatpush1.msra.mxu0 %v2715
    %2813 = vmatprep.subr.mxu0 %v2720
    %2814 = vmatpush1.msra.mxu0 %v2719
    %2815 = vmatprep.subr.mxu0 0.0
    %2816 = vmatpush1.msra.mxu0 0.0
    %2817 = vmatprep.subr.mxu0 0.0
    %2818 = vmatpush1.msra.mxu0 0.0
    %2819 = vmatprep.subr.mxu0 0.0
    %2820 = vmatpush1.msra.mxu0 0.0
    %2821 = vmatprep.subr.mxu0 0.0
    %2822 = vmatpush1.msra.mxu0 0.0
    %2823 = vmatprep.subr.mxu0 0.0
    %2824 = vmatpush1.msra.mxu0 0.0
    %2825 = vmatprep.subr.mxu0 0.0
    %2826 = vmatpush1.msra.mxu0 0.0
    %2827 = vmatprep.subr.mxu0 0.0
    %2828 = vmatpush1.msra.mxu0 0.0
    %2829 = vmatprep.subr.mxu0 0.0
    %2830 = vmatpush1.msra.mxu0 0.0
    %2831 = vmatprep.subr.mxu0 0.0
    %2832 = vmatpush1.msra.mxu0 0.0
    %2833 = vmatprep.subr.mxu0 0.0
    %2834 = vmatpush1.msra.mxu0 0.0
    %2835 = vmatprep.subr.mxu0 0.0
    %2836 = vmatpush1.msra.mxu0 0.0
    %2837 = vmatprep.subr.mxu0 0.0
    %2838 = vmatpush1.msra.mxu0 0.0
    %2839 = vmatprep.subr.mxu0 0.0
    %2840 = vmatpush1.msra.mxu0 0.0
    %2841 = vmatprep.subr.mxu0 0.0
    %2842 = vmatpush1.msra.mxu0 0.0
    %2843 = vmatprep.subr.mxu0 0.0
    %2844 = vmatpush1.msra.mxu0 0.0
    %2845 = vmatprep.subr.mxu0 0.0
    %2846 = vmatpush1.msra.mxu0 0.0
    %2847 = vmatprep.subr.mxu0 0.0
    %2848 = vmatpush1.msra.mxu0 0.0
    %2849 = vmatprep.subr.mxu0 0.0
    %2850 = vmatpush1.msra.mxu0 0.0
    %2851 = vmatprep.subr.mxu0 0.0
    %2852 = vmatpush1.msra.mxu0 0.0
    %2853 = vmatprep.subr.mxu0 0.0
    %2854 = vmatpush1.msra.mxu0 0.0
    %2855 = vmatprep.subr.mxu0 0.0
    %2856 = vmatpush1.msra.mxu0 0.0
    %2857 = vmatprep.subr.mxu0 0.0
    %2858 = vmatpush1.msra.mxu0 0.0
    %2859 = vmatprep.subr.mxu0 0.0
    %2860 = vmatpush1.msra.mxu0 0.0
    %2861 = vmatprep.subr.mxu0 0.0
    %2862 = vmatpush1.msra.mxu0 0.0
    %2863 = vmatprep.mubr.f32.mxu0 0.0
    %2864 = vmatmul.mubr.f32.gmra.mrb[0].mxu0 %v2726
    %v2865 = vpop.f32.mrb[0].mxu0
    %v2866 = vadd.f32 0.0, %v2865
    %v2867 = vpop.f32.mrb[0].mxu0
    %v2868 = vadd.f32 0.0, %v2867
    %2869 = vdwg.mxu0
    %v2870 = vadd.f32 %v2721, %v2795
    %v2871 = vadd.f32 %v2722, %v2797
    %v2872 = vadd.f32 %v2723, %v2866
    %v2873 = vadd.f32 %v2724, %v2868
    %v2874 = vxor.u32 %v2870, 2147483648
    %v2875 = vxor.u32 %v2871, 2147483648
    %v2876 = vxor.u32 %v2872, 2147483648
    %v2877 = vmul.f32 %v2874, 1.442695
    %v2878 = vpow.pop %v2877
    %v2879 = vmul.f32 %v2875, 1.442695
    %v2880 = vpow.pop %v2879
    %v2881 = vmul.f32 %v2876, 1.442695
    %v2882 = vpow.pop %v2881
    %v2883 = vadd.f32 %v2878, 1.0
    %v2884 = vadd.f32 %v2880, 1.0
    %v2885 = vadd.f32 %v2882, 1.0
    %v2886 = vrcp.pop %v2883
    %v2887 = vmul.f32 1.0, %v2886
    %v2888 = vrcp.pop %v2884
    %v2889 = vmul.f32 1.0, %v2888
    %v2890 = vrcp.pop %v2885
    %v2891 = vmul.f32 1.0, %v2890
    %v2892 = vtanh.pop %v2873
    %v2893 = vmul.f32 %v2889, 0.0
    %v2894 = vmul.f32 %v2887, %v2892
    %v2895 = vadd.f32 %v2893, %v2894
    %v2896 = vtanh.pop %v2895
    %v2897 = vmul.f32 %v2891, %v2896
    %v2898 = vadd.f32 %v1641, %v2535
    %v2899 = vadd.f32 %v1643, %v2537
    %v2900 = vadd.f32 %v1787, %v2681
    %v2901 = vadd.f32 %v1789, %v2683
    %v2903 = vsel %vm312, %v2897, 0
    %2905 = vmatprep.subr.mxu0 %v2690
    %2906 = vmatpush1.msra.mxu0 %v2689
    %2907 = vmatprep.subr.mxu0 %v2694
    %2908 = vmatpush1.msra.mxu0 %v2693
    %2909 = vmatprep.subr.mxu0 %v2698
    %2910 = vmatpush1.msra.mxu0 %v2697
    %2911 = vmatprep.subr.mxu0 %v2702
    %2912 = vmatpush1.msra.mxu0 %v2701
    %2913 = vmatprep.subr.mxu0 %v2706
    %2914 = vmatpush1.msra.mxu0 %v2705
    %2915 = vmatprep.subr.mxu0 %v2710
    %2916 = vmatpush1.msra.mxu0 %v2709
    %2917 = vmatprep.subr.mxu0 %v2714
    %2918 = vmatpush1.msra.mxu0 %v2713
    %2919 = vmatprep.subr.mxu0 %v2718
    %2920 = vmatpush1.msra.mxu0 %v2717
    %2921 = vmatprep.subr.mxu0 0.0
    %2922 = vmatpush1.msra.mxu0 0.0
    %2923 = vmatprep.subr.mxu0 0.0
    %2924 = vmatpush1.msra.mxu0 0.0
    %2925 = vmatprep.subr.mxu0 0.0
    %2926 = vmatpush1.msra.mxu0 0.0
    %2927 = vmatprep.subr.mxu0 0.0
    %2928 = vmatpush1.msra.mxu0 0.0
    %2929 = vmatprep.subr.mxu0 0.0
    %2930 = vmatpush1.msra.mxu0 0.0
    %2931 = vmatprep.subr.mxu0 0.0
    %2932 = vmatpush1.msra.mxu0 0.0
    %2933 = vmatprep.subr.mxu0 0.0
    %2934 = vmatpush1.msra.mxu0 0.0
    %2935 = vmatprep.subr.mxu0 0.0
    %2936 = vmatpush1.msra.mxu0 0.0
    %2937 = vmatprep.subr.mxu0 0.0
    %2938 = vmatpush1.msra.mxu0 0.0
    %2939 = vmatprep.subr.mxu0 0.0
    %2940 = vmatpush1.msra.mxu0 0.0
    %2941 = vmatprep.subr.mxu0 0.0
    %2942 = vmatpush1.msra.mxu0 0.0
    %2943 = vmatprep.subr.mxu0 0.0
    %2944 = vmatpush1.msra.mxu0 0.0
    %2945 = vmatprep.subr.mxu0 0.0
    %2946 = vmatpush1.msra.mxu0 0.0
    %2947 = vmatprep.subr.mxu0 0.0
    %2948 = vmatpush1.msra.mxu0 0.0
    %2949 = vmatprep.subr.mxu0 0.0
    %2950 = vmatpush1.msra.mxu0 0.0
    %2951 = vmatprep.subr.mxu0 0.0
    %2952 = vmatpush1.msra.mxu0 0.0
    %2953 = vmatprep.subr.mxu0 0.0
    %2954 = vmatpush1.msra.mxu0 0.0
    %2955 = vmatprep.subr.mxu0 0.0
    %2956 = vmatpush1.msra.mxu0 0.0
    %2957 = vmatprep.subr.mxu0 0.0
    %2958 = vmatpush1.msra.mxu0 0.0
    %2959 = vmatprep.subr.mxu0 0.0
    %2960 = vmatpush1.msra.mxu0 0.0
    %2961 = vmatprep.subr.mxu0 0.0
    %2962 = vmatpush1.msra.mxu0 0.0
    %2963 = vmatprep.subr.mxu0 0.0
    %2964 = vmatpush1.msra.mxu0 0.0
    %2965 = vmatprep.subr.mxu0 0.0
    %2966 = vmatpush1.msra.mxu0 0.0
    %2967 = vmatprep.subr.mxu0 0.0
    %2968 = vmatpush1.msra.mxu0 0.0
    %2969 = vmatprep.mubr.f32.mxu0 0.0
    %2970 = vmatmul.mubr.f32.gmra.mrb[0].mxu0 %v2903
    %v2971 = vpop.f32.mrb[0].mxu0
    %v2972 = vadd.f32 0.0, %v2971
    %v2973 = vpop.f32.mrb[0].mxu0
    %v2974 = vadd.f32 0.0, %v2973
    %2975 = vdwg.mxu0
    %2976 = vmatprep.subr.mxu0 %v2692
    %2977 = vmatpush1.msra.mxu0 %v2691
    %2978 = vmatprep.subr.mxu0 %v2696
    %2979 = vmatpush1.msra.mxu0 %v2695
    %2980 = vmatprep.subr.mxu0 %v2700
    %2981 = vmatpush1.msra.mxu0 %v2699
    %2982 = vmatprep.subr.mxu0 %v2704
    %2983 = vmatpush1.msra.mxu0 %v2703
    %2984 = vmatprep.subr.mxu0 %v2708
    %2985 = vmatpush1.msra.mxu0 %v2707
    %2986 = vmatprep.subr.mxu0 %v2712
    %2987 = vmatpush1.msra.mxu0 %v2711
    %2988 = vmatprep.subr.mxu0 %v2716
    %2989 = vmatpush1.msra.mxu0 %v2715
    %2990 = vmatprep.subr.mxu0 %v2720
    %2991 = vmatpush1.msra.mxu0 %v2719
    %2992 = vmatprep.subr.mxu0 0.0
    %2993 = vmatpush1.msra.mxu0 0.0
    %2994 = vmatprep.subr.mxu0 0.0
    %2995 = vmatpush1.msra.mxu0 0.0
    %2996 = vmatprep.subr.mxu0 0.0
    %2997 = vmatpush1.msra.mxu0 0.0
    %2998 = vmatprep.subr.mxu0 0.0
    %2999 = vmatpush1.msra.mxu0 0.0
    %3000 = vmatprep.subr.mxu0 0.0
    %3001 = vmatpush1.msra.mxu0 0.0
    %3002 = vmatprep.subr.mxu0 0.0
    %3003 = vmatpush1.msra.mxu0 0.0
    %3004 = vmatprep.subr.mxu0 0.0
    %3005 = vmatpush1.msra.mxu0 0.0
    %3006 = vmatprep.subr.mxu0 0.0
    %3007 = vmatpush1.msra.mxu0 0.0
    %3008 = vmatprep.subr.mxu0 0.0
    %3009 = vmatpush1.msra.mxu0 0.0
    %3010 = vmatprep.subr.mxu0 0.0
    %3011 = vmatpush1.msra.mxu0 0.0
    %3012 = vmatprep.subr.mxu0 0.0
    %3013 = vmatpush1.msra.mxu0 0.0
    %3014 = vmatprep.subr.mxu0 0.0
    %3015 = vmatpush1.msra.mxu0 0.0
    %3016 = vmatprep.subr.mxu0 0.0
    %3017 = vmatpush1.msra.mxu0 0.0
    %3018 = vmatprep.subr.mxu0 0.0
    %3019 = vmatpush1.msra.mxu0 0.0
    %3020 = vmatprep.subr.mxu0 0.0
    %3021 = vmatpush1.msra.mxu0 0.0
    %3022 = vmatprep.subr.mxu0 0.0
    %3023 = vmatpush1.msra.mxu0 0.0
    %3024 = vmatprep.subr.mxu0 0.0
    %3025 = vmatpush1.msra.mxu0 0.0
    %3026 = vmatprep.subr.mxu0 0.0
    %3027 = vmatpush1.msra.mxu0 0.0
    %3028 = vmatprep.subr.mxu0 0.0
    %3029 = vmatpush1.msra.mxu0 0.0
    %3030 = vmatprep.subr.mxu0 0.0
    %3031 = vmatpush1.msra.mxu0 0.0
    %3032 = vmatprep.subr.mxu0 0.0
    %3033 = vmatpush1.msra.mxu0 0.0
    %3034 = vmatprep.subr.mxu0 0.0
    %3035 = vmatpush1.msra.mxu0 0.0
    %3036 = vmatprep.subr.mxu0 0.0
    %3037 = vmatpush1.msra.mxu0 0.0
    %3038 = vmatprep.subr.mxu0 0.0
    %3039 = vmatpush1.msra.mxu0 0.0
    %3040 = vmatprep.mubr.f32.mxu0 0.0
    %3041 = vmatmul.mubr.f32.gmra.mrb[0].mxu0 %v2903
    %v3042 = vpop.f32.mrb[0].mxu0
    %v3043 = vadd.f32 0.0, %v3042
    %v3044 = vpop.f32.mrb[0].mxu0
    %v3045 = vadd.f32 0.0, %v3044
    %3046 = vdwg.mxu0
    %v3047 = vadd.f32 %v2898, %v2972
    %v3048 = vadd.f32 %v2899, %v2974
    %v3049 = vadd.f32 %v2900, %v3043
    %v3050 = vadd.f32 %v2901, %v3045
    %v3051 = vxor.u32 %v3047, 2147483648
    %v3052 = vxor.u32 %v3048, 2147483648
    %v3053 = vxor.u32 %v3049, 2147483648
    %v3054 = vmul.f32 %v3051, 1.442695
    %v3055 = vpow.pop %v3054
    %v3056 = vmul.f32 %v3052, 1.442695
    %v3057 = vpow.pop %v3056
    %v3058 = vmul.f32 %v3053, 1.442695
    %v3059 = vpow.pop %v3058
    %v3060 = vadd.f32 %v3055, 1.0
    %v3061 = vadd.f32 %v3057, 1.0
    %v3062 = vadd.f32 %v3059, 1.0
    %v3063 = vrcp.pop %v3060
    %v3064 = vmul.f32 1.0, %v3063
    %v3065 = vrcp.pop %v3061
    %v3066 = vmul.f32 1.0, %v3065
    %v3067 = vrcp.pop %v3062
    %v3068 = vmul.f32 1.0, %v3067
    %v3069 = vtanh.pop %v3050
    %v3070 = vmul.f32 %v3066, %v2895
    %v3071 = vmul.f32 %v3064, %v3069
    %v3072 = vadd.f32 %v3070, %v3071
    %v3073 = vtanh.pop %v3072
    %v3074 = vmul.f32 %v3068, %v3073
    %v3075 = vadd.f32 %v1647, %v2529
    %v3076 = vadd.f32 %v1649, %v2531
    %v3077 = vadd.f32 %v1793, %v2675
    %v3078 = vadd.f32 %v1795, %v2677
    %v3080 = vsel %vm312, %v3074, 0
    %3082 = vmatprep.subr.mxu0 %v2690
    %3083 = vmatpush1.msra.mxu0 %v2689
    %3084 = vmatprep.subr.mxu0 %v2694
    %3085 = vmatpush1.msra.mxu0 %v2693
    %3086 = vmatprep.subr.mxu0 %v2698
    %3087 = vmatpush1.msra.mxu0 %v2697
    %3088 = vmatprep.subr.mxu0 %v2702
    %3089 = vmatpush1.msra.mxu0 %v2701
    %3090 = vmatprep.subr.mxu0 %v2706
    %3091 = vmatpush1.msra.mxu0 %v2705
    %3092 = vmatprep.subr.mxu0 %v2710
    %3093 = vmatpush1.msra.mxu0 %v2709
    %3094 = vmatprep.subr.mxu0 %v2714
    %3095 = vmatpush1.msra.mxu0 %v2713
    %3096 = vmatprep.subr.mxu0 %v2718
    %3097 = vmatpush1.msra.mxu0 %v2717
    %3098 = vmatprep.subr.mxu0 0.0
    %3099 = vmatpush1.msra.mxu0 0.0
    %3100 = vmatprep.subr.mxu0 0.0
    %3101 = vmatpush1.msra.mxu0 0.0
    %3102 = vmatprep.subr.mxu0 0.0
    %3103 = vmatpush1.msra.mxu0 0.0
    %3104 = vmatprep.subr.mxu0 0.0
    %3105 = vmatpush1.msra.mxu0 0.0
    %3106 = vmatprep.subr.mxu0 0.0
    %3107 = vmatpush1.msra.mxu0 0.0
    %3108 = vmatprep.subr.mxu0 0.0
    %3109 = vmatpush1.msra.mxu0 0.0
    %3110 = vmatprep.subr.mxu0 0.0
    %3111 = vmatpush1.msra.mxu0 0.0
    %3112 = vmatprep.subr.mxu0 0.0
    %3113 = vmatpush1.msra.mxu0 0.0
    %3114 = vmatprep.subr.mxu0 0.0
    %3115 = vmatpush1.msra.mxu0 0.0
    %3116 = vmatprep.subr.mxu0 0.0
    %3117 = vmatpush1.msra.mxu0 0.0
    %3118 = vmatprep.subr.mxu0 0.0
    %3119 = vmatpush1.msra.mxu0 0.0
    %3120 = vmatprep.subr.mxu0 0.0
    %3121 = vmatpush1.msra.mxu0 0.0
    %3122 = vmatprep.subr.mxu0 0.0
    %3123 = vmatpush1.msra.mxu0 0.0
    %3124 = vmatprep.subr.mxu0 0.0
    %3125 = vmatpush1.msra.mxu0 0.0
    %3126 = vmatprep.subr.mxu0 0.0
    %3127 = vmatpush1.msra.mxu0 0.0
    %3128 = vmatprep.subr.mxu0 0.0
    %3129 = vmatpush1.msra.mxu0 0.0
    %3130 = vmatprep.subr.mxu0 0.0
    %3131 = vmatpush1.msra.mxu0 0.0
    %3132 = vmatprep.subr.mxu0 0.0
    %3133 = vmatpush1.msra.mxu0 0.0
    %3134 = vmatprep.subr.mxu0 0.0
    %3135 = vmatpush1.msra.mxu0 0.0
    %3136 = vmatprep.subr.mxu0 0.0
    %3137 = vmatpush1.msra.mxu0 0.0
    %3138 = vmatprep.subr.mxu0 0.0
    %3139 = vmatpush1.msra.mxu0 0.0
    %3140 = vmatprep.subr.mxu0 0.0
    %3141 = vmatpush1.msra.mxu0 0.0
    %3142 = vmatprep.subr.mxu0 0.0
    %3143 = vmatpush1.msra.mxu0 0.0
    %3144 = vmatprep.subr.mxu0 0.0
    %3145 = vmatpush1.msra.mxu0 0.0
    %3146 = vmatprep.mubr.f32.mxu0 0.0
    %3147 = vmatmul.mubr.f32.gmra.mrb[0].mxu0 %v3080
    %v3148 = vpop.f32.mrb[0].mxu0
    %v3149 = vadd.f32 0.0, %v3148
    %v3150 = vpop.f32.mrb[0].mxu0
    %v3151 = vadd.f32 0.0, %v3150
    %3152 = vdwg.mxu0
    %3153 = vmatprep.subr.mxu0 %v2692
    %3154 = vmatpush1.msra.mxu0 %v2691
    %3155 = vmatprep.subr.mxu0 %v2696
    %3156 = vmatpush1.msra.mxu0 %v2695
    %3157 = vmatprep.subr.mxu0 %v2700
    %3158 = vmatpush1.msra.mxu0 %v2699
    %3159 = vmatprep.subr.mxu0 %v2704
    %3160 = vmatpush1.msra.mxu0 %v2703
    %3161 = vmatprep.subr.mxu0 %v2708
    %3162 = vmatpush1.msra.mxu0 %v2707
    %3163 = vmatprep.subr.mxu0 %v2712
    %3164 = vmatpush1.msra.mxu0 %v2711
    %3165 = vmatprep.subr.mxu0 %v2716
    %3166 = vmatpush1.msra.mxu0 %v2715
    %3167 = vmatprep.subr.mxu0 %v2720
    %3168 = vmatpush1.msra.mxu0 %v2719
    %3169 = vmatprep.subr.mxu0 0.0
    %3170 = vmatpush1.msra.mxu0 0.0
    %3171 = vmatprep.subr.mxu0 0.0
    %3172 = vmatpush1.msra.mxu0 0.0
    %3173 = vmatprep.subr.mxu0 0.0
    %3174 = vmatpush1.msra.mxu0 0.0
    %3175 = vmatprep.subr.mxu0 0.0
    %3176 = vmatpush1.msra.mxu0 0.0
    %3177 = vmatprep.subr.mxu0 0.0
    %3178 = vmatpush1.msra.mxu0 0.0
    %3179 = vmatprep.subr.mxu0 0.0
    %3180 = vmatpush1.msra.mxu0 0.0
    %3181 = vmatprep.subr.mxu0 0.0
    %3182 = vmatpush1.msra.mxu0 0.0
    %3183 = vmatprep.subr.mxu0 0.0
    %3184 = vmatpush1.msra.mxu0 0.0
    %3185 = vmatprep.subr.mxu0 0.0
    %3186 = vmatpush1.msra.mxu0 0.0
    %3187 = vmatprep.subr.mxu0 0.0
    %3188 = vmatpush1.msra.mxu0 0.0
    %3189 = vmatprep.subr.mxu0 0.0
    %3190 = vmatpush1.msra.mxu0 0.0
    %3191 = vmatprep.subr.mxu0 0.0
    %3192 = vmatpush1.msra.mxu0 0.0
    %3193 = vmatprep.subr.mxu0 0.0
    %3194 = vmatpush1.msra.mxu0 0.0
    %3195 = vmatprep.subr.mxu0 0.0
    %3196 = vmatpush1.msra.mxu0 0.0
    %3197 = vmatprep.subr.mxu0 0.0
    %3198 = vmatpush1.msra.mxu0 0.0
    %3199 = vmatprep.subr.mxu0 0.0
    %3200 = vmatpush1.msra.mxu0 0.0
    %3201 = vmatprep.subr.mxu0 0.0
    %3202 = vmatpush1.msra.mxu0 0.0
    %3203 = vmatprep.subr.mxu0 0.0
    %3204 = vmatpush1.msra.mxu0 0.0
    %3205 = vmatprep.subr.mxu0 0.0
    %3206 = vmatpush1.msra.mxu0 0.0
    %3207 = vmatprep.subr.mxu0 0.0
    %3208 = vmatpush1.msra.mxu0 0.0
    %3209 = vmatprep.subr.mxu0 0.0
    %3210 = vmatpush1.msra.mxu0 0.0
    %3211 = vmatprep.subr.mxu0 0.0
    %3212 = vmatpush1.msra.mxu0 0.0
    %3213 = vmatprep.subr.mxu0 0.0
    %3214 = vmatpush1.msra.mxu0 0.0
    %3215 = vmatprep.subr.mxu0 0.0
    %3216 = vmatpush1.msra.mxu0 0.0
    %3217 = vmatprep.mubr.f32.mxu0 0.0
    %3218 = vmatmul.mubr.f32.gmra.mrb[0].mxu0 %v3080
    %v3219 = vpop.f32.mrb[0].mxu0
    %v3220 = vadd.f32 0.0, %v3219
    %v3221 = vpop.f32.mrb[0].mxu0
    %v3222 = vadd.f32 0.0, %v3221
    %3223 = vdwg.mxu0
    %v3224 = vadd.f32 %v3075, %v3149
    %v3225 = vadd.f32 %v3076, %v3151
    %v3226 = vadd.f32 %v3077, %v3220
    %v3227 = vadd.f32 %v3078, %v3222
    %v3228 = vxor.u32 %v3224, 2147483648
    %v3229 = vxor.u32 %v3225, 2147483648
    %v3230 = vxor.u32 %v3226, 2147483648
    %v3231 = vmul.f32 %v3228, 1.442695
    %v3232 = vpow.pop %v3231
    %v3233 = vmul.f32 %v3229, 1.442695
    %v3234 = vpow.pop %v3233
    %v3235 = vmul.f32 %v3230, 1.442695
    %v3236 = vpow.pop %v3235
    %v3237 = vadd.f32 %v3232, 1.0
    %v3238 = vadd.f32 %v3234, 1.0
    %v3239 = vadd.f32 %v3236, 1.0
    %v3240 = vrcp.pop %v3237
    %v3241 = vmul.f32 1.0, %v3240
    %v3242 = vrcp.pop %v3238
    %v3243 = vmul.f32 1.0, %v3242
    %v3244 = vrcp.pop %v3239
    %v3245 = vmul.f32 1.0, %v3244
    %v3246 = vtanh.pop %v3227
    %v3247 = vmul.f32 %v3243, %v3072
    %v3248 = vmul.f32 %v3241, %v3246
    %v3249 = vadd.f32 %v3247, %v3248
    %v3250 = vtanh.pop %v3249
    %v3251 = vmul.f32 %v3245, %v3250
    %v3252 = vadd.f32 %v1651, %v2525
    %v3253 = vadd.f32 %v1653, %v2527
    %v3254 = vadd.f32 %v1797, %v2671
    %v3255 = vadd.f32 %v1799, %v2673
    %v3257 = vsel %vm312, %v3251, 0
    %3259 = vmatprep.subr.mxu0 %v2690
    %3260 = vmatpush1.msra.mxu0 %v2689
    %3261 = vmatprep.subr.mxu0 %v2694
    %3262 = vmatpush1.msra.mxu0 %v2693
    %3263 = vmatprep.subr.mxu0 %v2698
    %3264 = vmatpush1.msra.mxu0 %v2697
    %3265 = vmatprep.subr.mxu0 %v2702
    %3266 = vmatpush1.msra.mxu0 %v2701
    %3267 = vmatprep.subr.mxu0 %v2706
    %3268 = vmatpush1.msra.mxu0 %v2705
    %3269 = vmatprep.subr.mxu0 %v2710
    %3270 = vmatpush1.msra.mxu0 %v2709
    %3271 = vmatprep.subr.mxu0 %v2714
    %3272 = vmatpush1.msra.mxu0 %v2713
    %3273 = vmatprep.subr.mxu0 %v2718
    %3274 = vmatpush1.msra.mxu0 %v2717
    %3275 = vmatprep.subr.mxu0 0.0
    %3276 = vmatpush1.msra.mxu0 0.0
    %3277 = vmatprep.subr.mxu0 0.0
    %3278 = vmatpush1.msra.mxu0 0.0
    %3279 = vmatprep.subr.mxu0 0.0
    %3280 = vmatpush1.msra.mxu0 0.0
    %3281 = vmatprep.subr.mxu0 0.0
    %3282 = vmatpush1.msra.mxu0 0.0
    %3283 = vmatprep.subr.mxu0 0.0
    %3284 = vmatpush1.msra.mxu0 0.0
    %3285 = vmatprep.subr.mxu0 0.0
    %3286 = vmatpush1.msra.mxu0 0.0
    %3287 = vmatprep.subr.mxu0 0.0
    %3288 = vmatpush1.msra.mxu0 0.0
    %3289 = vmatprep.subr.mxu0 0.0
    %3290 = vmatpush1.msra.mxu0 0.0
    %3291 = vmatprep.subr.mxu0 0.0
    %3292 = vmatpush1.msra.mxu0 0.0
    %3293 = vmatprep.subr.mxu0 0.0
    %3294 = vmatpush1.msra.mxu0 0.0
    %3295 = vmatprep.subr.mxu0 0.0
    %3296 = vmatpush1.msra.mxu0 0.0
    %3297 = vmatprep.subr.mxu0 0.0
    %3298 = vmatpush1.msra.mxu0 0.0
    %3299 = vmatprep.subr.mxu0 0.0
    %3300 = vmatpush1.msra.mxu0 0.0
    %3301 = vmatprep.subr.mxu0 0.0
    %3302 = vmatpush1.msra.mxu0 0.0
    %3303 = vmatprep.subr.mxu0 0.0
    %3304 = vmatpush1.msra.mxu0 0.0
    %3305 = vmatprep.subr.mxu0 0.0
    %3306 = vmatpush1.msra.mxu0 0.0
    %3307 = vmatprep.subr.mxu0 0.0
    %3308 = vmatpush1.msra.mxu0 0.0
    %3309 = vmatprep.subr.mxu0 0.0
    %3310 = vmatpush1.msra.mxu0 0.0
    %3311 = vmatprep.subr.mxu0 0.0
    %3312 = vmatpush1.msra.mxu0 0.0
    %3313 = vmatprep.subr.mxu0 0.0
    %3314 = vmatpush1.msra.mxu0 0.0
    %3315 = vmatprep.subr.mxu0 0.0
    %3316 = vmatpush1.msra.mxu0 0.0
    %3317 = vmatprep.subr.mxu0 0.0
    %3318 = vmatpush1.msra.mxu0 0.0
    %3319 = vmatprep.subr.mxu0 0.0
    %3320 = vmatpush1.msra.mxu0 0.0
    %3321 = vmatprep.subr.mxu0 0.0
    %3322 = vmatpush1.msra.mxu0 0.0
    %3323 = vmatprep.mubr.f32.mxu0 0.0
    %3324 = vmatmul.mubr.f32.gmra.mrb[0].mxu0 %v3257
    %v3325 = vpop.f32.mrb[0].mxu0
    %v3326 = vadd.f32 0.0, %v3325
    %v3327 = vpop.f32.mrb[0].mxu0
    %v3328 = vadd.f32 0.0, %v3327
    %3329 = vdwg.mxu0
    %3330 = vmatprep.subr.mxu0 %v2692
    %3331 = vmatpush1.msra.mxu0 %v2691
    %3332 = vmatprep.subr.mxu0 %v2696
    %3333 = vmatpush1.msra.mxu0 %v2695
    %3334 = vmatprep.subr.mxu0 %v2700
    %3335 = vmatpush1.msra.mxu0 %v2699
    %3336 = vmatprep.subr.mxu0 %v2704
    %3337 = vmatpush1.msra.mxu0 %v2703
    %3338 = vmatprep.subr.mxu0 %v2708
    %3339 = vmatpush1.msra.mxu0 %v2707
    %3340 = vmatprep.subr.mxu0 %v2712
    %3341 = vmatpush1.msra.mxu0 %v2711
    %3342 = vmatprep.subr.mxu0 %v2716
    %3343 = vmatpush1.msra.mxu0 %v2715
    %3344 = vmatprep.subr.mxu0 %v2720
    %3345 = vmatpush1.msra.mxu0 %v2719
    %3346 = vmatprep.subr.mxu0 0.0
    %3347 = vmatpush1.msra.mxu0 0.0
    %3348 = vmatprep.subr.mxu0 0.0
    %3349 = vmatpush1.msra.mxu0 0.0
    %3350 = vmatprep.subr.mxu0 0.0
    %3351 = vmatpush1.msra.mxu0 0.0
    %3352 = vmatprep.subr.mxu0 0.0
    %3353 = vmatpush1.msra.mxu0 0.0
    %3354 = vmatprep.subr.mxu0 0.0
    %3355 = vmatpush1.msra.mxu0 0.0
    %3356 = vmatprep.subr.mxu0 0.0
    %3357 = vmatpush1.msra.mxu0 0.0
    %3358 = vmatprep.subr.mxu0 0.0
    %3359 = vmatpush1.msra.mxu0 0.0
    %3360 = vmatprep.subr.mxu0 0.0
    %3361 = vmatpush1.msra.mxu0 0.0
    %3362 = vmatprep.subr.mxu0 0.0
    %3363 = vmatpush1.msra.mxu0 0.0
    %3364 = vmatprep.subr.mxu0 0.0
    %3365 = vmatpush1.msra.mxu0 0.0
    %3366 = vmatprep.subr.mxu0 0.0
    %3367 = vmatpush1.msra.mxu0 0.0
    %3368 = vmatprep.subr.mxu0 0.0
    %3369 = vmatpush1.msra.mxu0 0.0
    %3370 = vmatprep.subr.mxu0 0.0
    %3371 = vmatpush1.msra.mxu0 0.0
    %3372 = vmatprep.subr.mxu0 0.0
    %3373 = vmatpush1.msra.mxu0 0.0
    %3374 = vmatprep.subr.mxu0 0.0
    %3375 = vmatpush1.msra.mxu0 0.0
    %3376 = vmatprep.subr.mxu0 0.0
    %3377 = vmatpush1.msra.mxu0 0.0
    %3378 = vmatprep.subr.mxu0 0.0
    %3379 = vmatpush1.msra.mxu0 0.0
    %3380 = vmatprep.subr.mxu0 0.0
    %3381 = vmatpush1.msra.mxu0 0.0
    %3382 = vmatprep.subr.mxu0 0.0
    %3383 = vmatpush1.msra.mxu0 0.0
    %3384 = vmatprep.subr.mxu0 0.0
    %3385 = vmatpush1.msra.mxu0 0.0
    %3386 = vmatprep.subr.mxu0 0.0
    %3387 = vmatpush1.msra.mxu0 0.0
    %3388 = vmatprep.subr.mxu0 0.0
    %3389 = vmatpush1.msra.mxu0 0.0
    %3390 = vmatprep.subr.mxu0 0.0
    %3391 = vmatpush1.msra.mxu0 0.0
    %3392 = vmatprep.subr.mxu0 0.0
    %3393 = vmatpush1.msra.mxu0 0.0
    %3394 = vmatprep.mubr.f32.mxu0 0.0
    %3395 = vmatmul.mubr.f32.gmra.mrb[0].mxu0 %v3257
    %v3396 = vpop.f32.mrb[0].mxu0
    %v3397 = vadd.f32 0.0, %v3396
    %v3398 = vpop.f32.mrb[0].mxu0
    %v3399 = vadd.f32 0.0, %v3398
    %3400 = vdwg.mxu0
    %v3401 = vadd.f32 %v3252, %v3326
    %v3402 = vadd.f32 %v3253, %v3328
    %v3403 = vadd.f32 %v3254, %v3397
    %v3404 = vadd.f32 %v3255, %v3399
    %v3405 = vxor.u32 %v3401, 2147483648
    %v3406 = vxor.u32 %v3402, 2147483648
    %v3407 = vxor.u32 %v3403, 2147483648
    %v3408 = vmul.f32 %v3405, 1.442695
    %v3409 = vpow.pop %v3408
    %v3410 = vmul.f32 %v3406, 1.442695
    %v3411 = vpow.pop %v3410
    %v3412 = vmul.f32 %v3407, 1.442695
    %v3413 = vpow.pop %v3412
    %v3414 = vadd.f32 %v3409, 1.0
    %v3415 = vadd.f32 %v3411, 1.0
    %v3416 = vadd.f32 %v3413, 1.0
    %v3417 = vrcp.pop %v3414
    %v3418 = vmul.f32 1.0, %v3417
    %v3419 = vrcp.pop %v3415
    %v3420 = vmul.f32 1.0, %v3419
    %v3421 = vrcp.pop %v3416
    %v3422 = vmul.f32 1.0, %v3421
    %v3423 = vtanh.pop %v3404
    %v3424 = vmul.f32 %v3420, %v3249
    %v3425 = vmul.f32 %v3418, %v3423
    %v3426 = vadd.f32 %v3424, %v3425
    %v3427 = vtanh.pop %v3426
    %v3428 = vmul.f32 %v3422, %v3427
    %v3429 = vadd.f32 %v1657, %v2519
    %v3430 = vadd.f32 %v1659, %v2521
    %v3431 = vadd.f32 %v1803, %v2665
    %v3432 = vadd.f32 %v1805, %v2667
    %v3434 = vsel %vm312, %v3428, 0
    %3436 = vmatprep.subr.mxu0 %v2690
    %3437 = vmatpush1.msra.mxu0 %v2689
    %3438 = vmatprep.subr.mxu0 %v2694
    %3439 = vmatpush1.msra.mxu0 %v2693
    %3440 = vmatprep.subr.mxu0 %v2698
    %3441 = vmatpush1.msra.mxu0 %v2697
    %3442 = vmatprep.subr.mxu0 %v2702
    %3443 = vmatpush1.msra.mxu0 %v2701
    %3444 = vmatprep.subr.mxu0 %v2706
    %3445 = vmatpush1.msra.mxu0 %v2705
    %3446 = vmatprep.subr.mxu0 %v2710
    %3447 = vmatpush1.msra.mxu0 %v2709
    %3448 = vmatprep.subr.mxu0 %v2714
    %3449 = vmatpush1.msra.mxu0 %v2713
    %3450 = vmatprep.subr.mxu0 %v2718
    %3451 = vmatpush1.msra.mxu0 %v2717
    %3452 = vmatprep.subr.mxu0 0.0
    %3453 = vmatpush1.msra.mxu0 0.0
    %3454 = vmatprep.subr.mxu0 0.0
    %3455 = vmatpush1.msra.mxu0 0.0
    %3456 = vmatprep.subr.mxu0 0.0
    %3457 = vmatpush1.msra.mxu0 0.0
    %3458 = vmatprep.subr.mxu0 0.0
    %3459 = vmatpush1.msra.mxu0 0.0
    %3460 = vmatprep.subr.mxu0 0.0
    %3461 = vmatpush1.msra.mxu0 0.0
    %3462 = vmatprep.subr.mxu0 0.0
    %3463 = vmatpush1.msra.mxu0 0.0
    %3464 = vmatprep.subr.mxu0 0.0
    %3465 = vmatpush1.msra.mxu0 0.0
    %3466 = vmatprep.subr.mxu0 0.0
    %3467 = vmatpush1.msra.mxu0 0.0
    %3468 = vmatprep.subr.mxu0 0.0
    %3469 = vmatpush1.msra.mxu0 0.0
    %3470 = vmatprep.subr.mxu0 0.0
    %3471 = vmatpush1.msra.mxu0 0.0
    %3472 = vmatprep.subr.mxu0 0.0
    %3473 = vmatpush1.msra.mxu0 0.0
    %3474 = vmatprep.subr.mxu0 0.0
    %3475 = vmatpush1.msra.mxu0 0.0
    %3476 = vmatprep.subr.mxu0 0.0
    %3477 = vmatpush1.msra.mxu0 0.0
    %3478 = vmatprep.subr.mxu0 0.0
    %3479 = vmatpush1.msra.mxu0 0.0
    %3480 = vmatprep.subr.mxu0 0.0
    %3481 = vmatpush1.msra.mxu0 0.0
    %3482 = vmatprep.subr.mxu0 0.0
    %3483 = vmatpush1.msra.mxu0 0.0
    %3484 = vmatprep.subr.mxu0 0.0
    %3485 = vmatpush1.msra.mxu0 0.0
    %3486 = vmatprep.subr.mxu0 0.0
    %3487 = vmatpush1.msra.mxu0 0.0
    %3488 = vmatprep.subr.mxu0 0.0
    %3489 = vmatpush1.msra.mxu0 0.0
    %3490 = vmatprep.subr.mxu0 0.0
    %3491 = vmatpush1.msra.mxu0 0.0
    %3492 = vmatprep.subr.mxu0 0.0
    %3493 = vmatpush1.msra.mxu0 0.0
    %3494 = vmatprep.subr.mxu0 0.0
    %3495 = vmatpush1.msra.mxu0 0.0
    %3496 = vmatprep.subr.mxu0 0.0
    %3497 = vmatpush1.msra.mxu0 0.0
    %3498 = vmatprep.subr.mxu0 0.0
    %3499 = vmatpush1.msra.mxu0 0.0
    %3500 = vmatprep.mubr.f32.mxu0 0.0
    %3501 = vmatmul.mubr.f32.gmra.mrb[0].mxu0 %v3434
    %v3502 = vpop.f32.mrb[0].mxu0
    %v3503 = vadd.f32 0.0, %v3502
    %v3504 = vpop.f32.mrb[0].mxu0
    %v3505 = vadd.f32 0.0, %v3504
    %3506 = vdwg.mxu0
    %3507 = vmatprep.subr.mxu0 %v2692
    %3508 = vmatpush1.msra.mxu0 %v2691
    %3509 = vmatprep.subr.mxu0 %v2696
    %3510 = vmatpush1.msra.mxu0 %v2695
    %3511 = vmatprep.subr.mxu0 %v2700
    %3512 = vmatpush1.msra.mxu0 %v2699
    %3513 = vmatprep.subr.mxu0 %v2704
    %3514 = vmatpush1.msra.mxu0 %v2703
    %3515 = vmatprep.subr.mxu0 %v2708
    %3516 = vmatpush1.msra.mxu0 %v2707
    %3517 = vmatprep.subr.mxu0 %v2712
    %3518 = vmatpush1.msra.mxu0 %v2711
    %3519 = vmatprep.subr.mxu0 %v2716
    %3520 = vmatpush1.msra.mxu0 %v2715
    %3521 = vmatprep.subr.mxu0 %v2720
    %3522 = vmatpush1.msra.mxu0 %v2719
    %3523 = vmatprep.subr.mxu0 0.0
    %3524 = vmatpush1.msra.mxu0 0.0
    %3525 = vmatprep.subr.mxu0 0.0
    %3526 = vmatpush1.msra.mxu0 0.0
    %3527 = vmatprep.subr.mxu0 0.0
    %3528 = vmatpush1.msra.mxu0 0.0
    %3529 = vmatprep.subr.mxu0 0.0
    %3530 = vmatpush1.msra.mxu0 0.0
    %3531 = vmatprep.subr.mxu0 0.0
    %3532 = vmatpush1.msra.mxu0 0.0
    %3533 = vmatprep.subr.mxu0 0.0
    %3534 = vmatpush1.msra.mxu0 0.0
    %3535 = vmatprep.subr.mxu0 0.0
    %3536 = vmatpush1.msra.mxu0 0.0
    %3537 = vmatprep.subr.mxu0 0.0
    %3538 = vmatpush1.msra.mxu0 0.0
    %3539 = vmatprep.subr.mxu0 0.0
    %3540 = vmatpush1.msra.mxu0 0.0
    %3541 = vmatprep.subr.mxu0 0.0
    %3542 = vmatpush1.msra.mxu0 0.0
    %3543 = vmatprep.subr.mxu0 0.0
    %3544 = vmatpush1.msra.mxu0 0.0
    %3545 = vmatprep.subr.mxu0 0.0
    %3546 = vmatpush1.msra.mxu0 0.0
    %3547 = vmatprep.subr.mxu0 0.0
    %3548 = vmatpush1.msra.mxu0 0.0
    %3549 = vmatprep.subr.mxu0 0.0
    %3550 = vmatpush1.msra.mxu0 0.0
    %3551 = vmatprep.subr.mxu0 0.0
    %3552 = vmatpush1.msra.mxu0 0.0
    %3553 = vmatprep.subr.mxu0 0.0
    %3554 = vmatpush1.msra.mxu0 0.0
    %3555 = vmatprep.subr.mxu0 0.0
    %3556 = vmatpush1.msra.mxu0 0.0
    %3557 = vmatprep.subr.mxu0 0.0
    %3558 = vmatpush1.msra.mxu0 0.0
    %3559 = vmatprep.subr.mxu0 0.0
    %3560 = vmatpush1.msra.mxu0 0.0
    %3561 = vmatprep.subr.mxu0 0.0
    %3562 = vmatpush1.msra.mxu0 0.0
    %3563 = vmatprep.subr.mxu0 0.0
    %3564 = vmatpush1.msra.mxu0 0.0
    %3565 = vmatprep.subr.mxu0 0.0
    %3566 = vmatpush1.msra.mxu0 0.0
    %3567 = vmatprep.subr.mxu0 0.0
    %3568 = vmatpush1.msra.mxu0 0.0
    %3569 = vmatprep.subr.mxu0 0.0
    %3570 = vmatpush1.msra.mxu0 0.0
    %3571 = vmatprep.mubr.f32.mxu0 0.0
    %3572 = vmatmul.mubr.f32.gmra.mrb[0].mxu0 %v3434
    %v3573 = vpop.f32.mrb[0].mxu0
    %v3574 = vadd.f32 0.0, %v3573
    %v3575 = vpop.f32.mrb[0].mxu0
    %v3576 = vadd.f32 0.0, %v3575
    %3577 = vdwg.mxu0
    %v3578 = vadd.f32 %v3429, %v3503
    %v3579 = vadd.f32 %v3430, %v3505
    %v3580 = vadd.f32 %v3431, %v3574
    %v3581 = vadd.f32 %v3432, %v3576
    %v3582 = vxor.u32 %v3578, 2147483648
    %v3583 = vxor.u32 %v3579, 2147483648
    %v3584 = vxor.u32 %v3580, 2147483648
    %v3585 = vmul.f32 %v3582, 1.442695
    %v3586 = vpow.pop %v3585
    %v3587 = vmul.f32 %v3583, 1.442695
    %v3588 = vpow.pop %v3587
    %v3589 = vmul.f32 %v3584, 1.442695
    %v3590 = vpow.pop %v3589
    %v3591 = vadd.f32 %v3586, 1.0
    %v3592 = vadd.f32 %v3588, 1.0
    %v3593 = vadd.f32 %v3590, 1.0
    %v3594 = vrcp.pop %v3591
    %v3595 = vmul.f32 1.0, %v3594
    %v3596 = vrcp.pop %v3592
    %v3597 = vmul.f32 1.0, %v3596
    %v3598 = vrcp.pop %v3593
    %v3599 = vmul.f32 1.0, %v3598
    %v3600 = vtanh.pop %v3581
    %v3601 = vmul.f32 %v3597, %v3426
    %v3602 = vmul.f32 %v3595, %v3600
    %v3603 = vadd.f32 %v3601, %v3602
    %v3604 = vtanh.pop %v3603
    %v3605 = vmul.f32 %v3599, %v3604
    %v3606 = vadd.f32 %v1661, %v2515
    %v3607 = vadd.f32 %v1663, %v2517
    %v3608 = vadd.f32 %v1807, %v2661
    %v3609 = vadd.f32 %v1809, %v2663
    %v3611 = vsel %vm312, %v3605, 0
    %3613 = vmatprep.subr.mxu0 %v2690
    %3614 = vmatpush1.msra.mxu0 %v2689
    %3615 = vmatprep.subr.mxu0 %v2694
    %3616 = vmatpush1.msra.mxu0 %v2693
    %3617 = vmatprep.subr.mxu0 %v2698
    %3618 = vmatpush1.msra.mxu0 %v2697
    %3619 = vmatprep.subr.mxu0 %v2702
    %3620 = vmatpush1.msra.mxu0 %v2701
    %3621 = vmatprep.subr.mxu0 %v2706
    %3622 = vmatpush1.msra.mxu0 %v2705
    %3623 = vmatprep.subr.mxu0 %v2710
    %3624 = vmatpush1.msra.mxu0 %v2709
    %3625 = vmatprep.subr.mxu0 %v2714
    %3626 = vmatpush1.msra.mxu0 %v2713
    %3627 = vmatprep.subr.mxu0 %v2718
    %3628 = vmatpush1.msra.mxu0 %v2717
    %3629 = vmatprep.subr.mxu0 0.0
    %3630 = vmatpush1.msra.mxu0 0.0
    %3631 = vmatprep.subr.mxu0 0.0
    %3632 = vmatpush1.msra.mxu0 0.0
    %3633 = vmatprep.subr.mxu0 0.0
    %3634 = vmatpush1.msra.mxu0 0.0
    %3635 = vmatprep.subr.mxu0 0.0
    %3636 = vmatpush1.msra.mxu0 0.0
    %3637 = vmatprep.subr.mxu0 0.0
    %3638 = vmatpush1.msra.mxu0 0.0
    %3639 = vmatprep.subr.mxu0 0.0
    %3640 = vmatpush1.msra.mxu0 0.0
    %3641 = vmatprep.subr.mxu0 0.0
    %3642 = vmatpush1.msra.mxu0 0.0
    %3643 = vmatprep.subr.mxu0 0.0
    %3644 = vmatpush1.msra.mxu0 0.0
    %3645 = vmatprep.subr.mxu0 0.0
    %3646 = vmatpush1.msra.mxu0 0.0
    %3647 = vmatprep.subr.mxu0 0.0
    %3648 = vmatpush1.msra.mxu0 0.0
    %3649 = vmatprep.subr.mxu0 0.0
    %3650 = vmatpush1.msra.mxu0 0.0
    %3651 = vmatprep.subr.mxu0 0.0
    %3652 = vmatpush1.msra.mxu0 0.0
    %3653 = vmatprep.subr.mxu0 0.0
    %3654 = vmatpush1.msra.mxu0 0.0
    %3655 = vmatprep.subr.mxu0 0.0
    %3656 = vmatpush1.msra.mxu0 0.0
    %3657 = vmatprep.subr.mxu0 0.0
    %3658 = vmatpush1.msra.mxu0 0.0
    %3659 = vmatprep.subr.mxu0 0.0
    %3660 = vmatpush1.msra.mxu0 0.0
    %3661 = vmatprep.subr.mxu0 0.0
    %3662 = vmatpush1.msra.mxu0 0.0
    %3663 = vmatprep.subr.mxu0 0.0
    %3664 = vmatpush1.msra.mxu0 0.0
    %3665 = vmatprep.subr.mxu0 0.0
    %3666 = vmatpush1.msra.mxu0 0.0
    %3667 = vmatprep.subr.mxu0 0.0
    %3668 = vmatpush1.msra.mxu0 0.0
    %3669 = vmatprep.subr.mxu0 0.0
    %3670 = vmatpush1.msra.mxu0 0.0
    %3671 = vmatprep.subr.mxu0 0.0
    %3672 = vmatpush1.msra.mxu0 0.0
    %3673 = vmatprep.subr.mxu0 0.0
    %3674 = vmatpush1.msra.mxu0 0.0
    %3675 = vmatprep.subr.mxu0 0.0
    %3676 = vmatpush1.msra.mxu0 0.0
    %3677 = vmatprep.mubr.f32.mxu0 0.0
    %3678 = vmatmul.mubr.f32.gmra.mrb[0].mxu0 %v3611
    %v3679 = vpop.f32.mrb[0].mxu0
    %v3680 = vadd.f32 0.0, %v3679
    %v3681 = vpop.f32.mrb[0].mxu0
    %v3682 = vadd.f32 0.0, %v3681
    %3683 = vdwg.mxu0
    %3684 = vmatprep.subr.mxu0 %v2692
    %3685 = vmatpush1.msra.mxu0 %v2691
    %3686 = vmatprep.subr.mxu0 %v2696
    %3687 = vmatpush1.msra.mxu0 %v2695
    %3688 = vmatprep.subr.mxu0 %v2700
    %3689 = vmatpush1.msra.mxu0 %v2699
    %3690 = vmatprep.subr.mxu0 %v2704
    %3691 = vmatpush1.msra.mxu0 %v2703
    %3692 = vmatprep.subr.mxu0 %v2708
    %3693 = vmatpush1.msra.mxu0 %v2707
    %3694 = vmatprep.subr.mxu0 %v2712
    %3695 = vmatpush1.msra.mxu0 %v2711
    %3696 = vmatprep.subr.mxu0 %v2716
    %3697 = vmatpush1.msra.mxu0 %v2715
    %3698 = vmatprep.subr.mxu0 %v2720
    %3699 = vmatpush1.msra.mxu0 %v2719
    %3700 = vmatprep.subr.mxu0 0.0
    %3701 = vmatpush1.msra.mxu0 0.0
    %3702 = vmatprep.subr.mxu0 0.0
    %3703 = vmatpush1.msra.mxu0 0.0
    %3704 = vmatprep.subr.mxu0 0.0
    %3705 = vmatpush1.msra.mxu0 0.0
    %3706 = vmatprep.subr.mxu0 0.0
    %3707 = vmatpush1.msra.mxu0 0.0
    %3708 = vmatprep.subr.mxu0 0.0
    %3709 = vmatpush1.msra.mxu0 0.0
    %3710 = vmatprep.subr.mxu0 0.0
    %3711 = vmatpush1.msra.mxu0 0.0
    %3712 = vmatprep.subr.mxu0 0.0
    %3713 = vmatpush1.msra.mxu0 0.0
    %3714 = vmatprep.subr.mxu0 0.0
    %3715 = vmatpush1.msra.mxu0 0.0
    %3716 = vmatprep.subr.mxu0 0.0
    %3717 = vmatpush1.msra.mxu0 0.0
    %3718 = vmatprep.subr.mxu0 0.0
    %3719 = vmatpush1.msra.mxu0 0.0
    %3720 = vmatprep.subr.mxu0 0.0
    %3721 = vmatpush1.msra.mxu0 0.0
    %3722 = vmatprep.subr.mxu0 0.0
    %3723 = vmatpush1.msra.mxu0 0.0
    %3724 = vmatprep.subr.mxu0 0.0
    %3725 = vmatpush1.msra.mxu0 0.0
    %3726 = vmatprep.subr.mxu0 0.0
    %3727 = vmatpush1.msra.mxu0 0.0
    %3728 = vmatprep.subr.mxu0 0.0
    %3729 = vmatpush1.msra.mxu0 0.0
    %3730 = vmatprep.subr.mxu0 0.0
    %3731 = vmatpush1.msra.mxu0 0.0
    %3732 = vmatprep.subr.mxu0 0.0
    %3733 = vmatpush1.msra.mxu0 0.0
    %3734 = vmatprep.subr.mxu0 0.0
    %3735 = vmatpush1.msra.mxu0 0.0
    %3736 = vmatprep.subr.mxu0 0.0
    %3737 = vmatpush1.msra.mxu0 0.0
    %3738 = vmatprep.subr.mxu0 0.0
    %3739 = vmatpush1.msra.mxu0 0.0
    %3740 = vmatprep.subr.mxu0 0.0
    %3741 = vmatpush1.msra.mxu0 0.0
    %3742 = vmatprep.subr.mxu0 0.0
    %3743 = vmatpush1.msra.mxu0 0.0
    %3744 = vmatprep.subr.mxu0 0.0
    %3745 = vmatpush1.msra.mxu0 0.0
    %3746 = vmatprep.subr.mxu0 0.0
    %3747 = vmatpush1.msra.mxu0 0.0
    %3748 = vmatprep.mubr.f32.mxu0 0.0
    %3749 = vmatmul.mubr.f32.gmra.mrb[0].mxu0 %v3611
    %v3750 = vpop.f32.mrb[0].mxu0
    %v3751 = vadd.f32 0.0, %v3750
    %v3752 = vpop.f32.mrb[0].mxu0
    %v3753 = vadd.f32 0.0, %v3752
    %3754 = vdwg.mxu0
    %v3755 = vadd.f32 %v3606, %v3680
    %v3756 = vadd.f32 %v3607, %v3682
    %v3757 = vadd.f32 %v3608, %v3751
    %v3758 = vadd.f32 %v3609, %v3753
    %v3759 = vxor.u32 %v3755, 2147483648
    %v3760 = vxor.u32 %v3756, 2147483648
    %v3761 = vxor.u32 %v3757, 2147483648
    %v3762 = vmul.f32 %v3759, 1.442695
    %v3763 = vpow.pop %v3762
    %v3764 = vmul.f32 %v3760, 1.442695
    %v3765 = vpow.pop %v3764
    %v3766 = vmul.f32 %v3761, 1.442695
    %v3767 = vpow.pop %v3766
    %v3768 = vadd.f32 %v3763, 1.0
    %v3769 = vadd.f32 %v3765, 1.0
    %v3770 = vadd.f32 %v3767, 1.0
    %v3771 = vrcp.pop %v3768
    %v3772 = vmul.f32 1.0, %v3771
    %v3773 = vrcp.pop %v3769
    %v3774 = vmul.f32 1.0, %v3773
    %v3775 = vrcp.pop %v3770
    %v3776 = vmul.f32 1.0, %v3775
    %v3777 = vtanh.pop %v3758
    %v3778 = vmul.f32 %v3774, %v3603
    %v3779 = vmul.f32 %v3772, %v3777
    %v3780 = vadd.f32 %v3778, %v3779
    %v3781 = vtanh.pop %v3780
    %v3782 = vmul.f32 %v3776, %v3781
    %v3783 = vadd.f32 %v1667, %v2509
    %v3784 = vadd.f32 %v1669, %v2511
    %v3785 = vadd.f32 %v1813, %v2655
    %v3786 = vadd.f32 %v1815, %v2657
    %v3788 = vsel %vm312, %v3782, 0
    %3790 = vmatprep.subr.mxu0 %v2690
    %3791 = vmatpush1.msra.mxu0 %v2689
    %3792 = vmatprep.subr.mxu0 %v2694
    %3793 = vmatpush1.msra.mxu0 %v2693
    %3794 = vmatprep.subr.mxu0 %v2698
    %3795 = vmatpush1.msra.mxu0 %v2697
    %3796 = vmatprep.subr.mxu0 %v2702
    %3797 = vmatpush1.msra.mxu0 %v2701
    %3798 = vmatprep.subr.mxu0 %v2706
    %3799 = vmatpush1.msra.mxu0 %v2705
    %3800 = vmatprep.subr.mxu0 %v2710
    %3801 = vmatpush1.msra.mxu0 %v2709
    %3802 = vmatprep.subr.mxu0 %v2714
    %3803 = vmatpush1.msra.mxu0 %v2713
    %3804 = vmatprep.subr.mxu0 %v2718
    %3805 = vmatpush1.msra.mxu0 %v2717
    %3806 = vmatprep.subr.mxu0 0.0
    %3807 = vmatpush1.msra.mxu0 0.0
    %3808 = vmatprep.subr.mxu0 0.0
    %3809 = vmatpush1.msra.mxu0 0.0
    %3810 = vmatprep.subr.mxu0 0.0
    %3811 = vmatpush1.msra.mxu0 0.0
    %3812 = vmatprep.subr.mxu0 0.0
    %3813 = vmatpush1.msra.mxu0 0.0
    %3814 = vmatprep.subr.mxu0 0.0
    %3815 = vmatpush1.msra.mxu0 0.0
    %3816 = vmatprep.subr.mxu0 0.0
    %3817 = vmatpush1.msra.mxu0 0.0
    %3818 = vmatprep.subr.mxu0 0.0
    %3819 = vmatpush1.msra.mxu0 0.0
    %3820 = vmatprep.subr.mxu0 0.0
    %3821 = vmatpush1.msra.mxu0 0.0
    %3822 = vmatprep.subr.mxu0 0.0
    %3823 = vmatpush1.msra.mxu0 0.0
    %3824 = vmatprep.subr.mxu0 0.0
    %3825 = vmatpush1.msra.mxu0 0.0
    %3826 = vmatprep.subr.mxu0 0.0
    %3827 = vmatpush1.msra.mxu0 0.0
    %3828 = vmatprep.subr.mxu0 0.0
    %3829 = vmatpush1.msra.mxu0 0.0
    %3830 = vmatprep.subr.mxu0 0.0
    %3831 = vmatpush1.msra.mxu0 0.0
    %3832 = vmatprep.subr.mxu0 0.0
    %3833 = vmatpush1.msra.mxu0 0.0
    %3834 = vmatprep.subr.mxu0 0.0
    %3835 = vmatpush1.msra.mxu0 0.0
    %3836 = vmatprep.subr.mxu0 0.0
    %3837 = vmatpush1.msra.mxu0 0.0
    %3838 = vmatprep.subr.mxu0 0.0
    %3839 = vmatpush1.msra.mxu0 0.0
    %3840 = vmatprep.subr.mxu0 0.0
    %3841 = vmatpush1.msra.mxu0 0.0
    %3842 = vmatprep.subr.mxu0 0.0
    %3843 = vmatpush1.msra.mxu0 0.0
    %3844 = vmatprep.subr.mxu0 0.0
    %3845 = vmatpush1.msra.mxu0 0.0
    %3846 = vmatprep.subr.mxu0 0.0
    %3847 = vmatpush1.msra.mxu0 0.0
    %3848 = vmatprep.subr.mxu0 0.0
    %3849 = vmatpush1.msra.mxu0 0.0
    %3850 = vmatprep.subr.mxu0 0.0
    %3851 = vmatpush1.msra.mxu0 0.0
    %3852 = vmatprep.subr.mxu0 0.0
    %3853 = vmatpush1.msra.mxu0 0.0
    %3854 = vmatprep.mubr.f32.mxu0 0.0
    %3855 = vmatmul.mubr.f32.gmra.mrb[0].mxu0 %v3788
    %v3856 = vpop.f32.mrb[0].mxu0
    %v3857 = vadd.f32 0.0, %v3856
    %v3858 = vpop.f32.mrb[0].mxu0
    %v3859 = vadd.f32 0.0, %v3858
    %3860 = vdwg.mxu0
    %3861 = vmatprep.subr.mxu0 %v2692
    %3862 = vmatpush1.msra.mxu0 %v2691
    %3863 = vmatprep.subr.mxu0 %v2696
    %3864 = vmatpush1.msra.mxu0 %v2695
    %3865 = vmatprep.subr.mxu0 %v2700
    %3866 = vmatpush1.msra.mxu0 %v2699
    %3867 = vmatprep.subr.mxu0 %v2704
    %3868 = vmatpush1.msra.mxu0 %v2703
    %3869 = vmatprep.subr.mxu0 %v2708
    %3870 = vmatpush1.msra.mxu0 %v2707
    %3871 = vmatprep.subr.mxu0 %v2712
    %3872 = vmatpush1.msra.mxu0 %v2711
    %3873 = vmatprep.subr.mxu0 %v2716
    %3874 = vmatpush1.msra.mxu0 %v2715
    %3875 = vmatprep.subr.mxu0 %v2720
    %3876 = vmatpush1.msra.mxu0 %v2719
    %3877 = vmatprep.subr.mxu0 0.0
    %3878 = vmatpush1.msra.mxu0 0.0
    %3879 = vmatprep.subr.mxu0 0.0
    %3880 = vmatpush1.msra.mxu0 0.0
    %3881 = vmatprep.subr.mxu0 0.0
    %3882 = vmatpush1.msra.mxu0 0.0
    %3883 = vmatprep.subr.mxu0 0.0
    %3884 = vmatpush1.msra.mxu0 0.0
    %3885 = vmatprep.subr.mxu0 0.0
    %3886 = vmatpush1.msra.mxu0 0.0
    %3887 = vmatprep.subr.mxu0 0.0
    %3888 = vmatpush1.msra.mxu0 0.0
    %3889 = vmatprep.subr.mxu0 0.0
    %3890 = vmatpush1.msra.mxu0 0.0
    %3891 = vmatprep.subr.mxu0 0.0
    %3892 = vmatpush1.msra.mxu0 0.0
    %3893 = vmatprep.subr.mxu0 0.0
    %3894 = vmatpush1.msra.mxu0 0.0
    %3895 = vmatprep.subr.mxu0 0.0
    %3896 = vmatpush1.msra.mxu0 0.0
    %3897 = vmatprep.subr.mxu0 0.0
    %3898 = vmatpush1.msra.mxu0 0.0
    %3899 = vmatprep.subr.mxu0 0.0
    %3900 = vmatpush1.msra.mxu0 0.0
    %3901 = vmatprep.subr.mxu0 0.0
    %3902 = vmatpush1.msra.mxu0 0.0
    %3903 = vmatprep.subr.mxu0 0.0
    %3904 = vmatpush1.msra.mxu0 0.0
    %3905 = vmatprep.subr.mxu0 0.0
    %3906 = vmatpush1.msra.mxu0 0.0
    %3907 = vmatprep.subr.mxu0 0.0
    %3908 = vmatpush1.msra.mxu0 0.0
    %3909 = vmatprep.subr.mxu0 0.0
    %3910 = vmatpush1.msra.mxu0 0.0
    %3911 = vmatprep.subr.mxu0 0.0
    %3912 = vmatpush1.msra.mxu0 0.0
    %3913 = vmatprep.subr.mxu0 0.0
    %3914 = vmatpush1.msra.mxu0 0.0
    %3915 = vmatprep.subr.mxu0 0.0
    %3916 = vmatpush1.msra.mxu0 0.0
    %3917 = vmatprep.subr.mxu0 0.0
    %3918 = vmatpush1.msra.mxu0 0.0
    %3919 = vmatprep.subr.mxu0 0.0
    %3920 = vmatpush1.msra.mxu0 0.0
    %3921 = vmatprep.subr.mxu0 0.0
    %3922 = vmatpush1.msra.mxu0 0.0
    %3923 = vmatprep.subr.mxu0 0.0
    %3924 = vmatpush1.msra.mxu0 0.0
    %3925 = vmatprep.mubr.f32.mxu0 0.0
    %3926 = vmatmul.mubr.f32.gmra.mrb[0].mxu0 %v3788
    %v3927 = vpop.f32.mrb[0].mxu0
    %v3928 = vadd.f32 0.0, %v3927
    %v3929 = vpop.f32.mrb[0].mxu0
    %v3930 = vadd.f32 0.0, %v3929
    %3931 = vdwg.mxu0
    %v3932 = vadd.f32 %v3783, %v3857
    %v3933 = vadd.f32 %v3784, %v3859
    %v3934 = vadd.f32 %v3785, %v3928
    %v3935 = vadd.f32 %v3786, %v3930
    %v3936 = vxor.u32 %v3932, 2147483648
    %v3937 = vxor.u32 %v3933, 2147483648
    %v3938 = vxor.u32 %v3934, 2147483648
    %v3939 = vmul.f32 %v3936, 1.442695
    %v3940 = vpow.pop %v3939
    %v3941 = vmul.f32 %v3937, 1.442695
    %v3942 = vpow.pop %v3941
    %v3943 = vmul.f32 %v3938, 1.442695
    %v3944 = vpow.pop %v3943
    %v3945 = vadd.f32 %v3940, 1.0
    %v3946 = vadd.f32 %v3942, 1.0
    %v3947 = vadd.f32 %v3944, 1.0
    %v3948 = vrcp.pop %v3945
    %v3949 = vmul.f32 1.0, %v3948
    %v3950 = vrcp.pop %v3946
    %v3951 = vmul.f32 1.0, %v3950
    %v3952 = vrcp.pop %v3947
    %v3953 = vmul.f32 1.0, %v3952
    %v3954 = vtanh.pop %v3935
    %v3955 = vmul.f32 %v3951, %v3780
    %v3956 = vmul.f32 %v3949, %v3954
    %v3957 = vadd.f32 %v3955, %v3956
    %v3958 = vtanh.pop %v3957
    %v3959 = vmul.f32 %v3953, %v3958
    %v3960 = vadd.f32 %v1671, %v2505
    %v3961 = vadd.f32 %v1673, %v2507
    %v3962 = vadd.f32 %v1817, %v2651
    %v3963 = vadd.f32 %v1819, %v2653
    %v3965 = vsel %vm312, %v3959, 0
    %3967 = vmatprep.subr.mxu0 %v2690
    %3968 = vmatpush1.msra.mxu0 %v2689
    %3969 = vmatprep.subr.mxu0 %v2694
    %3970 = vmatpush1.msra.mxu0 %v2693
    %3971 = vmatprep.subr.mxu0 %v2698
    %3972 = vmatpush1.msra.mxu0 %v2697
    %3973 = vmatprep.subr.mxu0 %v2702
    %3974 = vmatpush1.msra.mxu0 %v2701
    %3975 = vmatprep.subr.mxu0 %v2706
    %3976 = vmatpush1.msra.mxu0 %v2705
    %3977 = vmatprep.subr.mxu0 %v2710
    %3978 = vmatpush1.msra.mxu0 %v2709
    %3979 = vmatprep.subr.mxu0 %v2714
    %3980 = vmatpush1.msra.mxu0 %v2713
    %3981 = vmatprep.subr.mxu0 %v2718
    %3982 = vmatpush1.msra.mxu0 %v2717
    %3983 = vmatprep.subr.mxu0 0.0
    %3984 = vmatpush1.msra.mxu0 0.0
    %3985 = vmatprep.subr.mxu0 0.0
    %3986 = vmatpush1.msra.mxu0 0.0
    %3987 = vmatprep.subr.mxu0 0.0
    %3988 = vmatpush1.msra.mxu0 0.0
    %3989 = vmatprep.subr.mxu0 0.0
    %3990 = vmatpush1.msra.mxu0 0.0
    %3991 = vmatprep.subr.mxu0 0.0
    %3992 = vmatpush1.msra.mxu0 0.0
    %3993 = vmatprep.subr.mxu0 0.0
    %3994 = vmatpush1.msra.mxu0 0.0
    %3995 = vmatprep.subr.mxu0 0.0
    %3996 = vmatpush1.msra.mxu0 0.0
    %3997 = vmatprep.subr.mxu0 0.0
    %3998 = vmatpush1.msra.mxu0 0.0
    %3999 = vmatprep.subr.mxu0 0.0
    %4000 = vmatpush1.msra.mxu0 0.0
    %4001 = vmatprep.subr.mxu0 0.0
    %4002 = vmatpush1.msra.mxu0 0.0
    %4003 = vmatprep.subr.mxu0 0.0
    %4004 = vmatpush1.msra.mxu0 0.0
    %4005 = vmatprep.subr.mxu0 0.0
    %4006 = vmatpush1.msra.mxu0 0.0
    %4007 = vmatprep.subr.mxu0 0.0
    %4008 = vmatpush1.msra.mxu0 0.0
    %4009 = vmatprep.subr.mxu0 0.0
    %4010 = vmatpush1.msra.mxu0 0.0
    %4011 = vmatprep.subr.mxu0 0.0
    %4012 = vmatpush1.msra.mxu0 0.0
    %4013 = vmatprep.subr.mxu0 0.0
    %4014 = vmatpush1.msra.mxu0 0.0
    %4015 = vmatprep.subr.mxu0 0.0
    %4016 = vmatpush1.msra.mxu0 0.0
    %4017 = vmatprep.subr.mxu0 0.0
    %4018 = vmatpush1.msra.mxu0 0.0
    %4019 = vmatprep.subr.mxu0 0.0
    %4020 = vmatpush1.msra.mxu0 0.0
    %4021 = vmatprep.subr.mxu0 0.0
    %4022 = vmatpush1.msra.mxu0 0.0
    %4023 = vmatprep.subr.mxu0 0.0
    %4024 = vmatpush1.msra.mxu0 0.0
    %4025 = vmatprep.subr.mxu0 0.0
    %4026 = vmatpush1.msra.mxu0 0.0
    %4027 = vmatprep.subr.mxu0 0.0
    %4028 = vmatpush1.msra.mxu0 0.0
    %4029 = vmatprep.subr.mxu0 0.0
    %4030 = vmatpush1.msra.mxu0 0.0
    %4031 = vmatprep.mubr.f32.mxu0 0.0
    %4032 = vmatmul.mubr.f32.gmra.mrb[0].mxu0 %v3965
    %v4033 = vpop.f32.mrb[0].mxu0
    %v4034 = vadd.f32 0.0, %v4033
    %v4035 = vpop.f32.mrb[0].mxu0
    %v4036 = vadd.f32 0.0, %v4035
    %4037 = vdwg.mxu0
    %4038 = vmatprep.subr.mxu0 %v2692
    %4039 = vmatpush1.msra.mxu0 %v2691
    %4040 = vmatprep.subr.mxu0 %v2696
    %4041 = vmatpush1.msra.mxu0 %v2695
    %4042 = vmatprep.subr.mxu0 %v2700
    %4043 = vmatpush1.msra.mxu0 %v2699
    %4044 = vmatprep.subr.mxu0 %v2704
    %4045 = vmatpush1.msra.mxu0 %v2703
    %4046 = vmatprep.subr.mxu0 %v2708
    %4047 = vmatpush1.msra.mxu0 %v2707
    %4048 = vmatprep.subr.mxu0 %v2712
    %4049 = vmatpush1.msra.mxu0 %v2711
    %4050 = vmatprep.subr.mxu0 %v2716
    %4051 = vmatpush1.msra.mxu0 %v2715
    %4052 = vmatprep.subr.mxu0 %v2720
    %4053 = vmatpush1.msra.mxu0 %v2719
    %4054 = vmatprep.subr.mxu0 0.0
    %4055 = vmatpush1.msra.mxu0 0.0
    %4056 = vmatprep.subr.mxu0 0.0
    %4057 = vmatpush1.msra.mxu0 0.0
    %4058 = vmatprep.subr.mxu0 0.0
    %4059 = vmatpush1.msra.mxu0 0.0
    %4060 = vmatprep.subr.mxu0 0.0
    %4061 = vmatpush1.msra.mxu0 0.0
    %4062 = vmatprep.subr.mxu0 0.0
    %4063 = vmatpush1.msra.mxu0 0.0
    %4064 = vmatprep.subr.mxu0 0.0
    %4065 = vmatpush1.msra.mxu0 0.0
    %4066 = vmatprep.subr.mxu0 0.0
    %4067 = vmatpush1.msra.mxu0 0.0
    %4068 = vmatprep.subr.mxu0 0.0
    %4069 = vmatpush1.msra.mxu0 0.0
    %4070 = vmatprep.subr.mxu0 0.0
    %4071 = vmatpush1.msra.mxu0 0.0
    %4072 = vmatprep.subr.mxu0 0.0
    %4073 = vmatpush1.msra.mxu0 0.0
    %4074 = vmatprep.subr.mxu0 0.0
    %4075 = vmatpush1.msra.mxu0 0.0
    %4076 = vmatprep.subr.mxu0 0.0
    %4077 = vmatpush1.msra.mxu0 0.0
    %4078 = vmatprep.subr.mxu0 0.0
    %4079 = vmatpush1.msra.mxu0 0.0
    %4080 = vmatprep.subr.mxu0 0.0
    %4081 = vmatpush1.msra.mxu0 0.0
    %4082 = vmatprep.subr.mxu0 0.0
    %4083 = vmatpush1.msra.mxu0 0.0
    %4084 = vmatprep.subr.mxu0 0.0
    %4085 = vmatpush1.msra.mxu0 0.0
    %4086 = vmatprep.subr.mxu0 0.0
    %4087 = vmatpush1.msra.mxu0 0.0
    %4088 = vmatprep.subr.mxu0 0.0
    %4089 = vmatpush1.msra.mxu0 0.0
    %4090 = vmatprep.subr.mxu0 0.0
    %4091 = vmatpush1.msra.mxu0 0.0
    %4092 = vmatprep.subr.mxu0 0.0
    %4093 = vmatpush1.msra.mxu0 0.0
    %4094 = vmatprep.subr.mxu0 0.0
    %4095 = vmatpush1.msra.mxu0 0.0
    %4096 = vmatprep.subr.mxu0 0.0
    %4097 = vmatpush1.msra.mxu0 0.0
    %4098 = vmatprep.subr.mxu0 0.0
    %4099 = vmatpush1.msra.mxu0 0.0
    %4100 = vmatprep.subr.mxu0 0.0
    %4101 = vmatpush1.msra.mxu0 0.0
    %4102 = vmatprep.mubr.f32.mxu0 0.0
    %4103 = vmatmul.mubr.f32.gmra.mrb[0].mxu0 %v3965
    %v4104 = vpop.f32.mrb[0].mxu0
    %v4105 = vadd.f32 0.0, %v4104
    %v4106 = vpop.f32.mrb[0].mxu0
    %v4107 = vadd.f32 0.0, %v4106
    %4108 = vdwg.mxu0
    %v4109 = vadd.f32 %v3960, %v4034
    %v4110 = vadd.f32 %v3961, %v4036
    %v4111 = vadd.f32 %v3962, %v4105
    %v4112 = vadd.f32 %v3963, %v4107
    %v4113 = vxor.u32 %v4109, 2147483648
    %v4114 = vxor.u32 %v4110, 2147483648
    %v4115 = vxor.u32 %v4111, 2147483648
    %v4116 = vmul.f32 %v4113, 1.442695
    %v4117 = vpow.pop %v4116
    %v4118 = vmul.f32 %v4114, 1.442695
    %v4119 = vpow.pop %v4118
    %v4120 = vmul.f32 %v4115, 1.442695
    %v4121 = vpow.pop %v4120
    %v4122 = vadd.f32 %v4117, 1.0
    %v4123 = vadd.f32 %v4119, 1.0
    %v4124 = vadd.f32 %v4121, 1.0
    %v4125 = vrcp.pop %v4122
    %v4126 = vmul.f32 1.0, %v4125
    %v4127 = vrcp.pop %v4123
    %v4128 = vmul.f32 1.0, %v4127
    %v4129 = vrcp.pop %v4124
    %v4130 = vmul.f32 1.0, %v4129
    %v4131 = vtanh.pop %v4112
    %v4132 = vmul.f32 %v4128, %v3957
    %v4133 = vmul.f32 %v4126, %v4131
    %v4134 = vadd.f32 %v4132, %v4133
    %v4135 = vtanh.pop %v4134
    %v4136 = vmul.f32 %v4130, %v4135
    %v4137 = vmax.f32 %v4136, 0.0
    %v4138 = vmax.f32 %v3959, 0.0
    %v4139 = vmax.f32 %v3782, 0.0
    %v4140 = vmax.f32 %v3605, 0.0
    %v4141 = vmax.f32 %v3428, 0.0
    %v4142 = vmax.f32 %v3251, 0.0
    %v4143 = vmax.f32 %v3074, 0.0
    %v4144 = vmax.f32 %v2897, 0.0
    %v4145 = vpack.c.bf16 %v4138, %v4137
    %v4146 = vpack.c.bf16 %v4140, %v4139
    %v4147 = vpack.c.bf16 %v4142, %v4141
    %v4148 = vpack.c.bf16 %v4144, %v4143
    %v4149 = vpack.c.bf16 %v4143, %v4144
    %v4150 = vpack.c.bf16 %v4141, %v4142
    %v4151 = vpack.c.bf16 %v4139, %v4140
    %v4152 = vpack.c.bf16 %v4137, %v4138
    %v4153 = vld [vmem:[#allocation9] sm:$0xff]
    %v4154 = vld [vmem:[#allocation9 + $0x8] sm:$0xff]
    %v4155 = vld [vmem:[#allocation9 + $0x10] sm:$0xff]
    %v4156 = vld [vmem:[#allocation9 + $0x18] sm:$0xff]
    %v4157 = vld [vmem:[#allocation9 + $0x20] sm:$0xff]
    %v4158 = vld [vmem:[#allocation9 + $0x28] sm:$0xff]
    %v4159 = vld [vmem:[#allocation9 + $0x30] sm:$0xff]
    %v4160 = vld [vmem:[#allocation9 + $0x38] sm:$0xff]
    %v4161 = vld [vmem:[#allocation9 + $0x40] sm:$0xff]
    %v4162 = vld [vmem:[#allocation9 + $0x48] sm:$0xff]
    %v4163 = vld [vmem:[#allocation9 + $0x50] sm:$0xff]
    %v4164 = vld [vmem:[#allocation9 + $0x58] sm:$0xff]
    %v4165 = vld [vmem:[#allocation9 + $0x60] sm:$0xff]
    %v4166 = vld [vmem:[#allocation9 + $0x68] sm:$0xff]
    %v4167 = vld [vmem:[#allocation9 + $0x70] sm:$0xff]
    %v4168 = vld [vmem:[#allocation9 + $0x78] sm:$0xff]
    %v4169 = vld [vmem:[#allocation10] sm:$0xff]
    %v4170 = vld [vmem:[#allocation10 + $0x8] sm:$0xff]
    %v4171 = vld [vmem:[#allocation10 + $0x10] sm:$0xff]
    %v4172 = vld [vmem:[#allocation10 + $0x18] sm:$0xff]
    %v4173 = vld [vmem:[#allocation10 + $0x20] sm:$0xff]
    %v4174 = vld [vmem:[#allocation10 + $0x28] sm:$0xff]
    %v4175 = vld [vmem:[#allocation10 + $0x30] sm:$0xff]
    %v4176 = vld [vmem:[#allocation10 + $0x38] sm:$0xff]
    %v4177 = vld [vmem:[#allocation10 + $0x40] sm:$0xff]
    %v4178 = vld [vmem:[#allocation10 + $0x48] sm:$0xff]
    %v4179 = vld [vmem:[#allocation10 + $0x50] sm:$0xff]
    %v4180 = vld [vmem:[#allocation10 + $0x58] sm:$0xff]
    %v4181 = vld [vmem:[#allocation10 + $0x60] sm:$0xff]
    %v4182 = vld [vmem:[#allocation10 + $0x68] sm:$0xff]
    %v4183 = vld [vmem:[#allocation10 + $0x70] sm:$0xff]
    %v4184 = vld [vmem:[#allocation10 + $0x78] sm:$0xff]
    %v4201 = vunpack.c.l.b16 %v4169
    %v4202 = vunpack.c.h.b16 %v4169
    %v4203 = vunpack.c.l.b16 %v4170
    %v4204 = vunpack.c.h.b16 %v4170
    %v4205 = vunpack.c.l.b16 %v4171
    %v4206 = vunpack.c.h.b16 %v4171
    %v4207 = vunpack.c.l.b16 %v4172
    %v4208 = vunpack.c.h.b16 %v4172
    %v4209 = vunpack.c.l.b16 %v4173
    %v4210 = vunpack.c.h.b16 %v4173
    %v4211 = vunpack.c.l.b16 %v4174
    %v4212 = vunpack.c.h.b16 %v4174
    %v4213 = vunpack.c.l.b16 %v4175
    %v4214 = vunpack.c.h.b16 %v4175
    %v4215 = vunpack.c.l.b16 %v4176
    %v4216 = vunpack.c.h.b16 %v4176
    %v4217 = vunpack.c.l.b16 %v4177
    %v4218 = vunpack.c.h.b16 %v4177
    %v4219 = vunpack.c.l.b16 %v4178
    %v4220 = vunpack.c.h.b16 %v4178
    %v4221 = vunpack.c.l.b16 %v4179
    %v4222 = vunpack.c.h.b16 %v4179
    %v4223 = vunpack.c.l.b16 %v4180
    %v4224 = vunpack.c.h.b16 %v4180
    %v4225 = vunpack.c.l.b16 %v4181
    %v4226 = vunpack.c.h.b16 %v4181
    %v4227 = vunpack.c.l.b16 %v4182
    %v4228 = vunpack.c.h.b16 %v4182
    %v4229 = vunpack.c.l.b16 %v4183
    %v4230 = vunpack.c.h.b16 %v4183
    %v4231 = vunpack.c.l.b16 %v4184
    %v4232 = vunpack.c.h.b16 %v4184
    %v4233 = vpack.c.b16 %v4205, %v4201
    %v4234 = vpack.c.b16 %v4206, %v4202
    %v4235 = vpack.c.b16 %v4207, %v4203
    %v4236 = vpack.c.b16 %v4208, %v4204
    %v4237 = vpack.c.b16 %v4213, %v4209
    %v4238 = vpack.c.b16 %v4214, %v4210
    %v4239 = vpack.c.b16 %v4215, %v4211
    %v4240 = vpack.c.b16 %v4216, %v4212
    %v4241 = vpack.c.b16 %v4221, %v4217
    %v4242 = vpack.c.b16 %v4222, %v4218
    %v4243 = vpack.c.b16 %v4223, %v4219
    %v4244 = vpack.c.b16 %v4224, %v4220
    %v4245 = vpack.c.b16 %v4229, %v4225
    %v4246 = vpack.c.b16 %v4230, %v4226
    %v4247 = vpack.c.b16 %v4231, %v4227
    %v4248 = vpack.c.b16 %v4232, %v4228
    %v4266 = vsel %vm312, %v4149, 0
    %v4269 = vsel %vm312, %v4150, 0
    %v4272 = vsel %vm312, %v4151, 0
    %v4275 = vsel %vm312, %v4152, 0
    %4277 = vmatprep.subr.bf16.mxu0 %v4234
    %4278 = vmatpush1.bf16.msra.mxu0 %v4233
    %4279 = vmatprep.subr.bf16.mxu0 %v4238
    %4280 = vmatpush1.bf16.msra.mxu0 %v4237
    %4281 = vmatprep.subr.bf16.mxu0 %v4242
    %4282 = vmatpush1.bf16.msra.mxu0 %v4241
    %4283 = vmatprep.subr.bf16.mxu0 %v4246
    %4284 = vmatpush1.bf16.msra.mxu0 %v4245
    %4285 = vmatprep.subr.bf16.mxu0 0
    %4286 = vmatpush1.bf16.msra.mxu0 0
    %4287 = vmatprep.subr.bf16.mxu0 0
    %4288 = vmatpush1.bf16.msra.mxu0 0
    %4289 = vmatprep.subr.bf16.mxu0 0
    %4290 = vmatpush1.bf16.msra.mxu0 0
    %4291 = vmatprep.subr.bf16.mxu0 0
    %4292 = vmatpush1.bf16.msra.mxu0 0
    %4293 = vmatprep.subr.bf16.mxu0 0
    %4294 = vmatpush1.bf16.msra.mxu0 0
    %4295 = vmatprep.subr.bf16.mxu0 0
    %4296 = vmatpush1.bf16.msra.mxu0 0
    %4297 = vmatprep.subr.bf16.mxu0 0
    %4298 = vmatpush1.bf16.msra.mxu0 0
    %4299 = vmatprep.subr.bf16.mxu0 0
    %4300 = vmatpush1.bf16.msra.mxu0 0
    %4301 = vmatprep.subr.bf16.mxu0 0
    %4302 = vmatpush1.bf16.msra.mxu0 0
    %4303 = vmatprep.subr.bf16.mxu0 0
    %4304 = vmatpush1.bf16.msra.mxu0 0
    %4305 = vmatprep.subr.bf16.mxu0 0
    %4306 = vmatpush1.bf16.msra.mxu0 0
    %4307 = vmatprep.subr.bf16.mxu0 0
    %4308 = vmatpush1.bf16.msra.mxu0 0
    %4309 = vmatprep.mubr.bf16.mxu0 0
    %4310 = vmatmul.mubr.bf16.gmra.mrb[0].mxu0 %v4266
    %v4311 = vpop.f32.mrb[0].mxu0
    %v4312 = vadd.f32 0.0, %v4311
    %v4313 = vpop.f32.mrb[0].mxu0
    %v4314 = vadd.f32 0.0, %v4313
    %v4315 = vpop.f32.mrb[0].mxu0
    %v4316 = vadd.f32 0.0, %v4315
    %v4317 = vpop.f32.mrb[0].mxu0
    %v4318 = vadd.f32 0.0, %v4317
    %4319 = vmatprep.mubr.bf16.mxu0 0
    %4320 = vmatmul.mubr.bf16.gmra.mrb[0].mxu0 %v4269
    %v4321 = vpop.f32.mrb[0].mxu0
    %v4322 = vadd.f32 0.0, %v4321
    %v4323 = vpop.f32.mrb[0].mxu0
    %v4324 = vadd.f32 0.0, %v4323
    %v4325 = vpop.f32.mrb[0].mxu0
    %v4326 = vadd.f32 0.0, %v4325
    %v4327 = vpop.f32.mrb[0].mxu0
    %v4328 = vadd.f32 0.0, %v4327
    %4329 = vmatprep.mubr.bf16.mxu0 0
    %4330 = vmatmul.mubr.bf16.gmra.mrb[0].mxu0 %v4272
    %v4331 = vpop.f32.mrb[0].mxu0
    %v4332 = vadd.f32 0.0, %v4331
    %v4333 = vpop.f32.mrb[0].mxu0
    %v4334 = vadd.f32 0.0, %v4333
    %v4335 = vpop.f32.mrb[0].mxu0
    %v4336 = vadd.f32 0.0, %v4335
    %v4337 = vpop.f32.mrb[0].mxu0
    %v4338 = vadd.f32 0.0, %v4337
    %4339 = vmatprep.mubr.bf16.mxu0 0
    %4340 = vmatmul.mubr.bf16.gmra.mrb[0].mxu0 %v4275
    %v4341 = vpop.f32.mrb[0].mxu0
    %v4342 = vadd.f32 0.0, %v4341
    %v4343 = vpop.f32.mrb[0].mxu0
    %v4344 = vadd.f32 0.0, %v4343
    %v4345 = vpop.f32.mrb[0].mxu0
    %v4346 = vadd.f32 0.0, %v4345
    %v4347 = vpop.f32.mrb[0].mxu0
    %v4348 = vadd.f32 0.0, %v4347
    %4349 = vdwg.mxu0
    %4350 = vmatprep.subr.bf16.mxu0 %v4236
    %4351 = vmatpush1.bf16.msra.mxu0 %v4235
    %4352 = vmatprep.subr.bf16.mxu0 %v4240
    %4353 = vmatpush1.bf16.msra.mxu0 %v4239
    %4354 = vmatprep.subr.bf16.mxu0 %v4244
    %4355 = vmatpush1.bf16.msra.mxu0 %v4243
    %4356 = vmatprep.subr.bf16.mxu0 %v4248
    %4357 = vmatpush1.bf16.msra.mxu0 %v4247
    %4358 = vmatprep.subr.bf16.mxu0 0
    %4359 = vmatpush1.bf16.msra.mxu0 0
    %4360 = vmatprep.subr.bf16.mxu0 0
    %4361 = vmatpush1.bf16.msra.mxu0 0
    %4362 = vmatprep.subr.bf16.mxu0 0
    %4363 = vmatpush1.bf16.msra.mxu0 0
    %4364 = vmatprep.subr.bf16.mxu0 0
    %4365 = vmatpush1.bf16.msra.mxu0 0
    %4366 = vmatprep.subr.bf16.mxu0 0
    %4367 = vmatpush1.bf16.msra.mxu0 0
    %4368 = vmatprep.subr.bf16.mxu0 0
    %4369 = vmatpush1.bf16.msra.mxu0 0
    %4370 = vmatprep.subr.bf16.mxu0 0
    %4371 = vmatpush1.bf16.msra.mxu0 0
    %4372 = vmatprep.subr.bf16.mxu0 0
    %4373 = vmatpush1.bf16.msra.mxu0 0
    %4374 = vmatprep.subr.bf16.mxu0 0
    %4375 = vmatpush1.bf16.msra.mxu0 0
    %4376 = vmatprep.subr.bf16.mxu0 0
    %4377 = vmatpush1.bf16.msra.mxu0 0
    %4378 = vmatprep.subr.bf16.mxu0 0
    %4379 = vmatpush1.bf16.msra.mxu0 0
    %4380 = vmatprep.subr.bf16.mxu0 0
    %4381 = vmatpush1.bf16.msra.mxu0 0
    %4382 = vmatprep.mubr.bf16.mxu0 0
    %4383 = vmatmul.mubr.bf16.gmra.mrb[0].mxu0 %v4266
    %v4384 = vpop.f32.mrb[0].mxu0
    %v4385 = vadd.f32 0.0, %v4384
    %v4386 = vpop.f32.mrb[0].mxu0
    %v4387 = vadd.f32 0.0, %v4386
    %v4388 = vpop.f32.mrb[0].mxu0
    %v4389 = vadd.f32 0.0, %v4388
    %v4390 = vpop.f32.mrb[0].mxu0
    %v4391 = vadd.f32 0.0, %v4390
    %4392 = vmatprep.mubr.bf16.mxu0 0
    %4393 = vmatmul.mubr.bf16.gmra.mrb[0].mxu0 %v4269
    %v4394 = vpop.f32.mrb[0].mxu0
    %v4395 = vadd.f32 0.0, %v4394
    %v4396 = vpop.f32.mrb[0].mxu0
    %v4397 = vadd.f32 0.0, %v4396
    %v4398 = vpop.f32.mrb[0].mxu0
    %v4399 = vadd.f32 0.0, %v4398
    %v4400 = vpop.f32.mrb[0].mxu0
    %v4401 = vadd.f32 0.0, %v4400
    %4402 = vmatprep.mubr.bf16.mxu0 0
    %4403 = vmatmul.mubr.bf16.gmra.mrb[0].mxu0 %v4272
    %v4404 = vpop.f32.mrb[0].mxu0
    %v4405 = vadd.f32 0.0, %v4404
    %v4406 = vpop.f32.mrb[0].mxu0
    %v4407 = vadd.f32 0.0, %v4406
    %v4408 = vpop.f32.mrb[0].mxu0
    %v4409 = vadd.f32 0.0, %v4408
    %v4410 = vpop.f32.mrb[0].mxu0
    %v4411 = vadd.f32 0.0, %v4410
    %4412 = vmatprep.mubr.bf16.mxu0 0
    %4413 = vmatmul.mubr.bf16.gmra.mrb[0].mxu0 %v4275
    %v4414 = vpop.f32.mrb[0].mxu0
    %v4415 = vadd.f32 0.0, %v4414
    %v4416 = vpop.f32.mrb[0].mxu0
    %v4417 = vadd.f32 0.0, %v4416
    %v4418 = vpop.f32.mrb[0].mxu0
    %v4419 = vadd.f32 0.0, %v4418
    %v4420 = vpop.f32.mrb[0].mxu0
    %v4421 = vadd.f32 0.0, %v4420
    %4422 = vdwg.mxu0
    %v4439 = vunpack.c.l.b16 %v4153
    %v4440 = vunpack.c.h.b16 %v4153
    %v4441 = vunpack.c.l.b16 %v4154
    %v4442 = vunpack.c.h.b16 %v4154
    %v4443 = vunpack.c.l.b16 %v4155
    %v4444 = vunpack.c.h.b16 %v4155
    %v4445 = vunpack.c.l.b16 %v4156
    %v4446 = vunpack.c.h.b16 %v4156
    %v4447 = vunpack.c.l.b16 %v4157
    %v4448 = vunpack.c.h.b16 %v4157
    %v4449 = vunpack.c.l.b16 %v4158
    %v4450 = vunpack.c.h.b16 %v4158
    %v4451 = vunpack.c.l.b16 %v4159
    %v4452 = vunpack.c.h.b16 %v4159
    %v4453 = vunpack.c.l.b16 %v4160
    %v4454 = vunpack.c.h.b16 %v4160
    %v4455 = vunpack.c.l.b16 %v4161
    %v4456 = vunpack.c.h.b16 %v4161
    %v4457 = vunpack.c.l.b16 %v4162
    %v4458 = vunpack.c.h.b16 %v4162
    %v4459 = vunpack.c.l.b16 %v4163
    %v4460 = vunpack.c.h.b16 %v4163
    %v4461 = vunpack.c.l.b16 %v4164
    %v4462 = vunpack.c.h.b16 %v4164
    %v4463 = vunpack.c.l.b16 %v4165
    %v4464 = vunpack.c.h.b16 %v4165
    %v4465 = vunpack.c.l.b16 %v4166
    %v4466 = vunpack.c.h.b16 %v4166
    %v4467 = vunpack.c.l.b16 %v4167
    %v4468 = vunpack.c.h.b16 %v4167
    %v4469 = vunpack.c.l.b16 %v4168
    %v4470 = vunpack.c.h.b16 %v4168
    %v4471 = vpack.c.b16 %v4443, %v4439
    %v4472 = vpack.c.b16 %v4444, %v4440
    %v4473 = vpack.c.b16 %v4445, %v4441
    %v4474 = vpack.c.b16 %v4446, %v4442
    %v4475 = vpack.c.b16 %v4451, %v4447
    %v4476 = vpack.c.b16 %v4452, %v4448
    %v4477 = vpack.c.b16 %v4453, %v4449
    %v4478 = vpack.c.b16 %v4454, %v4450
    %v4479 = vpack.c.b16 %v4459, %v4455
    %v4480 = vpack.c.b16 %v4460, %v4456
    %v4481 = vpack.c.b16 %v4461, %v4457
    %v4482 = vpack.c.b16 %v4462, %v4458
    %v4483 = vpack.c.b16 %v4467, %v4463
    %v4484 = vpack.c.b16 %v4468, %v4464
    %v4485 = vpack.c.b16 %v4469, %v4465
    %v4486 = vpack.c.b16 %v4470, %v4466
    %v4504 = vsel %vm312, %v4145, 0
    %v4507 = vsel %vm312, %v4146, 0
    %v4510 = vsel %vm312, %v4147, 0
    %v4513 = vsel %vm312, %v4148, 0
    %4515 = vmatprep.subr.bf16.mxu0 %v4472
    %4516 = vmatpush1.bf16.msra.mxu0 %v4471
    %4517 = vmatprep.subr.bf16.mxu0 %v4476
    %4518 = vmatpush1.bf16.msra.mxu0 %v4475
    %4519 = vmatprep.subr.bf16.mxu0 %v4480
    %4520 = vmatpush1.bf16.msra.mxu0 %v4479
    %4521 = vmatprep.subr.bf16.mxu0 %v4484
    %4522 = vmatpush1.bf16.msra.mxu0 %v4483
    %4523 = vmatprep.subr.bf16.mxu0 0
    %4524 = vmatpush1.bf16.msra.mxu0 0
    %4525 = vmatprep.subr.bf16.mxu0 0
    %4526 = vmatpush1.bf16.msra.mxu0 0
    %4527 = vmatprep.subr.bf16.mxu0 0
    %4528 = vmatpush1.bf16.msra.mxu0 0
    %4529 = vmatprep.subr.bf16.mxu0 0
    %4530 = vmatpush1.bf16.msra.mxu0 0
    %4531 = vmatprep.subr.bf16.mxu0 0
    %4532 = vmatpush1.bf16.msra.mxu0 0
    %4533 = vmatprep.subr.bf16.mxu0 0
    %4534 = vmatpush1.bf16.msra.mxu0 0
    %4535 = vmatprep.subr.bf16.mxu0 0
    %4536 = vmatpush1.bf16.msra.mxu0 0
    %4537 = vmatprep.subr.bf16.mxu0 0
    %4538 = vmatpush1.bf16.msra.mxu0 0
    %4539 = vmatprep.subr.bf16.mxu0 0
    %4540 = vmatpush1.bf16.msra.mxu0 0
    %4541 = vmatprep.subr.bf16.mxu0 0
    %4542 = vmatpush1.bf16.msra.mxu0 0
    %4543 = vmatprep.subr.bf16.mxu0 0
    %4544 = vmatpush1.bf16.msra.mxu0 0
    %4545 = vmatprep.subr.bf16.mxu0 0
    %4546 = vmatpush1.bf16.msra.mxu0 0
    %4547 = vmatprep.mubr.bf16.mxu0 0
    %4548 = vmatmul.mubr.bf16.gmra.mrb[0].mxu0 %v4504
    %v4549 = vpop.f32.mrb[0].mxu0
    %v4550 = vadd.f32 %v4312, %v4549
    %v4551 = vpop.f32.mrb[0].mxu0
    %v4552 = vadd.f32 %v4314, %v4551
    %v4553 = vpop.f32.mrb[0].mxu0
    %v4554 = vadd.f32 %v4316, %v4553
    %v4555 = vpop.f32.mrb[0].mxu0
    %v4556 = vadd.f32 %v4318, %v4555
    %4557 = vmatprep.mubr.bf16.mxu0 0
    %4558 = vmatmul.mubr.bf16.gmra.mrb[0].mxu0 %v4507
    %v4559 = vpop.f32.mrb[0].mxu0
    %v4560 = vadd.f32 %v4322, %v4559
    %v4561 = vpop.f32.mrb[0].mxu0
    %v4562 = vadd.f32 %v4324, %v4561
    %v4563 = vpop.f32.mrb[0].mxu0
    %v4564 = vadd.f32 %v4326, %v4563
    %v4565 = vpop.f32.mrb[0].mxu0
    %v4566 = vadd.f32 %v4328, %v4565
    %4567 = vmatprep.mubr.bf16.mxu0 0
    %4568 = vmatmul.mubr.bf16.gmra.mrb[0].mxu0 %v4510
    %v4569 = vpop.f32.mrb[0].mxu0
    %v4570 = vadd.f32 %v4332, %v4569
    %v4571 = vpop.f32.mrb[0].mxu0
    %v4572 = vadd.f32 %v4334, %v4571
    %v4573 = vpop.f32.mrb[0].mxu0
    %v4574 = vadd.f32 %v4336, %v4573
    %v4575 = vpop.f32.mrb[0].mxu0
    %v4576 = vadd.f32 %v4338, %v4575
    %4577 = vmatprep.mubr.bf16.mxu0 0
    %4578 = vmatmul.mubr.bf16.gmra.mrb[0].mxu0 %v4513
    %v4579 = vpop.f32.mrb[0].mxu0
    %v4580 = vadd.f32 %v4342, %v4579
    %v4581 = vpop.f32.mrb[0].mxu0
    %v4582 = vadd.f32 %v4344, %v4581
    %v4583 = vpop.f32.mrb[0].mxu0
    %v4584 = vadd.f32 %v4346, %v4583
    %v4585 = vpop.f32.mrb[0].mxu0
    %v4586 = vadd.f32 %v4348, %v4585
    %4587 = vdwg.mxu0
    %4588 = vmatprep.subr.bf16.mxu0 %v4474
    %4589 = vmatpush1.bf16.msra.mxu0 %v4473
    %4590 = vmatprep.subr.bf16.mxu0 %v4478
    %4591 = vmatpush1.bf16.msra.mxu0 %v4477
    %4592 = vmatprep.subr.bf16.mxu0 %v4482
    %4593 = vmatpush1.bf16.msra.mxu0 %v4481
    %4594 = vmatprep.subr.bf16.mxu0 %v4486
    %4595 = vmatpush1.bf16.msra.mxu0 %v4485
    %4596 = vmatprep.subr.bf16.mxu0 0
    %4597 = vmatpush1.bf16.msra.mxu0 0
    %4598 = vmatprep.subr.bf16.mxu0 0
    %4599 = vmatpush1.bf16.msra.mxu0 0
    %4600 = vmatprep.subr.bf16.mxu0 0
    %4601 = vmatpush1.bf16.msra.mxu0 0
    %4602 = vmatprep.subr.bf16.mxu0 0
    %4603 = vmatpush1.bf16.msra.mxu0 0
    %4604 = vmatprep.subr.bf16.mxu0 0
    %4605 = vmatpush1.bf16.msra.mxu0 0
    %4606 = vmatprep.subr.bf16.mxu0 0
    %4607 = vmatpush1.bf16.msra.mxu0 0
    %4608 = vmatprep.subr.bf16.mxu0 0
    %4609 = vmatpush1.bf16.msra.mxu0 0
    %4610 = vmatprep.subr.bf16.mxu0 0
    %4611 = vmatpush1.bf16.msra.mxu0 0
    %4612 = vmatprep.subr.bf16.mxu0 0
    %4613 = vmatpush1.bf16.msra.mxu0 0
    %4614 = vmatprep.subr.bf16.mxu0 0
    %4615 = vmatpush1.bf16.msra.mxu0 0
    %4616 = vmatprep.subr.bf16.mxu0 0
    %4617 = vmatpush1.bf16.msra.mxu0 0
    %4618 = vmatprep.subr.bf16.mxu0 0
    %4619 = vmatpush1.bf16.msra.mxu0 0
    %4620 = vmatprep.mubr.bf16.mxu0 0
    %4621 = vmatmul.mubr.bf16.gmra.mrb[0].mxu0 %v4504
    %v4622 = vpop.f32.mrb[0].mxu0
    %v4623 = vadd.f32 %v4385, %v4622
    %v4624 = vpop.f32.mrb[0].mxu0
    %v4625 = vadd.f32 %v4387, %v4624
    %v4626 = vpop.f32.mrb[0].mxu0
    %v4627 = vadd.f32 %v4389, %v4626
    %v4628 = vpop.f32.mrb[0].mxu0
    %v4629 = vadd.f32 %v4391, %v4628
    %4630 = vmatprep.mubr.bf16.mxu0 0
    %4631 = vmatmul.mubr.bf16.gmra.mrb[0].mxu0 %v4507
    %v4632 = vpop.f32.mrb[0].mxu0
    %v4633 = vadd.f32 %v4395, %v4632
    %v4634 = vpop.f32.mrb[0].mxu0
    %v4635 = vadd.f32 %v4397, %v4634
    %v4636 = vpop.f32.mrb[0].mxu0
    %v4637 = vadd.f32 %v4399, %v4636
    %v4638 = vpop.f32.mrb[0].mxu0
    %v4639 = vadd.f32 %v4401, %v4638
    %4640 = vmatprep.mubr.bf16.mxu0 0
    %4641 = vmatmul.mubr.bf16.gmra.mrb[0].mxu0 %v4510
    %v4642 = vpop.f32.mrb[0].mxu0
    %v4643 = vadd.f32 %v4405, %v4642
    %v4644 = vpop.f32.mrb[0].mxu0
    %v4645 = vadd.f32 %v4407, %v4644
    %v4646 = vpop.f32.mrb[0].mxu0
    %v4647 = vadd.f32 %v4409, %v4646
    %v4648 = vpop.f32.mrb[0].mxu0
    %v4649 = vadd.f32 %v4411, %v4648
    %4650 = vmatprep.mubr.bf16.mxu0 0
    %4651 = vmatmul.mubr.bf16.gmra.mrb[0].mxu0 %v4513
    %v4652 = vpop.f32.mrb[0].mxu0
    %v4653 = vadd.f32 %v4415, %v4652
    %v4654 = vpop.f32.mrb[0].mxu0
    %v4655 = vadd.f32 %v4417, %v4654
    %v4656 = vpop.f32.mrb[0].mxu0
    %v4657 = vadd.f32 %v4419, %v4656
    %v4658 = vpop.f32.mrb[0].mxu0
    %v4659 = vadd.f32 %v4421, %v4658
    %4660 = vdwg.mxu0
    %v4661 = vld [vmem:[%s11] sm:$0xf]
    %v4663 = vlaneseq
    %v4664 = vshrl.u32 %v4663, 7
    %v4665 = vsub.s32 0, %v4664
    %v4666 = vrot.slane %v4661, %v4665
    %v4667 = vlaneseq
    %v4668 = vshrl.u32 %v4667, 7
    %v4669 = vsub.s32 1, %v4668
    %v4670 = vrot.slane %v4661, %v4669
    %v4671 = vlaneseq
    %v4672 = vshrl.u32 %v4671, 7
    %v4673 = vsub.s32 2, %v4672
    %v4674 = vrot.slane %v4661, %v4673
    %v4675 = vlaneseq
    %v4676 = vshrl.u32 %v4675, 7
    %v4677 = vsub.s32 3, %v4676
    %v4678 = vrot.slane %v4661, %v4677
    %v4683 = vadd.f32 %v4550, %v4666
    %v4684 = vadd.f32 %v4552, %v4670
    %v4685 = vadd.f32 %v4623, %v4674
    %v4686 = vadd.f32 %v4625, %v4678
    %v4687 = vadd.f32 %v4554, %v4666
    %v4688 = vadd.f32 %v4556, %v4670
    %v4689 = vadd.f32 %v4627, %v4674
    %v4690 = vadd.f32 %v4629, %v4678
    %v4691 = vadd.f32 %v4560, %v4666
    %v4692 = vadd.f32 %v4562, %v4670
    %v4693 = vadd.f32 %v4633, %v4674
    %v4694 = vadd.f32 %v4635, %v4678
    %v4695 = vadd.f32 %v4564, %v4666
    %v4696 = vadd.f32 %v4566, %v4670
    %v4697 = vadd.f32 %v4637, %v4674
    %v4698 = vadd.f32 %v4639, %v4678
    %v4699 = vadd.f32 %v4570, %v4666
    %v4700 = vadd.f32 %v4572, %v4670
    %v4701 = vadd.f32 %v4643, %v4674
    %v4702 = vadd.f32 %v4645, %v4678
    %v4703 = vadd.f32 %v4574, %v4666
    %v4704 = vadd.f32 %v4576, %v4670
    %v4705 = vadd.f32 %v4647, %v4674
    %v4706 = vadd.f32 %v4649, %v4678
    %v4707 = vadd.f32 %v4580, %v4666
    %v4708 = vadd.f32 %v4582, %v4670
    %v4709 = vadd.f32 %v4653, %v4674
    %v4710 = vadd.f32 %v4655, %v4678
    %v4711 = vadd.f32 %v4584, %v4666
    %v4712 = vadd.f32 %v4586, %v4670
    %v4713 = vadd.f32 %v4657, %v4674
    %v4714 = vadd.f32 %v4659, %v4678
    %v4715 = vld [vmem:[%s10] sm:$0xff]
    %v4716 = vld [vmem:[%s10 + $0x8] sm:$0xff]
    %v4717 = vld [vmem:[%s10 + $0x10] sm:$0xff]
    %v4718 = vld [vmem:[%s10 + $0x18] sm:$0xff]
    %v4719 = vld [vmem:[%s10 + $0x20] sm:$0xff]
    %v4720 = vld [vmem:[%s10 + $0x28] sm:$0xff]
    %v4721 = vld [vmem:[%s10 + $0x30] sm:$0xff]
    %v4722 = vld [vmem:[%s10 + $0x38] sm:$0xff]
    %v4723 = vld [vmem:[%s10 + $0x40] sm:$0xff]
    %v4724 = vld [vmem:[%s10 + $0x48] sm:$0xff]
    %v4725 = vld [vmem:[%s10 + $0x50] sm:$0xff]
    %v4726 = vld [vmem:[%s10 + $0x58] sm:$0xff]
    %v4727 = vld [vmem:[%s10 + $0x60] sm:$0xff]
    %v4728 = vld [vmem:[%s10 + $0x68] sm:$0xff]
    %v4729 = vld [vmem:[%s10 + $0x70] sm:$0xff]
    %v4730 = vld [vmem:[%s10 + $0x78] sm:$0xff]
    %v4731 = vld [vmem:[%s10 + $0x80] sm:$0xff]
    %v4732 = vld [vmem:[%s10 + $0x88] sm:$0xff]
    %v4733 = vld [vmem:[%s10 + $0x90] sm:$0xff]
    %v4734 = vld [vmem:[%s10 + $0x98] sm:$0xff]
    %v4735 = vld [vmem:[%s10 + $0xa0] sm:$0xff]
    %v4736 = vld [vmem:[%s10 + $0xa8] sm:$0xff]
    %v4737 = vld [vmem:[%s10 + $0xb0] sm:$0xff]
    %v4738 = vld [vmem:[%s10 + $0xb8] sm:$0xff]
    %v4739 = vld [vmem:[%s10 + $0xc0] sm:$0xff]
    %v4740 = vld [vmem:[%s10 + $0xc8] sm:$0xff]
    %v4741 = vld [vmem:[%s10 + $0xd0] sm:$0xff]
    %v4742 = vld [vmem:[%s10 + $0xd8] sm:$0xff]
    %v4743 = vld [vmem:[%s10 + $0xe0] sm:$0xff]
    %v4744 = vld [vmem:[%s10 + $0xe8] sm:$0xff]
    %v4745 = vld [vmem:[%s10 + $0xf0] sm:$0xff]
    %v4746 = vld [vmem:[%s10 + $0xf8] sm:$0xff]
    %v4747 = vld [vmem:[%s10 + $0x100] sm:$0xff]
    %v4748 = vld [vmem:[%s10 + $0x108] sm:$0xff]
    %v4749 = vld [vmem:[%s10 + $0x110] sm:$0xff]
    %v4750 = vld [vmem:[%s10 + $0x118] sm:$0xff]
    %v4751 = vld [vmem:[%s10 + $0x120] sm:$0xff]
    %v4752 = vld [vmem:[%s10 + $0x128] sm:$0xff]
    %v4753 = vld [vmem:[%s10 + $0x130] sm:$0xff]
    %v4754 = vld [vmem:[%s10 + $0x138] sm:$0xff]
    %v4755 = vld [vmem:[%s10 + $0x140] sm:$0xff]
    %v4756 = vld [vmem:[%s10 + $0x148] sm:$0xff]
    %v4757 = vld [vmem:[%s10 + $0x150] sm:$0xff]
    %v4758 = vld [vmem:[%s10 + $0x158] sm:$0xff]
    %v4759 = vld [vmem:[%s10 + $0x160] sm:$0xff]
    %v4760 = vld [vmem:[%s10 + $0x168] sm:$0xff]
    %v4761 = vld [vmem:[%s10 + $0x170] sm:$0xff]
    %v4762 = vld [vmem:[%s10 + $0x178] sm:$0xff]
    %vm4763 = vcmask 785408
    %v4764 = vsel %vm4763, 0.0, 0
    %4766 = vmatprep.subr.mxu0 %v4716
    %4767 = vmatpush1.msra.mxu0 %v4715
    %4768 = vmatprep.subr.mxu0 %v4720
    %4769 = vmatpush1.msra.mxu0 %v4719
    %4770 = vmatprep.subr.mxu0 %v4724
    %4771 = vmatpush1.msra.mxu0 %v4723
    %4772 = vmatprep.subr.mxu0 %v4728
    %4773 = vmatpush1.msra.mxu0 %v4727
    %4774 = vmatprep.subr.mxu0 %v4732
    %4775 = vmatpush1.msra.mxu0 %v4731
    %4776 = vmatprep.subr.mxu0 %v4736
    %4777 = vmatpush1.msra.mxu0 %v4735
    %4778 = vmatprep.subr.mxu0 %v4740
    %4779 = vmatpush1.msra.mxu0 %v4739
    %4780 = vmatprep.subr.mxu0 %v4744
    %4781 = vmatpush1.msra.mxu0 %v4743
    %4782 = vmatprep.subr.mxu0 %v4748
    %4783 = vmatpush1.msra.mxu0 %v4747
    %4784 = vmatprep.subr.mxu0 %v4752
    %4785 = vmatpush1.msra.mxu0 %v4751
    %4786 = vmatprep.subr.mxu0 %v4756
    %4787 = vmatpush1.msra.mxu0 %v4755
    %4788 = vmatprep.subr.mxu0 %v4760
    %4789 = vmatpush1.msra.mxu0 %v4759
    %4790 = vmatprep.subr.mxu0 0.0
    %4791 = vmatpush1.msra.mxu0 0.0
    %4792 = vmatprep.subr.mxu0 0.0
    %4793 = vmatpush1.msra.mxu0 0.0
    %4794 = vmatprep.subr.mxu0 0.0
    %4795 = vmatpush1.msra.mxu0 0.0
    %4796 = vmatprep.subr.mxu0 0.0
    %4797 = vmatpush1.msra.mxu0 0.0
    %4798 = vmatprep.subr.mxu0 0.0
    %4799 = vmatpush1.msra.mxu0 0.0
    %4800 = vmatprep.subr.mxu0 0.0
    %4801 = vmatpush1.msra.mxu0 0.0
    %4802 = vmatprep.subr.mxu0 0.0
    %4803 = vmatpush1.msra.mxu0 0.0
    %4804 = vmatprep.subr.mxu0 0.0
    %4805 = vmatpush1.msra.mxu0 0.0
    %4806 = vmatprep.subr.mxu0 0.0
    %4807 = vmatpush1.msra.mxu0 0.0
    %4808 = vmatprep.subr.mxu0 0.0
    %4809 = vmatpush1.msra.mxu0 0.0
    %4810 = vmatprep.subr.mxu0 0.0
    %4811 = vmatpush1.msra.mxu0 0.0
    %4812 = vmatprep.subr.mxu0 0.0
    %4813 = vmatpush1.msra.mxu0 0.0
    %4814 = vmatprep.subr.mxu0 0.0
    %4815 = vmatpush1.msra.mxu0 0.0
    %4816 = vmatprep.subr.mxu0 0.0
    %4817 = vmatpush1.msra.mxu0 0.0
    %4818 = vmatprep.subr.mxu0 0.0
    %4819 = vmatpush1.msra.mxu0 0.0
    %4820 = vmatprep.subr.mxu0 0.0
    %4821 = vmatpush1.msra.mxu0 0.0
    %4822 = vmatprep.subr.mxu0 0.0
    %4823 = vmatpush1.msra.mxu0 0.0
    %4824 = vmatprep.subr.mxu0 0.0
    %4825 = vmatpush1.msra.mxu0 0.0
    %4826 = vmatprep.subr.mxu0 0.0
    %4827 = vmatpush1.msra.mxu0 0.0
    %4828 = vmatprep.subr.mxu0 0.0
    %4829 = vmatpush1.msra.mxu0 0.0
    %4830 = vmatprep.mubr.f32.mxu0 0.0
    %4831 = vmatmul.mubr.f32.gmra.mrb[0].mxu0 %v4764
    %v4832 = vpop.f32.mrb[0].mxu0
    %v4833 = vadd.f32 0.0, %v4832
    %v4834 = vpop.f32.mrb[0].mxu0
    %v4835 = vadd.f32 0.0, %v4834
    %4836 = vdwg.mxu0
    %4837 = vmatprep.subr.mxu0 %v4718
    %4838 = vmatpush1.msra.mxu0 %v4717
    %4839 = vmatprep.subr.mxu0 %v4722
    %4840 = vmatpush1.msra.mxu0 %v4721
    %4841 = vmatprep.subr.mxu0 %v4726
    %4842 = vmatpush1.msra.mxu0 %v4725
    %4843 = vmatprep.subr.mxu0 %v4730
    %4844 = vmatpush1.msra.mxu0 %v4729
    %4845 = vmatprep.subr.mxu0 %v4734
    %4846 = vmatpush1.msra.mxu0 %v4733
    %4847 = vmatprep.subr.mxu0 %v4738
    %4848 = vmatpush1.msra.mxu0 %v4737
    %4849 = vmatprep.subr.mxu0 %v4742
    %4850 = vmatpush1.msra.mxu0 %v4741
    %4851 = vmatprep.subr.mxu0 %v4746
    %4852 = vmatpush1.msra.mxu0 %v4745
    %4853 = vmatprep.subr.mxu0 %v4750
    %4854 = vmatpush1.msra.mxu0 %v4749
    %4855 = vmatprep.subr.mxu0 %v4754
    %4856 = vmatpush1.msra.mxu0 %v4753
    %4857 = vmatprep.subr.mxu0 %v4758
    %4858 = vmatpush1.msra.mxu0 %v4757
    %4859 = vmatprep.subr.mxu0 %v4762
    %4860 = vmatpush1.msra.mxu0 %v4761
    %4861 = vmatprep.subr.mxu0 0.0
    %4862 = vmatpush1.msra.mxu0 0.0
    %4863 = vmatprep.subr.mxu0 0.0
    %4864 = vmatpush1.msra.mxu0 0.0
    %4865 = vmatprep.subr.mxu0 0.0
    %4866 = vmatpush1.msra.mxu0 0.0
    %4867 = vmatprep.subr.mxu0 0.0
    %4868 = vmatpush1.msra.mxu0 0.0
    %4869 = vmatprep.subr.mxu0 0.0
    %4870 = vmatpush1.msra.mxu0 0.0
    %4871 = vmatprep.subr.mxu0 0.0
    %4872 = vmatpush1.msra.mxu0 0.0
    %4873 = vmatprep.subr.mxu0 0.0
    %4874 = vmatpush1.msra.mxu0 0.0
    %4875 = vmatprep.subr.mxu0 0.0
    %4876 = vmatpush1.msra.mxu0 0.0
    %4877 = vmatprep.subr.mxu0 0.0
    %4878 = vmatpush1.msra.mxu0 0.0
    %4879 = vmatprep.subr.mxu0 0.0
    %4880 = vmatpush1.msra.mxu0 0.0
    %4881 = vmatprep.subr.mxu0 0.0
    %4882 = vmatpush1.msra.mxu0 0.0
    %4883 = vmatprep.subr.mxu0 0.0
    %4884 = vmatpush1.msra.mxu0 0.0
    %4885 = vmatprep.subr.mxu0 0.0
    %4886 = vmatpush1.msra.mxu0 0.0
    %4887 = vmatprep.subr.mxu0 0.0
    %4888 = vmatpush1.msra.mxu0 0.0
    %4889 = vmatprep.subr.mxu0 0.0
    %4890 = vmatpush1.msra.mxu0 0.0
    %4891 = vmatprep.subr.mxu0 0.0
    %4892 = vmatpush1.msra.mxu0 0.0
    %4893 = vmatprep.subr.mxu0 0.0
    %4894 = vmatpush1.msra.mxu0 0.0
    %4895 = vmatprep.subr.mxu0 0.0
    %4896 = vmatpush1.msra.mxu0 0.0
    %4897 = vmatprep.subr.mxu0 0.0
    %4898 = vmatpush1.msra.mxu0 0.0
    %4899 = vmatprep.subr.mxu0 0.0
    %4900 = vmatpush1.msra.mxu0 0.0
    %4901 = vmatprep.mubr.f32.mxu0 0.0
    %4902 = vmatmul.mubr.f32.gmra.mrb[0].mxu0 %v4764
    %v4903 = vpop.f32.mrb[0].mxu0
    %v4904 = vadd.f32 0.0, %v4903
    %v4905 = vpop.f32.mrb[0].mxu0
    %v4906 = vadd.f32 0.0, %v4905
    %4907 = vdwg.mxu0
    %v4908 = vadd.f32 %v4683, %v4833
    %v4909 = vadd.f32 %v4684, %v4835
    %v4910 = vadd.f32 %v4685, %v4904
    %v4911 = vadd.f32 %v4686, %v4906
    %v4912 = vxor.u32 %v4908, 2147483648
    %v4913 = vxor.u32 %v4909, 2147483648
    %v4914 = vxor.u32 %v4910, 2147483648
    %v4915 = vmul.f32 %v4912, 1.442695
    %v4916 = vpow.pop %v4915
    %v4917 = vmul.f32 %v4913, 1.442695
    %v4918 = vpow.pop %v4917
    %v4919 = vmul.f32 %v4914, 1.442695
    %v4920 = vpow.pop %v4919
    %v4921 = vadd.f32 %v4916, 1.0
    %v4922 = vadd.f32 %v4918, 1.0
    %v4923 = vadd.f32 %v4920, 1.0
    %v4924 = vrcp.pop %v4921
    %v4925 = vmul.f32 1.0, %v4924
    %v4926 = vrcp.pop %v4922
    %v4927 = vmul.f32 1.0, %v4926
    %v4928 = vrcp.pop %v4923
    %v4929 = vmul.f32 1.0, %v4928
    %v4930 = vtanh.pop %v4911
    %v4931 = vmul.f32 %v4927, 0.0
    %v4932 = vmul.f32 %v4925, %v4930
    %v4933 = vadd.f32 %v4931, %v4932
    %v4934 = vtanh.pop %v4933
    %v4935 = vmul.f32 %v4929, %v4934
    %v4937 = vsel %vm4763, %v4935, 0
    %4939 = vmatprep.subr.mxu0 %v4716
    %4940 = vmatpush1.msra.mxu0 %v4715
    %4941 = vmatprep.subr.mxu0 %v4720
    %4942 = vmatpush1.msra.mxu0 %v4719
    %4943 = vmatprep.subr.mxu0 %v4724
    %4944 = vmatpush1.msra.mxu0 %v4723
    %4945 = vmatprep.subr.mxu0 %v4728
    %4946 = vmatpush1.msra.mxu0 %v4727
    %4947 = vmatprep.subr.mxu0 %v4732
    %4948 = vmatpush1.msra.mxu0 %v4731
    %4949 = vmatprep.subr.mxu0 %v4736
    %4950 = vmatpush1.msra.mxu0 %v4735
    %4951 = vmatprep.subr.mxu0 %v4740
    %4952 = vmatpush1.msra.mxu0 %v4739
    %4953 = vmatprep.subr.mxu0 %v4744
    %4954 = vmatpush1.msra.mxu0 %v4743
    %4955 = vmatprep.subr.mxu0 %v4748
    %4956 = vmatpush1.msra.mxu0 %v4747
    %4957 = vmatprep.subr.mxu0 %v4752
    %4958 = vmatpush1.msra.mxu0 %v4751
    %4959 = vmatprep.subr.mxu0 %v4756
    %4960 = vmatpush1.msra.mxu0 %v4755
    %4961 = vmatprep.subr.mxu0 %v4760
    %4962 = vmatpush1.msra.mxu0 %v4759
    %4963 = vmatprep.subr.mxu0 0.0
    %4964 = vmatpush1.msra.mxu0 0.0
    %4965 = vmatprep.subr.mxu0 0.0
    %4966 = vmatpush1.msra.mxu0 0.0
    %4967 = vmatprep.subr.mxu0 0.0
    %4968 = vmatpush1.msra.mxu0 0.0
    %4969 = vmatprep.subr.mxu0 0.0
    %4970 = vmatpush1.msra.mxu0 0.0
    %4971 = vmatprep.subr.mxu0 0.0
    %4972 = vmatpush1.msra.mxu0 0.0
    %4973 = vmatprep.subr.mxu0 0.0
    %4974 = vmatpush1.msra.mxu0 0.0
    %4975 = vmatprep.subr.mxu0 0.0
    %4976 = vmatpush1.msra.mxu0 0.0
    %4977 = vmatprep.subr.mxu0 0.0
    %4978 = vmatpush1.msra.mxu0 0.0
    %4979 = vmatprep.subr.mxu0 0.0
    %4980 = vmatpush1.msra.mxu0 0.0
    %4981 = vmatprep.subr.mxu0 0.0
    %4982 = vmatpush1.msra.mxu0 0.0
    %4983 = vmatprep.subr.mxu0 0.0
    %4984 = vmatpush1.msra.mxu0 0.0
    %4985 = vmatprep.subr.mxu0 0.0
    %4986 = vmatpush1.msra.mxu0 0.0
    %4987 = vmatprep.subr.mxu0 0.0
    %4988 = vmatpush1.msra.mxu0 0.0
    %4989 = vmatprep.subr.mxu0 0.0
    %4990 = vmatpush1.msra.mxu0 0.0
    %4991 = vmatprep.subr.mxu0 0.0
    %4992 = vmatpush1.msra.mxu0 0.0
    %4993 = vmatprep.subr.mxu0 0.0
    %4994 = vmatpush1.msra.mxu0 0.0
    %4995 = vmatprep.subr.mxu0 0.0
    %4996 = vmatpush1.msra.mxu0 0.0
    %4997 = vmatprep.subr.mxu0 0.0
    %4998 = vmatpush1.msra.mxu0 0.0
    %4999 = vmatprep.subr.mxu0 0.0
    %5000 = vmatpush1.msra.mxu0 0.0
    %5001 = vmatprep.subr.mxu0 0.0
    %5002 = vmatpush1.msra.mxu0 0.0
    %5003 = vmatprep.mubr.f32.mxu0 0.0
    %5004 = vmatmul.mubr.f32.gmra.mrb[0].mxu0 %v4937
    %v5005 = vpop.f32.mrb[0].mxu0
    %v5006 = vadd.f32 0.0, %v5005
    %v5007 = vpop.f32.mrb[0].mxu0
    %v5008 = vadd.f32 0.0, %v5007
    %5009 = vdwg.mxu0
    %5010 = vmatprep.subr.mxu0 %v4718
    %5011 = vmatpush1.msra.mxu0 %v4717
    %5012 = vmatprep.subr.mxu0 %v4722
    %5013 = vmatpush1.msra.mxu0 %v4721
    %5014 = vmatprep.subr.mxu0 %v4726
    %5015 = vmatpush1.msra.mxu0 %v4725
    %5016 = vmatprep.subr.mxu0 %v4730
    %5017 = vmatpush1.msra.mxu0 %v4729
    %5018 = vmatprep.subr.mxu0 %v4734
    %5019 = vmatpush1.msra.mxu0 %v4733
    %5020 = vmatprep.subr.mxu0 %v4738
    %5021 = vmatpush1.msra.mxu0 %v4737
    %5022 = vmatprep.subr.mxu0 %v4742
    %5023 = vmatpush1.msra.mxu0 %v4741
    %5024 = vmatprep.subr.mxu0 %v4746
    %5025 = vmatpush1.msra.mxu0 %v4745
    %5026 = vmatprep.subr.mxu0 %v4750
    %5027 = vmatpush1.msra.mxu0 %v4749
    %5028 = vmatprep.subr.mxu0 %v4754
    %5029 = vmatpush1.msra.mxu0 %v4753
    %5030 = vmatprep.subr.mxu0 %v4758
    %5031 = vmatpush1.msra.mxu0 %v4757
    %5032 = vmatprep.subr.mxu0 %v4762
    %5033 = vmatpush1.msra.mxu0 %v4761
    %5034 = vmatprep.subr.mxu0 0.0
    %5035 = vmatpush1.msra.mxu0 0.0
    %5036 = vmatprep.subr.mxu0 0.0
    %5037 = vmatpush1.msra.mxu0 0.0
    %5038 = vmatprep.subr.mxu0 0.0
    %5039 = vmatpush1.msra.mxu0 0.0
    %5040 = vmatprep.subr.mxu0 0.0
    %5041 = vmatpush1.msra.mxu0 0.0
    %5042 = vmatprep.subr.mxu0 0.0
    %5043 = vmatpush1.msra.mxu0 0.0
    %5044 = vmatprep.subr.mxu0 0.0
    %5045 = vmatpush1.msra.mxu0 0.0
    %5046 = vmatprep.subr.mxu0 0.0
    %5047 = vmatpush1.msra.mxu0 0.0
    %5048 = vmatprep.subr.mxu0 0.0
    %5049 = vmatpush1.msra.mxu0 0.0
    %5050 = vmatprep.subr.mxu0 0.0
    %5051 = vmatpush1.msra.mxu0 0.0
    %5052 = vmatprep.subr.mxu0 0.0
    %5053 = vmatpush1.msra.mxu0 0.0
    %5054 = vmatprep.subr.mxu0 0.0
    %5055 = vmatpush1.msra.mxu0 0.0
    %5056 = vmatprep.subr.mxu0 0.0
    %5057 = vmatpush1.msra.mxu0 0.0
    %5058 = vmatprep.subr.mxu0 0.0
    %5059 = vmatpush1.msra.mxu0 0.0
    %5060 = vmatprep.subr.mxu0 0.0
    %5061 = vmatpush1.msra.mxu0 0.0
    %5062 = vmatprep.subr.mxu0 0.0
    %5063 = vmatpush1.msra.mxu0 0.0
    %5064 = vmatprep.subr.mxu0 0.0
    %5065 = vmatpush1.msra.mxu0 0.0
    %5066 = vmatprep.subr.mxu0 0.0
    %5067 = vmatpush1.msra.mxu0 0.0
    %5068 = vmatprep.subr.mxu0 0.0
    %5069 = vmatpush1.msra.mxu0 0.0
    %5070 = vmatprep.subr.mxu0 0.0
    %5071 = vmatpush1.msra.mxu0 0.0
    %5072 = vmatprep.subr.mxu0 0.0
    %5073 = vmatpush1.msra.mxu0 0.0
    %5074 = vmatprep.mubr.f32.mxu0 0.0
    %5075 = vmatmul.mubr.f32.gmra.mrb[0].mxu0 %v4937
    %v5076 = vpop.f32.mrb[0].mxu0
    %v5077 = vadd.f32 0.0, %v5076
    %v5078 = vpop.f32.mrb[0].mxu0
    %v5079 = vadd.f32 0.0, %v5078
    %5080 = vdwg.mxu0
    %v5081 = vadd.f32 %v4687, %v5006
    %v5082 = vadd.f32 %v4688, %v5008
    %v5083 = vadd.f32 %v4689, %v5077
    %v5084 = vadd.f32 %v4690, %v5079
    %v5085 = vxor.u32 %v5081, 2147483648
    %v5086 = vxor.u32 %v5082, 2147483648
    %v5087 = vxor.u32 %v5083, 2147483648
    %v5088 = vmul.f32 %v5085, 1.442695
    %v5089 = vpow.pop %v5088
    %v5090 = vmul.f32 %v5086, 1.442695
    %v5091 = vpow.pop %v5090
    %v5092 = vmul.f32 %v5087, 1.442695
    %v5093 = vpow.pop %v5092
    %v5094 = vadd.f32 %v5089, 1.0
    %v5095 = vadd.f32 %v5091, 1.0
    %v5096 = vadd.f32 %v5093, 1.0
    %v5097 = vrcp.pop %v5094
    %v5098 = vmul.f32 1.0, %v5097
    %v5099 = vrcp.pop %v5095
    %v5100 = vmul.f32 1.0, %v5099
    %v5101 = vrcp.pop %v5096
    %v5102 = vmul.f32 1.0, %v5101
    %v5103 = vtanh.pop %v5084
    %v5104 = vmul.f32 %v5100, %v4933
    %v5105 = vmul.f32 %v5098, %v5103
    %v5106 = vadd.f32 %v5104, %v5105
    %v5107 = vtanh.pop %v5106
    %v5108 = vmul.f32 %v5102, %v5107
    %v5110 = vsel %vm4763, %v5108, 0
    %5112 = vmatprep.subr.mxu0 %v4716
    %5113 = vmatpush1.msra.mxu0 %v4715
    %5114 = vmatprep.subr.mxu0 %v4720
    %5115 = vmatpush1.msra.mxu0 %v4719
    %5116 = vmatprep.subr.mxu0 %v4724
    %5117 = vmatpush1.msra.mxu0 %v4723
    %5118 = vmatprep.subr.mxu0 %v4728
    %5119 = vmatpush1.msra.mxu0 %v4727
    %5120 = vmatprep.subr.mxu0 %v4732
    %5121 = vmatpush1.msra.mxu0 %v4731
    %5122 = vmatprep.subr.mxu0 %v4736
    %5123 = vmatpush1.msra.mxu0 %v4735
    %5124 = vmatprep.subr.mxu0 %v4740
    %5125 = vmatpush1.msra.mxu0 %v4739
    %5126 = vmatprep.subr.mxu0 %v4744
    %5127 = vmatpush1.msra.mxu0 %v4743
    %5128 = vmatprep.subr.mxu0 %v4748
    %5129 = vmatpush1.msra.mxu0 %v4747
    %5130 = vmatprep.subr.mxu0 %v4752
    %5131 = vmatpush1.msra.mxu0 %v4751
    %5132 = vmatprep.subr.mxu0 %v4756
    %5133 = vmatpush1.msra.mxu0 %v4755
    %5134 = vmatprep.subr.mxu0 %v4760
    %5135 = vmatpush1.msra.mxu0 %v4759
    %5136 = vmatprep.subr.mxu0 0.0
    %5137 = vmatpush1.msra.mxu0 0.0
    %5138 = vmatprep.subr.mxu0 0.0
    %5139 = vmatpush1.msra.mxu0 0.0
    %5140 = vmatprep.subr.mxu0 0.0
    %5141 = vmatpush1.msra.mxu0 0.0
    %5142 = vmatprep.subr.mxu0 0.0
    %5143 = vmatpush1.msra.mxu0 0.0
    %5144 = vmatprep.subr.mxu0 0.0
    %5145 = vmatpush1.msra.mxu0 0.0
    %5146 = vmatprep.subr.mxu0 0.0
    %5147 = vmatpush1.msra.mxu0 0.0
    %5148 = vmatprep.subr.mxu0 0.0
    %5149 = vmatpush1.msra.mxu0 0.0
    %5150 = vmatprep.subr.mxu0 0.0
    %5151 = vmatpush1.msra.mxu0 0.0
    %5152 = vmatprep.subr.mxu0 0.0
    %5153 = vmatpush1.msra.mxu0 0.0
    %5154 = vmatprep.subr.mxu0 0.0
    %5155 = vmatpush1.msra.mxu0 0.0
    %5156 = vmatprep.subr.mxu0 0.0
    %5157 = vmatpush1.msra.mxu0 0.0
    %5158 = vmatprep.subr.mxu0 0.0
    %5159 = vmatpush1.msra.mxu0 0.0
    %5160 = vmatprep.subr.mxu0 0.0
    %5161 = vmatpush1.msra.mxu0 0.0
    %5162 = vmatprep.subr.mxu0 0.0
    %5163 = vmatpush1.msra.mxu0 0.0
    %5164 = vmatprep.subr.mxu0 0.0
    %5165 = vmatpush1.msra.mxu0 0.0
    %5166 = vmatprep.subr.mxu0 0.0
    %5167 = vmatpush1.msra.mxu0 0.0
    %5168 = vmatprep.subr.mxu0 0.0
    %5169 = vmatpush1.msra.mxu0 0.0
    %5170 = vmatprep.subr.mxu0 0.0
    %5171 = vmatpush1.msra.mxu0 0.0
    %5172 = vmatprep.subr.mxu0 0.0
    %5173 = vmatpush1.msra.mxu0 0.0
    %5174 = vmatprep.subr.mxu0 0.0
    %5175 = vmatpush1.msra.mxu0 0.0
    %5176 = vmatprep.mubr.f32.mxu0 0.0
    %5177 = vmatmul.mubr.f32.gmra.mrb[0].mxu0 %v5110
    %v5178 = vpop.f32.mrb[0].mxu0
    %v5179 = vadd.f32 0.0, %v5178
    %v5180 = vpop.f32.mrb[0].mxu0
    %v5181 = vadd.f32 0.0, %v5180
    %5182 = vdwg.mxu0
    %5183 = vmatprep.subr.mxu0 %v4718
    %5184 = vmatpush1.msra.mxu0 %v4717
    %5185 = vmatprep.subr.mxu0 %v4722
    %5186 = vmatpush1.msra.mxu0 %v4721
    %5187 = vmatprep.subr.mxu0 %v4726
    %5188 = vmatpush1.msra.mxu0 %v4725
    %5189 = vmatprep.subr.mxu0 %v4730
    %5190 = vmatpush1.msra.mxu0 %v4729
    %5191 = vmatprep.subr.mxu0 %v4734
    %5192 = vmatpush1.msra.mxu0 %v4733
    %5193 = vmatprep.subr.mxu0 %v4738
    %5194 = vmatpush1.msra.mxu0 %v4737
    %5195 = vmatprep.subr.mxu0 %v4742
    %5196 = vmatpush1.msra.mxu0 %v4741
    %5197 = vmatprep.subr.mxu0 %v4746
    %5198 = vmatpush1.msra.mxu0 %v4745
    %5199 = vmatprep.subr.mxu0 %v4750
    %5200 = vmatpush1.msra.mxu0 %v4749
    %5201 = vmatprep.subr.mxu0 %v4754
    %5202 = vmatpush1.msra.mxu0 %v4753
    %5203 = vmatprep.subr.mxu0 %v4758
    %5204 = vmatpush1.msra.mxu0 %v4757
    %5205 = vmatprep.subr.mxu0 %v4762
    %5206 = vmatpush1.msra.mxu0 %v4761
    %5207 = vmatprep.subr.mxu0 0.0
    %5208 = vmatpush1.msra.mxu0 0.0
    %5209 = vmatprep.subr.mxu0 0.0
    %5210 = vmatpush1.msra.mxu0 0.0
    %5211 = vmatprep.subr.mxu0 0.0
    %5212 = vmatpush1.msra.mxu0 0.0
    %5213 = vmatprep.subr.mxu0 0.0
    %5214 = vmatpush1.msra.mxu0 0.0
    %5215 = vmatprep.subr.mxu0 0.0
    %5216 = vmatpush1.msra.mxu0 0.0
    %5217 = vmatprep.subr.mxu0 0.0
    %5218 = vmatpush1.msra.mxu0 0.0
    %5219 = vmatprep.subr.mxu0 0.0
    %5220 = vmatpush1.msra.mxu0 0.0
    %5221 = vmatprep.subr.mxu0 0.0
    %5222 = vmatpush1.msra.mxu0 0.0
    %5223 = vmatprep.subr.mxu0 0.0
    %5224 = vmatpush1.msra.mxu0 0.0
    %5225 = vmatprep.subr.mxu0 0.0
    %5226 = vmatpush1.msra.mxu0 0.0
    %5227 = vmatprep.subr.mxu0 0.0
    %5228 = vmatpush1.msra.mxu0 0.0
    %5229 = vmatprep.subr.mxu0 0.0
    %5230 = vmatpush1.msra.mxu0 0.0
    %5231 = vmatprep.subr.mxu0 0.0
    %5232 = vmatpush1.msra.mxu0 0.0
    %5233 = vmatprep.subr.mxu0 0.0
    %5234 = vmatpush1.msra.mxu0 0.0
    %5235 = vmatprep.subr.mxu0 0.0
    %5236 = vmatpush1.msra.mxu0 0.0
    %5237 = vmatprep.subr.mxu0 0.0
    %5238 = vmatpush1.msra.mxu0 0.0
    %5239 = vmatprep.subr.mxu0 0.0
    %5240 = vmatpush1.msra.mxu0 0.0
    %5241 = vmatprep.subr.mxu0 0.0
    %5242 = vmatpush1.msra.mxu0 0.0
    %5243 = vmatprep.subr.mxu0 0.0
    %5244 = vmatpush1.msra.mxu0 0.0
    %5245 = vmatprep.subr.mxu0 0.0
    %5246 = vmatpush1.msra.mxu0 0.0
    %5247 = vmatprep.mubr.f32.mxu0 0.0
    %5248 = vmatmul.mubr.f32.gmra.mrb[0].mxu0 %v5110
    %v5249 = vpop.f32.mrb[0].mxu0
    %v5250 = vadd.f32 0.0, %v5249
    %v5251 = vpop.f32.mrb[0].mxu0
    %v5252 = vadd.f32 0.0, %v5251
    %5253 = vdwg.mxu0
    %v5254 = vadd.f32 %v4691, %v5179
    %v5255 = vadd.f32 %v4692, %v5181
    %v5256 = vadd.f32 %v4693, %v5250
    %v5257 = vadd.f32 %v4694, %v5252
    %v5258 = vxor.u32 %v5254, 2147483648
    %v5259 = vxor.u32 %v5255, 2147483648
    %v5260 = vxor.u32 %v5256, 2147483648
    %v5261 = vmul.f32 %v5258, 1.442695
    %v5262 = vpow.pop %v5261
    %v5263 = vmul.f32 %v5259, 1.442695
    %v5264 = vpow.pop %v5263
    %v5265 = vmul.f32 %v5260, 1.442695
    %v5266 = vpow.pop %v5265
    %v5267 = vadd.f32 %v5262, 1.0
    %v5268 = vadd.f32 %v5264, 1.0
    %v5269 = vadd.f32 %v5266, 1.0
    %v5270 = vrcp.pop %v5267
    %v5271 = vmul.f32 1.0, %v5270
    %v5272 = vrcp.pop %v5268
    %v5273 = vmul.f32 1.0, %v5272
    %v5274 = vrcp.pop %v5269
    %v5275 = vmul.f32 1.0, %v5274
    %v5276 = vtanh.pop %v5257
    %v5277 = vmul.f32 %v5273, %v5106
    %v5278 = vmul.f32 %v5271, %v5276
    %v5279 = vadd.f32 %v5277, %v5278
    %v5280 = vtanh.pop %v5279
    %v5281 = vmul.f32 %v5275, %v5280
    %v5283 = vsel %vm4763, %v5281, 0
    %5285 = vmatprep.subr.mxu0 %v4716
    %5286 = vmatpush1.msra.mxu0 %v4715
    %5287 = vmatprep.subr.mxu0 %v4720
    %5288 = vmatpush1.msra.mxu0 %v4719
    %5289 = vmatprep.subr.mxu0 %v4724
    %5290 = vmatpush1.msra.mxu0 %v4723
    %5291 = vmatprep.subr.mxu0 %v4728
    %5292 = vmatpush1.msra.mxu0 %v4727
    %5293 = vmatprep.subr.mxu0 %v4732
    %5294 = vmatpush1.msra.mxu0 %v4731
    %5295 = vmatprep.subr.mxu0 %v4736
    %5296 = vmatpush1.msra.mxu0 %v4735
    %5297 = vmatprep.subr.mxu0 %v4740
    %5298 = vmatpush1.msra.mxu0 %v4739
    %5299 = vmatprep.subr.mxu0 %v4744
    %5300 = vmatpush1.msra.mxu0 %v4743
    %5301 = vmatprep.subr.mxu0 %v4748
    %5302 = vmatpush1.msra.mxu0 %v4747
    %5303 = vmatprep.subr.mxu0 %v4752
    %5304 = vmatpush1.msra.mxu0 %v4751
    %5305 = vmatprep.subr.mxu0 %v4756
    %5306 = vmatpush1.msra.mxu0 %v4755
    %5307 = vmatprep.subr.mxu0 %v4760
    %5308 = vmatpush1.msra.mxu0 %v4759
    %5309 = vmatprep.subr.mxu0 0.0
    %5310 = vmatpush1.msra.mxu0 0.0
    %5311 = vmatprep.subr.mxu0 0.0
    %5312 = vmatpush1.msra.mxu0 0.0
    %5313 = vmatprep.subr.mxu0 0.0
    %5314 = vmatpush1.msra.mxu0 0.0
    %5315 = vmatprep.subr.mxu0 0.0
    %5316 = vmatpush1.msra.mxu0 0.0
    %5317 = vmatprep.subr.mxu0 0.0
    %5318 = vmatpush1.msra.mxu0 0.0
    %5319 = vmatprep.subr.mxu0 0.0
    %5320 = vmatpush1.msra.mxu0 0.0
    %5321 = vmatprep.subr.mxu0 0.0
    %5322 = vmatpush1.msra.mxu0 0.0
    %5323 = vmatprep.subr.mxu0 0.0
    %5324 = vmatpush1.msra.mxu0 0.0
    %5325 = vmatprep.subr.mxu0 0.0
    %5326 = vmatpush1.msra.mxu0 0.0
    %5327 = vmatprep.subr.mxu0 0.0
    %5328 = vmatpush1.msra.mxu0 0.0
    %5329 = vmatprep.subr.mxu0 0.0
    %5330 = vmatpush1.msra.mxu0 0.0
    %5331 = vmatprep.subr.mxu0 0.0
    %5332 = vmatpush1.msra.mxu0 0.0
    %5333 = vmatprep.subr.mxu0 0.0
    %5334 = vmatpush1.msra.mxu0 0.0
    %5335 = vmatprep.subr.mxu0 0.0
    %5336 = vmatpush1.msra.mxu0 0.0
    %5337 = vmatprep.subr.mxu0 0.0
    %5338 = vmatpush1.msra.mxu0 0.0
    %5339 = vmatprep.subr.mxu0 0.0
    %5340 = vmatpush1.msra.mxu0 0.0
    %5341 = vmatprep.subr.mxu0 0.0
    %5342 = vmatpush1.msra.mxu0 0.0
    %5343 = vmatprep.subr.mxu0 0.0
    %5344 = vmatpush1.msra.mxu0 0.0
    %5345 = vmatprep.subr.mxu0 0.0
    %5346 = vmatpush1.msra.mxu0 0.0
    %5347 = vmatprep.subr.mxu0 0.0
    %5348 = vmatpush1.msra.mxu0 0.0
    %5349 = vmatprep.mubr.f32.mxu0 0.0
    %5350 = vmatmul.mubr.f32.gmra.mrb[0].mxu0 %v5283
    %v5351 = vpop.f32.mrb[0].mxu0
    %v5352 = vadd.f32 0.0, %v5351
    %v5353 = vpop.f32.mrb[0].mxu0
    %v5354 = vadd.f32 0.0, %v5353
    %5355 = vdwg.mxu0
    %5356 = vmatprep.subr.mxu0 %v4718
    %5357 = vmatpush1.msra.mxu0 %v4717
    %5358 = vmatprep.subr.mxu0 %v4722
    %5359 = vmatpush1.msra.mxu0 %v4721
    %5360 = vmatprep.subr.mxu0 %v4726
    %5361 = vmatpush1.msra.mxu0 %v4725
    %5362 = vmatprep.subr.mxu0 %v4730
    %5363 = vmatpush1.msra.mxu0 %v4729
    %5364 = vmatprep.subr.mxu0 %v4734
    %5365 = vmatpush1.msra.mxu0 %v4733
    %5366 = vmatprep.subr.mxu0 %v4738
    %5367 = vmatpush1.msra.mxu0 %v4737
    %5368 = vmatprep.subr.mxu0 %v4742
    %5369 = vmatpush1.msra.mxu0 %v4741
    %5370 = vmatprep.subr.mxu0 %v4746
    %5371 = vmatpush1.msra.mxu0 %v4745
    %5372 = vmatprep.subr.mxu0 %v4750
    %5373 = vmatpush1.msra.mxu0 %v4749
    %5374 = vmatprep.subr.mxu0 %v4754
    %5375 = vmatpush1.msra.mxu0 %v4753
    %5376 = vmatprep.subr.mxu0 %v4758
    %5377 = vmatpush1.msra.mxu0 %v4757
    %5378 = vmatprep.subr.mxu0 %v4762
    %5379 = vmatpush1.msra.mxu0 %v4761
    %5380 = vmatprep.subr.mxu0 0.0
    %5381 = vmatpush1.msra.mxu0 0.0
    %5382 = vmatprep.subr.mxu0 0.0
    %5383 = vmatpush1.msra.mxu0 0.0
    %5384 = vmatprep.subr.mxu0 0.0
    %5385 = vmatpush1.msra.mxu0 0.0
    %5386 = vmatprep.subr.mxu0 0.0
    %5387 = vmatpush1.msra.mxu0 0.0
    %5388 = vmatprep.subr.mxu0 0.0
    %5389 = vmatpush1.msra.mxu0 0.0
    %5390 = vmatprep.subr.mxu0 0.0
    %5391 = vmatpush1.msra.mxu0 0.0
    %5392 = vmatprep.subr.mxu0 0.0
    %5393 = vmatpush1.msra.mxu0 0.0
    %5394 = vmatprep.subr.mxu0 0.0
    %5395 = vmatpush1.msra.mxu0 0.0
    %5396 = vmatprep.subr.mxu0 0.0
    %5397 = vmatpush1.msra.mxu0 0.0
    %5398 = vmatprep.subr.mxu0 0.0
    %5399 = vmatpush1.msra.mxu0 0.0
    %5400 = vmatprep.subr.mxu0 0.0
    %5401 = vmatpush1.msra.mxu0 0.0
    %5402 = vmatprep.subr.mxu0 0.0
    %5403 = vmatpush1.msra.mxu0 0.0
    %5404 = vmatprep.subr.mxu0 0.0
    %5405 = vmatpush1.msra.mxu0 0.0
    %5406 = vmatprep.subr.mxu0 0.0
    %5407 = vmatpush1.msra.mxu0 0.0
    %5408 = vmatprep.subr.mxu0 0.0
    %5409 = vmatpush1.msra.mxu0 0.0
    %5410 = vmatprep.subr.mxu0 0.0
    %5411 = vmatpush1.msra.mxu0 0.0
    %5412 = vmatprep.subr.mxu0 0.0
    %5413 = vmatpush1.msra.mxu0 0.0
    %5414 = vmatprep.subr.mxu0 0.0
    %5415 = vmatpush1.msra.mxu0 0.0
    %5416 = vmatprep.subr.mxu0 0.0
    %5417 = vmatpush1.msra.mxu0 0.0
    %5418 = vmatprep.subr.mxu0 0.0
    %5419 = vmatpush1.msra.mxu0 0.0
    %5420 = vmatprep.mubr.f32.mxu0 0.0
    %5421 = vmatmul.mubr.f32.gmra.mrb[0].mxu0 %v5283
    %v5422 = vpop.f32.mrb[0].mxu0
    %v5423 = vadd.f32 0.0, %v5422
    %v5424 = vpop.f32.mrb[0].mxu0
    %v5425 = vadd.f32 0.0, %v5424
    %5426 = vdwg.mxu0
    %v5427 = vadd.f32 %v4695, %v5352
    %v5428 = vadd.f32 %v4696, %v5354
    %v5429 = vadd.f32 %v4697, %v5423
    %v5430 = vadd.f32 %v4698, %v5425
    %v5431 = vxor.u32 %v5427, 2147483648
    %v5432 = vxor.u32 %v5428, 2147483648
    %v5433 = vxor.u32 %v5429, 2147483648
    %v5434 = vmul.f32 %v5431, 1.442695
    %v5435 = vpow.pop %v5434
    %v5436 = vmul.f32 %v5432, 1.442695
    %v5437 = vpow.pop %v5436
    %v5438 = vmul.f32 %v5433, 1.442695
    %v5439 = vpow.pop %v5438
    %v5440 = vadd.f32 %v5435, 1.0
    %v5441 = vadd.f32 %v5437, 1.0
    %v5442 = vadd.f32 %v5439, 1.0
    %v5443 = vrcp.pop %v5440
    %v5444 = vmul.f32 1.0, %v5443
    %v5445 = vrcp.pop %v5441
    %v5446 = vmul.f32 1.0, %v5445
    %v5447 = vrcp.pop %v5442
    %v5448 = vmul.f32 1.0, %v5447
    %v5449 = vtanh.pop %v5430
    %v5450 = vmul.f32 %v5446, %v5279
    %v5451 = vmul.f32 %v5444, %v5449
    %v5452 = vadd.f32 %v5450, %v5451
    %v5453 = vtanh.pop %v5452
    %v5454 = vmul.f32 %v5448, %v5453
    %v5456 = vsel %vm4763, %v5454, 0
    %5458 = vmatprep.subr.mxu0 %v4716
    %5459 = vmatpush1.msra.mxu0 %v4715
    %5460 = vmatprep.subr.mxu0 %v4720
    %5461 = vmatpush1.msra.mxu0 %v4719
    %5462 = vmatprep.subr.mxu0 %v4724
    %5463 = vmatpush1.msra.mxu0 %v4723
    %5464 = vmatprep.subr.mxu0 %v4728
    %5465 = vmatpush1.msra.mxu0 %v4727
    %5466 = vmatprep.subr.mxu0 %v4732
    %5467 = vmatpush1.msra.mxu0 %v4731
    %5468 = vmatprep.subr.mxu0 %v4736
    %5469 = vmatpush1.msra.mxu0 %v4735
    %5470 = vmatprep.subr.mxu0 %v4740
    %5471 = vmatpush1.msra.mxu0 %v4739
    %5472 = vmatprep.subr.mxu0 %v4744
    %5473 = vmatpush1.msra.mxu0 %v4743
    %5474 = vmatprep.subr.mxu0 %v4748
    %5475 = vmatpush1.msra.mxu0 %v4747
    %5476 = vmatprep.subr.mxu0 %v4752
    %5477 = vmatpush1.msra.mxu0 %v4751
    %5478 = vmatprep.subr.mxu0 %v4756
    %5479 = vmatpush1.msra.mxu0 %v4755
    %5480 = vmatprep.subr.mxu0 %v4760
    %5481 = vmatpush1.msra.mxu0 %v4759
    %5482 = vmatprep.subr.mxu0 0.0
    %5483 = vmatpush1.msra.mxu0 0.0
    %5484 = vmatprep.subr.mxu0 0.0
    %5485 = vmatpush1.msra.mxu0 0.0
    %5486 = vmatprep.subr.mxu0 0.0
    %5487 = vmatpush1.msra.mxu0 0.0
    %5488 = vmatprep.subr.mxu0 0.0
    %5489 = vmatpush1.msra.mxu0 0.0
    %5490 = vmatprep.subr.mxu0 0.0
    %5491 = vmatpush1.msra.mxu0 0.0
    %5492 = vmatprep.subr.mxu0 0.0
    %5493 = vmatpush1.msra.mxu0 0.0
    %5494 = vmatprep.subr.mxu0 0.0
    %5495 = vmatpush1.msra.mxu0 0.0
    %5496 = vmatprep.subr.mxu0 0.0
    %5497 = vmatpush1.msra.mxu0 0.0
    %5498 = vmatprep.subr.mxu0 0.0
    %5499 = vmatpush1.msra.mxu0 0.0
    %5500 = vmatprep.subr.mxu0 0.0
    %5501 = vmatpush1.msra.mxu0 0.0
    %5502 = vmatprep.subr.mxu0 0.0
    %5503 = vmatpush1.msra.mxu0 0.0
    %5504 = vmatprep.subr.mxu0 0.0
    %5505 = vmatpush1.msra.mxu0 0.0
    %5506 = vmatprep.subr.mxu0 0.0
    %5507 = vmatpush1.msra.mxu0 0.0
    %5508 = vmatprep.subr.mxu0 0.0
    %5509 = vmatpush1.msra.mxu0 0.0
    %5510 = vmatprep.subr.mxu0 0.0
    %5511 = vmatpush1.msra.mxu0 0.0
    %5512 = vmatprep.subr.mxu0 0.0
    %5513 = vmatpush1.msra.mxu0 0.0
    %5514 = vmatprep.subr.mxu0 0.0
    %5515 = vmatpush1.msra.mxu0 0.0
    %5516 = vmatprep.subr.mxu0 0.0
    %5517 = vmatpush1.msra.mxu0 0.0
    %5518 = vmatprep.subr.mxu0 0.0
    %5519 = vmatpush1.msra.mxu0 0.0
    %5520 = vmatprep.subr.mxu0 0.0
    %5521 = vmatpush1.msra.mxu0 0.0
    %5522 = vmatprep.mubr.f32.mxu0 0.0
    %5523 = vmatmul.mubr.f32.gmra.mrb[0].mxu0 %v5456
    %v5524 = vpop.f32.mrb[0].mxu0
    %v5525 = vadd.f32 0.0, %v5524
    %v5526 = vpop.f32.mrb[0].mxu0
    %v5527 = vadd.f32 0.0, %v5526
    %5528 = vdwg.mxu0
    %5529 = vmatprep.subr.mxu0 %v4718
    %5530 = vmatpush1.msra.mxu0 %v4717
    %5531 = vmatprep.subr.mxu0 %v4722
    %5532 = vmatpush1.msra.mxu0 %v4721
    %5533 = vmatprep.subr.mxu0 %v4726
    %5534 = vmatpush1.msra.mxu0 %v4725
    %5535 = vmatprep.subr.mxu0 %v4730
    %5536 = vmatpush1.msra.mxu0 %v4729
    %5537 = vmatprep.subr.mxu0 %v4734
    %5538 = vmatpush1.msra.mxu0 %v4733
    %5539 = vmatprep.subr.mxu0 %v4738
    %5540 = vmatpush1.msra.mxu0 %v4737
    %5541 = vmatprep.subr.mxu0 %v4742
    %5542 = vmatpush1.msra.mxu0 %v4741
    %5543 = vmatprep.subr.mxu0 %v4746
    %5544 = vmatpush1.msra.mxu0 %v4745
    %5545 = vmatprep.subr.mxu0 %v4750
    %5546 = vmatpush1.msra.mxu0 %v4749
    %5547 = vmatprep.subr.mxu0 %v4754
    %5548 = vmatpush1.msra.mxu0 %v4753
    %5549 = vmatprep.subr.mxu0 %v4758
    %5550 = vmatpush1.msra.mxu0 %v4757
    %5551 = vmatprep.subr.mxu0 %v4762
    %5552 = vmatpush1.msra.mxu0 %v4761
    %5553 = vmatprep.subr.mxu0 0.0
    %5554 = vmatpush1.msra.mxu0 0.0
    %5555 = vmatprep.subr.mxu0 0.0
    %5556 = vmatpush1.msra.mxu0 0.0
    %5557 = vmatprep.subr.mxu0 0.0
    %5558 = vmatpush1.msra.mxu0 0.0
    %5559 = vmatprep.subr.mxu0 0.0
    %5560 = vmatpush1.msra.mxu0 0.0
    %5561 = vmatprep.subr.mxu0 0.0
    %5562 = vmatpush1.msra.mxu0 0.0
    %5563 = vmatprep.subr.mxu0 0.0
    %5564 = vmatpush1.msra.mxu0 0.0
    %5565 = vmatprep.subr.mxu0 0.0
    %5566 = vmatpush1.msra.mxu0 0.0
    %5567 = vmatprep.subr.mxu0 0.0
    %5568 = vmatpush1.msra.mxu0 0.0
    %5569 = vmatprep.subr.mxu0 0.0
    %5570 = vmatpush1.msra.mxu0 0.0
    %5571 = vmatprep.subr.mxu0 0.0
    %5572 = vmatpush1.msra.mxu0 0.0
    %5573 = vmatprep.subr.mxu0 0.0
    %5574 = vmatpush1.msra.mxu0 0.0
    %5575 = vmatprep.subr.mxu0 0.0
    %5576 = vmatpush1.msra.mxu0 0.0
    %5577 = vmatprep.subr.mxu0 0.0
    %5578 = vmatpush1.msra.mxu0 0.0
    %5579 = vmatprep.subr.mxu0 0.0
    %5580 = vmatpush1.msra.mxu0 0.0
    %5581 = vmatprep.subr.mxu0 0.0
    %5582 = vmatpush1.msra.mxu0 0.0
    %5583 = vmatprep.subr.mxu0 0.0
    %5584 = vmatpush1.msra.mxu0 0.0
    %5585 = vmatprep.subr.mxu0 0.0
    %5586 = vmatpush1.msra.mxu0 0.0
    %5587 = vmatprep.subr.mxu0 0.0
    %5588 = vmatpush1.msra.mxu0 0.0
    %5589 = vmatprep.subr.mxu0 0.0
    %5590 = vmatpush1.msra.mxu0 0.0
    %5591 = vmatprep.subr.mxu0 0.0
    %5592 = vmatpush1.msra.mxu0 0.0
    %5593 = vmatprep.mubr.f32.mxu0 0.0
    %5594 = vmatmul.mubr.f32.gmra.mrb[0].mxu0 %v5456
    %v5595 = vpop.f32.mrb[0].mxu0
    %v5596 = vadd.f32 0.0, %v5595
    %v5597 = vpop.f32.mrb[0].mxu0
    %v5598 = vadd.f32 0.0, %v5597
    %5599 = vdwg.mxu0
    %v5600 = vadd.f32 %v4699, %v5525
    %v5601 = vadd.f32 %v4700, %v5527
    %v5602 = vadd.f32 %v4701, %v5596
    %v5603 = vadd.f32 %v4702, %v5598
    %v5604 = vxor.u32 %v5600, 2147483648
    %v5605 = vxor.u32 %v5601, 2147483648
    %v5606 = vxor.u32 %v5602, 2147483648
    %v5607 = vmul.f32 %v5604, 1.442695
    %v5608 = vpow.pop %v5607
    %v5609 = vmul.f32 %v5605, 1.442695
    %v5610 = vpow.pop %v5609
    %v5611 = vmul.f32 %v5606, 1.442695
    %v5612 = vpow.pop %v5611
    %v5613 = vadd.f32 %v5608, 1.0
    %v5614 = vadd.f32 %v5610, 1.0
    %v5615 = vadd.f32 %v5612, 1.0
    %v5616 = vrcp.pop %v5613
    %v5617 = vmul.f32 1.0, %v5616
    %v5618 = vrcp.pop %v5614
    %v5619 = vmul.f32 1.0, %v5618
    %v5620 = vrcp.pop %v5615
    %v5621 = vmul.f32 1.0, %v5620
    %v5622 = vtanh.pop %v5603
    %v5623 = vmul.f32 %v5619, %v5452
    %v5624 = vmul.f32 %v5617, %v5622
    %v5625 = vadd.f32 %v5623, %v5624
    %v5626 = vtanh.pop %v5625
    %v5627 = vmul.f32 %v5621, %v5626
    %v5629 = vsel %vm4763, %v5627, 0
    %5631 = vmatprep.subr.mxu0 %v4716
    %5632 = vmatpush1.msra.mxu0 %v4715
    %5633 = vmatprep.subr.mxu0 %v4720
    %5634 = vmatpush1.msra.mxu0 %v4719
    %5635 = vmatprep.subr.mxu0 %v4724
    %5636 = vmatpush1.msra.mxu0 %v4723
    %5637 = vmatprep.subr.mxu0 %v4728
    %5638 = vmatpush1.msra.mxu0 %v4727
    %5639 = vmatprep.subr.mxu0 %v4732
    %5640 = vmatpush1.msra.mxu0 %v4731
    %5641 = vmatprep.subr.mxu0 %v4736
    %5642 = vmatpush1.msra.mxu0 %v4735
    %5643 = vmatprep.subr.mxu0 %v4740
    %5644 = vmatpush1.msra.mxu0 %v4739
    %5645 = vmatprep.subr.mxu0 %v4744
    %5646 = vmatpush1.msra.mxu0 %v4743
    %5647 = vmatprep.subr.mxu0 %v4748
    %5648 = vmatpush1.msra.mxu0 %v4747
    %5649 = vmatprep.subr.mxu0 %v4752
    %5650 = vmatpush1.msra.mxu0 %v4751
    %5651 = vmatprep.subr.mxu0 %v4756
    %5652 = vmatpush1.msra.mxu0 %v4755
    %5653 = vmatprep.subr.mxu0 %v4760
    %5654 = vmatpush1.msra.mxu0 %v4759
    %5655 = vmatprep.subr.mxu0 0.0
    %5656 = vmatpush1.msra.mxu0 0.0
    %5657 = vmatprep.subr.mxu0 0.0
    %5658 = vmatpush1.msra.mxu0 0.0
    %5659 = vmatprep.subr.mxu0 0.0
    %5660 = vmatpush1.msra.mxu0 0.0
    %5661 = vmatprep.subr.mxu0 0.0
    %5662 = vmatpush1.msra.mxu0 0.0
    %5663 = vmatprep.subr.mxu0 0.0
    %5664 = vmatpush1.msra.mxu0 0.0
    %5665 = vmatprep.subr.mxu0 0.0
    %5666 = vmatpush1.msra.mxu0 0.0
    %5667 = vmatprep.subr.mxu0 0.0
    %5668 = vmatpush1.msra.mxu0 0.0
    %5669 = vmatprep.subr.mxu0 0.0
    %5670 = vmatpush1.msra.mxu0 0.0
    %5671 = vmatprep.subr.mxu0 0.0
    %5672 = vmatpush1.msra.mxu0 0.0
    %5673 = vmatprep.subr.mxu0 0.0
    %5674 = vmatpush1.msra.mxu0 0.0
    %5675 = vmatprep.subr.mxu0 0.0
    %5676 = vmatpush1.msra.mxu0 0.0
    %5677 = vmatprep.subr.mxu0 0.0
    %5678 = vmatpush1.msra.mxu0 0.0
    %5679 = vmatprep.subr.mxu0 0.0
    %5680 = vmatpush1.msra.mxu0 0.0
    %5681 = vmatprep.subr.mxu0 0.0
    %5682 = vmatpush1.msra.mxu0 0.0
    %5683 = vmatprep.subr.mxu0 0.0
    %5684 = vmatpush1.msra.mxu0 0.0
    %5685 = vmatprep.subr.mxu0 0.0
    %5686 = vmatpush1.msra.mxu0 0.0
    %5687 = vmatprep.subr.mxu0 0.0
    %5688 = vmatpush1.msra.mxu0 0.0
    %5689 = vmatprep.subr.mxu0 0.0
    %5690 = vmatpush1.msra.mxu0 0.0
    %5691 = vmatprep.subr.mxu0 0.0
    %5692 = vmatpush1.msra.mxu0 0.0
    %5693 = vmatprep.subr.mxu0 0.0
    %5694 = vmatpush1.msra.mxu0 0.0
    %5695 = vmatprep.mubr.f32.mxu0 0.0
    %5696 = vmatmul.mubr.f32.gmra.mrb[0].mxu0 %v5629
    %v5697 = vpop.f32.mrb[0].mxu0
    %v5698 = vadd.f32 0.0, %v5697
    %v5699 = vpop.f32.mrb[0].mxu0
    %v5700 = vadd.f32 0.0, %v5699
    %5701 = vdwg.mxu0
    %5702 = vmatprep.subr.mxu0 %v4718
    %5703 = vmatpush1.msra.mxu0 %v4717
    %5704 = vmatprep.subr.mxu0 %v4722
    %5705 = vmatpush1.msra.mxu0 %v4721
    %5706 = vmatprep.subr.mxu0 %v4726
    %5707 = vmatpush1.msra.mxu0 %v4725
    %5708 = vmatprep.subr.mxu0 %v4730
    %5709 = vmatpush1.msra.mxu0 %v4729
    %5710 = vmatprep.subr.mxu0 %v4734
    %5711 = vmatpush1.msra.mxu0 %v4733
    %5712 = vmatprep.subr.mxu0 %v4738
    %5713 = vmatpush1.msra.mxu0 %v4737
    %5714 = vmatprep.subr.mxu0 %v4742
    %5715 = vmatpush1.msra.mxu0 %v4741
    %5716 = vmatprep.subr.mxu0 %v4746
    %5717 = vmatpush1.msra.mxu0 %v4745
    %5718 = vmatprep.subr.mxu0 %v4750
    %5719 = vmatpush1.msra.mxu0 %v4749
    %5720 = vmatprep.subr.mxu0 %v4754
    %5721 = vmatpush1.msra.mxu0 %v4753
    %5722 = vmatprep.subr.mxu0 %v4758
    %5723 = vmatpush1.msra.mxu0 %v4757
    %5724 = vmatprep.subr.mxu0 %v4762
    %5725 = vmatpush1.msra.mxu0 %v4761
    %5726 = vmatprep.subr.mxu0 0.0
    %5727 = vmatpush1.msra.mxu0 0.0
    %5728 = vmatprep.subr.mxu0 0.0
    %5729 = vmatpush1.msra.mxu0 0.0
    %5730 = vmatprep.subr.mxu0 0.0
    %5731 = vmatpush1.msra.mxu0 0.0
    %5732 = vmatprep.subr.mxu0 0.0
    %5733 = vmatpush1.msra.mxu0 0.0
    %5734 = vmatprep.subr.mxu0 0.0
    %5735 = vmatpush1.msra.mxu0 0.0
    %5736 = vmatprep.subr.mxu0 0.0
    %5737 = vmatpush1.msra.mxu0 0.0
    %5738 = vmatprep.subr.mxu0 0.0
    %5739 = vmatpush1.msra.mxu0 0.0
    %5740 = vmatprep.subr.mxu0 0.0
    %5741 = vmatpush1.msra.mxu0 0.0
    %5742 = vmatprep.subr.mxu0 0.0
    %5743 = vmatpush1.msra.mxu0 0.0
    %5744 = vmatprep.subr.mxu0 0.0
    %5745 = vmatpush1.msra.mxu0 0.0
    %5746 = vmatprep.subr.mxu0 0.0
    %5747 = vmatpush1.msra.mxu0 0.0
    %5748 = vmatprep.subr.mxu0 0.0
    %5749 = vmatpush1.msra.mxu0 0.0
    %5750 = vmatprep.subr.mxu0 0.0
    %5751 = vmatpush1.msra.mxu0 0.0
    %5752 = vmatprep.subr.mxu0 0.0
    %5753 = vmatpush1.msra.mxu0 0.0
    %5754 = vmatprep.subr.mxu0 0.0
    %5755 = vmatpush1.msra.mxu0 0.0
    %5756 = vmatprep.subr.mxu0 0.0
    %5757 = vmatpush1.msra.mxu0 0.0
    %5758 = vmatprep.subr.mxu0 0.0
    %5759 = vmatpush1.msra.mxu0 0.0
    %5760 = vmatprep.subr.mxu0 0.0
    %5761 = vmatpush1.msra.mxu0 0.0
    %5762 = vmatprep.subr.mxu0 0.0
    %5763 = vmatpush1.msra.mxu0 0.0
    %5764 = vmatprep.subr.mxu0 0.0
    %5765 = vmatpush1.msra.mxu0 0.0
    %5766 = vmatprep.mubr.f32.mxu0 0.0
    %5767 = vmatmul.mubr.f32.gmra.mrb[0].mxu0 %v5629
    %v5768 = vpop.f32.mrb[0].mxu0
    %v5769 = vadd.f32 0.0, %v5768
    %v5770 = vpop.f32.mrb[0].mxu0
    %v5771 = vadd.f32 0.0, %v5770
    %5772 = vdwg.mxu0
    %v5773 = vadd.f32 %v4703, %v5698
    %v5774 = vadd.f32 %v4704, %v5700
    %v5775 = vadd.f32 %v4705, %v5769
    %v5776 = vadd.f32 %v4706, %v5771
    %v5777 = vxor.u32 %v5773, 2147483648
    %v5778 = vxor.u32 %v5774, 2147483648
    %v5779 = vxor.u32 %v5775, 2147483648
    %v5780 = vmul.f32 %v5777, 1.442695
    %v5781 = vpow.pop %v5780
    %v5782 = vmul.f32 %v5778, 1.442695
    %v5783 = vpow.pop %v5782
    %v5784 = vmul.f32 %v5779, 1.442695
    %v5785 = vpow.pop %v5784
    %v5786 = vadd.f32 %v5781, 1.0
    %v5787 = vadd.f32 %v5783, 1.0
    %v5788 = vadd.f32 %v5785, 1.0
    %v5789 = vrcp.pop %v5786
    %v5790 = vmul.f32 1.0, %v5789
    %v5791 = vrcp.pop %v5787
    %v5792 = vmul.f32 1.0, %v5791
    %v5793 = vrcp.pop %v5788
    %v5794 = vmul.f32 1.0, %v5793
    %v5795 = vtanh.pop %v5776
    %v5796 = vmul.f32 %v5792, %v5625
    %v5797 = vmul.f32 %v5790, %v5795
    %v5798 = vadd.f32 %v5796, %v5797
    %v5799 = vtanh.pop %v5798
    %v5800 = vmul.f32 %v5794, %v5799
    %v5802 = vsel %vm4763, %v5800, 0
    %5804 = vmatprep.subr.mxu0 %v4716
    %5805 = vmatpush1.msra.mxu0 %v4715
    %5806 = vmatprep.subr.mxu0 %v4720
    %5807 = vmatpush1.msra.mxu0 %v4719
    %5808 = vmatprep.subr.mxu0 %v4724
    %5809 = vmatpush1.msra.mxu0 %v4723
    %5810 = vmatprep.subr.mxu0 %v4728
    %5811 = vmatpush1.msra.mxu0 %v4727
    %5812 = vmatprep.subr.mxu0 %v4732
    %5813 = vmatpush1.msra.mxu0 %v4731
    %5814 = vmatprep.subr.mxu0 %v4736
    %5815 = vmatpush1.msra.mxu0 %v4735
    %5816 = vmatprep.subr.mxu0 %v4740
    %5817 = vmatpush1.msra.mxu0 %v4739
    %5818 = vmatprep.subr.mxu0 %v4744
    %5819 = vmatpush1.msra.mxu0 %v4743
    %5820 = vmatprep.subr.mxu0 %v4748
    %5821 = vmatpush1.msra.mxu0 %v4747
    %5822 = vmatprep.subr.mxu0 %v4752
    %5823 = vmatpush1.msra.mxu0 %v4751
    %5824 = vmatprep.subr.mxu0 %v4756
    %5825 = vmatpush1.msra.mxu0 %v4755
    %5826 = vmatprep.subr.mxu0 %v4760
    %5827 = vmatpush1.msra.mxu0 %v4759
    %5828 = vmatprep.subr.mxu0 0.0
    %5829 = vmatpush1.msra.mxu0 0.0
    %5830 = vmatprep.subr.mxu0 0.0
    %5831 = vmatpush1.msra.mxu0 0.0
    %5832 = vmatprep.subr.mxu0 0.0
    %5833 = vmatpush1.msra.mxu0 0.0
    %5834 = vmatprep.subr.mxu0 0.0
    %5835 = vmatpush1.msra.mxu0 0.0
    %5836 = vmatprep.subr.mxu0 0.0
    %5837 = vmatpush1.msra.mxu0 0.0
    %5838 = vmatprep.subr.mxu0 0.0
    %5839 = vmatpush1.msra.mxu0 0.0
    %5840 = vmatprep.subr.mxu0 0.0
    %5841 = vmatpush1.msra.mxu0 0.0
    %5842 = vmatprep.subr.mxu0 0.0
    %5843 = vmatpush1.msra.mxu0 0.0
    %5844 = vmatprep.subr.mxu0 0.0
    %5845 = vmatpush1.msra.mxu0 0.0
    %5846 = vmatprep.subr.mxu0 0.0
    %5847 = vmatpush1.msra.mxu0 0.0
    %5848 = vmatprep.subr.mxu0 0.0
    %5849 = vmatpush1.msra.mxu0 0.0
    %5850 = vmatprep.subr.mxu0 0.0
    %5851 = vmatpush1.msra.mxu0 0.0
    %5852 = vmatprep.subr.mxu0 0.0
    %5853 = vmatpush1.msra.mxu0 0.0
    %5854 = vmatprep.subr.mxu0 0.0
    %5855 = vmatpush1.msra.mxu0 0.0
    %5856 = vmatprep.subr.mxu0 0.0
    %5857 = vmatpush1.msra.mxu0 0.0
    %5858 = vmatprep.subr.mxu0 0.0
    %5859 = vmatpush1.msra.mxu0 0.0
    %5860 = vmatprep.subr.mxu0 0.0
    %5861 = vmatpush1.msra.mxu0 0.0
    %5862 = vmatprep.subr.mxu0 0.0
    %5863 = vmatpush1.msra.mxu0 0.0
    %5864 = vmatprep.subr.mxu0 0.0
    %5865 = vmatpush1.msra.mxu0 0.0
    %5866 = vmatprep.subr.mxu0 0.0
    %5867 = vmatpush1.msra.mxu0 0.0
    %5868 = vmatprep.mubr.f32.mxu0 0.0
    %5869 = vmatmul.mubr.f32.gmra.mrb[0].mxu0 %v5802
    %v5870 = vpop.f32.mrb[0].mxu0
    %v5871 = vadd.f32 0.0, %v5870
    %v5872 = vpop.f32.mrb[0].mxu0
    %v5873 = vadd.f32 0.0, %v5872
    %5874 = vdwg.mxu0
    %5875 = vmatprep.subr.mxu0 %v4718
    %5876 = vmatpush1.msra.mxu0 %v4717
    %5877 = vmatprep.subr.mxu0 %v4722
    %5878 = vmatpush1.msra.mxu0 %v4721
    %5879 = vmatprep.subr.mxu0 %v4726
    %5880 = vmatpush1.msra.mxu0 %v4725
    %5881 = vmatprep.subr.mxu0 %v4730
    %5882 = vmatpush1.msra.mxu0 %v4729
    %5883 = vmatprep.subr.mxu0 %v4734
    %5884 = vmatpush1.msra.mxu0 %v4733
    %5885 = vmatprep.subr.mxu0 %v4738
    %5886 = vmatpush1.msra.mxu0 %v4737
    %5887 = vmatprep.subr.mxu0 %v4742
    %5888 = vmatpush1.msra.mxu0 %v4741
    %5889 = vmatprep.subr.mxu0 %v4746
    %5890 = vmatpush1.msra.mxu0 %v4745
    %5891 = vmatprep.subr.mxu0 %v4750
    %5892 = vmatpush1.msra.mxu0 %v4749
    %5893 = vmatprep.subr.mxu0 %v4754
    %5894 = vmatpush1.msra.mxu0 %v4753
    %5895 = vmatprep.subr.mxu0 %v4758
    %5896 = vmatpush1.msra.mxu0 %v4757
    %5897 = vmatprep.subr.mxu0 %v4762
    %5898 = vmatpush1.msra.mxu0 %v4761
    %5899 = vmatprep.subr.mxu0 0.0
    %5900 = vmatpush1.msra.mxu0 0.0
    %5901 = vmatprep.subr.mxu0 0.0
    %5902 = vmatpush1.msra.mxu0 0.0
    %5903 = vmatprep.subr.mxu0 0.0
    %5904 = vmatpush1.msra.mxu0 0.0
    %5905 = vmatprep.subr.mxu0 0.0
    %5906 = vmatpush1.msra.mxu0 0.0
    %5907 = vmatprep.subr.mxu0 0.0
    %5908 = vmatpush1.msra.mxu0 0.0
    %5909 = vmatprep.subr.mxu0 0.0
    %5910 = vmatpush1.msra.mxu0 0.0
    %5911 = vmatprep.subr.mxu0 0.0
    %5912 = vmatpush1.msra.mxu0 0.0
    %5913 = vmatprep.subr.mxu0 0.0
    %5914 = vmatpush1.msra.mxu0 0.0
    %5915 = vmatprep.subr.mxu0 0.0
    %5916 = vmatpush1.msra.mxu0 0.0
    %5917 = vmatprep.subr.mxu0 0.0
    %5918 = vmatpush1.msra.mxu0 0.0
    %5919 = vmatprep.subr.mxu0 0.0
    %5920 = vmatpush1.msra.mxu0 0.0
    %5921 = vmatprep.subr.mxu0 0.0
    %5922 = vmatpush1.msra.mxu0 0.0
    %5923 = vmatprep.subr.mxu0 0.0
    %5924 = vmatpush1.msra.mxu0 0.0
    %5925 = vmatprep.subr.mxu0 0.0
    %5926 = vmatpush1.msra.mxu0 0.0
    %5927 = vmatprep.subr.mxu0 0.0
    %5928 = vmatpush1.msra.mxu0 0.0
    %5929 = vmatprep.subr.mxu0 0.0
    %5930 = vmatpush1.msra.mxu0 0.0
    %5931 = vmatprep.subr.mxu0 0.0
    %5932 = vmatpush1.msra.mxu0 0.0
    %5933 = vmatprep.subr.mxu0 0.0
    %5934 = vmatpush1.msra.mxu0 0.0
    %5935 = vmatprep.subr.mxu0 0.0
    %5936 = vmatpush1.msra.mxu0 0.0
    %5937 = vmatprep.subr.mxu0 0.0
    %5938 = vmatpush1.msra.mxu0 0.0
    %5939 = vmatprep.mubr.f32.mxu0 0.0
    %5940 = vmatmul.mubr.f32.gmra.mrb[0].mxu0 %v5802
    %v5941 = vpop.f32.mrb[0].mxu0
    %v5942 = vadd.f32 0.0, %v5941
    %v5943 = vpop.f32.mrb[0].mxu0
    %v5944 = vadd.f32 0.0, %v5943
    %5945 = vdwg.mxu0
    %v5946 = vadd.f32 %v4707, %v5871
    %v5947 = vadd.f32 %v4708, %v5873
    %v5948 = vadd.f32 %v4709, %v5942
    %v5949 = vadd.f32 %v4710, %v5944
    %v5950 = vxor.u32 %v5946, 2147483648
    %v5951 = vxor.u32 %v5947, 2147483648
    %v5952 = vxor.u32 %v5948, 2147483648
    %v5953 = vmul.f32 %v5950, 1.442695
    %v5954 = vpow.pop %v5953
    %v5955 = vmul.f32 %v5951, 1.442695
    %v5956 = vpow.pop %v5955
    %v5957 = vmul.f32 %v5952, 1.442695
    %v5958 = vpow.pop %v5957
    %v5959 = vadd.f32 %v5954, 1.0
    %v5960 = vadd.f32 %v5956, 1.0
    %v5961 = vadd.f32 %v5958, 1.0
    %v5962 = vrcp.pop %v5959
    %v5963 = vmul.f32 1.0, %v5962
    %v5964 = vrcp.pop %v5960
    %v5965 = vmul.f32 1.0, %v5964
    %v5966 = vrcp.pop %v5961
    %v5967 = vmul.f32 1.0, %v5966
    %v5968 = vtanh.pop %v5949
    %v5969 = vmul.f32 %v5965, %v5798
    %v5970 = vmul.f32 %v5963, %v5968
    %v5971 = vadd.f32 %v5969, %v5970
    %v5972 = vtanh.pop %v5971
    %v5973 = vmul.f32 %v5967, %v5972
    %v5975 = vsel %vm4763, %v5973, 0
    %5977 = vmatprep.subr.mxu0 %v4716
    %5978 = vmatpush1.msra.mxu0 %v4715
    %5979 = vmatprep.subr.mxu0 %v4720
    %5980 = vmatpush1.msra.mxu0 %v4719
    %5981 = vmatprep.subr.mxu0 %v4724
    %5982 = vmatpush1.msra.mxu0 %v4723
    %5983 = vmatprep.subr.mxu0 %v4728
    %5984 = vmatpush1.msra.mxu0 %v4727
    %5985 = vmatprep.subr.mxu0 %v4732
    %5986 = vmatpush1.msra.mxu0 %v4731
    %5987 = vmatprep.subr.mxu0 %v4736
    %5988 = vmatpush1.msra.mxu0 %v4735
    %5989 = vmatprep.subr.mxu0 %v4740
    %5990 = vmatpush1.msra.mxu0 %v4739
    %5991 = vmatprep.subr.mxu0 %v4744
    %5992 = vmatpush1.msra.mxu0 %v4743
    %5993 = vmatprep.subr.mxu0 %v4748
    %5994 = vmatpush1.msra.mxu0 %v4747
    %5995 = vmatprep.subr.mxu0 %v4752
    %5996 = vmatpush1.msra.mxu0 %v4751
    %5997 = vmatprep.subr.mxu0 %v4756
    %5998 = vmatpush1.msra.mxu0 %v4755
    %5999 = vmatprep.subr.mxu0 %v4760
    %6000 = vmatpush1.msra.mxu0 %v4759
    %6001 = vmatprep.subr.mxu0 0.0
    %6002 = vmatpush1.msra.mxu0 0.0
    %6003 = vmatprep.subr.mxu0 0.0
    %6004 = vmatpush1.msra.mxu0 0.0
    %6005 = vmatprep.subr.mxu0 0.0
    %6006 = vmatpush1.msra.mxu0 0.0
    %6007 = vmatprep.subr.mxu0 0.0
    %6008 = vmatpush1.msra.mxu0 0.0
    %6009 = vmatprep.subr.mxu0 0.0
    %6010 = vmatpush1.msra.mxu0 0.0
    %6011 = vmatprep.subr.mxu0 0.0
    %6012 = vmatpush1.msra.mxu0 0.0
    %6013 = vmatprep.subr.mxu0 0.0
    %6014 = vmatpush1.msra.mxu0 0.0
    %6015 = vmatprep.subr.mxu0 0.0
    %6016 = vmatpush1.msra.mxu0 0.0
    %6017 = vmatprep.subr.mxu0 0.0
    %6018 = vmatpush1.msra.mxu0 0.0
    %6019 = vmatprep.subr.mxu0 0.0
    %6020 = vmatpush1.msra.mxu0 0.0
    %6021 = vmatprep.subr.mxu0 0.0
    %6022 = vmatpush1.msra.mxu0 0.0
    %6023 = vmatprep.subr.mxu0 0.0
    %6024 = vmatpush1.msra.mxu0 0.0
    %6025 = vmatprep.subr.mxu0 0.0
    %6026 = vmatpush1.msra.mxu0 0.0
    %6027 = vmatprep.subr.mxu0 0.0
    %6028 = vmatpush1.msra.mxu0 0.0
    %6029 = vmatprep.subr.mxu0 0.0
    %6030 = vmatpush1.msra.mxu0 0.0
    %6031 = vmatprep.subr.mxu0 0.0
    %6032 = vmatpush1.msra.mxu0 0.0
    %6033 = vmatprep.subr.mxu0 0.0
    %6034 = vmatpush1.msra.mxu0 0.0
    %6035 = vmatprep.subr.mxu0 0.0
    %6036 = vmatpush1.msra.mxu0 0.0
    %6037 = vmatprep.subr.mxu0 0.0
    %6038 = vmatpush1.msra.mxu0 0.0
    %6039 = vmatprep.subr.mxu0 0.0
    %6040 = vmatpush1.msra.mxu0 0.0
    %6041 = vmatprep.mubr.f32.mxu0 0.0
    %6042 = vmatmul.mubr.f32.gmra.mrb[0].mxu0 %v5975
    %v6043 = vpop.f32.mrb[0].mxu0
    %v6044 = vadd.f32 0.0, %v6043
    %v6045 = vpop.f32.mrb[0].mxu0
    %v6046 = vadd.f32 0.0, %v6045
    %6047 = vdwg.mxu0
    %6048 = vmatprep.subr.mxu0 %v4718
    %6049 = vmatpush1.msra.mxu0 %v4717
    %6050 = vmatprep.subr.mxu0 %v4722
    %6051 = vmatpush1.msra.mxu0 %v4721
    %6052 = vmatprep.subr.mxu0 %v4726
    %6053 = vmatpush1.msra.mxu0 %v4725
    %6054 = vmatprep.subr.mxu0 %v4730
    %6055 = vmatpush1.msra.mxu0 %v4729
    %6056 = vmatprep.subr.mxu0 %v4734
    %6057 = vmatpush1.msra.mxu0 %v4733
    %6058 = vmatprep.subr.mxu0 %v4738
    %6059 = vmatpush1.msra.mxu0 %v4737
    %6060 = vmatprep.subr.mxu0 %v4742
    %6061 = vmatpush1.msra.mxu0 %v4741
    %6062 = vmatprep.subr.mxu0 %v4746
    %6063 = vmatpush1.msra.mxu0 %v4745
    %6064 = vmatprep.subr.mxu0 %v4750
    %6065 = vmatpush1.msra.mxu0 %v4749
    %6066 = vmatprep.subr.mxu0 %v4754
    %6067 = vmatpush1.msra.mxu0 %v4753
    %6068 = vmatprep.subr.mxu0 %v4758
    %6069 = vmatpush1.msra.mxu0 %v4757
    %6070 = vmatprep.subr.mxu0 %v4762
    %6071 = vmatpush1.msra.mxu0 %v4761
    %6072 = vmatprep.subr.mxu0 0.0
    %6073 = vmatpush1.msra.mxu0 0.0
    %6074 = vmatprep.subr.mxu0 0.0
    %6075 = vmatpush1.msra.mxu0 0.0
    %6076 = vmatprep.subr.mxu0 0.0
    %6077 = vmatpush1.msra.mxu0 0.0
    %6078 = vmatprep.subr.mxu0 0.0
    %6079 = vmatpush1.msra.mxu0 0.0
    %6080 = vmatprep.subr.mxu0 0.0
    %6081 = vmatpush1.msra.mxu0 0.0
    %6082 = vmatprep.subr.mxu0 0.0
    %6083 = vmatpush1.msra.mxu0 0.0
    %6084 = vmatprep.subr.mxu0 0.0
    %6085 = vmatpush1.msra.mxu0 0.0
    %6086 = vmatprep.subr.mxu0 0.0
    %6087 = vmatpush1.msra.mxu0 0.0
    %6088 = vmatprep.subr.mxu0 0.0
    %6089 = vmatpush1.msra.mxu0 0.0
    %6090 = vmatprep.subr.mxu0 0.0
    %6091 = vmatpush1.msra.mxu0 0.0
    %6092 = vmatprep.subr.mxu0 0.0
    %6093 = vmatpush1.msra.mxu0 0.0
    %6094 = vmatprep.subr.mxu0 0.0
    %6095 = vmatpush1.msra.mxu0 0.0
    %6096 = vmatprep.subr.mxu0 0.0
    %6097 = vmatpush1.msra.mxu0 0.0
    %6098 = vmatprep.subr.mxu0 0.0
    %6099 = vmatpush1.msra.mxu0 0.0
    %6100 = vmatprep.subr.mxu0 0.0
    %6101 = vmatpush1.msra.mxu0 0.0
    %6102 = vmatprep.subr.mxu0 0.0
    %6103 = vmatpush1.msra.mxu0 0.0
    %6104 = vmatprep.subr.mxu0 0.0
    %6105 = vmatpush1.msra.mxu0 0.0
    %6106 = vmatprep.subr.mxu0 0.0
    %6107 = vmatpush1.msra.mxu0 0.0
    %6108 = vmatprep.subr.mxu0 0.0
    %6109 = vmatpush1.msra.mxu0 0.0
    %6110 = vmatprep.subr.mxu0 0.0
    %6111 = vmatpush1.msra.mxu0 0.0
    %6112 = vmatprep.mubr.f32.mxu0 0.0
    %6113 = vmatmul.mubr.f32.gmra.mrb[0].mxu0 %v5975
    %v6114 = vpop.f32.mrb[0].mxu0
    %v6115 = vadd.f32 0.0, %v6114
    %v6116 = vpop.f32.mrb[0].mxu0
    %v6117 = vadd.f32 0.0, %v6116
    %6118 = vdwg.mxu0
    %v6119 = vadd.f32 %v4711, %v6044
    %v6120 = vadd.f32 %v4712, %v6046
    %v6121 = vadd.f32 %v4713, %v6115
    %v6122 = vadd.f32 %v4714, %v6117
    %v6123 = vxor.u32 %v6119, 2147483648
    %v6124 = vxor.u32 %v6120, 2147483648
    %v6125 = vxor.u32 %v6121, 2147483648
    %v6126 = vmul.f32 %v6123, 1.442695
    %v6127 = vpow.pop %v6126
    %v6128 = vmul.f32 %v6124, 1.442695
    %v6129 = vpow.pop %v6128
    %v6130 = vmul.f32 %v6125, 1.442695
    %v6131 = vpow.pop %v6130
    %v6132 = vadd.f32 %v6127, 1.0
    %v6133 = vadd.f32 %v6129, 1.0
    %v6134 = vadd.f32 %v6131, 1.0
    %v6135 = vrcp.pop %v6132
    %v6136 = vmul.f32 1.0, %v6135
    %v6137 = vrcp.pop %v6133
    %v6138 = vmul.f32 1.0, %v6137
    %v6139 = vrcp.pop %v6134
    %v6140 = vmul.f32 1.0, %v6139
    %v6141 = vtanh.pop %v6122
    %v6142 = vmul.f32 %v6138, %v5971
    %v6143 = vmul.f32 %v6136, %v6141
    %v6144 = vadd.f32 %v6142, %v6143
    %v6145 = vtanh.pop %v6144
    %v6146 = vmul.f32 %v6140, %v6145
    %v6147 = vld [vmem:[%s12] sm:$0xff]
    %v6148 = vld [vmem:[%s12 + $0x8] sm:$0xff]
    %v6149 = vld [vmem:[%s12 + $0x10] sm:$0xff]
    %v6150 = vld [vmem:[%s12 + $0x18] sm:$0xff]
    %v6151 = vld [vmem:[%s12 + $0x20] sm:$0xff]
    %v6152 = vld [vmem:[%s12 + $0x28] sm:$0xff]
    %v6153 = vld [vmem:[%s12 + $0x30] sm:$0xff]
    %v6154 = vld [vmem:[%s12 + $0x38] sm:$0xff]
    %v6155 = vld [vmem:[%s12 + $0x40] sm:$0xff]
    %v6156 = vld [vmem:[%s12 + $0x48] sm:$0xff]
    %v6157 = vld [vmem:[%s12 + $0x50] sm:$0xff]
    %v6158 = vld [vmem:[%s12 + $0x58] sm:$0xff]
    %v6159 = vld [vmem:[%s13] sm:$0x1]
    %v6161 = vlaneseq
    %v6162 = vshrl.u32 %v6161, 7
    %v6163 = vsub.s32 0, %v6162
    %v6164 = vrot.slane %v6159, %v6163
    %v6167 = vsel %vm4763, %v6146, 0
    %6169 = vmatprep.subr.mxu0 0.0
    %6170 = vmatpush1.msra.mxu0 %v6147
    %6171 = vmatprep.subr.mxu0 0.0
    %6172 = vmatpush1.msra.mxu0 %v6148
    %6173 = vmatprep.subr.mxu0 0.0
    %6174 = vmatpush1.msra.mxu0 %v6149
    %6175 = vmatprep.subr.mxu0 0.0
    %6176 = vmatpush1.msra.mxu0 %v6150
    %6177 = vmatprep.subr.mxu0 0.0
    %6178 = vmatpush1.msra.mxu0 %v6151
    %6179 = vmatprep.subr.mxu0 0.0
    %6180 = vmatpush1.msra.mxu0 %v6152
    %6181 = vmatprep.subr.mxu0 0.0
    %6182 = vmatpush1.msra.mxu0 %v6153
    %6183 = vmatprep.subr.mxu0 0.0
    %6184 = vmatpush1.msra.mxu0 %v6154
    %6185 = vmatprep.subr.mxu0 0.0
    %6186 = vmatpush1.msra.mxu0 %v6155
    %6187 = vmatprep.subr.mxu0 0.0
    %6188 = vmatpush1.msra.mxu0 %v6156
    %6189 = vmatprep.subr.mxu0 0.0
    %6190 = vmatpush1.msra.mxu0 %v6157
    %6191 = vmatprep.subr.mxu0 0.0
    %6192 = vmatpush1.msra.mxu0 %v6158
    %6193 = vmatprep.subr.mxu0 0.0
    %6194 = vmatpush1.msra.mxu0 0.0
    %6195 = vmatprep.subr.mxu0 0.0
    %6196 = vmatpush1.msra.mxu0 0.0
    %6197 = vmatprep.subr.mxu0 0.0
    %6198 = vmatpush1.msra.mxu0 0.0
    %6199 = vmatprep.subr.mxu0 0.0
    %6200 = vmatpush1.msra.mxu0 0.0
    %6201 = vmatprep.subr.mxu0 0.0
    %6202 = vmatpush1.msra.mxu0 0.0
    %6203 = vmatprep.subr.mxu0 0.0
    %6204 = vmatpush1.msra.mxu0 0.0
    %6205 = vmatprep.subr.mxu0 0.0
    %6206 = vmatpush1.msra.mxu0 0.0
    %6207 = vmatprep.subr.mxu0 0.0
    %6208 = vmatpush1.msra.mxu0 0.0
    %6209 = vmatprep.subr.mxu0 0.0
    %6210 = vmatpush1.msra.mxu0 0.0
    %6211 = vmatprep.subr.mxu0 0.0
    %6212 = vmatpush1.msra.mxu0 0.0
    %6213 = vmatprep.subr.mxu0 0.0
    %6214 = vmatpush1.msra.mxu0 0.0
    %6215 = vmatprep.subr.mxu0 0.0
    %6216 = vmatpush1.msra.mxu0 0.0
    %6217 = vmatprep.subr.mxu0 0.0
    %6218 = vmatpush1.msra.mxu0 0.0
    %6219 = vmatprep.subr.mxu0 0.0
    %6220 = vmatpush1.msra.mxu0 0.0
    %6221 = vmatprep.subr.mxu0 0.0
    %6222 = vmatpush1.msra.mxu0 0.0
    %6223 = vmatprep.subr.mxu0 0.0
    %6224 = vmatpush1.msra.mxu0 0.0
    %6225 = vmatprep.subr.mxu0 0.0
    %6226 = vmatpush1.msra.mxu0 0.0
    %6227 = vmatprep.subr.mxu0 0.0
    %6228 = vmatpush1.msra.mxu0 0.0
    %6229 = vmatprep.subr.mxu0 0.0
    %6230 = vmatpush1.msra.mxu0 0.0
    %6231 = vmatprep.subr.mxu0 0.0
    %6232 = vmatpush1.msra.mxu0 0.0
    %6233 = vmatprep.mubr.f32.mxu0 0.0
    %6234 = vmatmul.mubr.f32.gmra.mrb[0].mxu0 %v6167
    %v6235 = vpop.f32.mrb[0].mxu0
    %v6236 = vadd.f32 %v6164, %v6235
    %v6237 = vpop.f32.mrb[0].mxu0
    %6238 = vdwg.mxu0
    %v6239 = vmax.f32 %v6236, 0.0
    %v6240 = vld [vmem:[%s14] sm:$0xff]
    %v6241 = vld [vmem:[%s14 + $0x8] sm:$0xff]
    %v6242 = vld [vmem:[%s14 + $0x10] sm:$0xff]
    %v6243 = vld [vmem:[%s14 + $0x18] sm:$0xff]
    %v6244 = vld [vmem:[%s14 + $0x20] sm:$0xff]
    %v6245 = vld [vmem:[%s14 + $0x28] sm:$0xff]
    %v6246 = vld [vmem:[%s14 + $0x30] sm:$0xff]
    %v6247 = vld [vmem:[%s14 + $0x38] sm:$0xff]
    %v6248 = vld [vmem:[#allocation12] sm:$0x1]
    %v6250 = vlaneseq
    %v6251 = vshrl.u32 %v6250, 7
    %v6252 = vsub.s32 0, %v6251
    %v6253 = vrot.slane %v6248, %v6252
    %v6256 = vsel %vm312, %v6239, 0
    %6258 = vmatprep.subr.mxu0 0.0
    %6259 = vmatpush1.msra.mxu0 %v6240
    %6260 = vmatprep.subr.mxu0 0.0
    %6261 = vmatpush1.msra.mxu0 %v6241
    %6262 = vmatprep.subr.mxu0 0.0
    %6263 = vmatpush1.msra.mxu0 %v6242
    %6264 = vmatprep.subr.mxu0 0.0
    %6265 = vmatpush1.msra.mxu0 %v6243
    %6266 = vmatprep.subr.mxu0 0.0
    %6267 = vmatpush1.msra.mxu0 %v6244
    %6268 = vmatprep.subr.mxu0 0.0
    %6269 = vmatpush1.msra.mxu0 %v6245
    %6270 = vmatprep.subr.mxu0 0.0
    %6271 = vmatpush1.msra.mxu0 %v6246
    %6272 = vmatprep.subr.mxu0 0.0
    %6273 = vmatpush1.msra.mxu0 %v6247
    %6274 = vmatprep.subr.mxu0 0.0
    %6275 = vmatpush1.msra.mxu0 0.0
    %6276 = vmatprep.subr.mxu0 0.0
    %6277 = vmatpush1.msra.mxu0 0.0
    %6278 = vmatprep.subr.mxu0 0.0
    %6279 = vmatpush1.msra.mxu0 0.0
    %6280 = vmatprep.subr.mxu0 0.0
    %6281 = vmatpush1.msra.mxu0 0.0
    %6282 = vmatprep.subr.mxu0 0.0
    %6283 = vmatpush1.msra.mxu0 0.0
    %6284 = vmatprep.subr.mxu0 0.0
    %6285 = vmatpush1.msra.mxu0 0.0
    %6286 = vmatprep.subr.mxu0 0.0
    %6287 = vmatpush1.msra.mxu0 0.0
    %6288 = vmatprep.subr.mxu0 0.0
    %6289 = vmatpush1.msra.mxu0 0.0
    %6290 = vmatprep.subr.mxu0 0.0
    %6291 = vmatpush1.msra.mxu0 0.0
    %6292 = vmatprep.subr.mxu0 0.0
    %6293 = vmatpush1.msra.mxu0 0.0
    %6294 = vmatprep.subr.mxu0 0.0
    %6295 = vmatpush1.msra.mxu0 0.0
    %6296 = vmatprep.subr.mxu0 0.0
    %6297 = vmatpush1.msra.mxu0 0.0
    %6298 = vmatprep.subr.mxu0 0.0
    %6299 = vmatpush1.msra.mxu0 0.0
    %6300 = vmatprep.subr.mxu0 0.0
    %6301 = vmatpush1.msra.mxu0 0.0
    %6302 = vmatprep.subr.mxu0 0.0
    %6303 = vmatpush1.msra.mxu0 0.0
    %6304 = vmatprep.subr.mxu0 0.0
    %6305 = vmatpush1.msra.mxu0 0.0
    %6306 = vmatprep.subr.mxu0 0.0
    %6307 = vmatpush1.msra.mxu0 0.0
    %6308 = vmatprep.subr.mxu0 0.0
    %6309 = vmatpush1.msra.mxu0 0.0
    %6310 = vmatprep.subr.mxu0 0.0
    %6311 = vmatpush1.msra.mxu0 0.0
    %6312 = vmatprep.subr.mxu0 0.0
    %6313 = vmatpush1.msra.mxu0 0.0
    %6314 = vmatprep.subr.mxu0 0.0
    %6315 = vmatpush1.msra.mxu0 0.0
    %6316 = vmatprep.subr.mxu0 0.0
    %6317 = vmatpush1.msra.mxu0 0.0
    %6318 = vmatprep.subr.mxu0 0.0
    %6319 = vmatpush1.msra.mxu0 0.0
    %6320 = vmatprep.subr.mxu0 0.0
    %6321 = vmatpush1.msra.mxu0 0.0
    %6322 = vmatprep.mubr.f32.mxu0 0.0
    %6323 = vmatmul.mubr.f32.gmra.mrb[0].mxu0 %v6256
    %v6324 = vpop.f32.mrb[0].mxu0
    %v6325 = vadd.f32 %v6253, %v6324
    %v6326 = vpop.f32.mrb[0].mxu0
    %6327 = vdwg.mxu0
    %v6328 = vmax.f32 %v6325, 0.0
    %v6329 = vld [vmem:[#allocation13] sm:$0xff]
    %v6330 = vld [vmem:[#allocation13 + $0x8] sm:$0xff]
    %v6331 = vld [vmem:[#allocation13 + $0x10] sm:$0xff]
    %v6332 = vld [vmem:[#allocation13 + $0x18] sm:$0xff]
    %v6333 = vld [vmem:[#allocation15] sm:$0x1]
    %v6335 = vlaneseq
    %v6336 = vshrl.u32 %v6335, 7
    %v6337 = vsub.s32 0, %v6336
    %v6338 = vrot.slane %v6333, %v6337
    %vm6340 = vcmask 261120
    %v6342 = vsel %vm6340, %v6328, 0
    %6344 = vmatprep.subr.mxu0 0.0
    %6345 = vmatpush1.msra.mxu0 %v6329
    %6346 = vmatprep.subr.mxu0 0.0
    %6347 = vmatpush1.msra.mxu0 %v6330
    %6348 = vmatprep.subr.mxu0 0.0
    %6349 = vmatpush1.msra.mxu0 %v6331
    %6350 = vmatprep.subr.mxu0 0.0
    %6351 = vmatpush1.msra.mxu0 %v6332
    %6352 = vmatprep.subr.mxu0 0.0
    %6353 = vmatpush1.msra.mxu0 0.0
    %6354 = vmatprep.subr.mxu0 0.0
    %6355 = vmatpush1.msra.mxu0 0.0
    %6356 = vmatprep.subr.mxu0 0.0
    %6357 = vmatpush1.msra.mxu0 0.0
    %6358 = vmatprep.subr.mxu0 0.0
    %6359 = vmatpush1.msra.mxu0 0.0
    %6360 = vmatprep.subr.mxu0 0.0
    %6361 = vmatpush1.msra.mxu0 0.0
    %6362 = vmatprep.subr.mxu0 0.0
    %6363 = vmatpush1.msra.mxu0 0.0
    %6364 = vmatprep.subr.mxu0 0.0
    %6365 = vmatpush1.msra.mxu0 0.0
    %6366 = vmatprep.subr.mxu0 0.0
    %6367 = vmatpush1.msra.mxu0 0.0
    %6368 = vmatprep.subr.mxu0 0.0
    %6369 = vmatpush1.msra.mxu0 0.0
    %6370 = vmatprep.subr.mxu0 0.0
    %6371 = vmatpush1.msra.mxu0 0.0
    %6372 = vmatprep.subr.mxu0 0.0
    %6373 = vmatpush1.msra.mxu0 0.0
    %6374 = vmatprep.subr.mxu0 0.0
    %6375 = vmatpush1.msra.mxu0 0.0
    %6376 = vmatprep.subr.mxu0 0.0
    %6377 = vmatpush1.msra.mxu0 0.0
    %6378 = vmatprep.subr.mxu0 0.0
    %6379 = vmatpush1.msra.mxu0 0.0
    %6380 = vmatprep.subr.mxu0 0.0
    %6381 = vmatpush1.msra.mxu0 0.0
    %6382 = vmatprep.subr.mxu0 0.0
    %6383 = vmatpush1.msra.mxu0 0.0
    %6384 = vmatprep.subr.mxu0 0.0
    %6385 = vmatpush1.msra.mxu0 0.0
    %6386 = vmatprep.subr.mxu0 0.0
    %6387 = vmatpush1.msra.mxu0 0.0
    %6388 = vmatprep.subr.mxu0 0.0
    %6389 = vmatpush1.msra.mxu0 0.0
    %6390 = vmatprep.subr.mxu0 0.0
    %6391 = vmatpush1.msra.mxu0 0.0
    %6392 = vmatprep.subr.mxu0 0.0
    %6393 = vmatpush1.msra.mxu0 0.0
    %6394 = vmatprep.subr.mxu0 0.0
    %6395 = vmatpush1.msra.mxu0 0.0
    %6396 = vmatprep.subr.mxu0 0.0
    %6397 = vmatpush1.msra.mxu0 0.0
    %6398 = vmatprep.subr.mxu0 0.0
    %6399 = vmatpush1.msra.mxu0 0.0
    %6400 = vmatprep.subr.mxu0 0.0
    %6401 = vmatpush1.msra.mxu0 0.0
    %6402 = vmatprep.subr.mxu0 0.0
    %6403 = vmatpush1.msra.mxu0 0.0
    %6404 = vmatprep.subr.mxu0 0.0
    %6405 = vmatpush1.msra.mxu0 0.0
    %6406 = vmatprep.subr.mxu0 0.0
    %6407 = vmatpush1.msra.mxu0 0.0
    %6408 = vmatprep.mubr.f32.mxu0 0.0
    %6409 = vmatmul.mubr.f32.gmra.mrb[0].mxu0 %v6342
    %v6410 = vpop.f32.mrb[0].mxu0
    %v6411 = vadd.f32 %v6338, %v6410
    %v6412 = vpop.f32.mrb[0].mxu0
    %6413 = vdwg.mxu0
    %6414 = vst [vmem:[%s18] sm:$0xff] %v6411
    // Predicated region
    $region110: #{forward.1} parent=1 // pred_check
      _
    $region111: #{forward.1} parent=1 // pred_check_branch
      %6416 = sbr.rel (0) target = $region113
    $region112: #{forward.1} parent=1 // pred_region
      _
    $region113: #{forward.1} parent=1 // pred_fallthru
      _
    // Predicated region
    $region114: #{forward.1} parent=1 // pred_check
      _
    $region115: #{forward.1} parent=1 // pred_check_branch
      %6418 = sbr.rel (0) target = $region117
    $region116: #{forward.1} parent=1 // pred_region
      _
    $region117: #{forward.1} parent=1 // pred_fallthru
      _
    %6419 = vsyncpa [#allocation3], 1
    %6420 = vsyncpa [#allocation5], 1
    %6421 = vsyncpa [#allocation8], 1
    %6422 = vsyncpa [#allocation11], 1
    %6423 = vsyncpa [#allocation14], 1

</llo_original>
